<compile_context>
chip_gen: v6e
topology: v6e:2x2x1
jax: 0.10.0
libtpu: 0.0.40
codegen_flags: <defaults>
</compile_context>

<pallas_src>
import jax
import jax.numpy as jnp
from jax.experimental import pallas as pl
from jax.experimental.pallas import tpu as pltpu

RRELU_SLOPE = (1.0 + 1.0 / 3.0) / 2.0   # nn.RReLU(True) eval-mode negative slope
IN_EPS = 1e-5                            # nn.InstanceNorm2d default eps


# --------------------------------------------------------------------------------------
# Fused per-sample kernel
# --------------------------------------------------------------------------------------
def make_fused_kernel(H, W, C):
    HW = H * W
    C1, C2 = 64, 128

    def zero_halo_rows(st, kc):
        """Zero the padding=1 top/bottom halo rows (st[0], st[H+1]) of a staging buffer.
        Interior writes never touch these rows; left/right halo columns are baked (as
        zeros) into the staged values, so no masked column stores are needed."""
        z = jnp.zeros((1, W, kc), jnp.bfloat16)
        st[0:1, :, :] = z
        st[H + 1:H + 2, :, :] = z

    def stage_interior(st, y_f32, cin):
        """Cast the activation to bf16 once, build the three kw-shifted channel groups in
        registers (zero padding columns included) and issue ONE dense store of the interior
        rows: st[1+h, w, kw*cin + c] = y_zero_padded[h, w + kw - 1, c]."""
        y = y_f32.reshape(H, W, cin).astype(jnp.bfloat16)
        zc = jnp.zeros((H, 1, cin), jnp.bfloat16)
        left = jnp.concatenate([zc, y[:, 0:W - 1, :]], axis=1)    # value at w is y[h, w-1]
        right = jnp.concatenate([y[:, 1:W, :], zc], axis=1)       # value at w is y[h, w+1]
        st[1:H + 1, :, :] = jnp.concatenate([left, y, right], axis=2)

    def conv3x3(st, w_ref, cin, cout):
        """3x3 conv as 3 MXU matmuls with K = 3*cin (bf16 operands, f32 accumulation)."""
        acc = None
        for kh in range(3):
            patch = st[kh:kh + H, :, :].reshape(HW, 3 * cin)       # bf16, free outer-dim slice
            t = jnp.dot(patch, w_ref[kh], preferred_element_type=jnp.float32)
            acc = t if acc is None else acc + t
        return acc                                                 # (H*W, cout) f32

    def leaky(v):                                                  # RReLU(True), eval mode
        return jnp.maximum(v, v * RRELU_SLOPE)                     # exact: slope < 1

    def kernel(x_ref, fw_ref, fb_ref, w1_ref, w2_ref, b2_ref, w3_ref, b3_ref,
               w4_ref, b4_ref, o_ref, st_in, st_a, st_b):
        # Halo rows zeroed once per grid step (cheap: 2 row-slabs per buffer); scratch is
        # uninitialized per TensorCore so this cannot be gated on program_id == 0.
        zero_halo_rows(st_in, 3 * C)
        zero_halo_rows(st_a, 3 * C1)
        zero_halo_rows(st_b, 3 * C2)

        x = x_ref[0]                                               # (H, W, C) f32

        # ---- shrinkage / soft-threshold front end (VPU + EUP only, no MXU) ----
        y_abs = jnp.abs(x)
        avg = jnp.mean(y_abs, axis=(0, 1), keepdims=True).reshape(1, C)   # GAP + flatten
        z = fb_ref[...]                                            # (1, C)
        for i in range(C):                                         # tiny fc: unrolled VPU
            z = z + avg[:, i:i + 1] * fw_ref[i:i + 1, :]
        thr = (avg * jax.nn.sigmoid(z)).reshape(1, 1, C)           # average * fc(average)
        n_sub = jnp.maximum(y_abs - thr, 0.0)
        y0 = jnp.where(x >= 0.0, n_sub, -n_sub)                    # sign(x)*n_sub (n_sub(0)=0)

        # ---- conv1 (C->64) + InstanceNorm2d(64, affine=False) + RReLU(eval) ----
        stage_interior(st_in, y0, C)
        h = conv3x3(st_in, w1_ref, C, C1)        # conv1 bias omitted: cancelled exactly by IN
        mu = jnp.mean(h, axis=0, keepdims=True)
        var = jnp.maximum(jnp.mean(h * h, axis=0, keepdims=True) - mu * mu, 0.0)
        h = leaky((h - mu) * jax.lax.rsqrt(var + IN_EPS))

        # ---- conv2 (64->128) + RReLU (bias+leaky+bf16 cast fused into the staging write) ----
        stage_interior(st_a, h, C1)
        h = leaky(conv3x3(st_a, w2_ref, C1, C2) + b2_ref[...])

        # ---- conv3 (128->64) + RReLU ----
        stage_interior(st_b, h, C2)
        h = leaky(conv3x3(st_b, w3_ref, C2, C1) + b3_ref[...])

        # ---- conv4 (64->C) + residual with the ORIGINAL (pre-shrink) input ----
        stage_interior(st_a, h, C1)              # reuse 64-channel staging buffer (halos still 0)
        h = conv3x3(st_a, w4_ref, C1, C) + b4_ref[...]
        o_ref[0] = x + h.reshape(H, W, C)

    return kernel


# --------------------------------------------------------------------------------------
# Parameters & wrapper
# --------------------------------------------------------------------------------------
def init_params(dim=3):
    key = jax.random.PRNGKey(0)
    ks = jax.random.split(key, 10)
    scale = 0.1

    def w(k, shape):
        return (scale * jax.random.normal(k, shape)).astype(jnp.float32)

    return {
        # fc: Linear(dim, dim) stored as (in, out) (already transposed vs torch)
        "fc_w": w(ks[0], (dim, dim)),
        "fc_b": w(ks[1], (1, dim)),
        # conv weights are HWIO; conv1's bias is a no-op under InstanceNorm2d(affine=False).
        "w1": w(ks[2], (3, 3, dim, 64)),
        "w2": w(ks[3], (3, 3, 64, 128)), "b2": w(ks[4], (128,)),
        "w3": w(ks[5], (3, 3, 128, 64)), "b3": w(ks[6], (64,)),
        "w4": w(ks[7], (3, 3, 64, 3)),   "b4": w(ks[8], (3,)),
    }


def _rup(a, b):
    return -(-a // b) * b


def _padded_vmem_bytes(shape, dtype):
    """Approximate VMEM footprint of one buffer with (sublane, 128) lane tiling."""
    item = jnp.dtype(dtype).itemsize
    sub = 8 * (4 // item)                       # f32: 8 rows/tile, bf16: 16
    lead = 1
    for d in shape[:-2]:
        lead *= int(d)
    return lead * _rup(int(shape[-2]), sub) * _rup(int(shape[-1]), 128) * item


@jax.jit
def resnet_block1_forward(x_nchw, params):
    N, C, H, W = x_nchw.shape
    assert C == 3, "conv_block outputs 3 channels; the residual add requires dim == 3"
    assert W % 8 == 0 and H >= 1 and W >= 2, "W must be a multiple of 8 (lane/sublane tiling)"

    # NCHW (PyTorch) -> NHWC (channels on the TPU lane axis).  Only the small 3-channel
    # input/output cross this transpose; all wide intermediates stay in VMEM scratch.
    # TODO(synk): review item 5 (NCHW-native lane-dense I/O) not applied; this kernel is
    #             MXU/staging-bound so the 3-channel wrapper transposes are secondary.
    x = jnp.transpose(x_nchw, (0, 2, 3, 1)).astype(jnp.float32)

    # Conv weights: HWIO -> (kh, kw*Cin, Cout) so each kh-slice matches the kw-expanded
    # staging layout; bf16 for the MXU.
    w1 = params["w1"].reshape(3, 3 * C, 64).astype(jnp.bfloat16)
    w2 = params["w2"].reshape(3, 3 * 64, 128).astype(jnp.bfloat16)
    w3 = params["w3"].reshape(3, 3 * 128, 64).astype(jnp.bfloat16)
    w4 = params["w4"].reshape(3, 3 * 64, C).astype(jnp.bfloat16)
    b2 = params["b2"].reshape(1, 128).astype(jnp.float32)
    b3 = params["b3"].reshape(1, 64).astype(jnp.float32)
    b4 = params["b4"].reshape(1, C).astype(jnp.float32)
    fw = params["fc_w"].astype(jnp.float32)
    fb = params["fc_b"].reshape(1, C).astype(jnp.float32)

    def rep(rank):
        return lambda n: (0,) * rank

    in_specs = [
        pl.BlockSpec((1, H, W, C), lambda n: (n, 0, 0, 0)),   # x (per-sample block)
        pl.BlockSpec((C, C), rep(2)),                         # fc weight
        pl.BlockSpec((1, C), rep(2)),                         # fc bias
        pl.BlockSpec((3, 3 * C, 64), rep(3)),                 # w1
        pl.BlockSpec((3, 3 * 64, 128), rep(3)),               # w2
        pl.BlockSpec((1, 128), rep(2)),                       # b2
        pl.BlockSpec((3, 3 * 128, 64), rep(3)),               # w3
        pl.BlockSpec((1, 64), rep(2)),                        # b3
        pl.BlockSpec((3, 3 * 64, C), rep(3)),                 # w4
        pl.BlockSpec((1, C), rep(2)),                         # b4
    ]
    out_spec = pl.BlockSpec((1, H, W, C), lambda n: (n, 0, 0, 0))

    # kw-expanded staging buffers, bf16 (halved vs the previous f32 version).
    scratch_defs = [
        ((H + 2, W, 3 * C), jnp.bfloat16),      # conv1 input (shrunk x)
        ((H + 2, W, 3 * 64), jnp.bfloat16),     # conv2 / conv4 input (reused)
        ((H + 2, W, 3 * 128), jnp.bfloat16),    # conv3 input
    ]
    scratch = [pltpu.VMEM(s, d) for s, d in scratch_defs]

    # ---- computed VMEM budget (review item 9) ----
    HW = H * W
    scratch_bytes = sum(_padded_vmem_bytes(s, d) for s, d in scratch_defs)
    io_bytes = 2 * 2 * _padded_vmem_bytes((1, H, W, C), jnp.float32)     # double-buffered in+out
    weight_defs = [((3, 3 * C, 64), jnp.bfloat16), ((3, 3 * 64, 128), jnp.bfloat16),
                   ((3, 3 * 128, 64), jnp.bfloat16), ((3, 3 * 64, C), jnp.bfloat16),
                   ((1, 128), jnp.float32), ((1, 64), jnp.float32), ((1, C), jnp.float32),
                   ((C, C), jnp.float32), ((1, C), jnp.float32)]
    weight_bytes = 2 * sum(_padded_vmem_bytes(s, d) for s, d in weight_defs)
    interm_bytes = 4 * HW * 128 * 4                                       # live f32 (HW, Cout) values
    needed = scratch_bytes + io_bytes + weight_bytes + interm_bytes + (8 << 20)
    try:
        cap = int(pltpu.get_tpu_info().vmem_capacity_bytes)
    except Exception:
        cap = 64 * 1024 * 1024
    vmem_limit = int(min(max(needed, 32 * 1024 * 1024), cap - (4 << 20)))

    flops = 2 * N * H * W * 9 * (C * 64 + 64 * 128 + 128 * 64 + 64 * C)
    bytes_accessed = int(
        4 * (2 * N * H * W * C)
        + 2 * (w1.size + w2.size + w3.size + w4.size)
        + 4 * (fw.size + fb.size + b2.size + b3.size + b4.size))
    cost = pl.CostEstimate(flops=flops, transcendentals=N * (C + 64),
                           bytes_accessed=bytes_accessed)

    out = pl.pallas_call(
        make_fused_kernel(H, W, C),
        out_shape=jax.ShapeDtypeStruct((N, H, W, C), jnp.float32),
        grid_spec=pltpu.PrefetchScalarGridSpec(
            num_scalar_prefetch=0,
            grid=(N,),
            in_specs=in_specs,
            out_specs=out_spec,
            scratch_shapes=scratch,
        ),
        compiler_params=pltpu.CompilerParams(
            dimension_semantics=("parallel",),          # megacore batch split on v7x
            vmem_limit_bytes=vmem_limit,
        ),
        cost_estimate=cost,
    )(x, fw, fb, w1, w2, b2, w3, b3, w4, b4)

    # NHWC -> NCHW (3-channel only; cheap relative to the fused block)
    return jnp.transpose(out, (0, 3, 1, 2))


if __name__ == "__main__":
    dim = 3          # conv_block outputs 3 channels, so dim=3 makes the residual add exact
    N, H, W = 2, 16, 16
    key = jax.random.PRNGKey(0)
    x = jax.random.normal(key, (N, dim, H, W), dtype=jnp.float32)

    params = init_params(dim)
    out = resnet_block1_forward(x, params)
    out = jax.block_until_ready(out)
    assert out.shape == (N, dim, H, W), out.shape
    print("KERNEL_OK")
</pallas_src>

<mosaic_0001>
module attributes {stable_mosaic.version = 11 : i64} {
  func.func @kernel(%arg0: i32, %arg1: memref<1x16x16x3xf32, #tpu.memory_space<vmem>>, %arg2: memref<3x3xf32, #tpu.memory_space<vmem>>, %arg3: memref<1x3xf32, #tpu.memory_space<vmem>>, %arg4: memref<3x9x64xbf16, #tpu.memory_space<vmem>>, %arg5: memref<3x192x128xbf16, #tpu.memory_space<vmem>>, %arg6: memref<1x128xf32, #tpu.memory_space<vmem>>, %arg7: memref<3x384x64xbf16, #tpu.memory_space<vmem>>, %arg8: memref<1x64xf32, #tpu.memory_space<vmem>>, %arg9: memref<3x192x3xbf16, #tpu.memory_space<vmem>>, %arg10: memref<1x3xf32, #tpu.memory_space<vmem>>, %arg11: memref<1x16x16x3xf32, #tpu.memory_space<vmem>>, %arg12: memref<18x16x9xbf16, #tpu.memory_space<vmem>>, %arg13: memref<18x16x192xbf16, #tpu.memory_space<vmem>>, %arg14: memref<18x16x384xbf16, #tpu.memory_space<vmem>>) attributes {dimension_semantics = [#tpu.dimension_semantics<parallel>], iteration_bounds = array<i64: 2>, scalar_prefetch = 0 : i64, scratch_operands = 3 : i64, tpu.core_type = #tpu.core_type<tc>, window_params = [{transform_indices = @transform_0, window_bounds = array<i64: 1, 16, 16, 3>}, {pipeline_mode = #tpu.pipeline_mode<synchronous>, transform_indices = @transform_1, window_bounds = array<i64: 3, 3>}, {pipeline_mode = #tpu.pipeline_mode<synchronous>, transform_indices = @transform_2, window_bounds = array<i64: 1, 3>}, {pipeline_mode = #tpu.pipeline_mode<synchronous>, transform_indices = @transform_3, window_bounds = array<i64: 3, 9, 64>}, {pipeline_mode = #tpu.pipeline_mode<synchronous>, transform_indices = @transform_4, window_bounds = array<i64: 3, 192, 128>}, {pipeline_mode = #tpu.pipeline_mode<synchronous>, transform_indices = @transform_5, window_bounds = array<i64: 1, 128>}, {pipeline_mode = #tpu.pipeline_mode<synchronous>, transform_indices = @transform_6, window_bounds = array<i64: 3, 384, 64>}, {pipeline_mode = #tpu.pipeline_mode<synchronous>, transform_indices = @transform_7, window_bounds = array<i64: 1, 64>}, {pipeline_mode = #tpu.pipeline_mode<synchronous>, transform_indices = @transform_8, window_bounds = array<i64: 3, 192, 3>}, {pipeline_mode = #tpu.pipeline_mode<synchronous>, transform_indices = @transform_9, window_bounds = array<i64: 1, 3>}, {transform_indices = @transform_10, window_bounds = array<i64: 1, 16, 16, 3>}]} {
    %cst = arith.constant 0.000000e+00 : bf16
    %0 = vector.broadcast %cst : bf16 to vector<1x16x9xbf16>
    %c0 = arith.constant 0 : index
    %c0_0 = arith.constant 0 : index
    %c0_1 = arith.constant 0 : index
    %1 = vector.load %arg12[%c0, %c0_0, %c0_1] : memref<18x16x9xbf16, #tpu.memory_space<vmem>>, vector<1x16x9xbf16>
    tpu.vector_store %arg12[%c0, %c0_0, %c0_1], %0 {strides = array<i32>} : memref<18x16x9xbf16, #tpu.memory_space<vmem>>, vector<1x16x9xbf16>,
    %c17 = arith.constant 17 : index
    %c0_2 = arith.constant 0 : index
    %c0_3 = arith.constant 0 : index
    %2 = vector.load %arg12[%c17, %c0_2, %c0_3] : memref<18x16x9xbf16, #tpu.memory_space<vmem>>, vector<1x16x9xbf16>
    tpu.vector_store %arg12[%c17, %c0_2, %c0_3], %0 {strides = array<i32>} : memref<18x16x9xbf16, #tpu.memory_space<vmem>>, vector<1x16x9xbf16>,
    %cst_4 = arith.constant 0.000000e+00 : bf16
    %3 = vector.broadcast %cst_4 : bf16 to vector<1x16x192xbf16>
    %c0_5 = arith.constant 0 : index
    %c0_6 = arith.constant 0 : index
    %c0_7 = arith.constant 0 : index
    %4 = vector.load %arg13[%c0_5, %c0_6, %c0_7] : memref<18x16x192xbf16, #tpu.memory_space<vmem>>, vector<1x16x192xbf16>
    tpu.vector_store %arg13[%c0_5, %c0_6, %c0_7], %3 {strides = array<i32>} : memref<18x16x192xbf16, #tpu.memory_space<vmem>>, vector<1x16x192xbf16>,
    %c17_8 = arith.constant 17 : index
    %c0_9 = arith.constant 0 : index
    %c0_10 = arith.constant 0 : index
    %5 = vector.load %arg13[%c17_8, %c0_9, %c0_10] : memref<18x16x192xbf16, #tpu.memory_space<vmem>>, vector<1x16x192xbf16>
    tpu.vector_store %arg13[%c17_8, %c0_9, %c0_10], %3 {strides = array<i32>} : memref<18x16x192xbf16, #tpu.memory_space<vmem>>, vector<1x16x192xbf16>,
    %cst_11 = arith.constant 0.000000e+00 : bf16
    %6 = vector.broadcast %cst_11 : bf16 to vector<1x16x384xbf16>
    %c0_12 = arith.constant 0 : index
    %c0_13 = arith.constant 0 : index
    %c0_14 = arith.constant 0 : index
    %7 = vector.load %arg14[%c0_12, %c0_13, %c0_14] : memref<18x16x384xbf16, #tpu.memory_space<vmem>>, vector<1x16x384xbf16>
    tpu.vector_store %arg14[%c0_12, %c0_13, %c0_14], %6 {strides = array<i32>} : memref<18x16x384xbf16, #tpu.memory_space<vmem>>, vector<1x16x384xbf16>,
    %c17_15 = arith.constant 17 : index
    %c0_16 = arith.constant 0 : index
    %c0_17 = arith.constant 0 : index
    %8 = vector.load %arg14[%c17_15, %c0_16, %c0_17] : memref<18x16x384xbf16, #tpu.memory_space<vmem>>, vector<1x16x384xbf16>
    tpu.vector_store %arg14[%c17_15, %c0_16, %c0_17], %6 {strides = array<i32>} : memref<18x16x384xbf16, #tpu.memory_space<vmem>>, vector<1x16x384xbf16>,
    %c0_18 = arith.constant 0 : index
    %c0_19 = arith.constant 0 : index
    %c0_20 = arith.constant 0 : index
    %c0_21 = arith.constant 0 : index
    %9 = vector.load %arg1[%c0_18, %c0_19, %c0_20, %c0_21] : memref<1x16x16x3xf32, #tpu.memory_space<vmem>>, vector<1x16x16x3xf32>
    %10 = vector.shape_cast %9 : vector<1x16x16x3xf32> to vector<16x16x3xf32>
    %11 = math.absf %10 : vector<16x16x3xf32>
    %cst_22 = arith.constant dense<0.000000e+00> : vector<3xf32>
    %12 = vector.multi_reduction <add>, %11, %cst_22 [0, 1] : vector<16x16x3xf32> to vector<3xf32>
    %13 = vector.shape_cast %12 : vector<3xf32> to vector<1x1x3xf32>
    %cst_23 = arith.constant 2.560000e+02 : f32
    %14 = vector.broadcast %cst_23 : f32 to vector<1x1x3xf32>
    %15 = arith.divf %13, %14 : vector<1x1x3xf32>
    %16 = vector.shape_cast %15 : vector<1x1x3xf32> to vector<1x3xf32>
    %c0_24 = arith.constant 0 : index
    %c0_25 = arith.constant 0 : index
    %17 = vector.load %arg3[%c0_24, %c0_25] : memref<1x3xf32, #tpu.memory_space<vmem>>, vector<1x3xf32>
    %18 = vector.extract_strided_slice %16 {offsets = [0, 0], sizes = [1, 1], strides = [1, 1]} : vector<1x3xf32> to vector<1x1xf32>
    %c0_26 = arith.constant 0 : index
    %c0_27 = arith.constant 0 : index
    %19 = vector.load %arg2[%c0_26, %c0_27] : memref<3x3xf32, #tpu.memory_space<vmem>>, vector<1x3xf32>
    %20 = vector.broadcast %18 : vector<1x1xf32> to vector<1x3xf32>
    %21 = arith.mulf %20, %19 : vector<1x3xf32>
    %22 = arith.addf %17, %21 : vector<1x3xf32>
    %23 = vector.extract_strided_slice %16 {offsets = [0, 1], sizes = [1, 1], strides = [1, 1]} : vector<1x3xf32> to vector<1x1xf32>
    %c1 = arith.constant 1 : index
    %c0_28 = arith.constant 0 : index
    %24 = vector.load %arg2[%c1, %c0_28] : memref<3x3xf32, #tpu.memory_space<vmem>>, vector<1x3xf32>
    %25 = vector.broadcast %23 : vector<1x1xf32> to vector<1x3xf32>
    %26 = arith.mulf %25, %24 : vector<1x3xf32>
    %27 = arith.addf %22, %26 : vector<1x3xf32>
    %28 = vector.extract_strided_slice %16 {offsets = [0, 2], sizes = [1, 1], strides = [1, 1]} : vector<1x3xf32> to vector<1x1xf32>
    %c2 = arith.constant 2 : index
    %c0_29 = arith.constant 0 : index
    %29 = vector.load %arg2[%c2, %c0_29] : memref<3x3xf32, #tpu.memory_space<vmem>>, vector<1x3xf32>
    %30 = vector.broadcast %28 : vector<1x1xf32> to vector<1x3xf32>
    %31 = arith.mulf %30, %29 : vector<1x3xf32>
    %32 = arith.addf %27, %31 : vector<1x3xf32>
    %33 = arith.negf %32 : vector<1x3xf32>
    %34 = math.exp %33 : vector<1x3xf32>
    %cst_30 = arith.constant 1.000000e+00 : f32
    %35 = vector.broadcast %cst_30 : f32 to vector<1x3xf32>
    %36 = arith.addf %35, %34 : vector<1x3xf32>
    %37 = arith.divf %35, %36 : vector<1x3xf32>
    %38 = arith.mulf %16, %37 : vector<1x3xf32>
    %39 = vector.shape_cast %38 : vector<1x3xf32> to vector<1x1x3xf32>
    %40 = vector.broadcast %39 : vector<1x1x3xf32> to vector<16x16x3xf32>
    %41 = arith.subf %11, %40 : vector<16x16x3xf32>
    %cst_31 = arith.constant 0.000000e+00 : f32
    %42 = vector.broadcast %cst_31 : f32 to vector<16x16x3xf32>
    %43 = arith.maximumf %41, %42 : vector<16x16x3xf32>
    %cst_32 = arith.constant 0.000000e+00 : f32
    %44 = vector.broadcast %cst_32 : f32 to vector<16x16x3xf32>
    %45 = arith.cmpf oge, %10, %44 : vector<16x16x3xf32>
    %cst_33 = arith.constant 0.000000e+00 : f32
    %46 = vector.broadcast %cst_33 : f32 to vector<16x16x3xf32>
    %47 = arith.subf %46, %43 : vector<16x16x3xf32>
    %48 = arith.select %45, %43, %47 : vector<16x16x3xi1>, vector<16x16x3xf32>
    %49 = arith.truncf %48 : vector<16x16x3xf32> to vector<16x16x3xbf16>
    %cst_34 = arith.constant 0.000000e+00 : bf16
    %50 = vector.broadcast %cst_34 : bf16 to vector<16x1x3xbf16>
    %51 = vector.extract_strided_slice %49 {offsets = [0, 0, 0], sizes = [16, 15, 3], strides = [1, 1, 1]} : vector<16x16x3xbf16> to vector<16x15x3xbf16>
    %52 = tpu.concatenate %50, %51 in 1 : vector<16x1x3xbf16>, vector<16x15x3xbf16> -> vector<16x16x3xbf16>
    %53 = vector.extract_strided_slice %49 {offsets = [0, 1, 0], sizes = [16, 15, 3], strides = [1, 1, 1]} : vector<16x16x3xbf16> to vector<16x15x3xbf16>
    %54 = tpu.concatenate %53, %50 in 1 : vector<16x15x3xbf16>, vector<16x1x3xbf16> -> vector<16x16x3xbf16>
    %55 = tpu.concatenate %52, %49, %54 in 2 : vector<16x16x3xbf16>, vector<16x16x3xbf16>, vector<16x16x3xbf16> -> vector<16x16x9xbf16>
    %c1_35 = arith.constant 1 : index
    %c0_36 = arith.constant 0 : index
    %c0_37 = arith.constant 0 : index
    %56 = vector.load %arg12[%c1_35, %c0_36, %c0_37] : memref<18x16x9xbf16, #tpu.memory_space<vmem>>, vector<16x16x9xbf16>
    tpu.vector_store %arg12[%c1_35, %c0_36, %c0_37], %55 {strides = array<i32>} : memref<18x16x9xbf16, #tpu.memory_space<vmem>>, vector<16x16x9xbf16>,
    %c0_38 = arith.constant 0 : index
    %c0_39 = arith.constant 0 : index
    %c0_40 = arith.constant 0 : index
    %57 = vector.load %arg12[%c0_38, %c0_39, %c0_40] : memref<18x16x9xbf16, #tpu.memory_space<vmem>>, vector<16x16x9xbf16>
    %58 = vector.shape_cast %57 : vector<16x16x9xbf16> to vector<256x9xbf16>
    %c0_41 = arith.constant 0 : index
    %c0_42 = arith.constant 0 : index
    %c0_43 = arith.constant 0 : index
    %59 = vector.load %arg4[%c0_41, %c0_42, %c0_43] : memref<3x9x64xbf16, #tpu.memory_space<vmem>>, vector<1x9x64xbf16>
    %60 = vector.shape_cast %59 : vector<1x9x64xbf16> to vector<9x64xbf16>
    %cst_44 = arith.constant dense<0.000000e+00> : vector<256x64xf32>
    %61 = tpu.matmul %58, %60, %cst_44 {dimension_numbers = #tpu.dot_dimension_numbers<[1], [0], [0], [1], [0, 0, 1, 1], [], []>} : vector<256x9xbf16>, vector<9x64xbf16>, vector<256x64xf32> -> vector<256x64xf32>
    %c1_45 = arith.constant 1 : index
    %c0_46 = arith.constant 0 : index
    %c0_47 = arith.constant 0 : index
    %62 = vector.load %arg12[%c1_45, %c0_46, %c0_47] : memref<18x16x9xbf16, #tpu.memory_space<vmem>>, vector<16x16x9xbf16>
    %63 = vector.shape_cast %62 : vector<16x16x9xbf16> to vector<256x9xbf16>
    %c1_48 = arith.constant 1 : index
    %c0_49 = arith.constant 0 : index
    %c0_50 = arith.constant 0 : index
    %64 = vector.load %arg4[%c1_48, %c0_49, %c0_50] : memref<3x9x64xbf16, #tpu.memory_space<vmem>>, vector<1x9x64xbf16>
    %65 = vector.shape_cast %64 : vector<1x9x64xbf16> to vector<9x64xbf16>
    %cst_51 = arith.constant dense<0.000000e+00> : vector<256x64xf32>
    %66 = tpu.matmul %63, %65, %cst_51 {dimension_numbers = #tpu.dot_dimension_numbers<[1], [0], [0], [1], [0, 0, 1, 1], [], []>} : vector<256x9xbf16>, vector<9x64xbf16>, vector<256x64xf32> -> vector<256x64xf32>
    %67 = arith.addf %61, %66 : vector<256x64xf32>
    %c2_52 = arith.constant 2 : index
    %c0_53 = arith.constant 0 : index
    %c0_54 = arith.constant 0 : index
    %68 = vector.load %arg12[%c2_52, %c0_53, %c0_54] : memref<18x16x9xbf16, #tpu.memory_space<vmem>>, vector<16x16x9xbf16>
    %69 = vector.shape_cast %68 : vector<16x16x9xbf16> to vector<256x9xbf16>
    %c2_55 = arith.constant 2 : index
    %c0_56 = arith.constant 0 : index
    %c0_57 = arith.constant 0 : index
    %70 = vector.load %arg4[%c2_55, %c0_56, %c0_57] : memref<3x9x64xbf16, #tpu.memory_space<vmem>>, vector<1x9x64xbf16>
    %71 = vector.shape_cast %70 : vector<1x9x64xbf16> to vector<9x64xbf16>
    %cst_58 = arith.constant dense<0.000000e+00> : vector<256x64xf32>
    %72 = tpu.matmul %69, %71, %cst_58 {dimension_numbers = #tpu.dot_dimension_numbers<[1], [0], [0], [1], [0, 0, 1, 1], [], []>} : vector<256x9xbf16>, vector<9x64xbf16>, vector<256x64xf32> -> vector<256x64xf32>
    %73 = arith.addf %67, %72 : vector<256x64xf32>
    %cst_59 = arith.constant dense<0.000000e+00> : vector<64xf32>
    %74 = vector.multi_reduction <add>, %73, %cst_59 [0] : vector<256x64xf32> to vector<64xf32>
    %75 = vector.shape_cast %74 : vector<64xf32> to vector<1x64xf32>
    %cst_60 = arith.constant 2.560000e+02 : f32
    %76 = vector.broadcast %cst_60 : f32 to vector<1x64xf32>
    %77 = arith.divf %75, %76 : vector<1x64xf32>
    %78 = arith.mulf %73, %73 : vector<256x64xf32>
    %cst_61 = arith.constant dense<0.000000e+00> : vector<64xf32>
    %79 = vector.multi_reduction <add>, %78, %cst_61 [0] : vector<256x64xf32> to vector<64xf32>
    %80 = vector.shape_cast %79 : vector<64xf32> to vector<1x64xf32>
    %cst_62 = arith.constant 2.560000e+02 : f32
    %81 = vector.broadcast %cst_62 : f32 to vector<1x64xf32>
    %82 = arith.divf %80, %81 : vector<1x64xf32>
    %83 = arith.mulf %77, %77 : vector<1x64xf32>
    %84 = arith.subf %82, %83 : vector<1x64xf32>
    %cst_63 = arith.constant 0.000000e+00 : f32
    %85 = vector.broadcast %cst_63 : f32 to vector<1x64xf32>
    %86 = arith.maximumf %84, %85 : vector<1x64xf32>
    %87 = vector.broadcast %77 : vector<1x64xf32> to vector<256x64xf32>
    %88 = arith.subf %73, %87 : vector<256x64xf32>
    %cst_64 = arith.constant 9.99999974E-6 : f32
    %89 = vector.broadcast %cst_64 : f32 to vector<1x64xf32>
    %90 = arith.addf %86, %89 : vector<1x64xf32>
    %91 = math.rsqrt %90 : vector<1x64xf32>
    %92 = vector.broadcast %91 : vector<1x64xf32> to vector<256x64xf32>
    %93 = arith.mulf %88, %92 : vector<256x64xf32>
    %cst_65 = arith.constant 0.666666686 : f32
    %94 = vector.broadcast %cst_65 : f32 to vector<256x64xf32>
    %95 = arith.mulf %93, %94 : vector<256x64xf32>
    %96 = arith.maximumf %93, %95 : vector<256x64xf32>
    %97 = vector.shape_cast %96 : vector<256x64xf32> to vector<16x16x64xf32>
    %98 = arith.truncf %97 : vector<16x16x64xf32> to vector<16x16x64xbf16>
    %cst_66 = arith.constant 0.000000e+00 : bf16
    %99 = vector.broadcast %cst_66 : bf16 to vector<16x1x64xbf16>
    %100 = vector.extract_strided_slice %98 {offsets = [0, 0, 0], sizes = [16, 15, 64], strides = [1, 1, 1]} : vector<16x16x64xbf16> to vector<16x15x64xbf16>
    %101 = tpu.concatenate %99, %100 in 1 : vector<16x1x64xbf16>, vector<16x15x64xbf16> -> vector<16x16x64xbf16>
    %102 = vector.extract_strided_slice %98 {offsets = [0, 1, 0], sizes = [16, 15, 64], strides = [1, 1, 1]} : vector<16x16x64xbf16> to vector<16x15x64xbf16>
    %103 = tpu.concatenate %102, %99 in 1 : vector<16x15x64xbf16>, vector<16x1x64xbf16> -> vector<16x16x64xbf16>
    %104 = tpu.concatenate %101, %98, %103 in 2 : vector<16x16x64xbf16>, vector<16x16x64xbf16>, vector<16x16x64xbf16> -> vector<16x16x192xbf16>
    %c1_67 = arith.constant 1 : index
    %c0_68 = arith.constant 0 : index
    %c0_69 = arith.constant 0 : index
    %105 = vector.load %arg13[%c1_67, %c0_68, %c0_69] : memref<18x16x192xbf16, #tpu.memory_space<vmem>>, vector<16x16x192xbf16>
    tpu.vector_store %arg13[%c1_67, %c0_68, %c0_69], %104 {strides = array<i32>} : memref<18x16x192xbf16, #tpu.memory_space<vmem>>, vector<16x16x192xbf16>,
    %c0_70 = arith.constant 0 : index
    %c0_71 = arith.constant 0 : index
    %c0_72 = arith.constant 0 : index
    %106 = vector.load %arg13[%c0_70, %c0_71, %c0_72] : memref<18x16x192xbf16, #tpu.memory_space<vmem>>, vector<16x16x192xbf16>
    %107 = vector.shape_cast %106 : vector<16x16x192xbf16> to vector<256x192xbf16>
    %c0_73 = arith.constant 0 : index
    %c0_74 = arith.constant 0 : index
    %c0_75 = arith.constant 0 : index
    %108 = vector.load %arg5[%c0_73, %c0_74, %c0_75] : memref<3x192x128xbf16, #tpu.memory_space<vmem>>, vector<1x192x128xbf16>
    %109 = vector.shape_cast %108 : vector<1x192x128xbf16> to vector<192x128xbf16>
    %cst_76 = arith.constant dense<0.000000e+00> : vector<256x128xf32>
    %110 = tpu.matmul %107, %109, %cst_76 {dimension_numbers = #tpu.dot_dimension_numbers<[1], [0], [0], [1], [0, 0, 1, 1], [], []>} : vector<256x192xbf16>, vector<192x128xbf16>, vector<256x128xf32> -> vector<256x128xf32>
    %c1_77 = arith.constant 1 : index
    %c0_78 = arith.constant 0 : index
    %c0_79 = arith.constant 0 : index
    %111 = vector.load %arg13[%c1_77, %c0_78, %c0_79] : memref<18x16x192xbf16, #tpu.memory_space<vmem>>, vector<16x16x192xbf16>
    %112 = vector.shape_cast %111 : vector<16x16x192xbf16> to vector<256x192xbf16>
    %c1_80 = arith.constant 1 : index
    %c0_81 = arith.constant 0 : index
    %c0_82 = arith.constant 0 : index
    %113 = vector.load %arg5[%c1_80, %c0_81, %c0_82] : memref<3x192x128xbf16, #tpu.memory_space<vmem>>, vector<1x192x128xbf16>
    %114 = vector.shape_cast %113 : vector<1x192x128xbf16> to vector<192x128xbf16>
    %cst_83 = arith.constant dense<0.000000e+00> : vector<256x128xf32>
    %115 = tpu.matmul %112, %114, %cst_83 {dimension_numbers = #tpu.dot_dimension_numbers<[1], [0], [0], [1], [0, 0, 1, 1], [], []>} : vector<256x192xbf16>, vector<192x128xbf16>, vector<256x128xf32> -> vector<256x128xf32>
    %116 = arith.addf %110, %115 : vector<256x128xf32>
    %c2_84 = arith.constant 2 : index
    %c0_85 = arith.constant 0 : index
    %c0_86 = arith.constant 0 : index
    %117 = vector.load %arg13[%c2_84, %c0_85, %c0_86] : memref<18x16x192xbf16, #tpu.memory_space<vmem>>, vector<16x16x192xbf16>
    %118 = vector.shape_cast %117 : vector<16x16x192xbf16> to vector<256x192xbf16>
    %c2_87 = arith.constant 2 : index
    %c0_88 = arith.constant 0 : index
    %c0_89 = arith.constant 0 : index
    %119 = vector.load %arg5[%c2_87, %c0_88, %c0_89] : memref<3x192x128xbf16, #tpu.memory_space<vmem>>, vector<1x192x128xbf16>
    %120 = vector.shape_cast %119 : vector<1x192x128xbf16> to vector<192x128xbf16>
    %cst_90 = arith.constant dense<0.000000e+00> : vector<256x128xf32>
    %121 = tpu.matmul %118, %120, %cst_90 {dimension_numbers = #tpu.dot_dimension_numbers<[1], [0], [0], [1], [0, 0, 1, 1], [], []>} : vector<256x192xbf16>, vector<192x128xbf16>, vector<256x128xf32> -> vector<256x128xf32>
    %122 = arith.addf %116, %121 : vector<256x128xf32>
    %c0_91 = arith.constant 0 : index
    %c0_92 = arith.constant 0 : index
    %123 = vector.load %arg6[%c0_91, %c0_92] : memref<1x128xf32, #tpu.memory_space<vmem>>, vector<1x128xf32>
    %124 = vector.broadcast %123 : vector<1x128xf32> to vector<256x128xf32>
    %125 = arith.addf %122, %124 : vector<256x128xf32>
    %cst_93 = arith.constant 0.666666686 : f32
    %126 = vector.broadcast %cst_93 : f32 to vector<256x128xf32>
    %127 = arith.mulf %125, %126 : vector<256x128xf32>
    %128 = arith.maximumf %125, %127 : vector<256x128xf32>
    %129 = vector.shape_cast %128 : vector<256x128xf32> to vector<16x16x128xf32>
    %130 = arith.truncf %129 : vector<16x16x128xf32> to vector<16x16x128xbf16>
    %cst_94 = arith.constant 0.000000e+00 : bf16
    %131 = vector.broadcast %cst_94 : bf16 to vector<16x1x128xbf16>
    %132 = vector.extract_strided_slice %130 {offsets = [0, 0, 0], sizes = [16, 15, 128], strides = [1, 1, 1]} : vector<16x16x128xbf16> to vector<16x15x128xbf16>
    %133 = tpu.concatenate %131, %132 in 1 : vector<16x1x128xbf16>, vector<16x15x128xbf16> -> vector<16x16x128xbf16>
    %134 = vector.extract_strided_slice %130 {offsets = [0, 1, 0], sizes = [16, 15, 128], strides = [1, 1, 1]} : vector<16x16x128xbf16> to vector<16x15x128xbf16>
    %135 = tpu.concatenate %134, %131 in 1 : vector<16x15x128xbf16>, vector<16x1x128xbf16> -> vector<16x16x128xbf16>
    %136 = tpu.concatenate %133, %130, %135 in 2 : vector<16x16x128xbf16>, vector<16x16x128xbf16>, vector<16x16x128xbf16> -> vector<16x16x384xbf16>
    %c1_95 = arith.constant 1 : index
    %c0_96 = arith.constant 0 : index
    %c0_97 = arith.constant 0 : index
    %137 = vector.load %arg14[%c1_95, %c0_96, %c0_97] : memref<18x16x384xbf16, #tpu.memory_space<vmem>>, vector<16x16x384xbf16>
    tpu.vector_store %arg14[%c1_95, %c0_96, %c0_97], %136 {strides = array<i32>} : memref<18x16x384xbf16, #tpu.memory_space<vmem>>, vector<16x16x384xbf16>,
    %c0_98 = arith.constant 0 : index
    %c0_99 = arith.constant 0 : index
    %c0_100 = arith.constant 0 : index
    %138 = vector.load %arg14[%c0_98, %c0_99, %c0_100] : memref<18x16x384xbf16, #tpu.memory_space<vmem>>, vector<16x16x384xbf16>
    %139 = vector.shape_cast %138 : vector<16x16x384xbf16> to vector<256x384xbf16>
    %c0_101 = arith.constant 0 : index
    %c0_102 = arith.constant 0 : index
    %c0_103 = arith.constant 0 : index
    %140 = vector.load %arg7[%c0_101, %c0_102, %c0_103] : memref<3x384x64xbf16, #tpu.memory_space<vmem>>, vector<1x384x64xbf16>
    %141 = vector.shape_cast %140 : vector<1x384x64xbf16> to vector<384x64xbf16>
    %cst_104 = arith.constant dense<0.000000e+00> : vector<256x64xf32>
    %142 = tpu.matmul %139, %141, %cst_104 {dimension_numbers = #tpu.dot_dimension_numbers<[1], [0], [0], [1], [0, 0, 1, 1], [], []>} : vector<256x384xbf16>, vector<384x64xbf16>, vector<256x64xf32> -> vector<256x64xf32>
    %c1_105 = arith.constant 1 : index
    %c0_106 = arith.constant 0 : index
    %c0_107 = arith.constant 0 : index
    %143 = vector.load %arg14[%c1_105, %c0_106, %c0_107] : memref<18x16x384xbf16, #tpu.memory_space<vmem>>, vector<16x16x384xbf16>
    %144 = vector.shape_cast %143 : vector<16x16x384xbf16> to vector<256x384xbf16>
    %c1_108 = arith.constant 1 : index
    %c0_109 = arith.constant 0 : index
    %c0_110 = arith.constant 0 : index
    %145 = vector.load %arg7[%c1_108, %c0_109, %c0_110] : memref<3x384x64xbf16, #tpu.memory_space<vmem>>, vector<1x384x64xbf16>
    %146 = vector.shape_cast %145 : vector<1x384x64xbf16> to vector<384x64xbf16>
    %cst_111 = arith.constant dense<0.000000e+00> : vector<256x64xf32>
    %147 = tpu.matmul %144, %146, %cst_111 {dimension_numbers = #tpu.dot_dimension_numbers<[1], [0], [0], [1], [0, 0, 1, 1], [], []>} : vector<256x384xbf16>, vector<384x64xbf16>, vector<256x64xf32> -> vector<256x64xf32>
    %148 = arith.addf %142, %147 : vector<256x64xf32>
    %c2_112 = arith.constant 2 : index
    %c0_113 = arith.constant 0 : index
    %c0_114 = arith.constant 0 : index
    %149 = vector.load %arg14[%c2_112, %c0_113, %c0_114] : memref<18x16x384xbf16, #tpu.memory_space<vmem>>, vector<16x16x384xbf16>
    %150 = vector.shape_cast %149 : vector<16x16x384xbf16> to vector<256x384xbf16>
    %c2_115 = arith.constant 2 : index
    %c0_116 = arith.constant 0 : index
    %c0_117 = arith.constant 0 : index
    %151 = vector.load %arg7[%c2_115, %c0_116, %c0_117] : memref<3x384x64xbf16, #tpu.memory_space<vmem>>, vector<1x384x64xbf16>
    %152 = vector.shape_cast %151 : vector<1x384x64xbf16> to vector<384x64xbf16>
    %cst_118 = arith.constant dense<0.000000e+00> : vector<256x64xf32>
    %153 = tpu.matmul %150, %152, %cst_118 {dimension_numbers = #tpu.dot_dimension_numbers<[1], [0], [0], [1], [0, 0, 1, 1], [], []>} : vector<256x384xbf16>, vector<384x64xbf16>, vector<256x64xf32> -> vector<256x64xf32>
    %154 = arith.addf %148, %153 : vector<256x64xf32>
    %c0_119 = arith.constant 0 : index
    %c0_120 = arith.constant 0 : index
    %155 = vector.load %arg8[%c0_119, %c0_120] : memref<1x64xf32, #tpu.memory_space<vmem>>, vector<1x64xf32>
    %156 = vector.broadcast %155 : vector<1x64xf32> to vector<256x64xf32>
    %157 = arith.addf %154, %156 : vector<256x64xf32>
    %cst_121 = arith.constant 0.666666686 : f32
    %158 = vector.broadcast %cst_121 : f32 to vector<256x64xf32>
    %159 = arith.mulf %157, %158 : vector<256x64xf32>
    %160 = arith.maximumf %157, %159 : vector<256x64xf32>
    %161 = vector.shape_cast %160 : vector<256x64xf32> to vector<16x16x64xf32>
    %162 = arith.truncf %161 : vector<16x16x64xf32> to vector<16x16x64xbf16>
    %cst_122 = arith.constant 0.000000e+00 : bf16
    %163 = vector.broadcast %cst_122 : bf16 to vector<16x1x64xbf16>
    %164 = vector.extract_strided_slice %162 {offsets = [0, 0, 0], sizes = [16, 15, 64], strides = [1, 1, 1]} : vector<16x16x64xbf16> to vector<16x15x64xbf16>
    %165 = tpu.concatenate %163, %164 in 1 : vector<16x1x64xbf16>, vector<16x15x64xbf16> -> vector<16x16x64xbf16>
    %166 = vector.extract_strided_slice %162 {offsets = [0, 1, 0], sizes = [16, 15, 64], strides = [1, 1, 1]} : vector<16x16x64xbf16> to vector<16x15x64xbf16>
    %167 = tpu.concatenate %166, %163 in 1 : vector<16x15x64xbf16>, vector<16x1x64xbf16> -> vector<16x16x64xbf16>
    %168 = tpu.concatenate %165, %162, %167 in 2 : vector<16x16x64xbf16>, vector<16x16x64xbf16>, vector<16x16x64xbf16> -> vector<16x16x192xbf16>
    %c1_123 = arith.constant 1 : index
    %c0_124 = arith.constant 0 : index
    %c0_125 = arith.constant 0 : index
    %169 = vector.load %arg13[%c1_123, %c0_124, %c0_125] : memref<18x16x192xbf16, #tpu.memory_space<vmem>>, vector<16x16x192xbf16>
    tpu.vector_store %arg13[%c1_123, %c0_124, %c0_125], %168 {strides = array<i32>} : memref<18x16x192xbf16, #tpu.memory_space<vmem>>, vector<16x16x192xbf16>,
    %c0_126 = arith.constant 0 : index
    %c0_127 = arith.constant 0 : index
    %c0_128 = arith.constant 0 : index
    %170 = vector.load %arg13[%c0_126, %c0_127, %c0_128] : memref<18x16x192xbf16, #tpu.memory_space<vmem>>, vector<16x16x192xbf16>
    %171 = vector.shape_cast %170 : vector<16x16x192xbf16> to vector<256x192xbf16>
    %c0_129 = arith.constant 0 : index
    %c0_130 = arith.constant 0 : index
    %c0_131 = arith.constant 0 : index
    %172 = vector.load %arg9[%c0_129, %c0_130, %c0_131] : memref<3x192x3xbf16, #tpu.memory_space<vmem>>, vector<1x192x3xbf16>
    %173 = vector.shape_cast %172 : vector<1x192x3xbf16> to vector<192x3xbf16>
    %cst_132 = arith.constant dense<0.000000e+00> : vector<256x3xf32>
    %174 = tpu.matmul %171, %173, %cst_132 {dimension_numbers = #tpu.dot_dimension_numbers<[1], [0], [0], [1], [0, 0, 1, 1], [], []>} : vector<256x192xbf16>, vector<192x3xbf16>, vector<256x3xf32> -> vector<256x3xf32>
    %c1_133 = arith.constant 1 : index
    %c0_134 = arith.constant 0 : index
    %c0_135 = arith.constant 0 : index
    %175 = vector.load %arg13[%c1_133, %c0_134, %c0_135] : memref<18x16x192xbf16, #tpu.memory_space<vmem>>, vector<16x16x192xbf16>
    %176 = vector.shape_cast %175 : vector<16x16x192xbf16> to vector<256x192xbf16>
    %c1_136 = arith.constant 1 : index
    %c0_137 = arith.constant 0 : index
    %c0_138 = arith.constant 0 : index
    %177 = vector.load %arg9[%c1_136, %c0_137, %c0_138] : memref<3x192x3xbf16, #tpu.memory_space<vmem>>, vector<1x192x3xbf16>
    %178 = vector.shape_cast %177 : vector<1x192x3xbf16> to vector<192x3xbf16>
    %cst_139 = arith.constant dense<0.000000e+00> : vector<256x3xf32>
    %179 = tpu.matmul %176, %178, %cst_139 {dimension_numbers = #tpu.dot_dimension_numbers<[1], [0], [0], [1], [0, 0, 1, 1], [], []>} : vector<256x192xbf16>, vector<192x3xbf16>, vector<256x3xf32> -> vector<256x3xf32>
    %180 = arith.addf %174, %179 : vector<256x3xf32>
    %c2_140 = arith.constant 2 : index
    %c0_141 = arith.constant 0 : index
    %c0_142 = arith.constant 0 : index
    %181 = vector.load %arg13[%c2_140, %c0_141, %c0_142] : memref<18x16x192xbf16, #tpu.memory_space<vmem>>, vector<16x16x192xbf16>
    %182 = vector.shape_cast %181 : vector<16x16x192xbf16> to vector<256x192xbf16>
    %c2_143 = arith.constant 2 : index
    %c0_144 = arith.constant 0 : index
    %c0_145 = arith.constant 0 : index
    %183 = vector.load %arg9[%c2_143, %c0_144, %c0_145] : memref<3x192x3xbf16, #tpu.memory_space<vmem>>, vector<1x192x3xbf16>
    %184 = vector.shape_cast %183 : vector<1x192x3xbf16> to vector<192x3xbf16>
    %cst_146 = arith.constant dense<0.000000e+00> : vector<256x3xf32>
    %185 = tpu.matmul %182, %184, %cst_146 {dimension_numbers = #tpu.dot_dimension_numbers<[1], [0], [0], [1], [0, 0, 1, 1], [], []>} : vector<256x192xbf16>, vector<192x3xbf16>, vector<256x3xf32> -> vector<256x3xf32>
    %186 = arith.addf %180, %185 : vector<256x3xf32>
    %c0_147 = arith.constant 0 : index
    %c0_148 = arith.constant 0 : index
    %187 = vector.load %arg10[%c0_147, %c0_148] : memref<1x3xf32, #tpu.memory_space<vmem>>, vector<1x3xf32>
    %188 = vector.broadcast %187 : vector<1x3xf32> to vector<256x3xf32>
    %189 = arith.addf %186, %188 : vector<256x3xf32>
    %190 = vector.shape_cast %189 : vector<256x3xf32> to vector<16x16x3xf32>
    %191 = arith.addf %10, %190 : vector<16x16x3xf32>
    %c0_149 = arith.constant 0 : index
    %c0_150 = arith.constant 0 : index
    %c0_151 = arith.constant 0 : index
    %c0_152 = arith.constant 0 : index
    %192 = vector.load %arg11[%c0_149, %c0_150, %c0_151, %c0_152] : memref<1x16x16x3xf32, #tpu.memory_space<vmem>>, vector<1x16x16x3xf32>
    %193 = vector.shape_cast %192 : vector<1x16x16x3xf32> to vector<16x16x3xf32>
    %194 = vector.shape_cast %191 : vector<16x16x3xf32> to vector<1x16x16x3xf32>
    tpu.vector_store %arg11[%c0_149, %c0_150, %c0_151, %c0_152], %194 {strides = array<i32>} : memref<1x16x16x3xf32, #tpu.memory_space<vmem>>, vector<1x16x16x3xf32>,
    return
  }
  func.func @transform_0(%arg0: i32) -> (i32, i32, i32, i32) {
    %c0_i32 = arith.constant 0 : i32
    %c0_i32_0 = arith.constant 0 : i32
    %c0_i32_1 = arith.constant 0 : i32
    %c0_i32_2 = arith.constant 0 : i32
    return %arg0, %c0_i32, %c0_i32_0, %c0_i32_1 : i32, i32, i32, i32
  }
  func.func @transform_1(%arg0: i32) -> (i32, i32) {
    %c0_i32 = arith.constant 0 : i32
    %c0_i32_0 = arith.constant 0 : i32
    %c0_i32_1 = arith.constant 0 : i32
    return %c0_i32, %c0_i32_0 : i32, i32
  }
  func.func @transform_2(%arg0: i32) -> (i32, i32) {
    %c0_i32 = arith.constant 0 : i32
    %c0_i32_0 = arith.constant 0 : i32
    %c0_i32_1 = arith.constant 0 : i32
    return %c0_i32, %c0_i32_0 : i32, i32
  }
  func.func @transform_3(%arg0: i32) -> (i32, i32, i32) {
    %c0_i32 = arith.constant 0 : i32
    %c0_i32_0 = arith.constant 0 : i32
    %c0_i32_1 = arith.constant 0 : i32
    %c0_i32_2 = arith.constant 0 : i32
    return %c0_i32, %c0_i32_0, %c0_i32_1 : i32, i32, i32
  }
  func.func @transform_4(%arg0: i32) -> (i32, i32, i32) {
    %c0_i32 = arith.constant 0 : i32
    %c0_i32_0 = arith.constant 0 : i32
    %c0_i32_1 = arith.constant 0 : i32
    %c0_i32_2 = arith.constant 0 : i32
    return %c0_i32, %c0_i32_0, %c0_i32_1 : i32, i32, i32
  }
  func.func @transform_5(%arg0: i32) -> (i32, i32) {
    %c0_i32 = arith.constant 0 : i32
    %c0_i32_0 = arith.constant 0 : i32
    %c0_i32_1 = arith.constant 0 : i32
    return %c0_i32, %c0_i32_0 : i32, i32
  }
  func.func @transform_6(%arg0: i32) -> (i32, i32, i32) {
    %c0_i32 = arith.constant 0 : i32
    %c0_i32_0 = arith.constant 0 : i32
    %c0_i32_1 = arith.constant 0 : i32
    %c0_i32_2 = arith.constant 0 : i32
    return %c0_i32, %c0_i32_0, %c0_i32_1 : i32, i32, i32
  }
  func.func @transform_7(%arg0: i32) -> (i32, i32) {
    %c0_i32 = arith.constant 0 : i32
    %c0_i32_0 = arith.constant 0 : i32
    %c0_i32_1 = arith.constant 0 : i32
    return %c0_i32, %c0_i32_0 : i32, i32
  }
  func.func @transform_8(%arg0: i32) -> (i32, i32, i32) {
    %c0_i32 = arith.constant 0 : i32
    %c0_i32_0 = arith.constant 0 : i32
    %c0_i32_1 = arith.constant 0 : i32
    %c0_i32_2 = arith.constant 0 : i32
    return %c0_i32, %c0_i32_0, %c0_i32_1 : i32, i32, i32
  }
  func.func @transform_9(%arg0: i32) -> (i32, i32) {
    %c0_i32 = arith.constant 0 : i32
    %c0_i32_0 = arith.constant 0 : i32
    %c0_i32_1 = arith.constant 0 : i32
    return %c0_i32, %c0_i32_0 : i32, i32
  }
  func.func @transform_10(%arg0: i32) -> (i32, i32, i32, i32) {
    %c0_i32 = arith.constant 0 : i32
    %c0_i32_0 = arith.constant 0 : i32
    %c0_i32_1 = arith.constant 0 : i32
    %c0_i32_2 = arith.constant 0 : i32
    return %arg0, %c0_i32, %c0_i32_0, %c0_i32_1 : i32, i32, i32, i32
  }
}

</mosaic_0001>

<llo_original>
// kernel: resnet_block1_forward.1
$region0: #{resnet_block1_forward.1}
  #allocation0 [shape = 'u32[]', space=smem, size = 0x4, offset = 0x4, fixed_abs, tag = 'smem constant byte address 0x4 - core index']
  #allocation1 [shape = 'u32[144,128]{1,0:T(1,128)}', space=vmem, size = 0x12000, scoped, tag = 'internal scratch']
  #allocation2 [shape = 'bf16[18,16,9]{2,1,0:T(8,128)(2,1)}', space=vmem, size = 0x12000, scoped, tag = 'scratch operand']
  #allocation3 [shape = 'bf16[18,16,192]{2,1,0:T(8,128)(2,1)}', space=vmem, size = 0x24000, scoped, tag = 'scratch operand']
  #allocation4 [shape = 'bf16[18,16,384]{2,1,0:T(8,128)(2,1)}', space=vmem, size = 0x36000, scoped, tag = 'scratch operand']
  %s0 = inlined_call_operand.vmem [shape: f32[2,16,16,3], index: 0, kind: input, shape index: {}]
  %s1 = inlined_call_operand.vmem [shape: f32[3,3], index: 1, kind: input, shape index: {}]
  %s2 = inlined_call_operand.vmem [shape: f32[1,3], index: 2, kind: input, shape index: {}]
  %s3 = inlined_call_operand.vmem [shape: bf16[3,9,64], index: 3, kind: input, shape index: {}]
  %s4 = inlined_call_operand.vmem [shape: bf16[3,192,128], index: 4, kind: input, shape index: {}]
  %s5 = inlined_call_operand.vmem [shape: f32[1,128], index: 5, kind: input, shape index: {}]
  %s6 = inlined_call_operand.vmem [shape: bf16[3,384,64], index: 6, kind: input, shape index: {}]
  %s7 = inlined_call_operand.vmem [shape: f32[1,64], index: 7, kind: input, shape index: {}]
  %s8 = inlined_call_operand.vmem [shape: bf16[3,192,3], index: 8, kind: input, shape index: {}]
  %s9 = inlined_call_operand.vmem [shape: f32[1,3], index: 9, kind: input, shape index: {}]
  %s10 = inlined_call_operand.vmem [shape: f32[2,16,16,3], index: 10, kind: output, shape index: {}]
  %s11 = sld [smem:[#allocation0]]
  $region73: #{resnet_block1_forward.1} parent=0
    _
  %s13 = ssub.s32 1, %s11
  %s14 = scalar_select 0, %s13, %s11
  loop: start=0, step=1, limit=4
  $region2: #{resnet_block1_forward.1} parent=0 // loop_pre_header
    _
  $region3: #{resnet_block1_forward.1} parent=0 // loop_header
    %s16 = sphi 0, %s20
    %p17 = scmp.ge.s32.totalorder %s16, 4
    %s26 = sphi 0, %s28
    %s29 = sphi 0, %s26
    %s30 = sphi 0, %s29
    %s46 = sphi 0, %s30
    %s50 = sphi 0, %s50
    %s52 = sphi 0, %s50
    %s53 = sphi 0, %s52
    %s67 = sphi 0, %s53
    %s71 = sphi 0, %s71
    %s73 = sphi 0, %s71
    %s74 = sphi 0, %s73
    %s88 = sphi 0, %s74
    %s92 = sphi 0, %s92
    %s94 = sphi 0, %s92
    %s95 = sphi 0, %s94
    %s109 = sphi 0, %s95
    %s113 = sphi 0, %s113
    %s115 = sphi 0, %s113
    %s116 = sphi 0, %s115
    %s130 = sphi 0, %s116
    %s134 = sphi 0, %s134
    %s136 = sphi 0, %s134
    %s137 = sphi 0, %s136
    %s151 = sphi 0, %s137
    %s155 = sphi 0, %s155
    %s157 = sphi 0, %s155
    %s158 = sphi 0, %s157
    %s172 = sphi 0, %s158
    %s176 = sphi 0, %s176
    %s178 = sphi 0, %s176
    %s179 = sphi 0, %s178
    %s193 = sphi 0, %s179
    %s197 = sphi 0, %s197
    %s199 = sphi 0, %s197
    %s200 = sphi 0, %s199
    %s214 = sphi 0, %s200
    %s218 = sphi 0, %s218
    %s220 = sphi 0, %s218
    %s221 = sphi 0, %s220
    %s235 = sphi 0, %s221
    %s241 = sphi 0, %s243
    %s244 = sphi 0, %s241
    %s245 = sphi 0, %s244
    %s261 = sphi 0, %s245
  $region4: #{resnet_block1_forward.1} parent=0 // loop_header_branch
    %19 = sbr.rel (%p17) target = $region8
  $region5: #{resnet_block1_forward.1} parent=0 // loop_body
    %s21 = ssub.s32 %s16, 1
    %s22 = ssub.s32 %s16, 2
    %s23 = sadd.s32 %s16, 1
    %s24 = ssub.s32 %s16, %s23
    %p25 = scmp.eq.s32.totalorder %s24, 0
    %s27 = sadd.s32 %s26, 1
    %s28 = scalar_select %p25, %s26, %s27
    %p31 = pneg %p25
    %p32 = scmp.eq.s32.totalorder %s16, 1
    %p33 = por %p31, %p32
    %p34 = scmp.ne.s32.totalorder %s26, %s29
    %p35 = scmp.eq.s32.totalorder %s16, 0
    %p36 = por %p34, %p35
    %p37 = scmp.ne.s32.totalorder %s26, %s29
    %p38 = scmp.eq.s32.totalorder %s21, 1
    %p39 = por %p37, %p38
    %p40 = scmp.ne.s32.totalorder %s29, %s30
    %p41 = scmp.eq.s32.totalorder %s21, 0
    %p42 = por %p40, %p41
    %p43 = scmp.ne.s32.totalorder %s29, %s30
    %p44 = scmp.eq.s32.totalorder %s22, 1
    %p45 = por %p43, %p44
    %p47 = scmp.ne.s32.totalorder %s30, %s46
    %p48 = scmp.eq.s32.totalorder %s22, 0
    %p49 = por %p47, %p48
    %s51 = sadd.s32 %s50, 1
    %p54 = scmp.eq.s32.totalorder %s16, 1
    %p55 = scmp.ne.s32.totalorder %s50, %s52
    %p56 = scmp.eq.s32.totalorder %s16, 0
    %p57 = por %p55, %p56
    %p58 = scmp.ne.s32.totalorder %s50, %s52
    %p59 = scmp.eq.s32.totalorder %s21, 1
    %p60 = por %p58, %p59
    %p61 = scmp.ne.s32.totalorder %s52, %s53
    %p62 = scmp.eq.s32.totalorder %s21, 0
    %p63 = por %p61, %p62
    %p64 = scmp.ne.s32.totalorder %s52, %s53
    %p65 = scmp.eq.s32.totalorder %s22, 1
    %p66 = por %p64, %p65
    %p68 = scmp.ne.s32.totalorder %s53, %s67
    %p69 = scmp.eq.s32.totalorder %s22, 0
    %p70 = por %p68, %p69
    %s72 = sadd.s32 %s71, 1
    %p75 = scmp.eq.s32.totalorder %s16, 1
    %p76 = scmp.ne.s32.totalorder %s71, %s73
    %p77 = scmp.eq.s32.totalorder %s16, 0
    %p78 = por %p76, %p77
    %p79 = scmp.ne.s32.totalorder %s71, %s73
    %p80 = scmp.eq.s32.totalorder %s21, 1
    %p81 = por %p79, %p80
    %p82 = scmp.ne.s32.totalorder %s73, %s74
    %p83 = scmp.eq.s32.totalorder %s21, 0
    %p84 = por %p82, %p83
    %p85 = scmp.ne.s32.totalorder %s73, %s74
    %p86 = scmp.eq.s32.totalorder %s22, 1
    %p87 = por %p85, %p86
    %p89 = scmp.ne.s32.totalorder %s74, %s88
    %p90 = scmp.eq.s32.totalorder %s22, 0
    %p91 = por %p89, %p90
    %s93 = sadd.s32 %s92, 1
    %p96 = scmp.eq.s32.totalorder %s16, 1
    %p97 = scmp.ne.s32.totalorder %s92, %s94
    %p98 = scmp.eq.s32.totalorder %s16, 0
    %p99 = por %p97, %p98
    %p100 = scmp.ne.s32.totalorder %s92, %s94
    %p101 = scmp.eq.s32.totalorder %s21, 1
    %p102 = por %p100, %p101
    %p103 = scmp.ne.s32.totalorder %s94, %s95
    %p104 = scmp.eq.s32.totalorder %s21, 0
    %p105 = por %p103, %p104
    %p106 = scmp.ne.s32.totalorder %s94, %s95
    %p107 = scmp.eq.s32.totalorder %s22, 1
    %p108 = por %p106, %p107
    %p110 = scmp.ne.s32.totalorder %s95, %s109
    %p111 = scmp.eq.s32.totalorder %s22, 0
    %p112 = por %p110, %p111
    %s114 = sadd.s32 %s113, 1
    %p117 = scmp.eq.s32.totalorder %s16, 1
    %p118 = scmp.ne.s32.totalorder %s113, %s115
    %p119 = scmp.eq.s32.totalorder %s16, 0
    %p120 = por %p118, %p119
    %p121 = scmp.ne.s32.totalorder %s113, %s115
    %p122 = scmp.eq.s32.totalorder %s21, 1
    %p123 = por %p121, %p122
    %p124 = scmp.ne.s32.totalorder %s115, %s116
    %p125 = scmp.eq.s32.totalorder %s21, 0
    %p126 = por %p124, %p125
    %p127 = scmp.ne.s32.totalorder %s115, %s116
    %p128 = scmp.eq.s32.totalorder %s22, 1
    %p129 = por %p127, %p128
    %p131 = scmp.ne.s32.totalorder %s116, %s130
    %p132 = scmp.eq.s32.totalorder %s22, 0
    %p133 = por %p131, %p132
    %s135 = sadd.s32 %s134, 1
    %p138 = scmp.eq.s32.totalorder %s16, 1
    %p139 = scmp.ne.s32.totalorder %s134, %s136
    %p140 = scmp.eq.s32.totalorder %s16, 0
    %p141 = por %p139, %p140
    %p142 = scmp.ne.s32.totalorder %s134, %s136
    %p143 = scmp.eq.s32.totalorder %s21, 1
    %p144 = por %p142, %p143
    %p145 = scmp.ne.s32.totalorder %s136, %s137
    %p146 = scmp.eq.s32.totalorder %s21, 0
    %p147 = por %p145, %p146
    %p148 = scmp.ne.s32.totalorder %s136, %s137
    %p149 = scmp.eq.s32.totalorder %s22, 1
    %p150 = por %p148, %p149
    %p152 = scmp.ne.s32.totalorder %s137, %s151
    %p153 = scmp.eq.s32.totalorder %s22, 0
    %p154 = por %p152, %p153
    %s156 = sadd.s32 %s155, 1
    %p159 = scmp.eq.s32.totalorder %s16, 1
    %p160 = scmp.ne.s32.totalorder %s155, %s157
    %p161 = scmp.eq.s32.totalorder %s16, 0
    %p162 = por %p160, %p161
    %p163 = scmp.ne.s32.totalorder %s155, %s157
    %p164 = scmp.eq.s32.totalorder %s21, 1
    %p165 = por %p163, %p164
    %p166 = scmp.ne.s32.totalorder %s157, %s158
    %p167 = scmp.eq.s32.totalorder %s21, 0
    %p168 = por %p166, %p167
    %p169 = scmp.ne.s32.totalorder %s157, %s158
    %p170 = scmp.eq.s32.totalorder %s22, 1
    %p171 = por %p169, %p170
    %p173 = scmp.ne.s32.totalorder %s158, %s172
    %p174 = scmp.eq.s32.totalorder %s22, 0
    %p175 = por %p173, %p174
    %s177 = sadd.s32 %s176, 1
    %p180 = scmp.eq.s32.totalorder %s16, 1
    %p181 = scmp.ne.s32.totalorder %s176, %s178
    %p182 = scmp.eq.s32.totalorder %s16, 0
    %p183 = por %p181, %p182
    %p184 = scmp.ne.s32.totalorder %s176, %s178
    %p185 = scmp.eq.s32.totalorder %s21, 1
    %p186 = por %p184, %p185
    %p187 = scmp.ne.s32.totalorder %s178, %s179
    %p188 = scmp.eq.s32.totalorder %s21, 0
    %p189 = por %p187, %p188
    %p190 = scmp.ne.s32.totalorder %s178, %s179
    %p191 = scmp.eq.s32.totalorder %s22, 1
    %p192 = por %p190, %p191
    %p194 = scmp.ne.s32.totalorder %s179, %s193
    %p195 = scmp.eq.s32.totalorder %s22, 0
    %p196 = por %p194, %p195
    %s198 = sadd.s32 %s197, 1
    %p201 = scmp.eq.s32.totalorder %s16, 1
    %p202 = scmp.ne.s32.totalorder %s197, %s199
    %p203 = scmp.eq.s32.totalorder %s16, 0
    %p204 = por %p202, %p203
    %p205 = scmp.ne.s32.totalorder %s197, %s199
    %p206 = scmp.eq.s32.totalorder %s21, 1
    %p207 = por %p205, %p206
    %p208 = scmp.ne.s32.totalorder %s199, %s200
    %p209 = scmp.eq.s32.totalorder %s21, 0
    %p210 = por %p208, %p209
    %p211 = scmp.ne.s32.totalorder %s199, %s200
    %p212 = scmp.eq.s32.totalorder %s22, 1
    %p213 = por %p211, %p212
    %p215 = scmp.ne.s32.totalorder %s200, %s214
    %p216 = scmp.eq.s32.totalorder %s22, 0
    %p217 = por %p215, %p216
    %s219 = sadd.s32 %s218, 1
    %p222 = scmp.eq.s32.totalorder %s16, 1
    %p223 = scmp.ne.s32.totalorder %s218, %s220
    %p224 = scmp.eq.s32.totalorder %s16, 0
    %p225 = por %p223, %p224
    %p226 = scmp.ne.s32.totalorder %s218, %s220
    %p227 = scmp.eq.s32.totalorder %s21, 1
    %p228 = por %p226, %p227
    %p229 = scmp.ne.s32.totalorder %s220, %s221
    %p230 = scmp.eq.s32.totalorder %s21, 0
    %p231 = por %p229, %p230
    %p232 = scmp.ne.s32.totalorder %s220, %s221
    %p233 = scmp.eq.s32.totalorder %s22, 1
    %p234 = por %p232, %p233
    %p236 = scmp.ne.s32.totalorder %s221, %s235
    %p237 = scmp.eq.s32.totalorder %s22, 0
    %p238 = por %p236, %p237
    %s239 = ssub.s32 %s16, %s23
    %p240 = scmp.eq.s32.totalorder %s239, 0
    %s242 = sadd.s32 %s241, 1
    %s243 = scalar_select %p240, %s241, %s242
    %p246 = pneg %p240
    %p247 = scmp.eq.s32.totalorder %s16, 1
    %p248 = por %p246, %p247
    %p249 = scmp.ne.s32.totalorder %s241, %s244
    %p250 = scmp.eq.s32.totalorder %s16, 0
    %p251 = por %p249, %p250
    %p252 = scmp.ne.s32.totalorder %s241, %s244
    %p253 = scmp.eq.s32.totalorder %s21, 1
    %p254 = por %p252, %p253
    %p255 = scmp.ne.s32.totalorder %s244, %s245
    %p256 = scmp.eq.s32.totalorder %s21, 0
    %p257 = por %p255, %p256
    %p258 = scmp.ne.s32.totalorder %s244, %s245
    %p259 = scmp.eq.s32.totalorder %s22, 1
    %p260 = por %p258, %p259
    %p262 = scmp.ne.s32.totalorder %s245, %s261
    %p263 = scmp.eq.s32.totalorder %s22, 0
    %p264 = por %p262, %p263
    %p265 = scmp.le.s32.totalorder 1, %s16
    %p266 = scmp.lt.s32.totalorder %s16, 3
    %p267 = pnand %p265, %p266
    %p268 = pneg %p267
    // Predicated region
    $region9: #{resnet_block1_forward.1} parent=5 // pred_check
      _
    $region10: #{resnet_block1_forward.1} parent=5 // pred_check_branch
      %270 = sbr.rel (%p267) target = $region12
    $region11: #{resnet_block1_forward.1} parent=5 // pred_region
      %s271 = ssub.s32 %s16, 1
      // Predicated region
      $region13: #{resnet_block1_forward.1} parent=11 // pred_check
        %p272 = pneg %p63
      $region14: #{resnet_block1_forward.1} parent=11 // pred_check_branch
        %274 = sbr.rel (%p272) target = $region16
      $region15: #{resnet_block1_forward.1} parent=11 // pred_region
        _
      $region16: #{resnet_block1_forward.1} parent=11 // pred_fallthru
        _
      // Predicated region
      $region17: #{resnet_block1_forward.1} parent=11 // pred_check
        %p275 = pneg %p84
      $region18: #{resnet_block1_forward.1} parent=11 // pred_check_branch
        %277 = sbr.rel (%p275) target = $region20
      $region19: #{resnet_block1_forward.1} parent=11 // pred_region
        _
      $region20: #{resnet_block1_forward.1} parent=11 // pred_fallthru
        _
      // Predicated region
      $region21: #{resnet_block1_forward.1} parent=11 // pred_check
        %p278 = pneg %p105
      $region22: #{resnet_block1_forward.1} parent=11 // pred_check_branch
        %280 = sbr.rel (%p278) target = $region24
      $region23: #{resnet_block1_forward.1} parent=11 // pred_region
        _
      $region24: #{resnet_block1_forward.1} parent=11 // pred_fallthru
        _
      // Predicated region
      $region25: #{resnet_block1_forward.1} parent=11 // pred_check
        %p281 = pneg %p126
      $region26: #{resnet_block1_forward.1} parent=11 // pred_check_branch
        %283 = sbr.rel (%p281) target = $region28
      $region27: #{resnet_block1_forward.1} parent=11 // pred_region
        _
      $region28: #{resnet_block1_forward.1} parent=11 // pred_fallthru
        _
      // Predicated region
      $region29: #{resnet_block1_forward.1} parent=11 // pred_check
        %p284 = pneg %p147
      $region30: #{resnet_block1_forward.1} parent=11 // pred_check_branch
        %286 = sbr.rel (%p284) target = $region32
      $region31: #{resnet_block1_forward.1} parent=11 // pred_region
        _
      $region32: #{resnet_block1_forward.1} parent=11 // pred_fallthru
        _
      // Predicated region
      $region33: #{resnet_block1_forward.1} parent=11 // pred_check
        %p287 = pneg %p168
      $region34: #{resnet_block1_forward.1} parent=11 // pred_check_branch
        %289 = sbr.rel (%p287) target = $region36
      $region35: #{resnet_block1_forward.1} parent=11 // pred_region
        _
      $region36: #{resnet_block1_forward.1} parent=11 // pred_fallthru
        _
      // Predicated region
      $region37: #{resnet_block1_forward.1} parent=11 // pred_check
        %p290 = pneg %p189
      $region38: #{resnet_block1_forward.1} parent=11 // pred_check_branch
        %292 = sbr.rel (%p290) target = $region40
      $region39: #{resnet_block1_forward.1} parent=11 // pred_region
        _
      $region40: #{resnet_block1_forward.1} parent=11 // pred_fallthru
        _
      // Predicated region
      $region41: #{resnet_block1_forward.1} parent=11 // pred_check
        %p293 = pneg %p210
      $region42: #{resnet_block1_forward.1} parent=11 // pred_check_branch
        %295 = sbr.rel (%p293) target = $region44
      $region43: #{resnet_block1_forward.1} parent=11 // pred_region
        _
      $region44: #{resnet_block1_forward.1} parent=11 // pred_fallthru
        _
      // Predicated region
      $region45: #{resnet_block1_forward.1} parent=11 // pred_check
        %p296 = pneg %p231
      $region46: #{resnet_block1_forward.1} parent=11 // pred_check_branch
        %298 = sbr.rel (%p296) target = $region48
      $region47: #{resnet_block1_forward.1} parent=11 // pred_region
        _
      $region48: #{resnet_block1_forward.1} parent=11 // pred_fallthru
        _
    $region12: #{resnet_block1_forward.1} parent=5 // pred_fallthru
      _
    %p299 = scmp.lt.s32.totalorder %s16, 2
    // Predicated region
    $region49: #{resnet_block1_forward.1} parent=5 // pred_check
      %p300 = pneg %p299
    $region50: #{resnet_block1_forward.1} parent=5 // pred_check_branch
      %302 = sbr.rel (%p300) target = $region52
    $region51: #{resnet_block1_forward.1} parent=5 // pred_region
      // Predicated region
      $region53: #{resnet_block1_forward.1} parent=51 // pred_check
        %p303 = pneg %p36
      $region54: #{resnet_block1_forward.1} parent=51 // pred_check_branch
        %305 = sbr.rel (%p303) target = $region56
      $region55: #{resnet_block1_forward.1} parent=51 // pred_region
        %p306 = scmp.lt.s32.totalorder %s16, 1
        %s307 = scalar_select %p306, %s16, 1
        %s308 = smul.addr %s307, 32
        %s309 = smul.addr %s308, 8
        %s310 = scalar_lea.vmem %s0, %s309
      $region56: #{resnet_block1_forward.1} parent=51 // pred_fallthru
        _
    $region52: #{resnet_block1_forward.1} parent=5 // pred_fallthru
      _
    %p311 = scmp.le.s32.totalorder 1, %s16
    %p312 = scmp.lt.s32.totalorder %s16, 3
    %p313 = pnand %p311, %p312
    %p314 = pneg %p313
    // Predicated region
    $region57: #{resnet_block1_forward.1} parent=5 // pred_check
      _
    $region58: #{resnet_block1_forward.1} parent=5 // pred_check_branch
      %316 = sbr.rel (%p313) target = $region60
    $region59: #{resnet_block1_forward.1} parent=5 // pred_region
      %s317 = ssub.s32 %s16, 1
      %p318 = scmp.lt.s32.totalorder %s21, 1
      %s319 = scalar_select %p318, %s21, 1
      %s320 = smul.addr %s319, 32
      %s321 = smul.addr %s320, 8
      %s322 = scalar_lea.vmem %s0, %s321
      %p323 = pneg %p42
      %p324 = pneg %p39
      %p325 = pneg %p63
      %p326 = pneg %p60
      %p327 = pneg %p84
      %p328 = pneg %p81
      %p329 = pneg %p105
      %p330 = pneg %p102
      %p331 = pneg %p126
      %p332 = pneg %p123
      %p333 = pneg %p147
      %p334 = pneg %p144
      %p335 = pneg %p168
      %p336 = pneg %p165
      %p337 = pneg %p189
      %p338 = pneg %p186
      %p339 = pneg %p210
      %p340 = pneg %p207
      %p341 = pneg %p231
      %p342 = pneg %p228
      %p343 = pneg %p257
      %p344 = pneg %p254
      %p345 = scmp.lt.s32.totalorder %s21, 1
      %s346 = scalar_select %p345, %s21, 1
      %s347 = smul.addr %s346, 32
      %s348 = smul.addr %s347, 8
      %s349 = scalar_lea.vmem %s10, %s348
      %p350 = scmp.lt.s32.totalorder %s21, 1
      %s351 = scalar_select %p350, %s21, 1
      %s352 = smul.addr %s351, 32
      %s353 = smul.addr %s352, 8
      %s354 = scalar_lea.vmem %s0, %s353
      %p355 = scmp.lt.s32.totalorder %s21, 1
      %s356 = scalar_select %p355, %s21, 1
      %s357 = smul.addr %s356, 32
      %s358 = smul.addr %s357, 8
      %s359 = scalar_lea.vmem %s10, %s358
      %vm361 = vcmask 68608
      %362 = vst.msk [vmem:[#allocation2] sm:$0xf] %vm361, 0
      %363 = vst.msk [vmem:[#allocation2 + $0x4] sm:$0xf] %vm361, 0
      %s364 = scalar_lea.vmem [#allocation2], 136
      %365 = vst.msk [vmem:[%s364] sm:$0xf] %vm361, 0
      %366 = vst.msk [vmem:[%s364 + $0x4] sm:$0xf] %vm361, 0
      %vm367 = vcmask 1043456
      %vm368 = vcmask 523268
      %vm369 = vmor %vm368, %vm367
      %370 = vst.msk [vmem:[#allocation3] sm:$0xff] %vm369, 0
      %371 = vst.msk [vmem:[#allocation3 + $0x8] sm:$0xff] %vm369, 0
      %s372 = scalar_lea.vmem [#allocation3], 272
      %373 = vst.msk [vmem:[%s372] sm:$0xff] %vm369, 0
      %374 = vst.msk [vmem:[%s372 + $0x8] sm:$0xff] %vm369, 0
      %375 = vst [vmem:[#allocation4] sm:$0xff] 0
      %376 = vst [vmem:[#allocation4 + $0x8] sm:$0xf] 0
      %377 = vst [vmem:[#allocation4 + $0xc] sm:$0xff] 0
      %378 = vst [vmem:[#allocation4 + $0x14] sm:$0xf] 0
      %s379 = scalar_lea.vmem [#allocation4], 408
      %380 = vst [vmem:[%s379] sm:$0xff] 0
      %381 = vst [vmem:[%s379 + $0x8] sm:$0xf] 0
      %382 = vst [vmem:[%s379 + $0xc] sm:$0xff] 0
      %383 = vst [vmem:[%s379 + $0x14] sm:$0xf] 0
      %v384 = vld [vmem:[%s354] sm:$0xff]
      %v385 = vld [vmem:[%s354 + $0x8] sm:$0xff]
      %v386 = vld [vmem:[%s354 + $0x10] sm:$0xff]
      %v387 = vld [vmem:[%s354 + $0x18] sm:$0xff]
      %v388 = vld [vmem:[%s354 + $0x20] sm:$0xff]
      %v389 = vld [vmem:[%s354 + $0x28] sm:$0xff]
      %v390 = vld [vmem:[%s354 + $0x30] sm:$0xff]
      %v391 = vld [vmem:[%s354 + $0x38] sm:$0xff]
      %v392 = vld [vmem:[%s354 + $0x40] sm:$0xff]
      %v393 = vld [vmem:[%s354 + $0x48] sm:$0xff]
      %v394 = vld [vmem:[%s354 + $0x50] sm:$0xff]
      %v395 = vld [vmem:[%s354 + $0x58] sm:$0xff]
      %v396 = vld [vmem:[%s354 + $0x60] sm:$0xff]
      %v397 = vld [vmem:[%s354 + $0x68] sm:$0xff]
      %v398 = vld [vmem:[%s354 + $0x70] sm:$0xff]
      %v399 = vld [vmem:[%s354 + $0x78] sm:$0xff]
      %v400 = vld [vmem:[%s354 + $0x80] sm:$0xff]
      %v401 = vld [vmem:[%s354 + $0x88] sm:$0xff]
      %v402 = vld [vmem:[%s354 + $0x90] sm:$0xff]
      %v403 = vld [vmem:[%s354 + $0x98] sm:$0xff]
      %v404 = vld [vmem:[%s354 + $0xa0] sm:$0xff]
      %v405 = vld [vmem:[%s354 + $0xa8] sm:$0xff]
      %v406 = vld [vmem:[%s354 + $0xb0] sm:$0xff]
      %v407 = vld [vmem:[%s354 + $0xb8] sm:$0xff]
      %v408 = vld [vmem:[%s354 + $0xc0] sm:$0xff]
      %v409 = vld [vmem:[%s354 + $0xc8] sm:$0xff]
      %v410 = vld [vmem:[%s354 + $0xd0] sm:$0xff]
      %v411 = vld [vmem:[%s354 + $0xd8] sm:$0xff]
      %v412 = vld [vmem:[%s354 + $0xe0] sm:$0xff]
      %v413 = vld [vmem:[%s354 + $0xe8] sm:$0xff]
      %v414 = vld [vmem:[%s354 + $0xf0] sm:$0xff]
      %v415 = vld [vmem:[%s354 + $0xf8] sm:$0xff]
      %v416 = vand.u32 2147483647, %v384
      %v417 = vand.u32 2147483647, %v385
      %v418 = vand.u32 2147483647, %v386
      %v419 = vand.u32 2147483647, %v387
      %v420 = vand.u32 2147483647, %v388
      %v421 = vand.u32 2147483647, %v389
      %v422 = vand.u32 2147483647, %v390
      %v423 = vand.u32 2147483647, %v391
      %v424 = vand.u32 2147483647, %v392
      %v425 = vand.u32 2147483647, %v393
      %v426 = vand.u32 2147483647, %v394
      %v427 = vand.u32 2147483647, %v395
      %v428 = vand.u32 2147483647, %v396
      %v429 = vand.u32 2147483647, %v397
      %v430 = vand.u32 2147483647, %v398
      %v431 = vand.u32 2147483647, %v399
      %v432 = vand.u32 2147483647, %v400
      %v433 = vand.u32 2147483647, %v401
      %v434 = vand.u32 2147483647, %v402
      %v435 = vand.u32 2147483647, %v403
      %v436 = vand.u32 2147483647, %v404
      %v437 = vand.u32 2147483647, %v405
      %v438 = vand.u32 2147483647, %v406
      %v439 = vand.u32 2147483647, %v407
      %v440 = vand.u32 2147483647, %v408
      %v441 = vand.u32 2147483647, %v409
      %v442 = vand.u32 2147483647, %v410
      %v443 = vand.u32 2147483647, %v411
      %v444 = vand.u32 2147483647, %v412
      %v445 = vand.u32 2147483647, %v413
      %v446 = vand.u32 2147483647, %v414
      %v447 = vand.u32 2147483647, %v415
      %vm448 = vcmask 23552
      %v449 = vsel %vm448, %v416, 0.0
      %v450 = vsel %vm448, %v417, 0.0
      %v451 = vadd.f32 %v449, %v450
      %v452 = vsel %vm448, %v418, 0.0
      %v453 = vadd.f32 %v451, %v452
      %v454 = vsel %vm448, %v419, 0.0
      %v455 = vadd.f32 %v453, %v454
      %v456 = vsel %vm448, %v420, 0.0
      %v457 = vadd.f32 %v455, %v456
      %v458 = vsel %vm448, %v421, 0.0
      %v459 = vadd.f32 %v457, %v458
      %v460 = vsel %vm448, %v422, 0.0
      %v461 = vadd.f32 %v459, %v460
      %v462 = vsel %vm448, %v423, 0.0
      %v463 = vadd.f32 %v461, %v462
      %v464 = vsel %vm448, %v424, 0.0
      %v465 = vadd.f32 %v463, %v464
      %v466 = vsel %vm448, %v425, 0.0
      %v467 = vadd.f32 %v465, %v466
      %v468 = vsel %vm448, %v426, 0.0
      %v469 = vadd.f32 %v467, %v468
      %v470 = vsel %vm448, %v427, 0.0
      %v471 = vadd.f32 %v469, %v470
      %v472 = vsel %vm448, %v428, 0.0
      %v473 = vadd.f32 %v471, %v472
      %v474 = vsel %vm448, %v429, 0.0
      %v475 = vadd.f32 %v473, %v474
      %v476 = vsel %vm448, %v430, 0.0
      %v477 = vadd.f32 %v475, %v476
      %v478 = vsel %vm448, %v431, 0.0
      %v479 = vadd.f32 %v477, %v478
      %v480 = vsel %vm448, %v432, 0.0
      %v481 = vadd.f32 %v479, %v480
      %v482 = vsel %vm448, %v433, 0.0
      %v483 = vadd.f32 %v481, %v482
      %v484 = vsel %vm448, %v434, 0.0
      %v485 = vadd.f32 %v483, %v484
      %v486 = vsel %vm448, %v435, 0.0
      %v487 = vadd.f32 %v485, %v486
      %v488 = vsel %vm448, %v436, 0.0
      %v489 = vadd.f32 %v487, %v488
      %v490 = vsel %vm448, %v437, 0.0
      %v491 = vadd.f32 %v489, %v490
      %v492 = vsel %vm448, %v438, 0.0
      %v493 = vadd.f32 %v491, %v492
      %v494 = vsel %vm448, %v439, 0.0
      %v495 = vadd.f32 %v493, %v494
      %v496 = vsel %vm448, %v440, 0.0
      %v497 = vadd.f32 %v495, %v496
      %v498 = vsel %vm448, %v441, 0.0
      %v499 = vadd.f32 %v497, %v498
      %v500 = vsel %vm448, %v442, 0.0
      %v501 = vadd.f32 %v499, %v500
      %v502 = vsel %vm448, %v443, 0.0
      %v503 = vadd.f32 %v501, %v502
      %v504 = vsel %vm448, %v444, 0.0
      %v505 = vadd.f32 %v503, %v504
      %v506 = vsel %vm448, %v445, 0.0
      %v507 = vadd.f32 %v505, %v506
      %v508 = vsel %vm448, %v446, 0.0
      %v509 = vadd.f32 %v507, %v508
      %v510 = vsel %vm448, %v447, 0.0
      %v511 = vadd.f32 %v509, %v510
      %v512 = vrot.slane %v511, 4
      %v513 = vadd.f32 %v511, %v512
      %v514 = vrot.slane %v513, 2
      %v515 = vadd.f32 %v513, %v514
      %v516 = vrot.slane %v515, 1
      %v517 = vadd.f32 %v515, %v516
      %v518 = vrcp.pop 256.0
      %v519 = vmul.f32 %v517, %v518
      %v520 = vld [vmem:[%s2] sm:$0x1]
      %v521 = vld [vmem:[%s1] sm:$0x1]
      %523 = vset.pattern.permute.xlu0 0
      %524 = vperm.xlu0 %523, %v519
      %v525 = vpop.permute.xlu0 %524
      %v527 = vmul.f32 %v525, %v521
      %v528 = vadd.f32 %v520, %v527
      %v529 = vld [vmem:[%s1 + $0x1] sm:$0x1]
      %530 = vset.pattern.permute.xlu0 1
      %531 = vperm.xlu0 %530, %v519
      %v532 = vpop.permute.xlu0 %531
      %v534 = vmul.f32 %v532, %v529
      %v535 = vadd.f32 %v528, %v534
      %v536 = vld [vmem:[%s1 + $0x2] sm:$0x1]
      %537 = vset.pattern.permute.xlu0 2
      %538 = vperm.xlu0 %537, %v519
      %v539 = vpop.permute.xlu0 %538
      %v541 = vmul.f32 %v539, %v536
      %v542 = vadd.f32 %v535, %v541
      %v543 = vxor.u32 %v542, 2147483648
      %v544 = vmul.f32 %v543, 1.442695
      %v545 = vpow.pop %v544
      %v546 = vadd.f32 %v545, 1.0
      %v547 = vrcp.pop %v546
      %v548 = vmul.f32 1.0, %v547
      %v549 = vmul.f32 %v519, %v548
      %v550 = vlaneseq
      %v551 = vshrl.u32 %v550, 7
      %v552 = vsub.s32 0, %v551
      %v553 = vrot.slane %v549, %v552
      %v554 = vsub.f32 %v416, %v553
      %v555 = vsub.f32 %v417, %v553
      %v556 = vsub.f32 %v418, %v553
      %v557 = vsub.f32 %v419, %v553
      %v558 = vsub.f32 %v420, %v553
      %v559 = vsub.f32 %v421, %v553
      %v560 = vsub.f32 %v422, %v553
      %v561 = vsub.f32 %v423, %v553
      %v562 = vsub.f32 %v424, %v553
      %v563 = vsub.f32 %v425, %v553
      %v564 = vsub.f32 %v426, %v553
      %v565 = vsub.f32 %v427, %v553
      %v566 = vsub.f32 %v428, %v553
      %v567 = vsub.f32 %v429, %v553
      %v568 = vsub.f32 %v430, %v553
      %v569 = vsub.f32 %v431, %v553
      %v570 = vsub.f32 %v432, %v553
      %v571 = vsub.f32 %v433, %v553
      %v572 = vsub.f32 %v434, %v553
      %v573 = vsub.f32 %v435, %v553
      %v574 = vsub.f32 %v436, %v553
      %v575 = vsub.f32 %v437, %v553
      %v576 = vsub.f32 %v438, %v553
      %v577 = vsub.f32 %v439, %v553
      %v578 = vsub.f32 %v440, %v553
      %v579 = vsub.f32 %v441, %v553
      %v580 = vsub.f32 %v442, %v553
      %v581 = vsub.f32 %v443, %v553
      %v582 = vsub.f32 %v444, %v553
      %v583 = vsub.f32 %v445, %v553
      %v584 = vsub.f32 %v446, %v553
      %v585 = vsub.f32 %v447, %v553
      %v586 = vmax.f32 %v554, 0.0
      %v587 = vmax.f32 %v555, 0.0
      %v588 = vmax.f32 %v556, 0.0
      %v589 = vmax.f32 %v557, 0.0
      %v590 = vmax.f32 %v558, 0.0
      %v591 = vmax.f32 %v559, 0.0
      %v592 = vmax.f32 %v560, 0.0
      %v593 = vmax.f32 %v561, 0.0
      %v594 = vmax.f32 %v562, 0.0
      %v595 = vmax.f32 %v563, 0.0
      %v596 = vmax.f32 %v564, 0.0
      %v597 = vmax.f32 %v565, 0.0
      %v598 = vmax.f32 %v566, 0.0
      %v599 = vmax.f32 %v567, 0.0
      %v600 = vmax.f32 %v568, 0.0
      %v601 = vmax.f32 %v569, 0.0
      %v602 = vmax.f32 %v570, 0.0
      %v603 = vmax.f32 %v571, 0.0
      %v604 = vmax.f32 %v572, 0.0
      %v605 = vmax.f32 %v573, 0.0
      %v606 = vmax.f32 %v574, 0.0
      %v607 = vmax.f32 %v575, 0.0
      %v608 = vmax.f32 %v576, 0.0
      %v609 = vmax.f32 %v577, 0.0
      %v610 = vmax.f32 %v578, 0.0
      %v611 = vmax.f32 %v579, 0.0
      %v612 = vmax.f32 %v580, 0.0
      %v613 = vmax.f32 %v581, 0.0
      %v614 = vmax.f32 %v582, 0.0
      %v615 = vmax.f32 %v583, 0.0
      %v616 = vmax.f32 %v584, 0.0
      %v617 = vmax.f32 %v585, 0.0
      %vm618 = vcmp.ge.f32.partialorder %v384, 0.0
      %vm619 = vcmp.ge.f32.partialorder %v385, 0.0
      %vm620 = vcmp.ge.f32.partialorder %v386, 0.0
      %vm621 = vcmp.ge.f32.partialorder %v387, 0.0
      %vm622 = vcmp.ge.f32.partialorder %v388, 0.0
      %vm623 = vcmp.ge.f32.partialorder %v389, 0.0
      %vm624 = vcmp.ge.f32.partialorder %v390, 0.0
      %vm625 = vcmp.ge.f32.partialorder %v391, 0.0
      %vm626 = vcmp.ge.f32.partialorder %v392, 0.0
      %vm627 = vcmp.ge.f32.partialorder %v393, 0.0
      %vm628 = vcmp.ge.f32.partialorder %v394, 0.0
      %vm629 = vcmp.ge.f32.partialorder %v395, 0.0
      %vm630 = vcmp.ge.f32.partialorder %v396, 0.0
      %vm631 = vcmp.ge.f32.partialorder %v397, 0.0
      %vm632 = vcmp.ge.f32.partialorder %v398, 0.0
      %vm633 = vcmp.ge.f32.partialorder %v399, 0.0
      %vm634 = vcmp.ge.f32.partialorder %v400, 0.0
      %vm635 = vcmp.ge.f32.partialorder %v401, 0.0
      %vm636 = vcmp.ge.f32.partialorder %v402, 0.0
      %vm637 = vcmp.ge.f32.partialorder %v403, 0.0
      %vm638 = vcmp.ge.f32.partialorder %v404, 0.0
      %vm639 = vcmp.ge.f32.partialorder %v405, 0.0
      %vm640 = vcmp.ge.f32.partialorder %v406, 0.0
      %vm641 = vcmp.ge.f32.partialorder %v407, 0.0
      %vm642 = vcmp.ge.f32.partialorder %v408, 0.0
      %vm643 = vcmp.ge.f32.partialorder %v409, 0.0
      %vm644 = vcmp.ge.f32.partialorder %v410, 0.0
      %vm645 = vcmp.ge.f32.partialorder %v411, 0.0
      %vm646 = vcmp.ge.f32.partialorder %v412, 0.0
      %vm647 = vcmp.ge.f32.partialorder %v413, 0.0
      %vm648 = vcmp.ge.f32.partialorder %v414, 0.0
      %vm649 = vcmp.ge.f32.partialorder %v415, 0.0
      %v650 = vsub.f32 0.0, %v586
      %v651 = vsub.f32 0.0, %v587
      %v652 = vsub.f32 0.0, %v588
      %v653 = vsub.f32 0.0, %v589
      %v654 = vsub.f32 0.0, %v590
      %v655 = vsub.f32 0.0, %v591
      %v656 = vsub.f32 0.0, %v592
      %v657 = vsub.f32 0.0, %v593
      %v658 = vsub.f32 0.0, %v594
      %v659 = vsub.f32 0.0, %v595
      %v660 = vsub.f32 0.0, %v596
      %v661 = vsub.f32 0.0, %v597
      %v662 = vsub.f32 0.0, %v598
      %v663 = vsub.f32 0.0, %v599
      %v664 = vsub.f32 0.0, %v600
      %v665 = vsub.f32 0.0, %v601
      %v666 = vsub.f32 0.0, %v602
      %v667 = vsub.f32 0.0, %v603
      %v668 = vsub.f32 0.0, %v604
      %v669 = vsub.f32 0.0, %v605
      %v670 = vsub.f32 0.0, %v606
      %v671 = vsub.f32 0.0, %v607
      %v672 = vsub.f32 0.0, %v608
      %v673 = vsub.f32 0.0, %v609
      %v674 = vsub.f32 0.0, %v610
      %v675 = vsub.f32 0.0, %v611
      %v676 = vsub.f32 0.0, %v612
      %v677 = vsub.f32 0.0, %v613
      %v678 = vsub.f32 0.0, %v614
      %v679 = vsub.f32 0.0, %v615
      %v680 = vsub.f32 0.0, %v616
      %v681 = vsub.f32 0.0, %v617
      %v682 = vsel %vm618, %v586, %v650
      %v683 = vsel %vm619, %v587, %v651
      %v684 = vsel %vm620, %v588, %v652
      %v685 = vsel %vm621, %v589, %v653
      %v686 = vsel %vm622, %v590, %v654
      %v687 = vsel %vm623, %v591, %v655
      %v688 = vsel %vm624, %v592, %v656
      %v689 = vsel %vm625, %v593, %v657
      %v690 = vsel %vm626, %v594, %v658
      %v691 = vsel %vm627, %v595, %v659
      %v692 = vsel %vm628, %v596, %v660
      %v693 = vsel %vm629, %v597, %v661
      %v694 = vsel %vm630, %v598, %v662
      %v695 = vsel %vm631, %v599, %v663
      %v696 = vsel %vm632, %v600, %v664
      %v697 = vsel %vm633, %v601, %v665
      %v698 = vsel %vm634, %v602, %v666
      %v699 = vsel %vm635, %v603, %v667
      %v700 = vsel %vm636, %v604, %v668
      %v701 = vsel %vm637, %v605, %v669
      %v702 = vsel %vm638, %v606, %v670
      %v703 = vsel %vm639, %v607, %v671
      %v704 = vsel %vm640, %v608, %v672
      %v705 = vsel %vm641, %v609, %v673
      %v706 = vsel %vm642, %v610, %v674
      %v707 = vsel %vm643, %v611, %v675
      %v708 = vsel %vm644, %v612, %v676
      %v709 = vsel %vm645, %v613, %v677
      %v710 = vsel %vm646, %v614, %v678
      %v711 = vsel %vm647, %v615, %v679
      %v712 = vsel %vm648, %v616, %v680
      %v713 = vsel %vm649, %v617, %v681
      %v714 = vpack.c.bf16 %v683, %v682
      %v715 = vpack.c.bf16 %v685, %v684
      %v716 = vpack.c.bf16 %v687, %v686
      %v717 = vpack.c.bf16 %v689, %v688
      %v718 = vpack.c.bf16 %v691, %v690
      %v719 = vpack.c.bf16 %v693, %v692
      %v720 = vpack.c.bf16 %v695, %v694
      %v721 = vpack.c.bf16 %v697, %v696
      %v722 = vpack.c.bf16 %v699, %v698
      %v723 = vpack.c.bf16 %v701, %v700
      %v724 = vpack.c.bf16 %v703, %v702
      %v725 = vpack.c.bf16 %v705, %v704
      %v726 = vpack.c.bf16 %v707, %v706
      %v727 = vpack.c.bf16 %v709, %v708
      %v728 = vpack.c.bf16 %v711, %v710
      %v729 = vpack.c.bf16 %v713, %v712
      %v731 = vshrl.u32 %v714, 16
      %v733 = vrot.slane %v731, 7
      %v734 = vshll.u32 %v714, 16
      %v736 = vor.u32 %v733, %v734
      %v738 = vshrl.u32 %v715, 16
      %v740 = vrot.slane %v738, 7
      %v741 = vshll.u32 %v715, 16
      %v743 = vor.u32 %v740, %v741
      %v745 = vshrl.u32 %v716, 16
      %v747 = vrot.slane %v745, 7
      %v748 = vshll.u32 %v716, 16
      %v750 = vor.u32 %v747, %v748
      %v752 = vshrl.u32 %v717, 16
      %v754 = vrot.slane %v752, 7
      %v755 = vshll.u32 %v717, 16
      %v757 = vor.u32 %v754, %v755
      %v759 = vshrl.u32 %v718, 16
      %v761 = vrot.slane %v759, 7
      %v762 = vshll.u32 %v718, 16
      %v764 = vor.u32 %v761, %v762
      %v766 = vshrl.u32 %v719, 16
      %v768 = vrot.slane %v766, 7
      %v769 = vshll.u32 %v719, 16
      %v771 = vor.u32 %v768, %v769
      %v773 = vshrl.u32 %v720, 16
      %v775 = vrot.slane %v773, 7
      %v776 = vshll.u32 %v720, 16
      %v778 = vor.u32 %v775, %v776
      %v780 = vshrl.u32 %v721, 16
      %v782 = vrot.slane %v780, 7
      %v783 = vshll.u32 %v721, 16
      %v785 = vor.u32 %v782, %v783
      %v787 = vshrl.u32 %v722, 16
      %v789 = vrot.slane %v787, 7
      %v790 = vshll.u32 %v722, 16
      %v792 = vor.u32 %v789, %v790
      %v794 = vshrl.u32 %v723, 16
      %v796 = vrot.slane %v794, 7
      %v797 = vshll.u32 %v723, 16
      %v799 = vor.u32 %v796, %v797
      %v801 = vshrl.u32 %v724, 16
      %v803 = vrot.slane %v801, 7
      %v804 = vshll.u32 %v724, 16
      %v806 = vor.u32 %v803, %v804
      %v808 = vshrl.u32 %v725, 16
      %v810 = vrot.slane %v808, 7
      %v811 = vshll.u32 %v725, 16
      %v813 = vor.u32 %v810, %v811
      %v815 = vshrl.u32 %v726, 16
      %v817 = vrot.slane %v815, 7
      %v818 = vshll.u32 %v726, 16
      %v820 = vor.u32 %v817, %v818
      %v822 = vshrl.u32 %v727, 16
      %v824 = vrot.slane %v822, 7
      %v825 = vshll.u32 %v727, 16
      %v827 = vor.u32 %v824, %v825
      %v829 = vshrl.u32 %v728, 16
      %v831 = vrot.slane %v829, 7
      %v832 = vshll.u32 %v728, 16
      %v834 = vor.u32 %v831, %v832
      %v836 = vshrl.u32 %v729, 16
      %v838 = vrot.slane %v836, 7
      %v839 = vshll.u32 %v729, 16
      %v841 = vor.u32 %v838, %v839
      %vm858 = vcmask 1040384
      %vm859 = vsmask.f32 256
      %vm860 = vmand %vm858, %vm859
      %v861 = vsel %vm860, 0, %v736
      %v862 = vsel %vm860, 0, %v743
      %v863 = vsel %vm860, 0, %v750
      %v864 = vsel %vm860, 0, %v757
      %v865 = vsel %vm860, 0, %v764
      %v866 = vsel %vm860, 0, %v771
      %v867 = vsel %vm860, 0, %v778
      %v868 = vsel %vm860, 0, %v785
      %v869 = vsel %vm860, 0, %v792
      %v870 = vsel %vm860, 0, %v799
      %v871 = vsel %vm860, 0, %v806
      %v872 = vsel %vm860, 0, %v813
      %v873 = vsel %vm860, 0, %v820
      %v874 = vsel %vm860, 0, %v827
      %v875 = vsel %vm860, 0, %v834
      %v876 = vsel %vm860, 0, %v841
      %v877 = vrot.slane %v734, 1
      %v878 = vor.u32 %v731, %v877
      %v879 = vrot.slane %v741, 1
      %v880 = vor.u32 %v738, %v879
      %v881 = vrot.slane %v748, 1
      %v882 = vor.u32 %v745, %v881
      %v883 = vrot.slane %v755, 1
      %v884 = vor.u32 %v752, %v883
      %v885 = vrot.slane %v762, 1
      %v886 = vor.u32 %v759, %v885
      %v887 = vrot.slane %v769, 1
      %v888 = vor.u32 %v766, %v887
      %v889 = vrot.slane %v776, 1
      %v890 = vor.u32 %v773, %v889
      %v891 = vrot.slane %v783, 1
      %v892 = vor.u32 %v780, %v891
      %v893 = vrot.slane %v790, 1
      %v894 = vor.u32 %v787, %v893
      %v895 = vrot.slane %v797, 1
      %v896 = vor.u32 %v794, %v895
      %v897 = vrot.slane %v804, 1
      %v898 = vor.u32 %v801, %v897
      %v899 = vrot.slane %v811, 1
      %v900 = vor.u32 %v808, %v899
      %v901 = vrot.slane %v818, 1
      %v902 = vor.u32 %v815, %v901
      %v903 = vrot.slane %v825, 1
      %v904 = vor.u32 %v822, %v903
      %v905 = vrot.slane %v832, 1
      %v906 = vor.u32 %v829, %v905
      %v907 = vrot.slane %v839, 1
      %v908 = vor.u32 %v836, %v907
      %vm925 = vcmask 1047552
      %vm926 = vsmask.f32 7424
      %vm927 = vmand %vm925, %vm926
      %v928 = vsel %vm927, %v878, 0
      %v929 = vsel %vm927, %v880, 0
      %v930 = vsel %vm927, %v882, 0
      %v931 = vsel %vm927, %v884, 0
      %v932 = vsel %vm927, %v886, 0
      %v933 = vsel %vm927, %v888, 0
      %v934 = vsel %vm927, %v890, 0
      %v935 = vsel %vm927, %v892, 0
      %v936 = vsel %vm927, %v894, 0
      %v937 = vsel %vm927, %v896, 0
      %v938 = vsel %vm927, %v898, 0
      %v939 = vsel %vm927, %v900, 0
      %v940 = vsel %vm927, %v902, 0
      %v941 = vsel %vm927, %v904, 0
      %v942 = vsel %vm927, %v906, 0
      %v943 = vsel %vm927, %v908, 0
      %960 = vrot.lane.b32.xlu0 %v714, 3
      %v961 = vpop.permute.xlu0 %960
      %962 = vrot.lane.b32.xlu0 %v715, 3
      %v963 = vpop.permute.xlu0 %962
      %964 = vrot.lane.b32.xlu0 %v716, 3
      %v965 = vpop.permute.xlu0 %964
      %966 = vrot.lane.b32.xlu0 %v717, 3
      %v967 = vpop.permute.xlu0 %966
      %968 = vrot.lane.b32.xlu0 %v718, 3
      %v969 = vpop.permute.xlu0 %968
      %970 = vrot.lane.b32.xlu0 %v719, 3
      %v971 = vpop.permute.xlu0 %970
      %972 = vrot.lane.b32.xlu0 %v720, 3
      %v973 = vpop.permute.xlu0 %972
      %974 = vrot.lane.b32.xlu0 %v721, 3
      %v975 = vpop.permute.xlu0 %974
      %976 = vrot.lane.b32.xlu0 %v722, 3
      %v977 = vpop.permute.xlu0 %976
      %978 = vrot.lane.b32.xlu0 %v723, 3
      %v979 = vpop.permute.xlu0 %978
      %980 = vrot.lane.b32.xlu0 %v724, 3
      %v981 = vpop.permute.xlu0 %980
      %982 = vrot.lane.b32.xlu0 %v725, 3
      %v983 = vpop.permute.xlu0 %982
      %984 = vrot.lane.b32.xlu0 %v726, 3
      %v985 = vpop.permute.xlu0 %984
      %986 = vrot.lane.b32.xlu0 %v727, 3
      %v987 = vpop.permute.xlu0 %986
      %988 = vrot.lane.b32.xlu0 %v728, 3
      %v989 = vpop.permute.xlu0 %988
      %990 = vrot.lane.b32.xlu0 %v729, 3
      %v991 = vpop.permute.xlu0 %990
      %1008 = vrot.lane.b32.xlu0 %v928, 6
      %v1009 = vpop.permute.xlu0 %1008
      %1010 = vrot.lane.b32.xlu0 %v929, 6
      %v1011 = vpop.permute.xlu0 %1010
      %1012 = vrot.lane.b32.xlu0 %v930, 6
      %v1013 = vpop.permute.xlu0 %1012
      %1014 = vrot.lane.b32.xlu0 %v931, 6
      %v1015 = vpop.permute.xlu0 %1014
      %1016 = vrot.lane.b32.xlu0 %v932, 6
      %v1017 = vpop.permute.xlu0 %1016
      %1018 = vrot.lane.b32.xlu0 %v933, 6
      %v1019 = vpop.permute.xlu0 %1018
      %1020 = vrot.lane.b32.xlu0 %v934, 6
      %v1021 = vpop.permute.xlu0 %1020
      %1022 = vrot.lane.b32.xlu0 %v935, 6
      %v1023 = vpop.permute.xlu0 %1022
      %1024 = vrot.lane.b32.xlu0 %v936, 6
      %v1025 = vpop.permute.xlu0 %1024
      %1026 = vrot.lane.b32.xlu0 %v937, 6
      %v1027 = vpop.permute.xlu0 %1026
      %1028 = vrot.lane.b32.xlu0 %v938, 6
      %v1029 = vpop.permute.xlu0 %1028
      %1030 = vrot.lane.b32.xlu0 %v939, 6
      %v1031 = vpop.permute.xlu0 %1030
      %1032 = vrot.lane.b32.xlu0 %v940, 6
      %v1033 = vpop.permute.xlu0 %1032
      %1034 = vrot.lane.b32.xlu0 %v941, 6
      %v1035 = vpop.permute.xlu0 %1034
      %1036 = vrot.lane.b32.xlu0 %v942, 6
      %v1037 = vpop.permute.xlu0 %1036
      %1038 = vrot.lane.b32.xlu0 %v943, 6
      %v1039 = vpop.permute.xlu0 %1038
      %v1042 = vsel %vm448, %v861, %v961
      %v1045 = vsel %vm448, %v862, %v963
      %v1048 = vsel %vm448, %v863, %v965
      %v1051 = vsel %vm448, %v864, %v967
      %v1054 = vsel %vm448, %v865, %v969
      %v1057 = vsel %vm448, %v866, %v971
      %v1060 = vsel %vm448, %v867, %v973
      %v1063 = vsel %vm448, %v868, %v975
      %v1066 = vsel %vm448, %v869, %v977
      %v1069 = vsel %vm448, %v870, %v979
      %v1072 = vsel %vm448, %v871, %v981
      %v1075 = vsel %vm448, %v872, %v983
      %v1078 = vsel %vm448, %v873, %v985
      %v1081 = vsel %vm448, %v874, %v987
      %v1084 = vsel %vm448, %v875, %v989
      %v1087 = vsel %vm448, %v876, %v991
      %vm1088 = vcmask 48128
      %v1090 = vsel %vm1088, %v1042, %v1009
      %v1092 = vsel %vm1088, %v1045, %v1011
      %v1094 = vsel %vm1088, %v1048, %v1013
      %v1096 = vsel %vm1088, %v1051, %v1015
      %v1098 = vsel %vm1088, %v1054, %v1017
      %v1100 = vsel %vm1088, %v1057, %v1019
      %v1102 = vsel %vm1088, %v1060, %v1021
      %v1104 = vsel %vm1088, %v1063, %v1023
      %v1106 = vsel %vm1088, %v1066, %v1025
      %v1108 = vsel %vm1088, %v1069, %v1027
      %v1110 = vsel %vm1088, %v1072, %v1029
      %v1112 = vsel %vm1088, %v1075, %v1031
      %v1114 = vsel %vm1088, %v1078, %v1033
      %v1116 = vsel %vm1088, %v1081, %v1035
      %v1118 = vsel %vm1088, %v1084, %v1037
      %v1120 = vsel %vm1088, %v1087, %v1039
      %v1137 = vunpack.c.l.b16 %v1090
      %v1138 = vunpack.c.h.b16 %v1090
      %v1139 = vunpack.c.l.b16 %v1092
      %v1140 = vunpack.c.h.b16 %v1092
      %v1141 = vunpack.c.l.b16 %v1094
      %v1142 = vunpack.c.h.b16 %v1094
      %v1143 = vunpack.c.l.b16 %v1096
      %v1144 = vunpack.c.h.b16 %v1096
      %v1145 = vunpack.c.l.b16 %v1098
      %v1146 = vunpack.c.h.b16 %v1098
      %v1147 = vunpack.c.l.b16 %v1100
      %v1148 = vunpack.c.h.b16 %v1100
      %v1149 = vunpack.c.l.b16 %v1102
      %v1150 = vunpack.c.h.b16 %v1102
      %v1151 = vunpack.c.l.b16 %v1104
      %v1152 = vunpack.c.h.b16 %v1104
      %v1153 = vunpack.c.l.b16 %v1106
      %v1154 = vunpack.c.h.b16 %v1106
      %v1155 = vunpack.c.l.b16 %v1108
      %v1156 = vunpack.c.h.b16 %v1108
      %v1157 = vunpack.c.l.b16 %v1110
      %v1158 = vunpack.c.h.b16 %v1110
      %v1159 = vunpack.c.l.b16 %v1112
      %v1160 = vunpack.c.h.b16 %v1112
      %v1161 = vunpack.c.l.b16 %v1114
      %v1162 = vunpack.c.h.b16 %v1114
      %v1163 = vunpack.c.l.b16 %v1116
      %v1164 = vunpack.c.h.b16 %v1116
      %v1165 = vunpack.c.l.b16 %v1118
      %v1166 = vunpack.c.h.b16 %v1118
      %v1167 = vunpack.c.l.b16 %v1120
      %v1168 = vunpack.c.h.b16 %v1120
      %v1169 = vpack.c.b16 %v1137, %v1137
      %v1170 = vpack.c.b16 %v1138, %v1138
      %v1171 = vpack.c.b16 %v1139, %v1139
      %v1172 = vpack.c.b16 %v1140, %v1140
      %v1173 = vpack.c.b16 %v1141, %v1141
      %v1174 = vpack.c.b16 %v1142, %v1142
      %v1175 = vpack.c.b16 %v1143, %v1143
      %v1176 = vpack.c.b16 %v1144, %v1144
      %v1177 = vpack.c.b16 %v1145, %v1145
      %v1178 = vpack.c.b16 %v1146, %v1146
      %v1179 = vpack.c.b16 %v1147, %v1147
      %v1180 = vpack.c.b16 %v1148, %v1148
      %v1181 = vpack.c.b16 %v1149, %v1149
      %v1182 = vpack.c.b16 %v1150, %v1150
      %v1183 = vpack.c.b16 %v1151, %v1151
      %v1184 = vpack.c.b16 %v1152, %v1152
      %v1185 = vpack.c.b16 %v1153, %v1153
      %v1186 = vpack.c.b16 %v1154, %v1154
      %v1187 = vpack.c.b16 %v1155, %v1155
      %v1188 = vpack.c.b16 %v1156, %v1156
      %v1189 = vpack.c.b16 %v1157, %v1157
      %v1190 = vpack.c.b16 %v1158, %v1158
      %v1191 = vpack.c.b16 %v1159, %v1159
      %v1192 = vpack.c.b16 %v1160, %v1160
      %v1193 = vpack.c.b16 %v1161, %v1161
      %v1194 = vpack.c.b16 %v1162, %v1162
      %v1195 = vpack.c.b16 %v1163, %v1163
      %v1196 = vpack.c.b16 %v1164, %v1164
      %v1197 = vpack.c.b16 %v1165, %v1165
      %v1198 = vpack.c.b16 %v1166, %v1166
      %v1199 = vpack.c.b16 %v1167, %v1167
      %v1200 = vpack.c.b16 %v1168, %v1168
      %s1233 = scalar_lea.vmem [#allocation2], 8
      %1234 = vst.msk [vmem:[%s1233] sm:$0xf] %vm361, %v1169
      %1235 = vst.msk [vmem:[%s1233 + $0x4] sm:$0xf] %vm361, %v1170
      %1236 = vst.msk [vmem:[%s1233 + $0x8] sm:$0xf] %vm361, %v1171
      %1237 = vst.msk [vmem:[%s1233 + $0xc] sm:$0xf] %vm361, %v1172
      %1238 = vst.msk [vmem:[%s1233 + $0x10] sm:$0xf] %vm361, %v1173
      %1239 = vst.msk [vmem:[%s1233 + $0x14] sm:$0xf] %vm361, %v1174
      %1240 = vst.msk [vmem:[%s1233 + $0x18] sm:$0xf] %vm361, %v1175
      %1241 = vst.msk [vmem:[%s1233 + $0x1c] sm:$0xf] %vm361, %v1176
      %1242 = vst.msk [vmem:[%s1233 + $0x20] sm:$0xf] %vm361, %v1177
      %1243 = vst.msk [vmem:[%s1233 + $0x24] sm:$0xf] %vm361, %v1178
      %1244 = vst.msk [vmem:[%s1233 + $0x28] sm:$0xf] %vm361, %v1179
      %1245 = vst.msk [vmem:[%s1233 + $0x2c] sm:$0xf] %vm361, %v1180
      %1246 = vst.msk [vmem:[%s1233 + $0x30] sm:$0xf] %vm361, %v1181
      %1247 = vst.msk [vmem:[%s1233 + $0x34] sm:$0xf] %vm361, %v1182
      %1248 = vst.msk [vmem:[%s1233 + $0x38] sm:$0xf] %vm361, %v1183
      %1249 = vst.msk [vmem:[%s1233 + $0x3c] sm:$0xf] %vm361, %v1184
      %1250 = vst.msk [vmem:[%s1233 + $0x40] sm:$0xf] %vm361, %v1185
      %1251 = vst.msk [vmem:[%s1233 + $0x44] sm:$0xf] %vm361, %v1186
      %1252 = vst.msk [vmem:[%s1233 + $0x48] sm:$0xf] %vm361, %v1187
      %1253 = vst.msk [vmem:[%s1233 + $0x4c] sm:$0xf] %vm361, %v1188
      %1254 = vst.msk [vmem:[%s1233 + $0x50] sm:$0xf] %vm361, %v1189
      %1255 = vst.msk [vmem:[%s1233 + $0x54] sm:$0xf] %vm361, %v1190
      %1256 = vst.msk [vmem:[%s1233 + $0x58] sm:$0xf] %vm361, %v1191
      %1257 = vst.msk [vmem:[%s1233 + $0x5c] sm:$0xf] %vm361, %v1192
      %1258 = vst.msk [vmem:[%s1233 + $0x60] sm:$0xf] %vm361, %v1193
      %1259 = vst.msk [vmem:[%s1233 + $0x64] sm:$0xf] %vm361, %v1194
      %1260 = vst.msk [vmem:[%s1233 + $0x68] sm:$0xf] %vm361, %v1195
      %1261 = vst.msk [vmem:[%s1233 + $0x6c] sm:$0xf] %vm361, %v1196
      %1262 = vst.msk [vmem:[%s1233 + $0x70] sm:$0xf] %vm361, %v1197
      %1263 = vst.msk [vmem:[%s1233 + $0x74] sm:$0xf] %vm361, %v1198
      %1264 = vst.msk [vmem:[%s1233 + $0x78] sm:$0xf] %vm361, %v1199
      %1265 = vst.msk [vmem:[%s1233 + $0x7c] sm:$0xf] %vm361, %v1200
      %v1266 = vld [vmem:[#allocation2] sm:$0xf]
      %v1267 = vld [vmem:[#allocation2 + $0x4] sm:$0xf]
      %v1268 = vld [vmem:[#allocation2 + $0x8] sm:$0xf]
      %v1269 = vld [vmem:[#allocation2 + $0xc] sm:$0xf]
      %v1270 = vld [vmem:[#allocation2 + $0x10] sm:$0xf]
      %v1271 = vld [vmem:[#allocation2 + $0x14] sm:$0xf]
      %v1272 = vld [vmem:[#allocation2 + $0x18] sm:$0xf]
      %v1273 = vld [vmem:[#allocation2 + $0x1c] sm:$0xf]
      %v1274 = vld [vmem:[#allocation2 + $0x20] sm:$0xf]
      %v1275 = vld [vmem:[#allocation2 + $0x24] sm:$0xf]
      %v1276 = vld [vmem:[#allocation2 + $0x28] sm:$0xf]
      %v1277 = vld [vmem:[#allocation2 + $0x2c] sm:$0xf]
      %v1278 = vld [vmem:[#allocation2 + $0x30] sm:$0xf]
      %v1279 = vld [vmem:[#allocation2 + $0x34] sm:$0xf]
      %v1280 = vld [vmem:[#allocation2 + $0x38] sm:$0xf]
      %v1281 = vld [vmem:[#allocation2 + $0x3c] sm:$0xf]
      %v1282 = vld [vmem:[#allocation2 + $0x40] sm:$0xf]
      %v1283 = vld [vmem:[#allocation2 + $0x44] sm:$0xf]
      %v1284 = vld [vmem:[#allocation2 + $0x48] sm:$0xf]
      %v1285 = vld [vmem:[#allocation2 + $0x4c] sm:$0xf]
      %v1286 = vld [vmem:[#allocation2 + $0x50] sm:$0xf]
      %v1287 = vld [vmem:[#allocation2 + $0x54] sm:$0xf]
      %v1288 = vld [vmem:[#allocation2 + $0x58] sm:$0xf]
      %v1289 = vld [vmem:[#allocation2 + $0x5c] sm:$0xf]
      %v1290 = vld [vmem:[#allocation2 + $0x60] sm:$0xf]
      %v1291 = vld [vmem:[#allocation2 + $0x64] sm:$0xf]
      %v1292 = vld [vmem:[#allocation2 + $0x68] sm:$0xf]
      %v1293 = vld [vmem:[#allocation2 + $0x6c] sm:$0xf]
      %v1294 = vld [vmem:[#allocation2 + $0x70] sm:$0xf]
      %v1295 = vld [vmem:[#allocation2 + $0x74] sm:$0xf]
      %v1296 = vld [vmem:[#allocation2 + $0x78] sm:$0xf]
      %v1297 = vld [vmem:[#allocation2 + $0x7c] sm:$0xf]
      %v1298 = vld [vmem:[%s3] sm:$0xf]
      %v1299 = vld [vmem:[%s3 + $0x4] sm:$0x1]
      %v1300 = vld [vmem:[%s1233] sm:$0xf]
      %v1301 = vld [vmem:[%s1233 + $0x4] sm:$0xf]
      %v1302 = vld [vmem:[%s1233 + $0x8] sm:$0xf]
      %v1303 = vld [vmem:[%s1233 + $0xc] sm:$0xf]
      %v1304 = vld [vmem:[%s1233 + $0x10] sm:$0xf]
      %v1305 = vld [vmem:[%s1233 + $0x14] sm:$0xf]
      %v1306 = vld [vmem:[%s1233 + $0x18] sm:$0xf]
      %v1307 = vld [vmem:[%s1233 + $0x1c] sm:$0xf]
      %v1308 = vld [vmem:[%s1233 + $0x20] sm:$0xf]
      %v1309 = vld [vmem:[%s1233 + $0x24] sm:$0xf]
      %v1310 = vld [vmem:[%s1233 + $0x28] sm:$0xf]
      %v1311 = vld [vmem:[%s1233 + $0x2c] sm:$0xf]
      %v1312 = vld [vmem:[%s1233 + $0x30] sm:$0xf]
      %v1313 = vld [vmem:[%s1233 + $0x34] sm:$0xf]
      %v1314 = vld [vmem:[%s1233 + $0x38] sm:$0xf]
      %v1315 = vld [vmem:[%s1233 + $0x3c] sm:$0xf]
      %v1316 = vld [vmem:[%s1233 + $0x40] sm:$0xf]
      %v1317 = vld [vmem:[%s1233 + $0x44] sm:$0xf]
      %v1318 = vld [vmem:[%s1233 + $0x48] sm:$0xf]
      %v1319 = vld [vmem:[%s1233 + $0x4c] sm:$0xf]
      %v1320 = vld [vmem:[%s1233 + $0x50] sm:$0xf]
      %v1321 = vld [vmem:[%s1233 + $0x54] sm:$0xf]
      %v1322 = vld [vmem:[%s1233 + $0x58] sm:$0xf]
      %v1323 = vld [vmem:[%s1233 + $0x5c] sm:$0xf]
      %v1324 = vld [vmem:[%s1233 + $0x60] sm:$0xf]
      %v1325 = vld [vmem:[%s1233 + $0x64] sm:$0xf]
      %v1326 = vld [vmem:[%s1233 + $0x68] sm:$0xf]
      %v1327 = vld [vmem:[%s1233 + $0x6c] sm:$0xf]
      %v1328 = vld [vmem:[%s1233 + $0x70] sm:$0xf]
      %v1329 = vld [vmem:[%s1233 + $0x74] sm:$0xf]
      %v1330 = vld [vmem:[%s1233 + $0x78] sm:$0xf]
      %v1331 = vld [vmem:[%s1233 + $0x7c] sm:$0xf]
      %s1332 = scalar_lea.vmem %s3, 8
      %v1333 = vld [vmem:[%s1332] sm:$0xf]
      %v1334 = vld [vmem:[%s1332 + $0x4] sm:$0x1]
      %v1367 = vunpack.c.l.b16 %v1300
      %v1368 = vunpack.c.l.b16 %v1301
      %v1369 = vunpack.c.l.b16 %v1302
      %v1370 = vunpack.c.l.b16 %v1303
      %v1371 = vunpack.c.l.b16 %v1304
      %v1372 = vunpack.c.l.b16 %v1305
      %v1373 = vunpack.c.l.b16 %v1306
      %v1374 = vunpack.c.l.b16 %v1307
      %v1375 = vunpack.c.l.b16 %v1308
      %v1376 = vunpack.c.l.b16 %v1309
      %v1377 = vunpack.c.l.b16 %v1310
      %v1378 = vunpack.c.l.b16 %v1311
      %v1379 = vunpack.c.l.b16 %v1312
      %v1380 = vunpack.c.l.b16 %v1313
      %v1381 = vunpack.c.l.b16 %v1314
      %v1382 = vunpack.c.l.b16 %v1315
      %v1383 = vunpack.c.l.b16 %v1316
      %v1384 = vunpack.c.l.b16 %v1317
      %v1385 = vunpack.c.l.b16 %v1318
      %v1386 = vunpack.c.l.b16 %v1319
      %v1387 = vunpack.c.l.b16 %v1320
      %v1388 = vunpack.c.l.b16 %v1321
      %v1389 = vunpack.c.l.b16 %v1322
      %v1390 = vunpack.c.l.b16 %v1323
      %v1391 = vunpack.c.l.b16 %v1324
      %v1392 = vunpack.c.l.b16 %v1325
      %v1393 = vunpack.c.l.b16 %v1326
      %v1394 = vunpack.c.l.b16 %v1327
      %v1395 = vunpack.c.l.b16 %v1328
      %v1396 = vunpack.c.l.b16 %v1329
      %v1397 = vunpack.c.l.b16 %v1330
      %v1398 = vunpack.c.l.b16 %v1331
      %v1399 = vpack.c.b16 %v1368, %v1367
      %v1400 = vpack.c.b16 %v1370, %v1369
      %v1401 = vpack.c.b16 %v1372, %v1371
      %v1402 = vpack.c.b16 %v1374, %v1373
      %v1403 = vpack.c.b16 %v1376, %v1375
      %v1404 = vpack.c.b16 %v1378, %v1377
      %v1405 = vpack.c.b16 %v1380, %v1379
      %v1406 = vpack.c.b16 %v1382, %v1381
      %v1407 = vpack.c.b16 %v1384, %v1383
      %v1408 = vpack.c.b16 %v1386, %v1385
      %v1409 = vpack.c.b16 %v1388, %v1387
      %v1410 = vpack.c.b16 %v1390, %v1389
      %v1411 = vpack.c.b16 %v1392, %v1391
      %v1412 = vpack.c.b16 %v1394, %v1393
      %v1413 = vpack.c.b16 %v1396, %v1395
      %v1414 = vpack.c.b16 %v1398, %v1397
      %v1417 = vunpack.c.l.b16 %v1333
      %v1418 = vunpack.c.l.b16 %v1334
      %v1419 = vpack.c.b16 %v1418, %v1417
      %vm1420 = vcmask 72704
      %v1422 = vsel %vm1420, %v1399, 0
      %v1425 = vsel %vm1420, %v1400, 0
      %v1428 = vsel %vm1420, %v1401, 0
      %v1431 = vsel %vm1420, %v1402, 0
      %v1434 = vsel %vm1420, %v1403, 0
      %v1437 = vsel %vm1420, %v1404, 0
      %v1440 = vsel %vm1420, %v1405, 0
      %v1443 = vsel %vm1420, %v1406, 0
      %v1446 = vsel %vm1420, %v1407, 0
      %v1449 = vsel %vm1420, %v1408, 0
      %v1452 = vsel %vm1420, %v1409, 0
      %v1455 = vsel %vm1420, %v1410, 0
      %v1458 = vsel %vm1420, %v1411, 0
      %v1461 = vsel %vm1420, %v1412, 0
      %v1464 = vsel %vm1420, %v1413, 0
      %v1467 = vsel %vm1420, %v1414, 0
      %vm1469 = vcmask 1044480
      %v1470 = vsel %vm367, 4294967295, 65535
      %v1471 = vsel %vm1469, %v1470, 0
      %v1473 = vand.u32 %v1419, %v1471
      %1475 = vmatprep.subr.bf16.mxu0 0
      %1476 = vmatpush1.bf16.msra.mxu0 0
      %1477 = vmatprep.subr.bf16.mxu0 0
      %1478 = vmatpush1.bf16.msra.mxu0 0
      %1479 = vmatprep.subr.bf16.mxu0 0
      %1480 = vmatpush1.bf16.msra.mxu0 0
      %1481 = vmatprep.subr.bf16.mxu0 0
      %1482 = vmatpush1.bf16.msra.mxu0 0
      %1483 = vmatprep.subr.bf16.mxu0 0
      %1484 = vmatpush1.bf16.msra.mxu0 0
      %1485 = vmatprep.subr.bf16.mxu0 0
      %1486 = vmatpush1.bf16.msra.mxu0 0
      %1487 = vmatprep.subr.bf16.mxu0 0
      %1488 = vmatpush1.bf16.msra.mxu0 0
      %1489 = vmatprep.subr.bf16.mxu0 0
      %1490 = vmatpush1.bf16.msra.mxu0 %v1473
      %1491 = vmatprep.subr.bf16.mxu0 0
      %1492 = vmatpush2.bf16.msra.mxu0 0
      %1493 = vmatprep.subr.bf16.mxu0 0
      %1494 = vmatpush2.bf16.msra.mxu0 0
      %1495 = vmatprep.subr.bf16.mxu0 0
      %1496 = vmatpush2.bf16.msra.mxu0 0
      %1497 = vmatprep.subr.bf16.mxu0 0
      %1498 = vmatpush2.bf16.msra.mxu0 0
      %1499 = vmatprep.subr.bf16.mxu0 0
      %1500 = vmatpush2.bf16.msra.mxu0 0
      %1501 = vmatprep.subr.bf16.mxu0 0
      %1502 = vmatpush2.bf16.msra.mxu0 0
      %1503 = vmatprep.subr.bf16.mxu0 0
      %1504 = vmatpush2.bf16.msra.mxu0 0
      %1505 = vmatprep.subr.bf16.mxu0 0
      %1506 = vmatpush2.bf16.msra.mxu0 0
      %1507 = vmatprep.mubr.bf16.mxu0 0
      %1508 = vmatmul.mubr.bf16.gmra.mxu0 %v1422
      %v1509 = vpop.f32.mrf.mxu0
      %v1510 = vadd.f32 0.0, %v1509
      %v1511 = vpop.f32.mrf.mxu0
      %v1512 = vpop.f32.mrf.mxu0
      %v1513 = vadd.f32 0.0, %v1512
      %v1514 = vpop.f32.mrf.mxu0
      %1515 = vmatprep.mubr.bf16.mxu0 0
      %1516 = vmatmul.mubr.bf16.gmra.mxu0 %v1425
      %v1517 = vpop.f32.mrf.mxu0
      %v1518 = vadd.f32 0.0, %v1517
      %v1519 = vpop.f32.mrf.mxu0
      %v1520 = vpop.f32.mrf.mxu0
      %v1521 = vadd.f32 0.0, %v1520
      %v1522 = vpop.f32.mrf.mxu0
      %1523 = vmatprep.mubr.bf16.mxu0 0
      %1524 = vmatmul.mubr.bf16.gmra.mxu0 %v1428
      %v1525 = vpop.f32.mrf.mxu0
      %v1526 = vadd.f32 0.0, %v1525
      %v1527 = vpop.f32.mrf.mxu0
      %v1528 = vpop.f32.mrf.mxu0
      %v1529 = vadd.f32 0.0, %v1528
      %v1530 = vpop.f32.mrf.mxu0
      %1531 = vmatprep.mubr.bf16.mxu0 0
      %1532 = vmatmul.mubr.bf16.gmra.mxu0 %v1431
      %v1533 = vpop.f32.mrf.mxu0
      %v1534 = vadd.f32 0.0, %v1533
      %v1535 = vpop.f32.mrf.mxu0
      %v1536 = vpop.f32.mrf.mxu0
      %v1537 = vadd.f32 0.0, %v1536
      %v1538 = vpop.f32.mrf.mxu0
      %1539 = vmatprep.mubr.bf16.mxu0 0
      %1540 = vmatmul.mubr.bf16.gmra.mxu0 %v1434
      %v1541 = vpop.f32.mrf.mxu0
      %v1542 = vadd.f32 0.0, %v1541
      %v1543 = vpop.f32.mrf.mxu0
      %v1544 = vpop.f32.mrf.mxu0
      %v1545 = vadd.f32 0.0, %v1544
      %v1546 = vpop.f32.mrf.mxu0
      %1547 = vmatprep.mubr.bf16.mxu0 0
      %1548 = vmatmul.mubr.bf16.gmra.mxu0 %v1437
      %v1549 = vpop.f32.mrf.mxu0
      %v1550 = vadd.f32 0.0, %v1549
      %v1551 = vpop.f32.mrf.mxu0
      %v1552 = vpop.f32.mrf.mxu0
      %v1553 = vadd.f32 0.0, %v1552
      %v1554 = vpop.f32.mrf.mxu0
      %1555 = vmatprep.mubr.bf16.mxu0 0
      %1556 = vmatmul.mubr.bf16.gmra.mxu0 %v1440
      %v1557 = vpop.f32.mrf.mxu0
      %v1558 = vadd.f32 0.0, %v1557
      %v1559 = vpop.f32.mrf.mxu0
      %v1560 = vpop.f32.mrf.mxu0
      %v1561 = vadd.f32 0.0, %v1560
      %v1562 = vpop.f32.mrf.mxu0
      %1563 = vmatprep.mubr.bf16.mxu0 0
      %1564 = vmatmul.mubr.bf16.gmra.mxu0 %v1443
      %v1565 = vpop.f32.mrf.mxu0
      %v1566 = vadd.f32 0.0, %v1565
      %v1567 = vpop.f32.mrf.mxu0
      %v1568 = vpop.f32.mrf.mxu0
      %v1569 = vadd.f32 0.0, %v1568
      %v1570 = vpop.f32.mrf.mxu0
      %1571 = vmatprep.mubr.bf16.mxu0 0
      %1572 = vmatmul.mubr.bf16.gmra.mxu0 %v1446
      %v1573 = vpop.f32.mrf.mxu0
      %v1574 = vadd.f32 0.0, %v1573
      %v1575 = vpop.f32.mrf.mxu0
      %v1576 = vpop.f32.mrf.mxu0
      %v1577 = vadd.f32 0.0, %v1576
      %v1578 = vpop.f32.mrf.mxu0
      %1579 = vmatprep.mubr.bf16.mxu0 0
      %1580 = vmatmul.mubr.bf16.gmra.mxu0 %v1449
      %v1581 = vpop.f32.mrf.mxu0
      %v1582 = vadd.f32 0.0, %v1581
      %v1583 = vpop.f32.mrf.mxu0
      %v1584 = vpop.f32.mrf.mxu0
      %v1585 = vadd.f32 0.0, %v1584
      %v1586 = vpop.f32.mrf.mxu0
      %1587 = vmatprep.mubr.bf16.mxu0 0
      %1588 = vmatmul.mubr.bf16.gmra.mxu0 %v1452
      %v1589 = vpop.f32.mrf.mxu0
      %v1590 = vadd.f32 0.0, %v1589
      %v1591 = vpop.f32.mrf.mxu0
      %v1592 = vpop.f32.mrf.mxu0
      %v1593 = vadd.f32 0.0, %v1592
      %v1594 = vpop.f32.mrf.mxu0
      %1595 = vmatprep.mubr.bf16.mxu0 0
      %1596 = vmatmul.mubr.bf16.gmra.mxu0 %v1455
      %v1597 = vpop.f32.mrf.mxu0
      %v1598 = vadd.f32 0.0, %v1597
      %v1599 = vpop.f32.mrf.mxu0
      %v1600 = vpop.f32.mrf.mxu0
      %v1601 = vadd.f32 0.0, %v1600
      %v1602 = vpop.f32.mrf.mxu0
      %1603 = vmatprep.mubr.bf16.mxu0 0
      %1604 = vmatmul.mubr.bf16.gmra.mxu0 %v1458
      %v1605 = vpop.f32.mrf.mxu0
      %v1606 = vadd.f32 0.0, %v1605
      %v1607 = vpop.f32.mrf.mxu0
      %v1608 = vpop.f32.mrf.mxu0
      %v1609 = vadd.f32 0.0, %v1608
      %v1610 = vpop.f32.mrf.mxu0
      %1611 = vmatprep.mubr.bf16.mxu0 0
      %1612 = vmatmul.mubr.bf16.gmra.mxu0 %v1461
      %v1613 = vpop.f32.mrf.mxu0
      %v1614 = vadd.f32 0.0, %v1613
      %v1615 = vpop.f32.mrf.mxu0
      %v1616 = vpop.f32.mrf.mxu0
      %v1617 = vadd.f32 0.0, %v1616
      %v1618 = vpop.f32.mrf.mxu0
      %1619 = vmatprep.mubr.bf16.mxu0 0
      %1620 = vmatmul.mubr.bf16.gmra.mxu0 %v1464
      %v1621 = vpop.f32.mrf.mxu0
      %v1622 = vadd.f32 0.0, %v1621
      %v1623 = vpop.f32.mrf.mxu0
      %v1624 = vpop.f32.mrf.mxu0
      %v1625 = vadd.f32 0.0, %v1624
      %v1626 = vpop.f32.mrf.mxu0
      %1627 = vmatprep.mubr.bf16.mxu0 0
      %1628 = vmatmul.mubr.bf16.gmra.mxu0 %v1467
      %v1629 = vpop.f32.mrf.mxu0
      %v1630 = vadd.f32 0.0, %v1629
      %v1631 = vpop.f32.mrf.mxu0
      %v1632 = vpop.f32.mrf.mxu0
      %v1633 = vadd.f32 0.0, %v1632
      %v1634 = vpop.f32.mrf.mxu0
      %1635 = vdwg.mxu0
      %v1668 = vunpack.c.l.b16 %v1266
      %v1669 = vunpack.c.l.b16 %v1267
      %v1670 = vunpack.c.l.b16 %v1268
      %v1671 = vunpack.c.l.b16 %v1269
      %v1672 = vunpack.c.l.b16 %v1270
      %v1673 = vunpack.c.l.b16 %v1271
      %v1674 = vunpack.c.l.b16 %v1272
      %v1675 = vunpack.c.l.b16 %v1273
      %v1676 = vunpack.c.l.b16 %v1274
      %v1677 = vunpack.c.l.b16 %v1275
      %v1678 = vunpack.c.l.b16 %v1276
      %v1679 = vunpack.c.l.b16 %v1277
      %v1680 = vunpack.c.l.b16 %v1278
      %v1681 = vunpack.c.l.b16 %v1279
      %v1682 = vunpack.c.l.b16 %v1280
      %v1683 = vunpack.c.l.b16 %v1281
      %v1684 = vunpack.c.l.b16 %v1282
      %v1685 = vunpack.c.l.b16 %v1283
      %v1686 = vunpack.c.l.b16 %v1284
      %v1687 = vunpack.c.l.b16 %v1285
      %v1688 = vunpack.c.l.b16 %v1286
      %v1689 = vunpack.c.l.b16 %v1287
      %v1690 = vunpack.c.l.b16 %v1288
      %v1691 = vunpack.c.l.b16 %v1289
      %v1692 = vunpack.c.l.b16 %v1290
      %v1693 = vunpack.c.l.b16 %v1291
      %v1694 = vunpack.c.l.b16 %v1292
      %v1695 = vunpack.c.l.b16 %v1293
      %v1696 = vunpack.c.l.b16 %v1294
      %v1697 = vunpack.c.l.b16 %v1295
      %v1698 = vunpack.c.l.b16 %v1296
      %v1699 = vunpack.c.l.b16 %v1297
      %v1700 = vpack.c.b16 %v1669, %v1668
      %v1701 = vpack.c.b16 %v1671, %v1670
      %v1702 = vpack.c.b16 %v1673, %v1672
      %v1703 = vpack.c.b16 %v1675, %v1674
      %v1704 = vpack.c.b16 %v1677, %v1676
      %v1705 = vpack.c.b16 %v1679, %v1678
      %v1706 = vpack.c.b16 %v1681, %v1680
      %v1707 = vpack.c.b16 %v1683, %v1682
      %v1708 = vpack.c.b16 %v1685, %v1684
      %v1709 = vpack.c.b16 %v1687, %v1686
      %v1710 = vpack.c.b16 %v1689, %v1688
      %v1711 = vpack.c.b16 %v1691, %v1690
      %v1712 = vpack.c.b16 %v1693, %v1692
      %v1713 = vpack.c.b16 %v1695, %v1694
      %v1714 = vpack.c.b16 %v1697, %v1696
      %v1715 = vpack.c.b16 %v1699, %v1698
      %v1718 = vunpack.c.l.b16 %v1298
      %v1719 = vunpack.c.l.b16 %v1299
      %v1720 = vpack.c.b16 %v1719, %v1718
      %v1722 = vsel %vm1420, %v1700, 0
      %v1725 = vsel %vm1420, %v1701, 0
      %v1728 = vsel %vm1420, %v1702, 0
      %v1731 = vsel %vm1420, %v1703, 0
      %v1734 = vsel %vm1420, %v1704, 0
      %v1737 = vsel %vm1420, %v1705, 0
      %v1740 = vsel %vm1420, %v1706, 0
      %v1743 = vsel %vm1420, %v1707, 0
      %v1746 = vsel %vm1420, %v1708, 0
      %v1749 = vsel %vm1420, %v1709, 0
      %v1752 = vsel %vm1420, %v1710, 0
      %v1755 = vsel %vm1420, %v1711, 0
      %v1758 = vsel %vm1420, %v1712, 0
      %v1761 = vsel %vm1420, %v1713, 0
      %v1764 = vsel %vm1420, %v1714, 0
      %v1767 = vsel %vm1420, %v1715, 0
      %v1770 = vand.u32 %v1720, %v1471
      %1772 = vmatprep.subr.bf16.mxu0 0
      %1773 = vmatpush1.bf16.msra.mxu0 0
      %1774 = vmatprep.subr.bf16.mxu0 0
      %1775 = vmatpush1.bf16.msra.mxu0 0
      %1776 = vmatprep.subr.bf16.mxu0 0
      %1777 = vmatpush1.bf16.msra.mxu0 0
      %1778 = vmatprep.subr.bf16.mxu0 0
      %1779 = vmatpush1.bf16.msra.mxu0 0
      %1780 = vmatprep.subr.bf16.mxu0 0
      %1781 = vmatpush1.bf16.msra.mxu0 0
      %1782 = vmatprep.subr.bf16.mxu0 0
      %1783 = vmatpush1.bf16.msra.mxu0 0
      %1784 = vmatprep.subr.bf16.mxu0 0
      %1785 = vmatpush1.bf16.msra.mxu0 0
      %1786 = vmatprep.subr.bf16.mxu0 0
      %1787 = vmatpush1.bf16.msra.mxu0 %v1770
      %1788 = vmatprep.subr.bf16.mxu0 0
      %1789 = vmatpush2.bf16.msra.mxu0 0
      %1790 = vmatprep.subr.bf16.mxu0 0
      %1791 = vmatpush2.bf16.msra.mxu0 0
      %1792 = vmatprep.subr.bf16.mxu0 0
      %1793 = vmatpush2.bf16.msra.mxu0 0
      %1794 = vmatprep.subr.bf16.mxu0 0
      %1795 = vmatpush2.bf16.msra.mxu0 0
      %1796 = vmatprep.subr.bf16.mxu0 0
      %1797 = vmatpush2.bf16.msra.mxu0 0
      %1798 = vmatprep.subr.bf16.mxu0 0
      %1799 = vmatpush2.bf16.msra.mxu0 0
      %1800 = vmatprep.subr.bf16.mxu0 0
      %1801 = vmatpush2.bf16.msra.mxu0 0
      %1802 = vmatprep.subr.bf16.mxu0 0
      %1803 = vmatpush2.bf16.msra.mxu0 0
      %1804 = vmatprep.mubr.bf16.mxu0 0
      %1805 = vmatmul.mubr.bf16.gmra.mxu0 %v1722
      %v1806 = vpop.f32.mrf.mxu0
      %v1807 = vadd.f32 %v1510, %v1806
      %v1808 = vpop.f32.mrf.mxu0
      %v1809 = vpop.f32.mrf.mxu0
      %v1810 = vadd.f32 %v1513, %v1809
      %v1811 = vpop.f32.mrf.mxu0
      %1812 = vmatprep.mubr.bf16.mxu0 0
      %1813 = vmatmul.mubr.bf16.gmra.mxu0 %v1725
      %v1814 = vpop.f32.mrf.mxu0
      %v1815 = vadd.f32 %v1518, %v1814
      %v1816 = vpop.f32.mrf.mxu0
      %v1817 = vpop.f32.mrf.mxu0
      %v1818 = vadd.f32 %v1521, %v1817
      %v1819 = vpop.f32.mrf.mxu0
      %1820 = vmatprep.mubr.bf16.mxu0 0
      %1821 = vmatmul.mubr.bf16.gmra.mxu0 %v1728
      %v1822 = vpop.f32.mrf.mxu0
      %v1823 = vadd.f32 %v1526, %v1822
      %v1824 = vpop.f32.mrf.mxu0
      %v1825 = vpop.f32.mrf.mxu0
      %v1826 = vadd.f32 %v1529, %v1825
      %v1827 = vpop.f32.mrf.mxu0
      %1828 = vmatprep.mubr.bf16.mxu0 0
      %1829 = vmatmul.mubr.bf16.gmra.mxu0 %v1731
      %v1830 = vpop.f32.mrf.mxu0
      %v1831 = vadd.f32 %v1534, %v1830
      %v1832 = vpop.f32.mrf.mxu0
      %v1833 = vpop.f32.mrf.mxu0
      %v1834 = vadd.f32 %v1537, %v1833
      %v1835 = vpop.f32.mrf.mxu0
      %1836 = vmatprep.mubr.bf16.mxu0 0
      %1837 = vmatmul.mubr.bf16.gmra.mxu0 %v1734
      %v1838 = vpop.f32.mrf.mxu0
      %v1839 = vadd.f32 %v1542, %v1838
      %v1840 = vpop.f32.mrf.mxu0
      %v1841 = vpop.f32.mrf.mxu0
      %v1842 = vadd.f32 %v1545, %v1841
      %v1843 = vpop.f32.mrf.mxu0
      %1844 = vmatprep.mubr.bf16.mxu0 0
      %1845 = vmatmul.mubr.bf16.gmra.mxu0 %v1737
      %v1846 = vpop.f32.mrf.mxu0
      %v1847 = vadd.f32 %v1550, %v1846
      %v1848 = vpop.f32.mrf.mxu0
      %v1849 = vpop.f32.mrf.mxu0
      %v1850 = vadd.f32 %v1553, %v1849
      %v1851 = vpop.f32.mrf.mxu0
      %1852 = vmatprep.mubr.bf16.mxu0 0
      %1853 = vmatmul.mubr.bf16.gmra.mxu0 %v1740
      %v1854 = vpop.f32.mrf.mxu0
      %v1855 = vadd.f32 %v1558, %v1854
      %v1856 = vpop.f32.mrf.mxu0
      %v1857 = vpop.f32.mrf.mxu0
      %v1858 = vadd.f32 %v1561, %v1857
      %v1859 = vpop.f32.mrf.mxu0
      %1860 = vmatprep.mubr.bf16.mxu0 0
      %1861 = vmatmul.mubr.bf16.gmra.mxu0 %v1743
      %v1862 = vpop.f32.mrf.mxu0
      %v1863 = vadd.f32 %v1566, %v1862
      %v1864 = vpop.f32.mrf.mxu0
      %v1865 = vpop.f32.mrf.mxu0
      %v1866 = vadd.f32 %v1569, %v1865
      %v1867 = vpop.f32.mrf.mxu0
      %1868 = vmatprep.mubr.bf16.mxu0 0
      %1869 = vmatmul.mubr.bf16.gmra.mxu0 %v1746
      %v1870 = vpop.f32.mrf.mxu0
      %v1871 = vadd.f32 %v1574, %v1870
      %v1872 = vpop.f32.mrf.mxu0
      %v1873 = vpop.f32.mrf.mxu0
      %v1874 = vadd.f32 %v1577, %v1873
      %v1875 = vpop.f32.mrf.mxu0
      %1876 = vmatprep.mubr.bf16.mxu0 0
      %1877 = vmatmul.mubr.bf16.gmra.mxu0 %v1749
      %v1878 = vpop.f32.mrf.mxu0
      %v1879 = vadd.f32 %v1582, %v1878
      %v1880 = vpop.f32.mrf.mxu0
      %v1881 = vpop.f32.mrf.mxu0
      %v1882 = vadd.f32 %v1585, %v1881
      %v1883 = vpop.f32.mrf.mxu0
      %1884 = vmatprep.mubr.bf16.mxu0 0
      %1885 = vmatmul.mubr.bf16.gmra.mxu0 %v1752
      %v1886 = vpop.f32.mrf.mxu0
      %v1887 = vadd.f32 %v1590, %v1886
      %v1888 = vpop.f32.mrf.mxu0
      %v1889 = vpop.f32.mrf.mxu0
      %v1890 = vadd.f32 %v1593, %v1889
      %v1891 = vpop.f32.mrf.mxu0
      %1892 = vmatprep.mubr.bf16.mxu0 0
      %1893 = vmatmul.mubr.bf16.gmra.mxu0 %v1755
      %v1894 = vpop.f32.mrf.mxu0
      %v1895 = vadd.f32 %v1598, %v1894
      %v1896 = vpop.f32.mrf.mxu0
      %v1897 = vpop.f32.mrf.mxu0
      %v1898 = vadd.f32 %v1601, %v1897
      %v1899 = vpop.f32.mrf.mxu0
      %1900 = vmatprep.mubr.bf16.mxu0 0
      %1901 = vmatmul.mubr.bf16.gmra.mxu0 %v1758
      %v1902 = vpop.f32.mrf.mxu0
      %v1903 = vadd.f32 %v1606, %v1902
      %v1904 = vpop.f32.mrf.mxu0
      %v1905 = vpop.f32.mrf.mxu0
      %v1906 = vadd.f32 %v1609, %v1905
      %v1907 = vpop.f32.mrf.mxu0
      %1908 = vmatprep.mubr.bf16.mxu0 0
      %1909 = vmatmul.mubr.bf16.gmra.mxu0 %v1761
      %v1910 = vpop.f32.mrf.mxu0
      %v1911 = vadd.f32 %v1614, %v1910
      %v1912 = vpop.f32.mrf.mxu0
      %v1913 = vpop.f32.mrf.mxu0
      %v1914 = vadd.f32 %v1617, %v1913
      %v1915 = vpop.f32.mrf.mxu0
      %1916 = vmatprep.mubr.bf16.mxu0 0
      %1917 = vmatmul.mubr.bf16.gmra.mxu0 %v1764
      %v1918 = vpop.f32.mrf.mxu0
      %v1919 = vadd.f32 %v1622, %v1918
      %v1920 = vpop.f32.mrf.mxu0
      %v1921 = vpop.f32.mrf.mxu0
      %v1922 = vadd.f32 %v1625, %v1921
      %v1923 = vpop.f32.mrf.mxu0
      %1924 = vmatprep.mubr.bf16.mxu0 0
      %1925 = vmatmul.mubr.bf16.gmra.mxu0 %v1767
      %v1926 = vpop.f32.mrf.mxu0
      %v1927 = vadd.f32 %v1630, %v1926
      %v1928 = vpop.f32.mrf.mxu0
      %v1929 = vpop.f32.mrf.mxu0
      %v1930 = vadd.f32 %v1633, %v1929
      %v1931 = vpop.f32.mrf.mxu0
      %1932 = vdwg.mxu0
      %s1933 = scalar_lea.vmem [#allocation2], 16
      %v1934 = vld [vmem:[%s1933] sm:$0xf]
      %v1935 = vld [vmem:[%s1933 + $0x4] sm:$0xf]
      %v1936 = vld [vmem:[%s1933 + $0x8] sm:$0xf]
      %v1937 = vld [vmem:[%s1933 + $0xc] sm:$0xf]
      %v1938 = vld [vmem:[%s1933 + $0x10] sm:$0xf]
      %v1939 = vld [vmem:[%s1933 + $0x14] sm:$0xf]
      %v1940 = vld [vmem:[%s1933 + $0x18] sm:$0xf]
      %v1941 = vld [vmem:[%s1933 + $0x1c] sm:$0xf]
      %v1942 = vld [vmem:[%s1933 + $0x20] sm:$0xf]
      %v1943 = vld [vmem:[%s1933 + $0x24] sm:$0xf]
      %v1944 = vld [vmem:[%s1933 + $0x28] sm:$0xf]
      %v1945 = vld [vmem:[%s1933 + $0x2c] sm:$0xf]
      %v1946 = vld [vmem:[%s1933 + $0x30] sm:$0xf]
      %v1947 = vld [vmem:[%s1933 + $0x34] sm:$0xf]
      %v1948 = vld [vmem:[%s1933 + $0x38] sm:$0xf]
      %v1949 = vld [vmem:[%s1933 + $0x3c] sm:$0xf]
      %v1950 = vld [vmem:[%s1933 + $0x40] sm:$0xf]
      %v1951 = vld [vmem:[%s1933 + $0x44] sm:$0xf]
      %v1952 = vld [vmem:[%s1933 + $0x48] sm:$0xf]
      %v1953 = vld [vmem:[%s1933 + $0x4c] sm:$0xf]
      %v1954 = vld [vmem:[%s1933 + $0x50] sm:$0xf]
      %v1955 = vld [vmem:[%s1933 + $0x54] sm:$0xf]
      %v1956 = vld [vmem:[%s1933 + $0x58] sm:$0xf]
      %v1957 = vld [vmem:[%s1933 + $0x5c] sm:$0xf]
      %v1958 = vld [vmem:[%s1933 + $0x60] sm:$0xf]
      %v1959 = vld [vmem:[%s1933 + $0x64] sm:$0xf]
      %v1960 = vld [vmem:[%s1933 + $0x68] sm:$0xf]
      %v1961 = vld [vmem:[%s1933 + $0x6c] sm:$0xf]
      %v1962 = vld [vmem:[%s1933 + $0x70] sm:$0xf]
      %v1963 = vld [vmem:[%s1933 + $0x74] sm:$0xf]
      %v1964 = vld [vmem:[%s1933 + $0x78] sm:$0xf]
      %v1965 = vld [vmem:[%s1933 + $0x7c] sm:$0xf]
      %s1966 = scalar_lea.vmem %s3, 16
      %v1967 = vld [vmem:[%s1966] sm:$0xf]
      %v1968 = vld [vmem:[%s1966 + $0x4] sm:$0x1]
      %v2001 = vunpack.c.l.b16 %v1934
      %v2002 = vunpack.c.l.b16 %v1935
      %v2003 = vunpack.c.l.b16 %v1936
      %v2004 = vunpack.c.l.b16 %v1937
      %v2005 = vunpack.c.l.b16 %v1938
      %v2006 = vunpack.c.l.b16 %v1939
      %v2007 = vunpack.c.l.b16 %v1940
      %v2008 = vunpack.c.l.b16 %v1941
      %v2009 = vunpack.c.l.b16 %v1942
      %v2010 = vunpack.c.l.b16 %v1943
      %v2011 = vunpack.c.l.b16 %v1944
      %v2012 = vunpack.c.l.b16 %v1945
      %v2013 = vunpack.c.l.b16 %v1946
      %v2014 = vunpack.c.l.b16 %v1947
      %v2015 = vunpack.c.l.b16 %v1948
      %v2016 = vunpack.c.l.b16 %v1949
      %v2017 = vunpack.c.l.b16 %v1950
      %v2018 = vunpack.c.l.b16 %v1951
      %v2019 = vunpack.c.l.b16 %v1952
      %v2020 = vunpack.c.l.b16 %v1953
      %v2021 = vunpack.c.l.b16 %v1954
      %v2022 = vunpack.c.l.b16 %v1955
      %v2023 = vunpack.c.l.b16 %v1956
      %v2024 = vunpack.c.l.b16 %v1957
      %v2025 = vunpack.c.l.b16 %v1958
      %v2026 = vunpack.c.l.b16 %v1959
      %v2027 = vunpack.c.l.b16 %v1960
      %v2028 = vunpack.c.l.b16 %v1961
      %v2029 = vunpack.c.l.b16 %v1962
      %v2030 = vunpack.c.l.b16 %v1963
      %v2031 = vunpack.c.l.b16 %v1964
      %v2032 = vunpack.c.l.b16 %v1965
      %v2033 = vpack.c.b16 %v2002, %v2001
      %v2034 = vpack.c.b16 %v2004, %v2003
      %v2035 = vpack.c.b16 %v2006, %v2005
      %v2036 = vpack.c.b16 %v2008, %v2007
      %v2037 = vpack.c.b16 %v2010, %v2009
      %v2038 = vpack.c.b16 %v2012, %v2011
      %v2039 = vpack.c.b16 %v2014, %v2013
      %v2040 = vpack.c.b16 %v2016, %v2015
      %v2041 = vpack.c.b16 %v2018, %v2017
      %v2042 = vpack.c.b16 %v2020, %v2019
      %v2043 = vpack.c.b16 %v2022, %v2021
      %v2044 = vpack.c.b16 %v2024, %v2023
      %v2045 = vpack.c.b16 %v2026, %v2025
      %v2046 = vpack.c.b16 %v2028, %v2027
      %v2047 = vpack.c.b16 %v2030, %v2029
      %v2048 = vpack.c.b16 %v2032, %v2031
      %v2051 = vunpack.c.l.b16 %v1967
      %v2052 = vunpack.c.l.b16 %v1968
      %v2053 = vpack.c.b16 %v2052, %v2051
      %v2055 = vsel %vm1420, %v2033, 0
      %v2058 = vsel %vm1420, %v2034, 0
      %v2061 = vsel %vm1420, %v2035, 0
      %v2064 = vsel %vm1420, %v2036, 0
      %v2067 = vsel %vm1420, %v2037, 0
      %v2070 = vsel %vm1420, %v2038, 0
      %v2073 = vsel %vm1420, %v2039, 0
      %v2076 = vsel %vm1420, %v2040, 0
      %v2079 = vsel %vm1420, %v2041, 0
      %v2082 = vsel %vm1420, %v2042, 0
      %v2085 = vsel %vm1420, %v2043, 0
      %v2088 = vsel %vm1420, %v2044, 0
      %v2091 = vsel %vm1420, %v2045, 0
      %v2094 = vsel %vm1420, %v2046, 0
      %v2097 = vsel %vm1420, %v2047, 0
      %v2100 = vsel %vm1420, %v2048, 0
      %v2103 = vand.u32 %v2053, %v1471
      %2105 = vmatprep.subr.bf16.mxu0 0
      %2106 = vmatpush1.bf16.msra.mxu0 0
      %2107 = vmatprep.subr.bf16.mxu0 0
      %2108 = vmatpush1.bf16.msra.mxu0 0
      %2109 = vmatprep.subr.bf16.mxu0 0
      %2110 = vmatpush1.bf16.msra.mxu0 0
      %2111 = vmatprep.subr.bf16.mxu0 0
      %2112 = vmatpush1.bf16.msra.mxu0 0
      %2113 = vmatprep.subr.bf16.mxu0 0
      %2114 = vmatpush1.bf16.msra.mxu0 0
      %2115 = vmatprep.subr.bf16.mxu0 0
      %2116 = vmatpush1.bf16.msra.mxu0 0
      %2117 = vmatprep.subr.bf16.mxu0 0
      %2118 = vmatpush1.bf16.msra.mxu0 0
      %2119 = vmatprep.subr.bf16.mxu0 0
      %2120 = vmatpush1.bf16.msra.mxu0 %v2103
      %2121 = vmatprep.subr.bf16.mxu0 0
      %2122 = vmatpush2.bf16.msra.mxu0 0
      %2123 = vmatprep.subr.bf16.mxu0 0
      %2124 = vmatpush2.bf16.msra.mxu0 0
      %2125 = vmatprep.subr.bf16.mxu0 0
      %2126 = vmatpush2.bf16.msra.mxu0 0
      %2127 = vmatprep.subr.bf16.mxu0 0
      %2128 = vmatpush2.bf16.msra.mxu0 0
      %2129 = vmatprep.subr.bf16.mxu0 0
      %2130 = vmatpush2.bf16.msra.mxu0 0
      %2131 = vmatprep.subr.bf16.mxu0 0
      %2132 = vmatpush2.bf16.msra.mxu0 0
      %2133 = vmatprep.subr.bf16.mxu0 0
      %2134 = vmatpush2.bf16.msra.mxu0 0
      %2135 = vmatprep.subr.bf16.mxu0 0
      %2136 = vmatpush2.bf16.msra.mxu0 0
      %2137 = vmatprep.mubr.bf16.mxu0 0
      %2138 = vmatmul.mubr.bf16.gmra.mxu0 %v2055
      %v2139 = vpop.f32.mrf.mxu0
      %v2140 = vadd.f32 0.0, %v2139
      %v2141 = vpop.f32.mrf.mxu0
      %v2142 = vpop.f32.mrf.mxu0
      %v2143 = vadd.f32 0.0, %v2142
      %v2144 = vpop.f32.mrf.mxu0
      %2145 = vmatprep.mubr.bf16.mxu0 0
      %2146 = vmatmul.mubr.bf16.gmra.mxu0 %v2058
      %v2147 = vpop.f32.mrf.mxu0
      %v2148 = vadd.f32 0.0, %v2147
      %v2149 = vpop.f32.mrf.mxu0
      %v2150 = vpop.f32.mrf.mxu0
      %v2151 = vadd.f32 0.0, %v2150
      %v2152 = vpop.f32.mrf.mxu0
      %2153 = vmatprep.mubr.bf16.mxu0 0
      %2154 = vmatmul.mubr.bf16.gmra.mxu0 %v2061
      %v2155 = vpop.f32.mrf.mxu0
      %v2156 = vadd.f32 0.0, %v2155
      %v2157 = vpop.f32.mrf.mxu0
      %v2158 = vpop.f32.mrf.mxu0
      %v2159 = vadd.f32 0.0, %v2158
      %v2160 = vpop.f32.mrf.mxu0
      %2161 = vmatprep.mubr.bf16.mxu0 0
      %2162 = vmatmul.mubr.bf16.gmra.mxu0 %v2064
      %v2163 = vpop.f32.mrf.mxu0
      %v2164 = vadd.f32 0.0, %v2163
      %v2165 = vpop.f32.mrf.mxu0
      %v2166 = vpop.f32.mrf.mxu0
      %v2167 = vadd.f32 0.0, %v2166
      %v2168 = vpop.f32.mrf.mxu0
      %2169 = vmatprep.mubr.bf16.mxu0 0
      %2170 = vmatmul.mubr.bf16.gmra.mxu0 %v2067
      %v2171 = vpop.f32.mrf.mxu0
      %v2172 = vadd.f32 0.0, %v2171
      %v2173 = vpop.f32.mrf.mxu0
      %v2174 = vpop.f32.mrf.mxu0
      %v2175 = vadd.f32 0.0, %v2174
      %v2176 = vpop.f32.mrf.mxu0
      %2177 = vmatprep.mubr.bf16.mxu0 0
      %2178 = vmatmul.mubr.bf16.gmra.mxu0 %v2070
      %v2179 = vpop.f32.mrf.mxu0
      %v2180 = vadd.f32 0.0, %v2179
      %v2181 = vpop.f32.mrf.mxu0
      %v2182 = vpop.f32.mrf.mxu0
      %v2183 = vadd.f32 0.0, %v2182
      %v2184 = vpop.f32.mrf.mxu0
      %2185 = vmatprep.mubr.bf16.mxu0 0
      %2186 = vmatmul.mubr.bf16.gmra.mxu0 %v2073
      %v2187 = vpop.f32.mrf.mxu0
      %v2188 = vadd.f32 0.0, %v2187
      %v2189 = vpop.f32.mrf.mxu0
      %v2190 = vpop.f32.mrf.mxu0
      %v2191 = vadd.f32 0.0, %v2190
      %v2192 = vpop.f32.mrf.mxu0
      %2193 = vmatprep.mubr.bf16.mxu0 0
      %2194 = vmatmul.mubr.bf16.gmra.mxu0 %v2076
      %v2195 = vpop.f32.mrf.mxu0
      %v2196 = vadd.f32 0.0, %v2195
      %v2197 = vpop.f32.mrf.mxu0
      %v2198 = vpop.f32.mrf.mxu0
      %v2199 = vadd.f32 0.0, %v2198
      %v2200 = vpop.f32.mrf.mxu0
      %2201 = vmatprep.mubr.bf16.mxu0 0
      %2202 = vmatmul.mubr.bf16.gmra.mxu0 %v2079
      %v2203 = vpop.f32.mrf.mxu0
      %v2204 = vadd.f32 0.0, %v2203
      %v2205 = vpop.f32.mrf.mxu0
      %v2206 = vpop.f32.mrf.mxu0
      %v2207 = vadd.f32 0.0, %v2206
      %v2208 = vpop.f32.mrf.mxu0
      %2209 = vmatprep.mubr.bf16.mxu0 0
      %2210 = vmatmul.mubr.bf16.gmra.mxu0 %v2082
      %v2211 = vpop.f32.mrf.mxu0
      %v2212 = vadd.f32 0.0, %v2211
      %v2213 = vpop.f32.mrf.mxu0
      %v2214 = vpop.f32.mrf.mxu0
      %v2215 = vadd.f32 0.0, %v2214
      %v2216 = vpop.f32.mrf.mxu0
      %2217 = vmatprep.mubr.bf16.mxu0 0
      %2218 = vmatmul.mubr.bf16.gmra.mxu0 %v2085
      %v2219 = vpop.f32.mrf.mxu0
      %v2220 = vadd.f32 0.0, %v2219
      %v2221 = vpop.f32.mrf.mxu0
      %v2222 = vpop.f32.mrf.mxu0
      %v2223 = vadd.f32 0.0, %v2222
      %v2224 = vpop.f32.mrf.mxu0
      %2225 = vmatprep.mubr.bf16.mxu0 0
      %2226 = vmatmul.mubr.bf16.gmra.mxu0 %v2088
      %v2227 = vpop.f32.mrf.mxu0
      %v2228 = vadd.f32 0.0, %v2227
      %v2229 = vpop.f32.mrf.mxu0
      %v2230 = vpop.f32.mrf.mxu0
      %v2231 = vadd.f32 0.0, %v2230
      %v2232 = vpop.f32.mrf.mxu0
      %2233 = vmatprep.mubr.bf16.mxu0 0
      %2234 = vmatmul.mubr.bf16.gmra.mxu0 %v2091
      %v2235 = vpop.f32.mrf.mxu0
      %v2236 = vadd.f32 0.0, %v2235
      %v2237 = vpop.f32.mrf.mxu0
      %v2238 = vpop.f32.mrf.mxu0
      %v2239 = vadd.f32 0.0, %v2238
      %v2240 = vpop.f32.mrf.mxu0
      %2241 = vmatprep.mubr.bf16.mxu0 0
      %2242 = vmatmul.mubr.bf16.gmra.mxu0 %v2094
      %v2243 = vpop.f32.mrf.mxu0
      %v2244 = vadd.f32 0.0, %v2243
      %v2245 = vpop.f32.mrf.mxu0
      %v2246 = vpop.f32.mrf.mxu0
      %v2247 = vadd.f32 0.0, %v2246
      %v2248 = vpop.f32.mrf.mxu0
      %2249 = vmatprep.mubr.bf16.mxu0 0
      %2250 = vmatmul.mubr.bf16.gmra.mxu0 %v2097
      %v2251 = vpop.f32.mrf.mxu0
      %v2252 = vadd.f32 0.0, %v2251
      %v2253 = vpop.f32.mrf.mxu0
      %v2254 = vpop.f32.mrf.mxu0
      %v2255 = vadd.f32 0.0, %v2254
      %v2256 = vpop.f32.mrf.mxu0
      %2257 = vmatprep.mubr.bf16.mxu0 0
      %2258 = vmatmul.mubr.bf16.gmra.mxu0 %v2100
      %v2259 = vpop.f32.mrf.mxu0
      %v2260 = vadd.f32 0.0, %v2259
      %v2261 = vpop.f32.mrf.mxu0
      %v2262 = vpop.f32.mrf.mxu0
      %v2263 = vadd.f32 0.0, %v2262
      %v2264 = vpop.f32.mrf.mxu0
      %2265 = vdwg.mxu0
      %v2266 = vadd.f32 %v1807, %v2140
      %v2267 = vadd.f32 %v1810, %v2143
      %v2268 = vadd.f32 %v1815, %v2148
      %v2269 = vadd.f32 %v1818, %v2151
      %v2270 = vadd.f32 %v1823, %v2156
      %v2271 = vadd.f32 %v1826, %v2159
      %v2272 = vadd.f32 %v1831, %v2164
      %v2273 = vadd.f32 %v1834, %v2167
      %v2274 = vadd.f32 %v1839, %v2172
      %v2275 = vadd.f32 %v1842, %v2175
      %v2276 = vadd.f32 %v1847, %v2180
      %v2277 = vadd.f32 %v1850, %v2183
      %v2278 = vadd.f32 %v1855, %v2188
      %v2279 = vadd.f32 %v1858, %v2191
      %v2280 = vadd.f32 %v1863, %v2196
      %v2281 = vadd.f32 %v1866, %v2199
      %v2282 = vadd.f32 %v1871, %v2204
      %v2283 = vadd.f32 %v1874, %v2207
      %v2284 = vadd.f32 %v1879, %v2212
      %v2285 = vadd.f32 %v1882, %v2215
      %v2286 = vadd.f32 %v1887, %v2220
      %v2287 = vadd.f32 %v1890, %v2223
      %v2288 = vadd.f32 %v1895, %v2228
      %v2289 = vadd.f32 %v1898, %v2231
      %v2290 = vadd.f32 %v1903, %v2236
      %v2291 = vadd.f32 %v1906, %v2239
      %v2292 = vadd.f32 %v1911, %v2244
      %v2293 = vadd.f32 %v1914, %v2247
      %v2294 = vadd.f32 %v1919, %v2252
      %v2295 = vadd.f32 %v1922, %v2255
      %v2296 = vadd.f32 %v1927, %v2260
      %v2297 = vadd.f32 %v1930, %v2263
      %vm2298 = vcmask 523264
      %v2299 = vsel %vm2298, %v2266, 0.0
      %v2300 = vsel %vm2298, %v2267, 0.0
      %v2301 = vadd.f32 %v2299, %v2300
      %v2302 = vsel %vm2298, %v2268, 0.0
      %v2303 = vadd.f32 %v2301, %v2302
      %v2304 = vsel %vm2298, %v2269, 0.0
      %v2305 = vadd.f32 %v2303, %v2304
      %v2306 = vsel %vm2298, %v2270, 0.0
      %v2307 = vadd.f32 %v2305, %v2306
      %v2308 = vsel %vm2298, %v2271, 0.0
      %v2309 = vadd.f32 %v2307, %v2308
      %v2310 = vsel %vm2298, %v2272, 0.0
      %v2311 = vadd.f32 %v2309, %v2310
      %v2312 = vsel %vm2298, %v2273, 0.0
      %v2313 = vadd.f32 %v2311, %v2312
      %v2314 = vsel %vm2298, %v2274, 0.0
      %v2315 = vadd.f32 %v2313, %v2314
      %v2316 = vsel %vm2298, %v2275, 0.0
      %v2317 = vadd.f32 %v2315, %v2316
      %v2318 = vsel %vm2298, %v2276, 0.0
      %v2319 = vadd.f32 %v2317, %v2318
      %v2320 = vsel %vm2298, %v2277, 0.0
      %v2321 = vadd.f32 %v2319, %v2320
      %v2322 = vsel %vm2298, %v2278, 0.0
      %v2323 = vadd.f32 %v2321, %v2322
      %v2324 = vsel %vm2298, %v2279, 0.0
      %v2325 = vadd.f32 %v2323, %v2324
      %v2326 = vsel %vm2298, %v2280, 0.0
      %v2327 = vadd.f32 %v2325, %v2326
      %v2328 = vsel %vm2298, %v2281, 0.0
      %v2329 = vadd.f32 %v2327, %v2328
      %v2330 = vsel %vm2298, %v2282, 0.0
      %v2331 = vadd.f32 %v2329, %v2330
      %v2332 = vsel %vm2298, %v2283, 0.0
      %v2333 = vadd.f32 %v2331, %v2332
      %v2334 = vsel %vm2298, %v2284, 0.0
      %v2335 = vadd.f32 %v2333, %v2334
      %v2336 = vsel %vm2298, %v2285, 0.0
      %v2337 = vadd.f32 %v2335, %v2336
      %v2338 = vsel %vm2298, %v2286, 0.0
      %v2339 = vadd.f32 %v2337, %v2338
      %v2340 = vsel %vm2298, %v2287, 0.0
      %v2341 = vadd.f32 %v2339, %v2340
      %v2342 = vsel %vm2298, %v2288, 0.0
      %v2343 = vadd.f32 %v2341, %v2342
      %v2344 = vsel %vm2298, %v2289, 0.0
      %v2345 = vadd.f32 %v2343, %v2344
      %v2346 = vsel %vm2298, %v2290, 0.0
      %v2347 = vadd.f32 %v2345, %v2346
      %v2348 = vsel %vm2298, %v2291, 0.0
      %v2349 = vadd.f32 %v2347, %v2348
      %v2350 = vsel %vm2298, %v2292, 0.0
      %v2351 = vadd.f32 %v2349, %v2350
      %v2352 = vsel %vm2298, %v2293, 0.0
      %v2353 = vadd.f32 %v2351, %v2352
      %v2354 = vsel %vm2298, %v2294, 0.0
      %v2355 = vadd.f32 %v2353, %v2354
      %v2356 = vsel %vm2298, %v2295, 0.0
      %v2357 = vadd.f32 %v2355, %v2356
      %v2358 = vsel %vm2298, %v2296, 0.0
      %v2359 = vadd.f32 %v2357, %v2358
      %v2360 = vsel %vm2298, %v2297, 0.0
      %v2361 = vadd.f32 %v2359, %v2360
      %v2362 = vrot.slane %v2361, 4
      %v2363 = vadd.f32 %v2361, %v2362
      %v2364 = vrot.slane %v2363, 2
      %v2365 = vadd.f32 %v2363, %v2364
      %v2366 = vrot.slane %v2365, 1
      %v2367 = vadd.f32 %v2365, %v2366
      %v2368 = vmul.f32 %v2367, %v518
      %v2369 = vmul.f32 %v2266, %v2266
      %v2370 = vmul.f32 %v2267, %v2267
      %v2371 = vmul.f32 %v2268, %v2268
      %v2372 = vmul.f32 %v2269, %v2269
      %v2373 = vmul.f32 %v2270, %v2270
      %v2374 = vmul.f32 %v2271, %v2271
      %v2375 = vmul.f32 %v2272, %v2272
      %v2376 = vmul.f32 %v2273, %v2273
      %v2377 = vmul.f32 %v2274, %v2274
      %v2378 = vmul.f32 %v2275, %v2275
      %v2379 = vmul.f32 %v2276, %v2276
      %v2380 = vmul.f32 %v2277, %v2277
      %v2381 = vmul.f32 %v2278, %v2278
      %v2382 = vmul.f32 %v2279, %v2279
      %v2383 = vmul.f32 %v2280, %v2280
      %v2384 = vmul.f32 %v2281, %v2281
      %v2385 = vmul.f32 %v2282, %v2282
      %v2386 = vmul.f32 %v2283, %v2283
      %v2387 = vmul.f32 %v2284, %v2284
      %v2388 = vmul.f32 %v2285, %v2285
      %v2389 = vmul.f32 %v2286, %v2286
      %v2390 = vmul.f32 %v2287, %v2287
      %v2391 = vmul.f32 %v2288, %v2288
      %v2392 = vmul.f32 %v2289, %v2289
      %v2393 = vmul.f32 %v2290, %v2290
      %v2394 = vmul.f32 %v2291, %v2291
      %v2395 = vmul.f32 %v2292, %v2292
      %v2396 = vmul.f32 %v2293, %v2293
      %v2397 = vmul.f32 %v2294, %v2294
      %v2398 = vmul.f32 %v2295, %v2295
      %v2399 = vmul.f32 %v2296, %v2296
      %v2400 = vmul.f32 %v2297, %v2297
      %v2401 = vsel %vm2298, %v2369, 0.0
      %v2402 = vsel %vm2298, %v2370, 0.0
      %v2403 = vadd.f32 %v2401, %v2402
      %v2404 = vsel %vm2298, %v2371, 0.0
      %v2405 = vadd.f32 %v2403, %v2404
      %v2406 = vsel %vm2298, %v2372, 0.0
      %v2407 = vadd.f32 %v2405, %v2406
      %v2408 = vsel %vm2298, %v2373, 0.0
      %v2409 = vadd.f32 %v2407, %v2408
      %v2410 = vsel %vm2298, %v2374, 0.0
      %v2411 = vadd.f32 %v2409, %v2410
      %v2412 = vsel %vm2298, %v2375, 0.0
      %v2413 = vadd.f32 %v2411, %v2412
      %v2414 = vsel %vm2298, %v2376, 0.0
      %v2415 = vadd.f32 %v2413, %v2414
      %v2416 = vsel %vm2298, %v2377, 0.0
      %v2417 = vadd.f32 %v2415, %v2416
      %v2418 = vsel %vm2298, %v2378, 0.0
      %v2419 = vadd.f32 %v2417, %v2418
      %v2420 = vsel %vm2298, %v2379, 0.0
      %v2421 = vadd.f32 %v2419, %v2420
      %v2422 = vsel %vm2298, %v2380, 0.0
      %v2423 = vadd.f32 %v2421, %v2422
      %v2424 = vsel %vm2298, %v2381, 0.0
      %v2425 = vadd.f32 %v2423, %v2424
      %v2426 = vsel %vm2298, %v2382, 0.0
      %v2427 = vadd.f32 %v2425, %v2426
      %v2428 = vsel %vm2298, %v2383, 0.0
      %v2429 = vadd.f32 %v2427, %v2428
      %v2430 = vsel %vm2298, %v2384, 0.0
      %v2431 = vadd.f32 %v2429, %v2430
      %v2432 = vsel %vm2298, %v2385, 0.0
      %v2433 = vadd.f32 %v2431, %v2432
      %v2434 = vsel %vm2298, %v2386, 0.0
      %v2435 = vadd.f32 %v2433, %v2434
      %v2436 = vsel %vm2298, %v2387, 0.0
      %v2437 = vadd.f32 %v2435, %v2436
      %v2438 = vsel %vm2298, %v2388, 0.0
      %v2439 = vadd.f32 %v2437, %v2438
      %v2440 = vsel %vm2298, %v2389, 0.0
      %v2441 = vadd.f32 %v2439, %v2440
      %v2442 = vsel %vm2298, %v2390, 0.0
      %v2443 = vadd.f32 %v2441, %v2442
      %v2444 = vsel %vm2298, %v2391, 0.0
      %v2445 = vadd.f32 %v2443, %v2444
      %v2446 = vsel %vm2298, %v2392, 0.0
      %v2447 = vadd.f32 %v2445, %v2446
      %v2448 = vsel %vm2298, %v2393, 0.0
      %v2449 = vadd.f32 %v2447, %v2448
      %v2450 = vsel %vm2298, %v2394, 0.0
      %v2451 = vadd.f32 %v2449, %v2450
      %v2452 = vsel %vm2298, %v2395, 0.0
      %v2453 = vadd.f32 %v2451, %v2452
      %v2454 = vsel %vm2298, %v2396, 0.0
      %v2455 = vadd.f32 %v2453, %v2454
      %v2456 = vsel %vm2298, %v2397, 0.0
      %v2457 = vadd.f32 %v2455, %v2456
      %v2458 = vsel %vm2298, %v2398, 0.0
      %v2459 = vadd.f32 %v2457, %v2458
      %v2460 = vsel %vm2298, %v2399, 0.0
      %v2461 = vadd.f32 %v2459, %v2460
      %v2462 = vsel %vm2298, %v2400, 0.0
      %v2463 = vadd.f32 %v2461, %v2462
      %v2464 = vrot.slane %v2463, 4
      %v2465 = vadd.f32 %v2463, %v2464
      %v2466 = vrot.slane %v2465, 2
      %v2467 = vadd.f32 %v2465, %v2466
      %v2468 = vrot.slane %v2467, 1
      %v2469 = vadd.f32 %v2467, %v2468
      %v2470 = vmul.f32 %v2469, %v518
      %v2471 = vmul.f32 %v2368, %v2368
      %v2472 = vsub.f32 %v2470, %v2471
      %v2473 = vmax.f32 %v2472, 0.0
      %v2474 = vsub.f32 %v2266, %v2368
      %v2475 = vsub.f32 %v2267, %v2368
      %v2476 = vsub.f32 %v2268, %v2368
      %v2477 = vsub.f32 %v2269, %v2368
      %v2478 = vsub.f32 %v2270, %v2368
      %v2479 = vsub.f32 %v2271, %v2368
      %v2480 = vsub.f32 %v2272, %v2368
      %v2481 = vsub.f32 %v2273, %v2368
      %v2482 = vsub.f32 %v2274, %v2368
      %v2483 = vsub.f32 %v2275, %v2368
      %v2484 = vsub.f32 %v2276, %v2368
      %v2485 = vsub.f32 %v2277, %v2368
      %v2486 = vsub.f32 %v2278, %v2368
      %v2487 = vsub.f32 %v2279, %v2368
      %v2488 = vsub.f32 %v2280, %v2368
      %v2489 = vsub.f32 %v2281, %v2368
      %v2490 = vsub.f32 %v2282, %v2368
      %v2491 = vsub.f32 %v2283, %v2368
      %v2492 = vsub.f32 %v2284, %v2368
      %v2493 = vsub.f32 %v2285, %v2368
      %v2494 = vsub.f32 %v2286, %v2368
      %v2495 = vsub.f32 %v2287, %v2368
      %v2496 = vsub.f32 %v2288, %v2368
      %v2497 = vsub.f32 %v2289, %v2368
      %v2498 = vsub.f32 %v2290, %v2368
      %v2499 = vsub.f32 %v2291, %v2368
      %v2500 = vsub.f32 %v2292, %v2368
      %v2501 = vsub.f32 %v2293, %v2368
      %v2502 = vsub.f32 %v2294, %v2368
      %v2503 = vsub.f32 %v2295, %v2368
      %v2504 = vsub.f32 %v2296, %v2368
      %v2505 = vsub.f32 %v2297, %v2368
      %v2506 = vadd.f32 %v2473, 1e-05
      %v2507 = vrsqrt.pop %v2506
      %v2508 = vmul.f32 %v2474, %v2507
      %v2509 = vmul.f32 %v2475, %v2507
      %v2510 = vmul.f32 %v2476, %v2507
      %v2511 = vmul.f32 %v2477, %v2507
      %v2512 = vmul.f32 %v2478, %v2507
      %v2513 = vmul.f32 %v2479, %v2507
      %v2514 = vmul.f32 %v2480, %v2507
      %v2515 = vmul.f32 %v2481, %v2507
      %v2516 = vmul.f32 %v2482, %v2507
      %v2517 = vmul.f32 %v2483, %v2507
      %v2518 = vmul.f32 %v2484, %v2507
      %v2519 = vmul.f32 %v2485, %v2507
      %v2520 = vmul.f32 %v2486, %v2507
      %v2521 = vmul.f32 %v2487, %v2507
      %v2522 = vmul.f32 %v2488, %v2507
      %v2523 = vmul.f32 %v2489, %v2507
      %v2524 = vmul.f32 %v2490, %v2507
      %v2525 = vmul.f32 %v2491, %v2507
      %v2526 = vmul.f32 %v2492, %v2507
      %v2527 = vmul.f32 %v2493, %v2507
      %v2528 = vmul.f32 %v2494, %v2507
      %v2529 = vmul.f32 %v2495, %v2507
      %v2530 = vmul.f32 %v2496, %v2507
      %v2531 = vmul.f32 %v2497, %v2507
      %v2532 = vmul.f32 %v2498, %v2507
      %v2533 = vmul.f32 %v2499, %v2507
      %v2534 = vmul.f32 %v2500, %v2507
      %v2535 = vmul.f32 %v2501, %v2507
      %v2536 = vmul.f32 %v2502, %v2507
      %v2537 = vmul.f32 %v2503, %v2507
      %v2538 = vmul.f32 %v2504, %v2507
      %v2539 = vmul.f32 %v2505, %v2507
      %v2540 = vmul.f32 %v2508, 0.6666667
      %v2541 = vmul.f32 %v2509, 0.6666667
      %v2542 = vmul.f32 %v2510, 0.6666667
      %v2543 = vmul.f32 %v2511, 0.6666667
      %v2544 = vmul.f32 %v2512, 0.6666667
      %v2545 = vmul.f32 %v2513, 0.6666667
      %v2546 = vmul.f32 %v2514, 0.6666667
      %v2547 = vmul.f32 %v2515, 0.6666667
      %v2548 = vmul.f32 %v2516, 0.6666667
      %v2549 = vmul.f32 %v2517, 0.6666667
      %v2550 = vmul.f32 %v2518, 0.6666667
      %v2551 = vmul.f32 %v2519, 0.6666667
      %v2552 = vmul.f32 %v2520, 0.6666667
      %v2553 = vmul.f32 %v2521, 0.6666667
      %v2554 = vmul.f32 %v2522, 0.6666667
      %v2555 = vmul.f32 %v2523, 0.6666667
      %v2556 = vmul.f32 %v2524, 0.6666667
      %v2557 = vmul.f32 %v2525, 0.6666667
      %v2558 = vmul.f32 %v2526, 0.6666667
      %v2559 = vmul.f32 %v2527, 0.6666667
      %v2560 = vmul.f32 %v2528, 0.6666667
      %v2561 = vmul.f32 %v2529, 0.6666667
      %v2562 = vmul.f32 %v2530, 0.6666667
      %v2563 = vmul.f32 %v2531, 0.6666667
      %v2564 = vmul.f32 %v2532, 0.6666667
      %v2565 = vmul.f32 %v2533, 0.6666667
      %v2566 = vmul.f32 %v2534, 0.6666667
      %v2567 = vmul.f32 %v2535, 0.6666667
      %v2568 = vmul.f32 %v2536, 0.6666667
      %v2569 = vmul.f32 %v2537, 0.6666667
      %v2570 = vmul.f32 %v2538, 0.6666667
      %v2571 = vmul.f32 %v2539, 0.6666667
      %v2572 = vmax.f32 %v2508, %v2540
      %v2573 = vmax.f32 %v2509, %v2541
      %v2574 = vmax.f32 %v2510, %v2542
      %v2575 = vmax.f32 %v2511, %v2543
      %v2576 = vmax.f32 %v2512, %v2544
      %v2577 = vmax.f32 %v2513, %v2545
      %v2578 = vmax.f32 %v2514, %v2546
      %v2579 = vmax.f32 %v2515, %v2547
      %v2580 = vmax.f32 %v2516, %v2548
      %v2581 = vmax.f32 %v2517, %v2549
      %v2582 = vmax.f32 %v2518, %v2550
      %v2583 = vmax.f32 %v2519, %v2551
      %v2584 = vmax.f32 %v2520, %v2552
      %v2585 = vmax.f32 %v2521, %v2553
      %v2586 = vmax.f32 %v2522, %v2554
      %v2587 = vmax.f32 %v2523, %v2555
      %v2588 = vmax.f32 %v2524, %v2556
      %v2589 = vmax.f32 %v2525, %v2557
      %v2590 = vmax.f32 %v2526, %v2558
      %v2591 = vmax.f32 %v2527, %v2559
      %v2592 = vmax.f32 %v2528, %v2560
      %v2593 = vmax.f32 %v2529, %v2561
      %v2594 = vmax.f32 %v2530, %v2562
      %v2595 = vmax.f32 %v2531, %v2563
      %v2596 = vmax.f32 %v2532, %v2564
      %v2597 = vmax.f32 %v2533, %v2565
      %v2598 = vmax.f32 %v2534, %v2566
      %v2599 = vmax.f32 %v2535, %v2567
      %v2600 = vmax.f32 %v2536, %v2568
      %v2601 = vmax.f32 %v2537, %v2569
      %v2602 = vmax.f32 %v2538, %v2570
      %v2603 = vmax.f32 %v2539, %v2571
      %v2604 = vpack.c.bf16 %v2573, %v2572
      %v2605 = vpack.c.bf16 %v2575, %v2574
      %v2606 = vpack.c.bf16 %v2577, %v2576
      %v2607 = vpack.c.bf16 %v2579, %v2578
      %v2608 = vpack.c.bf16 %v2581, %v2580
      %v2609 = vpack.c.bf16 %v2583, %v2582
      %v2610 = vpack.c.bf16 %v2585, %v2584
      %v2611 = vpack.c.bf16 %v2587, %v2586
      %v2612 = vpack.c.bf16 %v2589, %v2588
      %v2613 = vpack.c.bf16 %v2591, %v2590
      %v2614 = vpack.c.bf16 %v2593, %v2592
      %v2615 = vpack.c.bf16 %v2595, %v2594
      %v2616 = vpack.c.bf16 %v2597, %v2596
      %v2617 = vpack.c.bf16 %v2599, %v2598
      %v2618 = vpack.c.bf16 %v2601, %v2600
      %v2619 = vpack.c.bf16 %v2603, %v2602
      %v2621 = vshrl.u32 %v2604, 16
      %v2623 = vrot.slane %v2621, 7
      %v2624 = vshll.u32 %v2604, 16
      %v2626 = vor.u32 %v2623, %v2624
      %v2628 = vshrl.u32 %v2605, 16
      %v2630 = vrot.slane %v2628, 7
      %v2631 = vshll.u32 %v2605, 16
      %v2633 = vor.u32 %v2630, %v2631
      %v2635 = vshrl.u32 %v2606, 16
      %v2637 = vrot.slane %v2635, 7
      %v2638 = vshll.u32 %v2606, 16
      %v2640 = vor.u32 %v2637, %v2638
      %v2642 = vshrl.u32 %v2607, 16
      %v2644 = vrot.slane %v2642, 7
      %v2645 = vshll.u32 %v2607, 16
      %v2647 = vor.u32 %v2644, %v2645
      %v2649 = vshrl.u32 %v2608, 16
      %v2651 = vrot.slane %v2649, 7
      %v2652 = vshll.u32 %v2608, 16
      %v2654 = vor.u32 %v2651, %v2652
      %v2656 = vshrl.u32 %v2609, 16
      %v2658 = vrot.slane %v2656, 7
      %v2659 = vshll.u32 %v2609, 16
      %v2661 = vor.u32 %v2658, %v2659
      %v2663 = vshrl.u32 %v2610, 16
      %v2665 = vrot.slane %v2663, 7
      %v2666 = vshll.u32 %v2610, 16
      %v2668 = vor.u32 %v2665, %v2666
      %v2670 = vshrl.u32 %v2611, 16
      %v2672 = vrot.slane %v2670, 7
      %v2673 = vshll.u32 %v2611, 16
      %v2675 = vor.u32 %v2672, %v2673
      %v2677 = vshrl.u32 %v2612, 16
      %v2679 = vrot.slane %v2677, 7
      %v2680 = vshll.u32 %v2612, 16
      %v2682 = vor.u32 %v2679, %v2680
      %v2684 = vshrl.u32 %v2613, 16
      %v2686 = vrot.slane %v2684, 7
      %v2687 = vshll.u32 %v2613, 16
      %v2689 = vor.u32 %v2686, %v2687
      %v2691 = vshrl.u32 %v2614, 16
      %v2693 = vrot.slane %v2691, 7
      %v2694 = vshll.u32 %v2614, 16
      %v2696 = vor.u32 %v2693, %v2694
      %v2698 = vshrl.u32 %v2615, 16
      %v2700 = vrot.slane %v2698, 7
      %v2701 = vshll.u32 %v2615, 16
      %v2703 = vor.u32 %v2700, %v2701
      %v2705 = vshrl.u32 %v2616, 16
      %v2707 = vrot.slane %v2705, 7
      %v2708 = vshll.u32 %v2616, 16
      %v2710 = vor.u32 %v2707, %v2708
      %v2712 = vshrl.u32 %v2617, 16
      %v2714 = vrot.slane %v2712, 7
      %v2715 = vshll.u32 %v2617, 16
      %v2717 = vor.u32 %v2714, %v2715
      %v2719 = vshrl.u32 %v2618, 16
      %v2721 = vrot.slane %v2719, 7
      %v2722 = vshll.u32 %v2618, 16
      %v2724 = vor.u32 %v2721, %v2722
      %v2726 = vshrl.u32 %v2619, 16
      %v2728 = vrot.slane %v2726, 7
      %v2729 = vshll.u32 %v2619, 16
      %v2731 = vor.u32 %v2728, %v2729
      %v2748 = vsel %vm860, 0, %v2626
      %v2749 = vsel %vm860, 0, %v2633
      %v2750 = vsel %vm860, 0, %v2640
      %v2751 = vsel %vm860, 0, %v2647
      %v2752 = vsel %vm860, 0, %v2654
      %v2753 = vsel %vm860, 0, %v2661
      %v2754 = vsel %vm860, 0, %v2668
      %v2755 = vsel %vm860, 0, %v2675
      %v2756 = vsel %vm860, 0, %v2682
      %v2757 = vsel %vm860, 0, %v2689
      %v2758 = vsel %vm860, 0, %v2696
      %v2759 = vsel %vm860, 0, %v2703
      %v2760 = vsel %vm860, 0, %v2710
      %v2761 = vsel %vm860, 0, %v2717
      %v2762 = vsel %vm860, 0, %v2724
      %v2763 = vsel %vm860, 0, %v2731
      %v2764 = vrot.slane %v2624, 1
      %v2765 = vor.u32 %v2621, %v2764
      %v2766 = vrot.slane %v2631, 1
      %v2767 = vor.u32 %v2628, %v2766
      %v2768 = vrot.slane %v2638, 1
      %v2769 = vor.u32 %v2635, %v2768
      %v2770 = vrot.slane %v2645, 1
      %v2771 = vor.u32 %v2642, %v2770
      %v2772 = vrot.slane %v2652, 1
      %v2773 = vor.u32 %v2649, %v2772
      %v2774 = vrot.slane %v2659, 1
      %v2775 = vor.u32 %v2656, %v2774
      %v2776 = vrot.slane %v2666, 1
      %v2777 = vor.u32 %v2663, %v2776
      %v2778 = vrot.slane %v2673, 1
      %v2779 = vor.u32 %v2670, %v2778
      %v2780 = vrot.slane %v2680, 1
      %v2781 = vor.u32 %v2677, %v2780
      %v2782 = vrot.slane %v2687, 1
      %v2783 = vor.u32 %v2684, %v2782
      %v2784 = vrot.slane %v2694, 1
      %v2785 = vor.u32 %v2691, %v2784
      %v2786 = vrot.slane %v2701, 1
      %v2787 = vor.u32 %v2698, %v2786
      %v2788 = vrot.slane %v2708, 1
      %v2789 = vor.u32 %v2705, %v2788
      %v2790 = vrot.slane %v2715, 1
      %v2791 = vor.u32 %v2712, %v2790
      %v2792 = vrot.slane %v2722, 1
      %v2793 = vor.u32 %v2719, %v2792
      %v2794 = vrot.slane %v2729, 1
      %v2795 = vor.u32 %v2726, %v2794
      %v2812 = vsel %vm927, %v2765, 0
      %v2813 = vsel %vm927, %v2767, 0
      %v2814 = vsel %vm927, %v2769, 0
      %v2815 = vsel %vm927, %v2771, 0
      %v2816 = vsel %vm927, %v2773, 0
      %v2817 = vsel %vm927, %v2775, 0
      %v2818 = vsel %vm927, %v2777, 0
      %v2819 = vsel %vm927, %v2779, 0
      %v2820 = vsel %vm927, %v2781, 0
      %v2821 = vsel %vm927, %v2783, 0
      %v2822 = vsel %vm927, %v2785, 0
      %v2823 = vsel %vm927, %v2787, 0
      %v2824 = vsel %vm927, %v2789, 0
      %v2825 = vsel %vm927, %v2791, 0
      %v2826 = vsel %vm927, %v2793, 0
      %v2827 = vsel %vm927, %v2795, 0
      %2844 = vrot.lane.b32.xlu0 %v2604, 64
      %v2845 = vpop.permute.xlu0 %2844
      %2846 = vrot.lane.b32.xlu0 %v2605, 64
      %v2847 = vpop.permute.xlu0 %2846
      %2848 = vrot.lane.b32.xlu0 %v2606, 64
      %v2849 = vpop.permute.xlu0 %2848
      %2850 = vrot.lane.b32.xlu0 %v2607, 64
      %v2851 = vpop.permute.xlu0 %2850
      %2852 = vrot.lane.b32.xlu0 %v2608, 64
      %v2853 = vpop.permute.xlu0 %2852
      %2854 = vrot.lane.b32.xlu0 %v2609, 64
      %v2855 = vpop.permute.xlu0 %2854
      %2856 = vrot.lane.b32.xlu0 %v2610, 64
      %v2857 = vpop.permute.xlu0 %2856
      %2858 = vrot.lane.b32.xlu0 %v2611, 64
      %v2859 = vpop.permute.xlu0 %2858
      %2860 = vrot.lane.b32.xlu0 %v2612, 64
      %v2861 = vpop.permute.xlu0 %2860
      %2862 = vrot.lane.b32.xlu0 %v2613, 64
      %v2863 = vpop.permute.xlu0 %2862
      %2864 = vrot.lane.b32.xlu0 %v2614, 64
      %v2865 = vpop.permute.xlu0 %2864
      %2866 = vrot.lane.b32.xlu0 %v2615, 64
      %v2867 = vpop.permute.xlu0 %2866
      %2868 = vrot.lane.b32.xlu0 %v2616, 64
      %v2869 = vpop.permute.xlu0 %2868
      %2870 = vrot.lane.b32.xlu0 %v2617, 64
      %v2871 = vpop.permute.xlu0 %2870
      %2872 = vrot.lane.b32.xlu0 %v2618, 64
      %v2873 = vpop.permute.xlu0 %2872
      %2874 = vrot.lane.b32.xlu0 %v2619, 64
      %v2875 = vpop.permute.xlu0 %2874
      %v2878 = vsel %vm2298, %v2748, %v2845
      %v2881 = vsel %vm2298, %v2749, %v2847
      %v2884 = vsel %vm2298, %v2750, %v2849
      %v2887 = vsel %vm2298, %v2751, %v2851
      %v2890 = vsel %vm2298, %v2752, %v2853
      %v2893 = vsel %vm2298, %v2753, %v2855
      %v2896 = vsel %vm2298, %v2754, %v2857
      %v2899 = vsel %vm2298, %v2755, %v2859
      %v2902 = vsel %vm2298, %v2756, %v2861
      %v2905 = vsel %vm2298, %v2757, %v2863
      %v2908 = vsel %vm2298, %v2758, %v2865
      %v2911 = vsel %vm2298, %v2759, %v2867
      %v2914 = vsel %vm2298, %v2760, %v2869
      %v2917 = vsel %vm2298, %v2761, %v2871
      %v2920 = vsel %vm2298, %v2762, %v2873
      %v2923 = vsel %vm2298, %v2763, %v2875
      %v2956 = vunpack.c.l.b16 %v2878
      %v2957 = vunpack.c.l.b16 %v2812
      %v2958 = vunpack.c.h.b16 %v2878
      %v2959 = vunpack.c.h.b16 %v2812
      %v2960 = vunpack.c.l.b16 %v2881
      %v2961 = vunpack.c.l.b16 %v2813
      %v2962 = vunpack.c.h.b16 %v2881
      %v2963 = vunpack.c.h.b16 %v2813
      %v2964 = vunpack.c.l.b16 %v2884
      %v2965 = vunpack.c.l.b16 %v2814
      %v2966 = vunpack.c.h.b16 %v2884
      %v2967 = vunpack.c.h.b16 %v2814
      %v2968 = vunpack.c.l.b16 %v2887
      %v2969 = vunpack.c.l.b16 %v2815
      %v2970 = vunpack.c.h.b16 %v2887
      %v2971 = vunpack.c.h.b16 %v2815
      %v2972 = vunpack.c.l.b16 %v2890
      %v2973 = vunpack.c.l.b16 %v2816
      %v2974 = vunpack.c.h.b16 %v2890
      %v2975 = vunpack.c.h.b16 %v2816
      %v2976 = vunpack.c.l.b16 %v2893
      %v2977 = vunpack.c.l.b16 %v2817
      %v2978 = vunpack.c.h.b16 %v2893
      %v2979 = vunpack.c.h.b16 %v2817
      %v2980 = vunpack.c.l.b16 %v2896
      %v2981 = vunpack.c.l.b16 %v2818
      %v2982 = vunpack.c.h.b16 %v2896
      %v2983 = vunpack.c.h.b16 %v2818
      %v2984 = vunpack.c.l.b16 %v2899
      %v2985 = vunpack.c.l.b16 %v2819
      %v2986 = vunpack.c.h.b16 %v2899
      %v2987 = vunpack.c.h.b16 %v2819
      %v2988 = vunpack.c.l.b16 %v2902
      %v2989 = vunpack.c.l.b16 %v2820
      %v2990 = vunpack.c.h.b16 %v2902
      %v2991 = vunpack.c.h.b16 %v2820
      %v2992 = vunpack.c.l.b16 %v2905
      %v2993 = vunpack.c.l.b16 %v2821
      %v2994 = vunpack.c.h.b16 %v2905
      %v2995 = vunpack.c.h.b16 %v2821
      %v2996 = vunpack.c.l.b16 %v2908
      %v2997 = vunpack.c.l.b16 %v2822
      %v2998 = vunpack.c.h.b16 %v2908
      %v2999 = vunpack.c.h.b16 %v2822
      %v3000 = vunpack.c.l.b16 %v2911
      %v3001 = vunpack.c.l.b16 %v2823
      %v3002 = vunpack.c.h.b16 %v2911
      %v3003 = vunpack.c.h.b16 %v2823
      %v3004 = vunpack.c.l.b16 %v2914
      %v3005 = vunpack.c.l.b16 %v2824
      %v3006 = vunpack.c.h.b16 %v2914
      %v3007 = vunpack.c.h.b16 %v2824
      %v3008 = vunpack.c.l.b16 %v2917
      %v3009 = vunpack.c.l.b16 %v2825
      %v3010 = vunpack.c.h.b16 %v2917
      %v3011 = vunpack.c.h.b16 %v2825
      %v3012 = vunpack.c.l.b16 %v2920
      %v3013 = vunpack.c.l.b16 %v2826
      %v3014 = vunpack.c.h.b16 %v2920
      %v3015 = vunpack.c.h.b16 %v2826
      %v3016 = vunpack.c.l.b16 %v2923
      %v3017 = vunpack.c.l.b16 %v2827
      %v3018 = vunpack.c.h.b16 %v2923
      %v3019 = vunpack.c.h.b16 %v2827
      %v3020 = vpack.c.b16 %v2957, %v2956
      %v3021 = vpack.c.b16 %v2959, %v2958
      %v3022 = vpack.c.b16 %v2961, %v2960
      %v3023 = vpack.c.b16 %v2963, %v2962
      %v3024 = vpack.c.b16 %v2965, %v2964
      %v3025 = vpack.c.b16 %v2967, %v2966
      %v3026 = vpack.c.b16 %v2969, %v2968
      %v3027 = vpack.c.b16 %v2971, %v2970
      %v3028 = vpack.c.b16 %v2973, %v2972
      %v3029 = vpack.c.b16 %v2975, %v2974
      %v3030 = vpack.c.b16 %v2977, %v2976
      %v3031 = vpack.c.b16 %v2979, %v2978
      %v3032 = vpack.c.b16 %v2981, %v2980
      %v3033 = vpack.c.b16 %v2983, %v2982
      %v3034 = vpack.c.b16 %v2985, %v2984
      %v3035 = vpack.c.b16 %v2987, %v2986
      %v3036 = vpack.c.b16 %v2989, %v2988
      %v3037 = vpack.c.b16 %v2991, %v2990
      %v3038 = vpack.c.b16 %v2993, %v2992
      %v3039 = vpack.c.b16 %v2995, %v2994
      %v3040 = vpack.c.b16 %v2997, %v2996
      %v3041 = vpack.c.b16 %v2999, %v2998
      %v3042 = vpack.c.b16 %v3001, %v3000
      %v3043 = vpack.c.b16 %v3003, %v3002
      %v3044 = vpack.c.b16 %v3005, %v3004
      %v3045 = vpack.c.b16 %v3007, %v3006
      %v3046 = vpack.c.b16 %v3009, %v3008
      %v3047 = vpack.c.b16 %v3011, %v3010
      %v3048 = vpack.c.b16 %v3013, %v3012
      %v3049 = vpack.c.b16 %v3015, %v3014
      %v3050 = vpack.c.b16 %v3017, %v3016
      %v3051 = vpack.c.b16 %v3019, %v3018
      %s3084 = scalar_lea.vmem [#allocation3], 16
      %3085 = vst.msk [vmem:[%s3084] sm:$0xff] %vm369, %v3020
      %3086 = vst.msk [vmem:[%s3084 + $0x8] sm:$0xff] %vm369, %v3021
      %3087 = vst.msk [vmem:[%s3084 + $0x10] sm:$0xff] %vm369, %v3022
      %3088 = vst.msk [vmem:[%s3084 + $0x18] sm:$0xff] %vm369, %v3023
      %3089 = vst.msk [vmem:[%s3084 + $0x20] sm:$0xff] %vm369, %v3024
      %3090 = vst.msk [vmem:[%s3084 + $0x28] sm:$0xff] %vm369, %v3025
      %3091 = vst.msk [vmem:[%s3084 + $0x30] sm:$0xff] %vm369, %v3026
      %3092 = vst.msk [vmem:[%s3084 + $0x38] sm:$0xff] %vm369, %v3027
      %3093 = vst.msk [vmem:[%s3084 + $0x40] sm:$0xff] %vm369, %v3028
      %3094 = vst.msk [vmem:[%s3084 + $0x48] sm:$0xff] %vm369, %v3029
      %3095 = vst.msk [vmem:[%s3084 + $0x50] sm:$0xff] %vm369, %v3030
      %3096 = vst.msk [vmem:[%s3084 + $0x58] sm:$0xff] %vm369, %v3031
      %3097 = vst.msk [vmem:[%s3084 + $0x60] sm:$0xff] %vm369, %v3032
      %3098 = vst.msk [vmem:[%s3084 + $0x68] sm:$0xff] %vm369, %v3033
      %3099 = vst.msk [vmem:[%s3084 + $0x70] sm:$0xff] %vm369, %v3034
      %3100 = vst.msk [vmem:[%s3084 + $0x78] sm:$0xff] %vm369, %v3035
      %3101 = vst.msk [vmem:[%s3084 + $0x80] sm:$0xff] %vm369, %v3036
      %3102 = vst.msk [vmem:[%s3084 + $0x88] sm:$0xff] %vm369, %v3037
      %3103 = vst.msk [vmem:[%s3084 + $0x90] sm:$0xff] %vm369, %v3038
      %3104 = vst.msk [vmem:[%s3084 + $0x98] sm:$0xff] %vm369, %v3039
      %3105 = vst.msk [vmem:[%s3084 + $0xa0] sm:$0xff] %vm369, %v3040
      %3106 = vst.msk [vmem:[%s3084 + $0xa8] sm:$0xff] %vm369, %v3041
      %3107 = vst.msk [vmem:[%s3084 + $0xb0] sm:$0xff] %vm369, %v3042
      %3108 = vst.msk [vmem:[%s3084 + $0xb8] sm:$0xff] %vm369, %v3043
      %3109 = vst.msk [vmem:[%s3084 + $0xc0] sm:$0xff] %vm369, %v3044
      %3110 = vst.msk [vmem:[%s3084 + $0xc8] sm:$0xff] %vm369, %v3045
      %3111 = vst.msk [vmem:[%s3084 + $0xd0] sm:$0xff] %vm369, %v3046
      %3112 = vst.msk [vmem:[%s3084 + $0xd8] sm:$0xff] %vm369, %v3047
      %3113 = vst.msk [vmem:[%s3084 + $0xe0] sm:$0xff] %vm369, %v3048
      %3114 = vst.msk [vmem:[%s3084 + $0xe8] sm:$0xff] %vm369, %v3049
      %3115 = vst.msk [vmem:[%s3084 + $0xf0] sm:$0xff] %vm369, %v3050
      %3116 = vst.msk [vmem:[%s3084 + $0xf8] sm:$0xff] %vm369, %v3051
      %v3117 = vld [vmem:[#allocation3] sm:$0xff]
      %v3118 = vld [vmem:[#allocation3 + $0x8] sm:$0xff]
      %v3119 = vld [vmem:[#allocation3 + $0x10] sm:$0xff]
      %v3120 = vld [vmem:[#allocation3 + $0x18] sm:$0xff]
      %v3121 = vld [vmem:[#allocation3 + $0x20] sm:$0xff]
      %v3122 = vld [vmem:[#allocation3 + $0x28] sm:$0xff]
      %v3123 = vld [vmem:[#allocation3 + $0x30] sm:$0xff]
      %v3124 = vld [vmem:[#allocation3 + $0x38] sm:$0xff]
      %v3125 = vld [vmem:[#allocation3 + $0x40] sm:$0xff]
      %v3126 = vld [vmem:[#allocation3 + $0x48] sm:$0xff]
      %v3127 = vld [vmem:[#allocation3 + $0x50] sm:$0xff]
      %v3128 = vld [vmem:[#allocation3 + $0x58] sm:$0xff]
      %v3129 = vld [vmem:[#allocation3 + $0x60] sm:$0xff]
      %v3130 = vld [vmem:[#allocation3 + $0x68] sm:$0xff]
      %v3131 = vld [vmem:[#allocation3 + $0x70] sm:$0xff]
      %v3132 = vld [vmem:[#allocation3 + $0x78] sm:$0xff]
      %v3133 = vld [vmem:[#allocation3 + $0x80] sm:$0xff]
      %v3134 = vld [vmem:[#allocation3 + $0x88] sm:$0xff]
      %v3135 = vld [vmem:[#allocation3 + $0x90] sm:$0xff]
      %v3136 = vld [vmem:[#allocation3 + $0x98] sm:$0xff]
      %v3137 = vld [vmem:[#allocation3 + $0xa0] sm:$0xff]
      %v3138 = vld [vmem:[#allocation3 + $0xa8] sm:$0xff]
      %v3139 = vld [vmem:[#allocation3 + $0xb0] sm:$0xff]
      %v3140 = vld [vmem:[#allocation3 + $0xb8] sm:$0xff]
      %v3141 = vld [vmem:[#allocation3 + $0xc0] sm:$0xff]
      %v3142 = vld [vmem:[#allocation3 + $0xc8] sm:$0xff]
      %v3143 = vld [vmem:[#allocation3 + $0xd0] sm:$0xff]
      %v3144 = vld [vmem:[#allocation3 + $0xd8] sm:$0xff]
      %v3145 = vld [vmem:[#allocation3 + $0xe0] sm:$0xff]
      %v3146 = vld [vmem:[#allocation3 + $0xe8] sm:$0xff]
      %v3147 = vld [vmem:[#allocation3 + $0xf0] sm:$0xff]
      %v3148 = vld [vmem:[#allocation3 + $0xf8] sm:$0xff]
      %v3149 = vld [vmem:[%s4] sm:$0xf]
      %v3150 = vld [vmem:[%s4 + $0x4] sm:$0xf]
      %v3151 = vld [vmem:[%s4 + $0x8] sm:$0xf]
      %v3152 = vld [vmem:[%s4 + $0xc] sm:$0xf]
      %v3153 = vld [vmem:[%s4 + $0x10] sm:$0xf]
      %v3154 = vld [vmem:[%s4 + $0x14] sm:$0xf]
      %v3155 = vld [vmem:[%s4 + $0x18] sm:$0xf]
      %v3156 = vld [vmem:[%s4 + $0x1c] sm:$0xf]
      %v3157 = vld [vmem:[%s4 + $0x20] sm:$0xf]
      %v3158 = vld [vmem:[%s4 + $0x24] sm:$0xf]
      %v3159 = vld [vmem:[%s4 + $0x28] sm:$0xf]
      %v3160 = vld [vmem:[%s4 + $0x2c] sm:$0xf]
      %v3161 = vld [vmem:[%s4 + $0x30] sm:$0xf]
      %v3162 = vld [vmem:[%s4 + $0x34] sm:$0xf]
      %v3163 = vld [vmem:[%s4 + $0x38] sm:$0xf]
      %v3164 = vld [vmem:[%s4 + $0x3c] sm:$0xf]
      %v3165 = vld [vmem:[%s4 + $0x40] sm:$0xf]
      %v3166 = vld [vmem:[%s4 + $0x44] sm:$0xf]
      %v3167 = vld [vmem:[%s4 + $0x48] sm:$0xf]
      %v3168 = vld [vmem:[%s4 + $0x4c] sm:$0xf]
      %v3169 = vld [vmem:[%s4 + $0x50] sm:$0xf]
      %v3170 = vld [vmem:[%s4 + $0x54] sm:$0xf]
      %v3171 = vld [vmem:[%s4 + $0x58] sm:$0xf]
      %v3172 = vld [vmem:[%s4 + $0x5c] sm:$0xf]
      %v3173 = vld [vmem:[%s3084] sm:$0xff]
      %v3174 = vld [vmem:[%s3084 + $0x8] sm:$0xff]
      %v3175 = vld [vmem:[%s3084 + $0x10] sm:$0xff]
      %v3176 = vld [vmem:[%s3084 + $0x18] sm:$0xff]
      %v3177 = vld [vmem:[%s3084 + $0x20] sm:$0xff]
      %v3178 = vld [vmem:[%s3084 + $0x28] sm:$0xff]
      %v3179 = vld [vmem:[%s3084 + $0x30] sm:$0xff]
      %v3180 = vld [vmem:[%s3084 + $0x38] sm:$0xff]
      %v3181 = vld [vmem:[%s3084 + $0x40] sm:$0xff]
      %v3182 = vld [vmem:[%s3084 + $0x48] sm:$0xff]
      %v3183 = vld [vmem:[%s3084 + $0x50] sm:$0xff]
      %v3184 = vld [vmem:[%s3084 + $0x58] sm:$0xff]
      %v3185 = vld [vmem:[%s3084 + $0x60] sm:$0xff]
      %v3186 = vld [vmem:[%s3084 + $0x68] sm:$0xff]
      %v3187 = vld [vmem:[%s3084 + $0x70] sm:$0xff]
      %v3188 = vld [vmem:[%s3084 + $0x78] sm:$0xff]
      %v3189 = vld [vmem:[%s3084 + $0x80] sm:$0xff]
      %v3190 = vld [vmem:[%s3084 + $0x88] sm:$0xff]
      %v3191 = vld [vmem:[%s3084 + $0x90] sm:$0xff]
      %v3192 = vld [vmem:[%s3084 + $0x98] sm:$0xff]
      %v3193 = vld [vmem:[%s3084 + $0xa0] sm:$0xff]
      %v3194 = vld [vmem:[%s3084 + $0xa8] sm:$0xff]
      %v3195 = vld [vmem:[%s3084 + $0xb0] sm:$0xff]
      %v3196 = vld [vmem:[%s3084 + $0xb8] sm:$0xff]
      %v3197 = vld [vmem:[%s3084 + $0xc0] sm:$0xff]
      %v3198 = vld [vmem:[%s3084 + $0xc8] sm:$0xff]
      %v3199 = vld [vmem:[%s3084 + $0xd0] sm:$0xff]
      %v3200 = vld [vmem:[%s3084 + $0xd8] sm:$0xff]
      %v3201 = vld [vmem:[%s3084 + $0xe0] sm:$0xff]
      %v3202 = vld [vmem:[%s3084 + $0xe8] sm:$0xff]
      %v3203 = vld [vmem:[%s3084 + $0xf0] sm:$0xff]
      %v3204 = vld [vmem:[%s3084 + $0xf8] sm:$0xff]
      %s3205 = scalar_lea.vmem %s4, 96
      %v3206 = vld [vmem:[%s3205] sm:$0xf]
      %v3207 = vld [vmem:[%s3205 + $0x4] sm:$0xf]
      %v3208 = vld [vmem:[%s3205 + $0x8] sm:$0xf]
      %v3209 = vld [vmem:[%s3205 + $0xc] sm:$0xf]
      %v3210 = vld [vmem:[%s3205 + $0x10] sm:$0xf]
      %v3211 = vld [vmem:[%s3205 + $0x14] sm:$0xf]
      %v3212 = vld [vmem:[%s3205 + $0x18] sm:$0xf]
      %v3213 = vld [vmem:[%s3205 + $0x1c] sm:$0xf]
      %v3214 = vld [vmem:[%s3205 + $0x20] sm:$0xf]
      %v3215 = vld [vmem:[%s3205 + $0x24] sm:$0xf]
      %v3216 = vld [vmem:[%s3205 + $0x28] sm:$0xf]
      %v3217 = vld [vmem:[%s3205 + $0x2c] sm:$0xf]
      %v3218 = vld [vmem:[%s3205 + $0x30] sm:$0xf]
      %v3219 = vld [vmem:[%s3205 + $0x34] sm:$0xf]
      %v3220 = vld [vmem:[%s3205 + $0x38] sm:$0xf]
      %v3221 = vld [vmem:[%s3205 + $0x3c] sm:$0xf]
      %v3222 = vld [vmem:[%s3205 + $0x40] sm:$0xf]
      %v3223 = vld [vmem:[%s3205 + $0x44] sm:$0xf]
      %v3224 = vld [vmem:[%s3205 + $0x48] sm:$0xf]
      %v3225 = vld [vmem:[%s3205 + $0x4c] sm:$0xf]
      %v3226 = vld [vmem:[%s3205 + $0x50] sm:$0xf]
      %v3227 = vld [vmem:[%s3205 + $0x54] sm:$0xf]
      %v3228 = vld [vmem:[%s3205 + $0x58] sm:$0xf]
      %v3229 = vld [vmem:[%s3205 + $0x5c] sm:$0xf]
      %v3262 = vunpack.c.l.b16 %v3173
      %v3263 = vunpack.c.h.b16 %v3173
      %v3264 = vunpack.c.l.b16 %v3174
      %v3265 = vunpack.c.h.b16 %v3174
      %v3266 = vunpack.c.l.b16 %v3175
      %v3267 = vunpack.c.h.b16 %v3175
      %v3268 = vunpack.c.l.b16 %v3176
      %v3269 = vunpack.c.h.b16 %v3176
      %v3270 = vunpack.c.l.b16 %v3177
      %v3271 = vunpack.c.h.b16 %v3177
      %v3272 = vunpack.c.l.b16 %v3178
      %v3273 = vunpack.c.h.b16 %v3178
      %v3274 = vunpack.c.l.b16 %v3179
      %v3275 = vunpack.c.h.b16 %v3179
      %v3276 = vunpack.c.l.b16 %v3180
      %v3277 = vunpack.c.h.b16 %v3180
      %v3278 = vunpack.c.l.b16 %v3181
      %v3279 = vunpack.c.h.b16 %v3181
      %v3280 = vunpack.c.l.b16 %v3182
      %v3281 = vunpack.c.h.b16 %v3182
      %v3282 = vunpack.c.l.b16 %v3183
      %v3283 = vunpack.c.h.b16 %v3183
      %v3284 = vunpack.c.l.b16 %v3184
      %v3285 = vunpack.c.h.b16 %v3184
      %v3286 = vunpack.c.l.b16 %v3185
      %v3287 = vunpack.c.h.b16 %v3185
      %v3288 = vunpack.c.l.b16 %v3186
      %v3289 = vunpack.c.h.b16 %v3186
      %v3290 = vunpack.c.l.b16 %v3187
      %v3291 = vunpack.c.h.b16 %v3187
      %v3292 = vunpack.c.l.b16 %v3188
      %v3293 = vunpack.c.h.b16 %v3188
      %v3294 = vunpack.c.l.b16 %v3189
      %v3295 = vunpack.c.h.b16 %v3189
      %v3296 = vunpack.c.l.b16 %v3190
      %v3297 = vunpack.c.h.b16 %v3190
      %v3298 = vunpack.c.l.b16 %v3191
      %v3299 = vunpack.c.h.b16 %v3191
      %v3300 = vunpack.c.l.b16 %v3192
      %v3301 = vunpack.c.h.b16 %v3192
      %v3302 = vunpack.c.l.b16 %v3193
      %v3303 = vunpack.c.h.b16 %v3193
      %v3304 = vunpack.c.l.b16 %v3194
      %v3305 = vunpack.c.h.b16 %v3194
      %v3306 = vunpack.c.l.b16 %v3195
      %v3307 = vunpack.c.h.b16 %v3195
      %v3308 = vunpack.c.l.b16 %v3196
      %v3309 = vunpack.c.h.b16 %v3196
      %v3310 = vunpack.c.l.b16 %v3197
      %v3311 = vunpack.c.h.b16 %v3197
      %v3312 = vunpack.c.l.b16 %v3198
      %v3313 = vunpack.c.h.b16 %v3198
      %v3314 = vunpack.c.l.b16 %v3199
      %v3315 = vunpack.c.h.b16 %v3199
      %v3316 = vunpack.c.l.b16 %v3200
      %v3317 = vunpack.c.h.b16 %v3200
      %v3318 = vunpack.c.l.b16 %v3201
      %v3319 = vunpack.c.h.b16 %v3201
      %v3320 = vunpack.c.l.b16 %v3202
      %v3321 = vunpack.c.h.b16 %v3202
      %v3322 = vunpack.c.l.b16 %v3203
      %v3323 = vunpack.c.h.b16 %v3203
      %v3324 = vunpack.c.l.b16 %v3204
      %v3325 = vunpack.c.h.b16 %v3204
      %v3326 = vpack.c.b16 %v3264, %v3262
      %v3327 = vpack.c.b16 %v3265, %v3263
      %v3328 = vpack.c.b16 %v3268, %v3266
      %v3329 = vpack.c.b16 %v3269, %v3267
      %v3330 = vpack.c.b16 %v3272, %v3270
      %v3331 = vpack.c.b16 %v3273, %v3271
      %v3332 = vpack.c.b16 %v3276, %v3274
      %v3333 = vpack.c.b16 %v3277, %v3275
      %v3334 = vpack.c.b16 %v3280, %v3278
      %v3335 = vpack.c.b16 %v3281, %v3279
      %v3336 = vpack.c.b16 %v3284, %v3282
      %v3337 = vpack.c.b16 %v3285, %v3283
      %v3338 = vpack.c.b16 %v3288, %v3286
      %v3339 = vpack.c.b16 %v3289, %v3287
      %v3340 = vpack.c.b16 %v3292, %v3290
      %v3341 = vpack.c.b16 %v3293, %v3291
      %v3342 = vpack.c.b16 %v3296, %v3294
      %v3343 = vpack.c.b16 %v3297, %v3295
      %v3344 = vpack.c.b16 %v3300, %v3298
      %v3345 = vpack.c.b16 %v3301, %v3299
      %v3346 = vpack.c.b16 %v3304, %v3302
      %v3347 = vpack.c.b16 %v3305, %v3303
      %v3348 = vpack.c.b16 %v3308, %v3306
      %v3349 = vpack.c.b16 %v3309, %v3307
      %v3350 = vpack.c.b16 %v3312, %v3310
      %v3351 = vpack.c.b16 %v3313, %v3311
      %v3352 = vpack.c.b16 %v3316, %v3314
      %v3353 = vpack.c.b16 %v3317, %v3315
      %v3354 = vpack.c.b16 %v3320, %v3318
      %v3355 = vpack.c.b16 %v3321, %v3319
      %v3356 = vpack.c.b16 %v3324, %v3322
      %v3357 = vpack.c.b16 %v3325, %v3323
      %v3398 = vunpack.c.l.b16 %v3206
      %v3399 = vunpack.c.l.b16 %v3207
      %v3400 = vunpack.c.l.b16 %v3208
      %v3401 = vunpack.c.l.b16 %v3209
      %v3402 = vunpack.c.l.b16 %v3210
      %v3403 = vunpack.c.l.b16 %v3211
      %v3404 = vunpack.c.l.b16 %v3212
      %v3405 = vunpack.c.l.b16 %v3213
      %v3406 = vunpack.c.l.b16 %v3214
      %v3407 = vunpack.c.l.b16 %v3215
      %v3408 = vunpack.c.l.b16 %v3216
      %v3409 = vunpack.c.l.b16 %v3217
      %v3410 = vunpack.c.l.b16 %v3218
      %v3411 = vunpack.c.l.b16 %v3219
      %v3412 = vunpack.c.l.b16 %v3220
      %v3413 = vunpack.c.l.b16 %v3221
      %v3414 = vunpack.c.l.b16 %v3222
      %v3415 = vunpack.c.l.b16 %v3223
      %v3416 = vunpack.c.l.b16 %v3224
      %v3417 = vunpack.c.l.b16 %v3225
      %v3418 = vunpack.c.l.b16 %v3226
      %v3419 = vunpack.c.l.b16 %v3227
      %v3420 = vunpack.c.l.b16 %v3228
      %v3421 = vunpack.c.l.b16 %v3229
      %v3422 = vpack.c.b16 %v3399, %v3398
      %v3423 = vpack.c.b16 %v3401, %v3400
      %v3424 = vpack.c.b16 %v3403, %v3402
      %v3425 = vpack.c.b16 %v3405, %v3404
      %v3426 = vpack.c.b16 %v3407, %v3406
      %v3427 = vpack.c.b16 %v3409, %v3408
      %v3428 = vpack.c.b16 %v3411, %v3410
      %v3429 = vpack.c.b16 %v3413, %v3412
      %v3430 = vpack.c.b16 %v3415, %v3414
      %v3431 = vpack.c.b16 %v3417, %v3416
      %v3432 = vpack.c.b16 %v3419, %v3418
      %v3433 = vpack.c.b16 %v3421, %v3420
      %v3447 = vsel %vm2298, %v3327, 0
      %v3450 = vsel %vm2298, %v3329, 0
      %v3453 = vsel %vm2298, %v3331, 0
      %v3456 = vsel %vm2298, %v3333, 0
      %v3459 = vsel %vm2298, %v3335, 0
      %v3462 = vsel %vm2298, %v3337, 0
      %v3465 = vsel %vm2298, %v3339, 0
      %v3468 = vsel %vm2298, %v3341, 0
      %v3471 = vsel %vm2298, %v3343, 0
      %v3474 = vsel %vm2298, %v3345, 0
      %v3477 = vsel %vm2298, %v3347, 0
      %v3480 = vsel %vm2298, %v3349, 0
      %v3483 = vsel %vm2298, %v3351, 0
      %v3486 = vsel %vm2298, %v3353, 0
      %v3489 = vsel %vm2298, %v3355, 0
      %v3492 = vsel %vm2298, %v3357, 0
      %3494 = vmatprep.subr.bf16.mxu0 0
      %3495 = vmatpush1.bf16.msra.mxu0 %v3429
      %3496 = vmatprep.subr.bf16.mxu0 0
      %3497 = vmatpush1.bf16.msra.mxu0 %v3428
      %3498 = vmatprep.subr.bf16.mxu0 0
      %3499 = vmatpush1.bf16.msra.mxu0 %v3427
      %3500 = vmatprep.subr.bf16.mxu0 0
      %3501 = vmatpush1.bf16.msra.mxu0 %v3426
      %3502 = vmatprep.subr.bf16.mxu0 0
      %3503 = vmatpush1.bf16.msra.mxu0 %v3425
      %3504 = vmatprep.subr.bf16.mxu0 0
      %3505 = vmatpush1.bf16.msra.mxu0 %v3424
      %3506 = vmatprep.subr.bf16.mxu0 0
      %3507 = vmatpush1.bf16.msra.mxu0 %v3423
      %3508 = vmatprep.subr.bf16.mxu0 0
      %3509 = vmatpush1.bf16.msra.mxu0 %v3422
      %3510 = vmatprep.subr.bf16.mxu0 0
      %3511 = vmatpush2.bf16.msra.mxu0 0
      %3512 = vmatprep.subr.bf16.mxu0 0
      %3513 = vmatpush2.bf16.msra.mxu0 0
      %3514 = vmatprep.subr.bf16.mxu0 0
      %3515 = vmatpush2.bf16.msra.mxu0 0
      %3516 = vmatprep.subr.bf16.mxu0 0
      %3517 = vmatpush2.bf16.msra.mxu0 0
      %3518 = vmatprep.subr.bf16.mxu0 0
      %3519 = vmatpush2.bf16.msra.mxu0 %v3433
      %3520 = vmatprep.subr.bf16.mxu0 0
      %3521 = vmatpush2.bf16.msra.mxu0 %v3432
      %3522 = vmatprep.subr.bf16.mxu0 0
      %3523 = vmatpush2.bf16.msra.mxu0 %v3431
      %3524 = vmatprep.subr.bf16.mxu0 0
      %3525 = vmatpush2.bf16.msra.mxu0 %v3430
      %3526 = vmatprep.mubr.bf16.mxu0 %v3447
      %3527 = vmatmul.mubr.bf16.gmra.mxu0 %v3326
      %v3528 = vpop.f32.mrf.mxu0
      %v3529 = vadd.f32 0.0, %v3528
      %v3530 = vpop.f32.mrf.mxu0
      %v3531 = vpop.f32.mrf.mxu0
      %v3532 = vadd.f32 0.0, %v3531
      %v3533 = vpop.f32.mrf.mxu0
      %3534 = vmatprep.mubr.bf16.mxu0 %v3450
      %3535 = vmatmul.mubr.bf16.gmra.mxu0 %v3328
      %v3536 = vpop.f32.mrf.mxu0
      %v3537 = vadd.f32 0.0, %v3536
      %v3538 = vpop.f32.mrf.mxu0
      %v3539 = vpop.f32.mrf.mxu0
      %v3540 = vadd.f32 0.0, %v3539
      %v3541 = vpop.f32.mrf.mxu0
      %3542 = vmatprep.mubr.bf16.mxu0 %v3453
      %3543 = vmatmul.mubr.bf16.gmra.mxu0 %v3330
      %v3544 = vpop.f32.mrf.mxu0
      %v3545 = vadd.f32 0.0, %v3544
      %v3546 = vpop.f32.mrf.mxu0
      %v3547 = vpop.f32.mrf.mxu0
      %v3548 = vadd.f32 0.0, %v3547
      %v3549 = vpop.f32.mrf.mxu0
      %3550 = vmatprep.mubr.bf16.mxu0 %v3456
      %3551 = vmatmul.mubr.bf16.gmra.mxu0 %v3332
      %v3552 = vpop.f32.mrf.mxu0
      %v3553 = vadd.f32 0.0, %v3552
      %v3554 = vpop.f32.mrf.mxu0
      %v3555 = vpop.f32.mrf.mxu0
      %v3556 = vadd.f32 0.0, %v3555
      %v3557 = vpop.f32.mrf.mxu0
      %3558 = vmatprep.mubr.bf16.mxu0 %v3459
      %3559 = vmatmul.mubr.bf16.gmra.mxu0 %v3334
      %v3560 = vpop.f32.mrf.mxu0
      %v3561 = vadd.f32 0.0, %v3560
      %v3562 = vpop.f32.mrf.mxu0
      %v3563 = vpop.f32.mrf.mxu0
      %v3564 = vadd.f32 0.0, %v3563
      %v3565 = vpop.f32.mrf.mxu0
      %3566 = vmatprep.mubr.bf16.mxu0 %v3462
      %3567 = vmatmul.mubr.bf16.gmra.mxu0 %v3336
      %v3568 = vpop.f32.mrf.mxu0
      %v3569 = vadd.f32 0.0, %v3568
      %v3570 = vpop.f32.mrf.mxu0
      %v3571 = vpop.f32.mrf.mxu0
      %v3572 = vadd.f32 0.0, %v3571
      %v3573 = vpop.f32.mrf.mxu0
      %3574 = vmatprep.mubr.bf16.mxu0 %v3465
      %3575 = vmatmul.mubr.bf16.gmra.mxu0 %v3338
      %v3576 = vpop.f32.mrf.mxu0
      %v3577 = vadd.f32 0.0, %v3576
      %v3578 = vpop.f32.mrf.mxu0
      %v3579 = vpop.f32.mrf.mxu0
      %v3580 = vadd.f32 0.0, %v3579
      %v3581 = vpop.f32.mrf.mxu0
      %3582 = vmatprep.mubr.bf16.mxu0 %v3468
      %3583 = vmatmul.mubr.bf16.gmra.mxu0 %v3340
      %v3584 = vpop.f32.mrf.mxu0
      %v3585 = vadd.f32 0.0, %v3584
      %v3586 = vpop.f32.mrf.mxu0
      %v3587 = vpop.f32.mrf.mxu0
      %v3588 = vadd.f32 0.0, %v3587
      %v3589 = vpop.f32.mrf.mxu0
      %3590 = vmatprep.mubr.bf16.mxu0 %v3471
      %3591 = vmatmul.mubr.bf16.gmra.mxu0 %v3342
      %v3592 = vpop.f32.mrf.mxu0
      %v3593 = vadd.f32 0.0, %v3592
      %v3594 = vpop.f32.mrf.mxu0
      %v3595 = vpop.f32.mrf.mxu0
      %v3596 = vadd.f32 0.0, %v3595
      %v3597 = vpop.f32.mrf.mxu0
      %3598 = vmatprep.mubr.bf16.mxu0 %v3474
      %3599 = vmatmul.mubr.bf16.gmra.mxu0 %v3344
      %v3600 = vpop.f32.mrf.mxu0
      %v3601 = vadd.f32 0.0, %v3600
      %v3602 = vpop.f32.mrf.mxu0
      %v3603 = vpop.f32.mrf.mxu0
      %v3604 = vadd.f32 0.0, %v3603
      %v3605 = vpop.f32.mrf.mxu0
      %3606 = vmatprep.mubr.bf16.mxu0 %v3477
      %3607 = vmatmul.mubr.bf16.gmra.mxu0 %v3346
      %v3608 = vpop.f32.mrf.mxu0
      %v3609 = vadd.f32 0.0, %v3608
      %v3610 = vpop.f32.mrf.mxu0
      %v3611 = vpop.f32.mrf.mxu0
      %v3612 = vadd.f32 0.0, %v3611
      %v3613 = vpop.f32.mrf.mxu0
      %3614 = vmatprep.mubr.bf16.mxu0 %v3480
      %3615 = vmatmul.mubr.bf16.gmra.mxu0 %v3348
      %v3616 = vpop.f32.mrf.mxu0
      %v3617 = vadd.f32 0.0, %v3616
      %v3618 = vpop.f32.mrf.mxu0
      %v3619 = vpop.f32.mrf.mxu0
      %v3620 = vadd.f32 0.0, %v3619
      %v3621 = vpop.f32.mrf.mxu0
      %3622 = vmatprep.mubr.bf16.mxu0 %v3483
      %3623 = vmatmul.mubr.bf16.gmra.mxu0 %v3350
      %v3624 = vpop.f32.mrf.mxu0
      %v3625 = vadd.f32 0.0, %v3624
      %v3626 = vpop.f32.mrf.mxu0
      %v3627 = vpop.f32.mrf.mxu0
      %v3628 = vadd.f32 0.0, %v3627
      %v3629 = vpop.f32.mrf.mxu0
      %3630 = vmatprep.mubr.bf16.mxu0 %v3486
      %3631 = vmatmul.mubr.bf16.gmra.mxu0 %v3352
      %v3632 = vpop.f32.mrf.mxu0
      %v3633 = vadd.f32 0.0, %v3632
      %v3634 = vpop.f32.mrf.mxu0
      %v3635 = vpop.f32.mrf.mxu0
      %v3636 = vadd.f32 0.0, %v3635
      %v3637 = vpop.f32.mrf.mxu0
      %3638 = vmatprep.mubr.bf16.mxu0 %v3489
      %3639 = vmatmul.mubr.bf16.gmra.mxu0 %v3354
      %v3640 = vpop.f32.mrf.mxu0
      %v3641 = vadd.f32 0.0, %v3640
      %v3642 = vpop.f32.mrf.mxu0
      %v3643 = vpop.f32.mrf.mxu0
      %v3644 = vadd.f32 0.0, %v3643
      %v3645 = vpop.f32.mrf.mxu0
      %3646 = vmatprep.mubr.bf16.mxu0 %v3492
      %3647 = vmatmul.mubr.bf16.gmra.mxu0 %v3356
      %v3648 = vpop.f32.mrf.mxu0
      %v3649 = vadd.f32 0.0, %v3648
      %v3650 = vpop.f32.mrf.mxu0
      %v3651 = vpop.f32.mrf.mxu0
      %v3652 = vadd.f32 0.0, %v3651
      %v3653 = vpop.f32.mrf.mxu0
      %3654 = vdwg.mxu0
      %v3687 = vunpack.c.l.b16 %v3117
      %v3688 = vunpack.c.h.b16 %v3117
      %v3689 = vunpack.c.l.b16 %v3118
      %v3690 = vunpack.c.h.b16 %v3118
      %v3691 = vunpack.c.l.b16 %v3119
      %v3692 = vunpack.c.h.b16 %v3119
      %v3693 = vunpack.c.l.b16 %v3120
      %v3694 = vunpack.c.h.b16 %v3120
      %v3695 = vunpack.c.l.b16 %v3121
      %v3696 = vunpack.c.h.b16 %v3121
      %v3697 = vunpack.c.l.b16 %v3122
      %v3698 = vunpack.c.h.b16 %v3122
      %v3699 = vunpack.c.l.b16 %v3123
      %v3700 = vunpack.c.h.b16 %v3123
      %v3701 = vunpack.c.l.b16 %v3124
      %v3702 = vunpack.c.h.b16 %v3124
      %v3703 = vunpack.c.l.b16 %v3125
      %v3704 = vunpack.c.h.b16 %v3125
      %v3705 = vunpack.c.l.b16 %v3126
      %v3706 = vunpack.c.h.b16 %v3126
      %v3707 = vunpack.c.l.b16 %v3127
      %v3708 = vunpack.c.h.b16 %v3127
      %v3709 = vunpack.c.l.b16 %v3128
      %v3710 = vunpack.c.h.b16 %v3128
      %v3711 = vunpack.c.l.b16 %v3129
      %v3712 = vunpack.c.h.b16 %v3129
      %v3713 = vunpack.c.l.b16 %v3130
      %v3714 = vunpack.c.h.b16 %v3130
      %v3715 = vunpack.c.l.b16 %v3131
      %v3716 = vunpack.c.h.b16 %v3131
      %v3717 = vunpack.c.l.b16 %v3132
      %v3718 = vunpack.c.h.b16 %v3132
      %v3719 = vunpack.c.l.b16 %v3133
      %v3720 = vunpack.c.h.b16 %v3133
      %v3721 = vunpack.c.l.b16 %v3134
      %v3722 = vunpack.c.h.b16 %v3134
      %v3723 = vunpack.c.l.b16 %v3135
      %v3724 = vunpack.c.h.b16 %v3135
      %v3725 = vunpack.c.l.b16 %v3136
      %v3726 = vunpack.c.h.b16 %v3136
      %v3727 = vunpack.c.l.b16 %v3137
      %v3728 = vunpack.c.h.b16 %v3137
      %v3729 = vunpack.c.l.b16 %v3138
      %v3730 = vunpack.c.h.b16 %v3138
      %v3731 = vunpack.c.l.b16 %v3139
      %v3732 = vunpack.c.h.b16 %v3139
      %v3733 = vunpack.c.l.b16 %v3140
      %v3734 = vunpack.c.h.b16 %v3140
      %v3735 = vunpack.c.l.b16 %v3141
      %v3736 = vunpack.c.h.b16 %v3141
      %v3737 = vunpack.c.l.b16 %v3142
      %v3738 = vunpack.c.h.b16 %v3142
      %v3739 = vunpack.c.l.b16 %v3143
      %v3740 = vunpack.c.h.b16 %v3143
      %v3741 = vunpack.c.l.b16 %v3144
      %v3742 = vunpack.c.h.b16 %v3144
      %v3743 = vunpack.c.l.b16 %v3145
      %v3744 = vunpack.c.h.b16 %v3145
      %v3745 = vunpack.c.l.b16 %v3146
      %v3746 = vunpack.c.h.b16 %v3146
      %v3747 = vunpack.c.l.b16 %v3147
      %v3748 = vunpack.c.h.b16 %v3147
      %v3749 = vunpack.c.l.b16 %v3148
      %v3750 = vunpack.c.h.b16 %v3148
      %v3751 = vpack.c.b16 %v3689, %v3687
      %v3752 = vpack.c.b16 %v3690, %v3688
      %v3753 = vpack.c.b16 %v3693, %v3691
      %v3754 = vpack.c.b16 %v3694, %v3692
      %v3755 = vpack.c.b16 %v3697, %v3695
      %v3756 = vpack.c.b16 %v3698, %v3696
      %v3757 = vpack.c.b16 %v3701, %v3699
      %v3758 = vpack.c.b16 %v3702, %v3700
      %v3759 = vpack.c.b16 %v3705, %v3703
      %v3760 = vpack.c.b16 %v3706, %v3704
      %v3761 = vpack.c.b16 %v3709, %v3707
      %v3762 = vpack.c.b16 %v3710, %v3708
      %v3763 = vpack.c.b16 %v3713, %v3711
      %v3764 = vpack.c.b16 %v3714, %v3712
      %v3765 = vpack.c.b16 %v3717, %v3715
      %v3766 = vpack.c.b16 %v3718, %v3716
      %v3767 = vpack.c.b16 %v3721, %v3719
      %v3768 = vpack.c.b16 %v3722, %v3720
      %v3769 = vpack.c.b16 %v3725, %v3723
      %v3770 = vpack.c.b16 %v3726, %v3724
      %v3771 = vpack.c.b16 %v3729, %v3727
      %v3772 = vpack.c.b16 %v3730, %v3728
      %v3773 = vpack.c.b16 %v3733, %v3731
      %v3774 = vpack.c.b16 %v3734, %v3732
      %v3775 = vpack.c.b16 %v3737, %v3735
      %v3776 = vpack.c.b16 %v3738, %v3736
      %v3777 = vpack.c.b16 %v3741, %v3739
      %v3778 = vpack.c.b16 %v3742, %v3740
      %v3779 = vpack.c.b16 %v3745, %v3743
      %v3780 = vpack.c.b16 %v3746, %v3744
      %v3781 = vpack.c.b16 %v3749, %v3747
      %v3782 = vpack.c.b16 %v3750, %v3748
      %v3823 = vunpack.c.l.b16 %v3149
      %v3824 = vunpack.c.l.b16 %v3150
      %v3825 = vunpack.c.l.b16 %v3151
      %v3826 = vunpack.c.l.b16 %v3152
      %v3827 = vunpack.c.l.b16 %v3153
      %v3828 = vunpack.c.l.b16 %v3154
      %v3829 = vunpack.c.l.b16 %v3155
      %v3830 = vunpack.c.l.b16 %v3156
      %v3831 = vunpack.c.l.b16 %v3157
      %v3832 = vunpack.c.l.b16 %v3158
      %v3833 = vunpack.c.l.b16 %v3159
      %v3834 = vunpack.c.l.b16 %v3160
      %v3835 = vunpack.c.l.b16 %v3161
      %v3836 = vunpack.c.l.b16 %v3162
      %v3837 = vunpack.c.l.b16 %v3163
      %v3838 = vunpack.c.l.b16 %v3164
      %v3839 = vunpack.c.l.b16 %v3165
      %v3840 = vunpack.c.l.b16 %v3166
      %v3841 = vunpack.c.l.b16 %v3167
      %v3842 = vunpack.c.l.b16 %v3168
      %v3843 = vunpack.c.l.b16 %v3169
      %v3844 = vunpack.c.l.b16 %v3170
      %v3845 = vunpack.c.l.b16 %v3171
      %v3846 = vunpack.c.l.b16 %v3172
      %v3847 = vpack.c.b16 %v3824, %v3823
      %v3848 = vpack.c.b16 %v3826, %v3825
      %v3849 = vpack.c.b16 %v3828, %v3827
      %v3850 = vpack.c.b16 %v3830, %v3829
      %v3851 = vpack.c.b16 %v3832, %v3831
      %v3852 = vpack.c.b16 %v3834, %v3833
      %v3853 = vpack.c.b16 %v3836, %v3835
      %v3854 = vpack.c.b16 %v3838, %v3837
      %v3855 = vpack.c.b16 %v3840, %v3839
      %v3856 = vpack.c.b16 %v3842, %v3841
      %v3857 = vpack.c.b16 %v3844, %v3843
      %v3858 = vpack.c.b16 %v3846, %v3845
      %v3872 = vsel %vm2298, %v3752, 0
      %v3875 = vsel %vm2298, %v3754, 0
      %v3878 = vsel %vm2298, %v3756, 0
      %v3881 = vsel %vm2298, %v3758, 0
      %v3884 = vsel %vm2298, %v3760, 0
      %v3887 = vsel %vm2298, %v3762, 0
      %v3890 = vsel %vm2298, %v3764, 0
      %v3893 = vsel %vm2298, %v3766, 0
      %v3896 = vsel %vm2298, %v3768, 0
      %v3899 = vsel %vm2298, %v3770, 0
      %v3902 = vsel %vm2298, %v3772, 0
      %v3905 = vsel %vm2298, %v3774, 0
      %v3908 = vsel %vm2298, %v3776, 0
      %v3911 = vsel %vm2298, %v3778, 0
      %v3914 = vsel %vm2298, %v3780, 0
      %v3917 = vsel %vm2298, %v3782, 0
      %3919 = vmatprep.subr.bf16.mxu0 0
      %3920 = vmatpush1.bf16.msra.mxu0 %v3854
      %3921 = vmatprep.subr.bf16.mxu0 0
      %3922 = vmatpush1.bf16.msra.mxu0 %v3853
      %3923 = vmatprep.subr.bf16.mxu0 0
      %3924 = vmatpush1.bf16.msra.mxu0 %v3852
      %3925 = vmatprep.subr.bf16.mxu0 0
      %3926 = vmatpush1.bf16.msra.mxu0 %v3851
      %3927 = vmatprep.subr.bf16.mxu0 0
      %3928 = vmatpush1.bf16.msra.mxu0 %v3850
      %3929 = vmatprep.subr.bf16.mxu0 0
      %3930 = vmatpush1.bf16.msra.mxu0 %v3849
      %3931 = vmatprep.subr.bf16.mxu0 0
      %3932 = vmatpush1.bf16.msra.mxu0 %v3848
      %3933 = vmatprep.subr.bf16.mxu0 0
      %3934 = vmatpush1.bf16.msra.mxu0 %v3847
      %3935 = vmatprep.subr.bf16.mxu0 0
      %3936 = vmatpush2.bf16.msra.mxu0 0
      %3937 = vmatprep.subr.bf16.mxu0 0
      %3938 = vmatpush2.bf16.msra.mxu0 0
      %3939 = vmatprep.subr.bf16.mxu0 0
      %3940 = vmatpush2.bf16.msra.mxu0 0
      %3941 = vmatprep.subr.bf16.mxu0 0
      %3942 = vmatpush2.bf16.msra.mxu0 0
      %3943 = vmatprep.subr.bf16.mxu0 0
      %3944 = vmatpush2.bf16.msra.mxu0 %v3858
      %3945 = vmatprep.subr.bf16.mxu0 0
      %3946 = vmatpush2.bf16.msra.mxu0 %v3857
      %3947 = vmatprep.subr.bf16.mxu0 0
      %3948 = vmatpush2.bf16.msra.mxu0 %v3856
      %3949 = vmatprep.subr.bf16.mxu0 0
      %3950 = vmatpush2.bf16.msra.mxu0 %v3855
      %3951 = vmatprep.mubr.bf16.mxu0 %v3872
      %3952 = vmatmul.mubr.bf16.gmra.mxu0 %v3751
      %v3953 = vpop.f32.mrf.mxu0
      %v3954 = vadd.f32 %v3529, %v3953
      %v3955 = vpop.f32.mrf.mxu0
      %v3956 = vpop.f32.mrf.mxu0
      %v3957 = vadd.f32 %v3532, %v3956
      %v3958 = vpop.f32.mrf.mxu0
      %3959 = vmatprep.mubr.bf16.mxu0 %v3875
      %3960 = vmatmul.mubr.bf16.gmra.mxu0 %v3753
      %v3961 = vpop.f32.mrf.mxu0
      %v3962 = vadd.f32 %v3537, %v3961
      %v3963 = vpop.f32.mrf.mxu0
      %v3964 = vpop.f32.mrf.mxu0
      %v3965 = vadd.f32 %v3540, %v3964
      %v3966 = vpop.f32.mrf.mxu0
      %3967 = vmatprep.mubr.bf16.mxu0 %v3878
      %3968 = vmatmul.mubr.bf16.gmra.mxu0 %v3755
      %v3969 = vpop.f32.mrf.mxu0
      %v3970 = vadd.f32 %v3545, %v3969
      %v3971 = vpop.f32.mrf.mxu0
      %v3972 = vpop.f32.mrf.mxu0
      %v3973 = vadd.f32 %v3548, %v3972
      %v3974 = vpop.f32.mrf.mxu0
      %3975 = vmatprep.mubr.bf16.mxu0 %v3881
      %3976 = vmatmul.mubr.bf16.gmra.mxu0 %v3757
      %v3977 = vpop.f32.mrf.mxu0
      %v3978 = vadd.f32 %v3553, %v3977
      %v3979 = vpop.f32.mrf.mxu0
      %v3980 = vpop.f32.mrf.mxu0
      %v3981 = vadd.f32 %v3556, %v3980
      %v3982 = vpop.f32.mrf.mxu0
      %3983 = vmatprep.mubr.bf16.mxu0 %v3884
      %3984 = vmatmul.mubr.bf16.gmra.mxu0 %v3759
      %v3985 = vpop.f32.mrf.mxu0
      %v3986 = vadd.f32 %v3561, %v3985
      %v3987 = vpop.f32.mrf.mxu0
      %v3988 = vpop.f32.mrf.mxu0
      %v3989 = vadd.f32 %v3564, %v3988
      %v3990 = vpop.f32.mrf.mxu0
      %3991 = vmatprep.mubr.bf16.mxu0 %v3887
      %3992 = vmatmul.mubr.bf16.gmra.mxu0 %v3761
      %v3993 = vpop.f32.mrf.mxu0
      %v3994 = vadd.f32 %v3569, %v3993
      %v3995 = vpop.f32.mrf.mxu0
      %v3996 = vpop.f32.mrf.mxu0
      %v3997 = vadd.f32 %v3572, %v3996
      %v3998 = vpop.f32.mrf.mxu0
      %3999 = vmatprep.mubr.bf16.mxu0 %v3890
      %4000 = vmatmul.mubr.bf16.gmra.mxu0 %v3763
      %v4001 = vpop.f32.mrf.mxu0
      %v4002 = vadd.f32 %v3577, %v4001
      %v4003 = vpop.f32.mrf.mxu0
      %v4004 = vpop.f32.mrf.mxu0
      %v4005 = vadd.f32 %v3580, %v4004
      %v4006 = vpop.f32.mrf.mxu0
      %4007 = vmatprep.mubr.bf16.mxu0 %v3893
      %4008 = vmatmul.mubr.bf16.gmra.mxu0 %v3765
      %v4009 = vpop.f32.mrf.mxu0
      %v4010 = vadd.f32 %v3585, %v4009
      %v4011 = vpop.f32.mrf.mxu0
      %v4012 = vpop.f32.mrf.mxu0
      %v4013 = vadd.f32 %v3588, %v4012
      %v4014 = vpop.f32.mrf.mxu0
      %4015 = vmatprep.mubr.bf16.mxu0 %v3896
      %4016 = vmatmul.mubr.bf16.gmra.mxu0 %v3767
      %v4017 = vpop.f32.mrf.mxu0
      %v4018 = vadd.f32 %v3593, %v4017
      %v4019 = vpop.f32.mrf.mxu0
      %v4020 = vpop.f32.mrf.mxu0
      %v4021 = vadd.f32 %v3596, %v4020
      %v4022 = vpop.f32.mrf.mxu0
      %4023 = vmatprep.mubr.bf16.mxu0 %v3899
      %4024 = vmatmul.mubr.bf16.gmra.mxu0 %v3769
      %v4025 = vpop.f32.mrf.mxu0
      %v4026 = vadd.f32 %v3601, %v4025
      %v4027 = vpop.f32.mrf.mxu0
      %v4028 = vpop.f32.mrf.mxu0
      %v4029 = vadd.f32 %v3604, %v4028
      %v4030 = vpop.f32.mrf.mxu0
      %4031 = vmatprep.mubr.bf16.mxu0 %v3902
      %4032 = vmatmul.mubr.bf16.gmra.mxu0 %v3771
      %v4033 = vpop.f32.mrf.mxu0
      %v4034 = vadd.f32 %v3609, %v4033
      %v4035 = vpop.f32.mrf.mxu0
      %v4036 = vpop.f32.mrf.mxu0
      %v4037 = vadd.f32 %v3612, %v4036
      %v4038 = vpop.f32.mrf.mxu0
      %4039 = vmatprep.mubr.bf16.mxu0 %v3905
      %4040 = vmatmul.mubr.bf16.gmra.mxu0 %v3773
      %v4041 = vpop.f32.mrf.mxu0
      %v4042 = vadd.f32 %v3617, %v4041
      %v4043 = vpop.f32.mrf.mxu0
      %v4044 = vpop.f32.mrf.mxu0
      %v4045 = vadd.f32 %v3620, %v4044
      %v4046 = vpop.f32.mrf.mxu0
      %4047 = vmatprep.mubr.bf16.mxu0 %v3908
      %4048 = vmatmul.mubr.bf16.gmra.mxu0 %v3775
      %v4049 = vpop.f32.mrf.mxu0
      %v4050 = vadd.f32 %v3625, %v4049
      %v4051 = vpop.f32.mrf.mxu0
      %v4052 = vpop.f32.mrf.mxu0
      %v4053 = vadd.f32 %v3628, %v4052
      %v4054 = vpop.f32.mrf.mxu0
      %4055 = vmatprep.mubr.bf16.mxu0 %v3911
      %4056 = vmatmul.mubr.bf16.gmra.mxu0 %v3777
      %v4057 = vpop.f32.mrf.mxu0
      %v4058 = vadd.f32 %v3633, %v4057
      %v4059 = vpop.f32.mrf.mxu0
      %v4060 = vpop.f32.mrf.mxu0
      %v4061 = vadd.f32 %v3636, %v4060
      %v4062 = vpop.f32.mrf.mxu0
      %4063 = vmatprep.mubr.bf16.mxu0 %v3914
      %4064 = vmatmul.mubr.bf16.gmra.mxu0 %v3779
      %v4065 = vpop.f32.mrf.mxu0
      %v4066 = vadd.f32 %v3641, %v4065
      %v4067 = vpop.f32.mrf.mxu0
      %v4068 = vpop.f32.mrf.mxu0
      %v4069 = vadd.f32 %v3644, %v4068
      %v4070 = vpop.f32.mrf.mxu0
      %4071 = vmatprep.mubr.bf16.mxu0 %v3917
      %4072 = vmatmul.mubr.bf16.gmra.mxu0 %v3781
      %v4073 = vpop.f32.mrf.mxu0
      %v4074 = vadd.f32 %v3649, %v4073
      %v4075 = vpop.f32.mrf.mxu0
      %v4076 = vpop.f32.mrf.mxu0
      %v4077 = vadd.f32 %v3652, %v4076
      %v4078 = vpop.f32.mrf.mxu0
      %4079 = vdwg.mxu0
      %s4080 = scalar_lea.vmem [#allocation3], 32
      %v4081 = vld [vmem:[%s4080] sm:$0xff]
      %v4082 = vld [vmem:[%s4080 + $0x8] sm:$0xff]
      %v4083 = vld [vmem:[%s4080 + $0x10] sm:$0xff]
      %v4084 = vld [vmem:[%s4080 + $0x18] sm:$0xff]
      %v4085 = vld [vmem:[%s4080 + $0x20] sm:$0xff]
      %v4086 = vld [vmem:[%s4080 + $0x28] sm:$0xff]
      %v4087 = vld [vmem:[%s4080 + $0x30] sm:$0xff]
      %v4088 = vld [vmem:[%s4080 + $0x38] sm:$0xff]
      %v4089 = vld [vmem:[%s4080 + $0x40] sm:$0xff]
      %v4090 = vld [vmem:[%s4080 + $0x48] sm:$0xff]
      %v4091 = vld [vmem:[%s4080 + $0x50] sm:$0xff]
      %v4092 = vld [vmem:[%s4080 + $0x58] sm:$0xff]
      %v4093 = vld [vmem:[%s4080 + $0x60] sm:$0xff]
      %v4094 = vld [vmem:[%s4080 + $0x68] sm:$0xff]
      %v4095 = vld [vmem:[%s4080 + $0x70] sm:$0xff]
      %v4096 = vld [vmem:[%s4080 + $0x78] sm:$0xff]
      %v4097 = vld [vmem:[%s4080 + $0x80] sm:$0xff]
      %v4098 = vld [vmem:[%s4080 + $0x88] sm:$0xff]
      %v4099 = vld [vmem:[%s4080 + $0x90] sm:$0xff]
      %v4100 = vld [vmem:[%s4080 + $0x98] sm:$0xff]
      %v4101 = vld [vmem:[%s4080 + $0xa0] sm:$0xff]
      %v4102 = vld [vmem:[%s4080 + $0xa8] sm:$0xff]
      %v4103 = vld [vmem:[%s4080 + $0xb0] sm:$0xff]
      %v4104 = vld [vmem:[%s4080 + $0xb8] sm:$0xff]
      %v4105 = vld [vmem:[%s4080 + $0xc0] sm:$0xff]
      %v4106 = vld [vmem:[%s4080 + $0xc8] sm:$0xff]
      %v4107 = vld [vmem:[%s4080 + $0xd0] sm:$0xff]
      %v4108 = vld [vmem:[%s4080 + $0xd8] sm:$0xff]
      %v4109 = vld [vmem:[%s4080 + $0xe0] sm:$0xff]
      %v4110 = vld [vmem:[%s4080 + $0xe8] sm:$0xff]
      %v4111 = vld [vmem:[%s4080 + $0xf0] sm:$0xff]
      %v4112 = vld [vmem:[%s4080 + $0xf8] sm:$0xff]
      %s4113 = scalar_lea.vmem %s4, 192
      %v4114 = vld [vmem:[%s4113] sm:$0xf]
      %v4115 = vld [vmem:[%s4113 + $0x4] sm:$0xf]
      %v4116 = vld [vmem:[%s4113 + $0x8] sm:$0xf]
      %v4117 = vld [vmem:[%s4113 + $0xc] sm:$0xf]
      %v4118 = vld [vmem:[%s4113 + $0x10] sm:$0xf]
      %v4119 = vld [vmem:[%s4113 + $0x14] sm:$0xf]
      %v4120 = vld [vmem:[%s4113 + $0x18] sm:$0xf]
      %v4121 = vld [vmem:[%s4113 + $0x1c] sm:$0xf]
      %v4122 = vld [vmem:[%s4113 + $0x20] sm:$0xf]
      %v4123 = vld [vmem:[%s4113 + $0x24] sm:$0xf]
      %v4124 = vld [vmem:[%s4113 + $0x28] sm:$0xf]
      %v4125 = vld [vmem:[%s4113 + $0x2c] sm:$0xf]
      %v4126 = vld [vmem:[%s4113 + $0x30] sm:$0xf]
      %v4127 = vld [vmem:[%s4113 + $0x34] sm:$0xf]
      %v4128 = vld [vmem:[%s4113 + $0x38] sm:$0xf]
      %v4129 = vld [vmem:[%s4113 + $0x3c] sm:$0xf]
      %v4130 = vld [vmem:[%s4113 + $0x40] sm:$0xf]
      %v4131 = vld [vmem:[%s4113 + $0x44] sm:$0xf]
      %v4132 = vld [vmem:[%s4113 + $0x48] sm:$0xf]
      %v4133 = vld [vmem:[%s4113 + $0x4c] sm:$0xf]
      %v4134 = vld [vmem:[%s4113 + $0x50] sm:$0xf]
      %v4135 = vld [vmem:[%s4113 + $0x54] sm:$0xf]
      %v4136 = vld [vmem:[%s4113 + $0x58] sm:$0xf]
      %v4137 = vld [vmem:[%s4113 + $0x5c] sm:$0xf]
      %v4170 = vunpack.c.l.b16 %v4081
      %v4171 = vunpack.c.h.b16 %v4081
      %v4172 = vunpack.c.l.b16 %v4082
      %v4173 = vunpack.c.h.b16 %v4082
      %v4174 = vunpack.c.l.b16 %v4083
      %v4175 = vunpack.c.h.b16 %v4083
      %v4176 = vunpack.c.l.b16 %v4084
      %v4177 = vunpack.c.h.b16 %v4084
      %v4178 = vunpack.c.l.b16 %v4085
      %v4179 = vunpack.c.h.b16 %v4085
      %v4180 = vunpack.c.l.b16 %v4086
      %v4181 = vunpack.c.h.b16 %v4086
      %v4182 = vunpack.c.l.b16 %v4087
      %v4183 = vunpack.c.h.b16 %v4087
      %v4184 = vunpack.c.l.b16 %v4088
      %v4185 = vunpack.c.h.b16 %v4088
      %v4186 = vunpack.c.l.b16 %v4089
      %v4187 = vunpack.c.h.b16 %v4089
      %v4188 = vunpack.c.l.b16 %v4090
      %v4189 = vunpack.c.h.b16 %v4090
      %v4190 = vunpack.c.l.b16 %v4091
      %v4191 = vunpack.c.h.b16 %v4091
      %v4192 = vunpack.c.l.b16 %v4092
      %v4193 = vunpack.c.h.b16 %v4092
      %v4194 = vunpack.c.l.b16 %v4093
      %v4195 = vunpack.c.h.b16 %v4093
      %v4196 = vunpack.c.l.b16 %v4094
      %v4197 = vunpack.c.h.b16 %v4094
      %v4198 = vunpack.c.l.b16 %v4095
      %v4199 = vunpack.c.h.b16 %v4095
      %v4200 = vunpack.c.l.b16 %v4096
      %v4201 = vunpack.c.h.b16 %v4096
      %v4202 = vunpack.c.l.b16 %v4097
      %v4203 = vunpack.c.h.b16 %v4097
      %v4204 = vunpack.c.l.b16 %v4098
      %v4205 = vunpack.c.h.b16 %v4098
      %v4206 = vunpack.c.l.b16 %v4099
      %v4207 = vunpack.c.h.b16 %v4099
      %v4208 = vunpack.c.l.b16 %v4100
      %v4209 = vunpack.c.h.b16 %v4100
      %v4210 = vunpack.c.l.b16 %v4101
      %v4211 = vunpack.c.h.b16 %v4101
      %v4212 = vunpack.c.l.b16 %v4102
      %v4213 = vunpack.c.h.b16 %v4102
      %v4214 = vunpack.c.l.b16 %v4103
      %v4215 = vunpack.c.h.b16 %v4103
      %v4216 = vunpack.c.l.b16 %v4104
      %v4217 = vunpack.c.h.b16 %v4104
      %v4218 = vunpack.c.l.b16 %v4105
      %v4219 = vunpack.c.h.b16 %v4105
      %v4220 = vunpack.c.l.b16 %v4106
      %v4221 = vunpack.c.h.b16 %v4106
      %v4222 = vunpack.c.l.b16 %v4107
      %v4223 = vunpack.c.h.b16 %v4107
      %v4224 = vunpack.c.l.b16 %v4108
      %v4225 = vunpack.c.h.b16 %v4108
      %v4226 = vunpack.c.l.b16 %v4109
      %v4227 = vunpack.c.h.b16 %v4109
      %v4228 = vunpack.c.l.b16 %v4110
      %v4229 = vunpack.c.h.b16 %v4110
      %v4230 = vunpack.c.l.b16 %v4111
      %v4231 = vunpack.c.h.b16 %v4111
      %v4232 = vunpack.c.l.b16 %v4112
      %v4233 = vunpack.c.h.b16 %v4112
      %v4234 = vpack.c.b16 %v4172, %v4170
      %v4235 = vpack.c.b16 %v4173, %v4171
      %v4236 = vpack.c.b16 %v4176, %v4174
      %v4237 = vpack.c.b16 %v4177, %v4175
      %v4238 = vpack.c.b16 %v4180, %v4178
      %v4239 = vpack.c.b16 %v4181, %v4179
      %v4240 = vpack.c.b16 %v4184, %v4182
      %v4241 = vpack.c.b16 %v4185, %v4183
      %v4242 = vpack.c.b16 %v4188, %v4186
      %v4243 = vpack.c.b16 %v4189, %v4187
      %v4244 = vpack.c.b16 %v4192, %v4190
      %v4245 = vpack.c.b16 %v4193, %v4191
      %v4246 = vpack.c.b16 %v4196, %v4194
      %v4247 = vpack.c.b16 %v4197, %v4195
      %v4248 = vpack.c.b16 %v4200, %v4198
      %v4249 = vpack.c.b16 %v4201, %v4199
      %v4250 = vpack.c.b16 %v4204, %v4202
      %v4251 = vpack.c.b16 %v4205, %v4203
      %v4252 = vpack.c.b16 %v4208, %v4206
      %v4253 = vpack.c.b16 %v4209, %v4207
      %v4254 = vpack.c.b16 %v4212, %v4210
      %v4255 = vpack.c.b16 %v4213, %v4211
      %v4256 = vpack.c.b16 %v4216, %v4214
      %v4257 = vpack.c.b16 %v4217, %v4215
      %v4258 = vpack.c.b16 %v4220, %v4218
      %v4259 = vpack.c.b16 %v4221, %v4219
      %v4260 = vpack.c.b16 %v4224, %v4222
      %v4261 = vpack.c.b16 %v4225, %v4223
      %v4262 = vpack.c.b16 %v4228, %v4226
      %v4263 = vpack.c.b16 %v4229, %v4227
      %v4264 = vpack.c.b16 %v4232, %v4230
      %v4265 = vpack.c.b16 %v4233, %v4231
      %v4306 = vunpack.c.l.b16 %v4114
      %v4307 = vunpack.c.l.b16 %v4115
      %v4308 = vunpack.c.l.b16 %v4116
      %v4309 = vunpack.c.l.b16 %v4117
      %v4310 = vunpack.c.l.b16 %v4118
      %v4311 = vunpack.c.l.b16 %v4119
      %v4312 = vunpack.c.l.b16 %v4120
      %v4313 = vunpack.c.l.b16 %v4121
      %v4314 = vunpack.c.l.b16 %v4122
      %v4315 = vunpack.c.l.b16 %v4123
      %v4316 = vunpack.c.l.b16 %v4124
      %v4317 = vunpack.c.l.b16 %v4125
      %v4318 = vunpack.c.l.b16 %v4126
      %v4319 = vunpack.c.l.b16 %v4127
      %v4320 = vunpack.c.l.b16 %v4128
      %v4321 = vunpack.c.l.b16 %v4129
      %v4322 = vunpack.c.l.b16 %v4130
      %v4323 = vunpack.c.l.b16 %v4131
      %v4324 = vunpack.c.l.b16 %v4132
      %v4325 = vunpack.c.l.b16 %v4133
      %v4326 = vunpack.c.l.b16 %v4134
      %v4327 = vunpack.c.l.b16 %v4135
      %v4328 = vunpack.c.l.b16 %v4136
      %v4329 = vunpack.c.l.b16 %v4137
      %v4330 = vpack.c.b16 %v4307, %v4306
      %v4331 = vpack.c.b16 %v4309, %v4308
      %v4332 = vpack.c.b16 %v4311, %v4310
      %v4333 = vpack.c.b16 %v4313, %v4312
      %v4334 = vpack.c.b16 %v4315, %v4314
      %v4335 = vpack.c.b16 %v4317, %v4316
      %v4336 = vpack.c.b16 %v4319, %v4318
      %v4337 = vpack.c.b16 %v4321, %v4320
      %v4338 = vpack.c.b16 %v4323, %v4322
      %v4339 = vpack.c.b16 %v4325, %v4324
      %v4340 = vpack.c.b16 %v4327, %v4326
      %v4341 = vpack.c.b16 %v4329, %v4328
      %v4355 = vsel %vm2298, %v4235, 0
      %v4358 = vsel %vm2298, %v4237, 0
      %v4361 = vsel %vm2298, %v4239, 0
      %v4364 = vsel %vm2298, %v4241, 0
      %v4367 = vsel %vm2298, %v4243, 0
      %v4370 = vsel %vm2298, %v4245, 0
      %v4373 = vsel %vm2298, %v4247, 0
      %v4376 = vsel %vm2298, %v4249, 0
      %v4379 = vsel %vm2298, %v4251, 0
      %v4382 = vsel %vm2298, %v4253, 0
      %v4385 = vsel %vm2298, %v4255, 0
      %v4388 = vsel %vm2298, %v4257, 0
      %v4391 = vsel %vm2298, %v4259, 0
      %v4394 = vsel %vm2298, %v4261, 0
      %v4397 = vsel %vm2298, %v4263, 0
      %v4400 = vsel %vm2298, %v4265, 0
      %4402 = vmatprep.subr.bf16.mxu0 0
      %4403 = vmatpush1.bf16.msra.mxu0 %v4337
      %4404 = vmatprep.subr.bf16.mxu0 0
      %4405 = vmatpush1.bf16.msra.mxu0 %v4336
      %4406 = vmatprep.subr.bf16.mxu0 0
      %4407 = vmatpush1.bf16.msra.mxu0 %v4335
      %4408 = vmatprep.subr.bf16.mxu0 0
      %4409 = vmatpush1.bf16.msra.mxu0 %v4334
      %4410 = vmatprep.subr.bf16.mxu0 0
      %4411 = vmatpush1.bf16.msra.mxu0 %v4333
      %4412 = vmatprep.subr.bf16.mxu0 0
      %4413 = vmatpush1.bf16.msra.mxu0 %v4332
      %4414 = vmatprep.subr.bf16.mxu0 0
      %4415 = vmatpush1.bf16.msra.mxu0 %v4331
      %4416 = vmatprep.subr.bf16.mxu0 0
      %4417 = vmatpush1.bf16.msra.mxu0 %v4330
      %4418 = vmatprep.subr.bf16.mxu0 0
      %4419 = vmatpush2.bf16.msra.mxu0 0
      %4420 = vmatprep.subr.bf16.mxu0 0
      %4421 = vmatpush2.bf16.msra.mxu0 0
      %4422 = vmatprep.subr.bf16.mxu0 0
      %4423 = vmatpush2.bf16.msra.mxu0 0
      %4424 = vmatprep.subr.bf16.mxu0 0
      %4425 = vmatpush2.bf16.msra.mxu0 0
      %4426 = vmatprep.subr.bf16.mxu0 0
      %4427 = vmatpush2.bf16.msra.mxu0 %v4341
      %4428 = vmatprep.subr.bf16.mxu0 0
      %4429 = vmatpush2.bf16.msra.mxu0 %v4340
      %4430 = vmatprep.subr.bf16.mxu0 0
      %4431 = vmatpush2.bf16.msra.mxu0 %v4339
      %4432 = vmatprep.subr.bf16.mxu0 0
      %4433 = vmatpush2.bf16.msra.mxu0 %v4338
      %4434 = vmatprep.mubr.bf16.mxu0 %v4355
      %4435 = vmatmul.mubr.bf16.gmra.mxu0 %v4234
      %v4436 = vpop.f32.mrf.mxu0
      %v4437 = vadd.f32 0.0, %v4436
      %v4438 = vpop.f32.mrf.mxu0
      %v4439 = vpop.f32.mrf.mxu0
      %v4440 = vadd.f32 0.0, %v4439
      %v4441 = vpop.f32.mrf.mxu0
      %4442 = vmatprep.mubr.bf16.mxu0 %v4358
      %4443 = vmatmul.mubr.bf16.gmra.mxu0 %v4236
      %v4444 = vpop.f32.mrf.mxu0
      %v4445 = vadd.f32 0.0, %v4444
      %v4446 = vpop.f32.mrf.mxu0
      %v4447 = vpop.f32.mrf.mxu0
      %v4448 = vadd.f32 0.0, %v4447
      %v4449 = vpop.f32.mrf.mxu0
      %4450 = vmatprep.mubr.bf16.mxu0 %v4361
      %4451 = vmatmul.mubr.bf16.gmra.mxu0 %v4238
      %v4452 = vpop.f32.mrf.mxu0
      %v4453 = vadd.f32 0.0, %v4452
      %v4454 = vpop.f32.mrf.mxu0
      %v4455 = vpop.f32.mrf.mxu0
      %v4456 = vadd.f32 0.0, %v4455
      %v4457 = vpop.f32.mrf.mxu0
      %4458 = vmatprep.mubr.bf16.mxu0 %v4364
      %4459 = vmatmul.mubr.bf16.gmra.mxu0 %v4240
      %v4460 = vpop.f32.mrf.mxu0
      %v4461 = vadd.f32 0.0, %v4460
      %v4462 = vpop.f32.mrf.mxu0
      %v4463 = vpop.f32.mrf.mxu0
      %v4464 = vadd.f32 0.0, %v4463
      %v4465 = vpop.f32.mrf.mxu0
      %4466 = vmatprep.mubr.bf16.mxu0 %v4367
      %4467 = vmatmul.mubr.bf16.gmra.mxu0 %v4242
      %v4468 = vpop.f32.mrf.mxu0
      %v4469 = vadd.f32 0.0, %v4468
      %v4470 = vpop.f32.mrf.mxu0
      %v4471 = vpop.f32.mrf.mxu0
      %v4472 = vadd.f32 0.0, %v4471
      %v4473 = vpop.f32.mrf.mxu0
      %4474 = vmatprep.mubr.bf16.mxu0 %v4370
      %4475 = vmatmul.mubr.bf16.gmra.mxu0 %v4244
      %v4476 = vpop.f32.mrf.mxu0
      %v4477 = vadd.f32 0.0, %v4476
      %v4478 = vpop.f32.mrf.mxu0
      %v4479 = vpop.f32.mrf.mxu0
      %v4480 = vadd.f32 0.0, %v4479
      %v4481 = vpop.f32.mrf.mxu0
      %4482 = vmatprep.mubr.bf16.mxu0 %v4373
      %4483 = vmatmul.mubr.bf16.gmra.mxu0 %v4246
      %v4484 = vpop.f32.mrf.mxu0
      %v4485 = vadd.f32 0.0, %v4484
      %v4486 = vpop.f32.mrf.mxu0
      %v4487 = vpop.f32.mrf.mxu0
      %v4488 = vadd.f32 0.0, %v4487
      %v4489 = vpop.f32.mrf.mxu0
      %4490 = vmatprep.mubr.bf16.mxu0 %v4376
      %4491 = vmatmul.mubr.bf16.gmra.mxu0 %v4248
      %v4492 = vpop.f32.mrf.mxu0
      %v4493 = vadd.f32 0.0, %v4492
      %v4494 = vpop.f32.mrf.mxu0
      %v4495 = vpop.f32.mrf.mxu0
      %v4496 = vadd.f32 0.0, %v4495
      %v4497 = vpop.f32.mrf.mxu0
      %4498 = vmatprep.mubr.bf16.mxu0 %v4379
      %4499 = vmatmul.mubr.bf16.gmra.mxu0 %v4250
      %v4500 = vpop.f32.mrf.mxu0
      %v4501 = vadd.f32 0.0, %v4500
      %v4502 = vpop.f32.mrf.mxu0
      %v4503 = vpop.f32.mrf.mxu0
      %v4504 = vadd.f32 0.0, %v4503
      %v4505 = vpop.f32.mrf.mxu0
      %4506 = vmatprep.mubr.bf16.mxu0 %v4382
      %4507 = vmatmul.mubr.bf16.gmra.mxu0 %v4252
      %v4508 = vpop.f32.mrf.mxu0
      %v4509 = vadd.f32 0.0, %v4508
      %v4510 = vpop.f32.mrf.mxu0
      %v4511 = vpop.f32.mrf.mxu0
      %v4512 = vadd.f32 0.0, %v4511
      %v4513 = vpop.f32.mrf.mxu0
      %4514 = vmatprep.mubr.bf16.mxu0 %v4385
      %4515 = vmatmul.mubr.bf16.gmra.mxu0 %v4254
      %v4516 = vpop.f32.mrf.mxu0
      %v4517 = vadd.f32 0.0, %v4516
      %v4518 = vpop.f32.mrf.mxu0
      %v4519 = vpop.f32.mrf.mxu0
      %v4520 = vadd.f32 0.0, %v4519
      %v4521 = vpop.f32.mrf.mxu0
      %4522 = vmatprep.mubr.bf16.mxu0 %v4388
      %4523 = vmatmul.mubr.bf16.gmra.mxu0 %v4256
      %v4524 = vpop.f32.mrf.mxu0
      %v4525 = vadd.f32 0.0, %v4524
      %v4526 = vpop.f32.mrf.mxu0
      %v4527 = vpop.f32.mrf.mxu0
      %v4528 = vadd.f32 0.0, %v4527
      %v4529 = vpop.f32.mrf.mxu0
      %4530 = vmatprep.mubr.bf16.mxu0 %v4391
      %4531 = vmatmul.mubr.bf16.gmra.mxu0 %v4258
      %v4532 = vpop.f32.mrf.mxu0
      %v4533 = vadd.f32 0.0, %v4532
      %v4534 = vpop.f32.mrf.mxu0
      %v4535 = vpop.f32.mrf.mxu0
      %v4536 = vadd.f32 0.0, %v4535
      %v4537 = vpop.f32.mrf.mxu0
      %4538 = vmatprep.mubr.bf16.mxu0 %v4394
      %4539 = vmatmul.mubr.bf16.gmra.mxu0 %v4260
      %v4540 = vpop.f32.mrf.mxu0
      %v4541 = vadd.f32 0.0, %v4540
      %v4542 = vpop.f32.mrf.mxu0
      %v4543 = vpop.f32.mrf.mxu0
      %v4544 = vadd.f32 0.0, %v4543
      %v4545 = vpop.f32.mrf.mxu0
      %4546 = vmatprep.mubr.bf16.mxu0 %v4397
      %4547 = vmatmul.mubr.bf16.gmra.mxu0 %v4262
      %v4548 = vpop.f32.mrf.mxu0
      %v4549 = vadd.f32 0.0, %v4548
      %v4550 = vpop.f32.mrf.mxu0
      %v4551 = vpop.f32.mrf.mxu0
      %v4552 = vadd.f32 0.0, %v4551
      %v4553 = vpop.f32.mrf.mxu0
      %4554 = vmatprep.mubr.bf16.mxu0 %v4400
      %4555 = vmatmul.mubr.bf16.gmra.mxu0 %v4264
      %v4556 = vpop.f32.mrf.mxu0
      %v4557 = vadd.f32 0.0, %v4556
      %v4558 = vpop.f32.mrf.mxu0
      %v4559 = vpop.f32.mrf.mxu0
      %v4560 = vadd.f32 0.0, %v4559
      %v4561 = vpop.f32.mrf.mxu0
      %4562 = vdwg.mxu0
      %v4563 = vadd.f32 %v3954, %v4437
      %v4564 = vadd.f32 %v3957, %v4440
      %v4565 = vadd.f32 %v3962, %v4445
      %v4566 = vadd.f32 %v3965, %v4448
      %v4567 = vadd.f32 %v3970, %v4453
      %v4568 = vadd.f32 %v3973, %v4456
      %v4569 = vadd.f32 %v3978, %v4461
      %v4570 = vadd.f32 %v3981, %v4464
      %v4571 = vadd.f32 %v3986, %v4469
      %v4572 = vadd.f32 %v3989, %v4472
      %v4573 = vadd.f32 %v3994, %v4477
      %v4574 = vadd.f32 %v3997, %v4480
      %v4575 = vadd.f32 %v4002, %v4485
      %v4576 = vadd.f32 %v4005, %v4488
      %v4577 = vadd.f32 %v4010, %v4493
      %v4578 = vadd.f32 %v4013, %v4496
      %v4579 = vadd.f32 %v4018, %v4501
      %v4580 = vadd.f32 %v4021, %v4504
      %v4581 = vadd.f32 %v4026, %v4509
      %v4582 = vadd.f32 %v4029, %v4512
      %v4583 = vadd.f32 %v4034, %v4517
      %v4584 = vadd.f32 %v4037, %v4520
      %v4585 = vadd.f32 %v4042, %v4525
      %v4586 = vadd.f32 %v4045, %v4528
      %v4587 = vadd.f32 %v4050, %v4533
      %v4588 = vadd.f32 %v4053, %v4536
      %v4589 = vadd.f32 %v4058, %v4541
      %v4590 = vadd.f32 %v4061, %v4544
      %v4591 = vadd.f32 %v4066, %v4549
      %v4592 = vadd.f32 %v4069, %v4552
      %v4593 = vadd.f32 %v4074, %v4557
      %v4594 = vadd.f32 %v4077, %v4560
      %v4595 = vld [vmem:[%s5] sm:$0x1]
      %v4597 = vlaneseq
      %v4598 = vshrl.u32 %v4597, 7
      %v4599 = vsub.s32 0, %v4598
      %v4600 = vrot.slane %v4595, %v4599
      %v4602 = vadd.f32 %v4563, %v4600
      %v4603 = vadd.f32 %v4564, %v4600
      %v4604 = vadd.f32 %v4565, %v4600
      %v4605 = vadd.f32 %v4566, %v4600
      %v4606 = vadd.f32 %v4567, %v4600
      %v4607 = vadd.f32 %v4568, %v4600
      %v4608 = vadd.f32 %v4569, %v4600
      %v4609 = vadd.f32 %v4570, %v4600
      %v4610 = vadd.f32 %v4571, %v4600
      %v4611 = vadd.f32 %v4572, %v4600
      %v4612 = vadd.f32 %v4573, %v4600
      %v4613 = vadd.f32 %v4574, %v4600
      %v4614 = vadd.f32 %v4575, %v4600
      %v4615 = vadd.f32 %v4576, %v4600
      %v4616 = vadd.f32 %v4577, %v4600
      %v4617 = vadd.f32 %v4578, %v4600
      %v4618 = vadd.f32 %v4579, %v4600
      %v4619 = vadd.f32 %v4580, %v4600
      %v4620 = vadd.f32 %v4581, %v4600
      %v4621 = vadd.f32 %v4582, %v4600
      %v4622 = vadd.f32 %v4583, %v4600
      %v4623 = vadd.f32 %v4584, %v4600
      %v4624 = vadd.f32 %v4585, %v4600
      %v4625 = vadd.f32 %v4586, %v4600
      %v4626 = vadd.f32 %v4587, %v4600
      %v4627 = vadd.f32 %v4588, %v4600
      %v4628 = vadd.f32 %v4589, %v4600
      %v4629 = vadd.f32 %v4590, %v4600
      %v4630 = vadd.f32 %v4591, %v4600
      %v4631 = vadd.f32 %v4592, %v4600
      %v4632 = vadd.f32 %v4593, %v4600
      %v4633 = vadd.f32 %v4594, %v4600
      %v4634 = vmul.f32 %v4602, 0.6666667
      %v4635 = vmul.f32 %v4603, 0.6666667
      %v4636 = vmul.f32 %v4604, 0.6666667
      %v4637 = vmul.f32 %v4605, 0.6666667
      %v4638 = vmul.f32 %v4606, 0.6666667
      %v4639 = vmul.f32 %v4607, 0.6666667
      %v4640 = vmul.f32 %v4608, 0.6666667
      %v4641 = vmul.f32 %v4609, 0.6666667
      %v4642 = vmul.f32 %v4610, 0.6666667
      %v4643 = vmul.f32 %v4611, 0.6666667
      %v4644 = vmul.f32 %v4612, 0.6666667
      %v4645 = vmul.f32 %v4613, 0.6666667
      %v4646 = vmul.f32 %v4614, 0.6666667
      %v4647 = vmul.f32 %v4615, 0.6666667
      %v4648 = vmul.f32 %v4616, 0.6666667
      %v4649 = vmul.f32 %v4617, 0.6666667
      %v4650 = vmul.f32 %v4618, 0.6666667
      %v4651 = vmul.f32 %v4619, 0.6666667
      %v4652 = vmul.f32 %v4620, 0.6666667
      %v4653 = vmul.f32 %v4621, 0.6666667
      %v4654 = vmul.f32 %v4622, 0.6666667
      %v4655 = vmul.f32 %v4623, 0.6666667
      %v4656 = vmul.f32 %v4624, 0.6666667
      %v4657 = vmul.f32 %v4625, 0.6666667
      %v4658 = vmul.f32 %v4626, 0.6666667
      %v4659 = vmul.f32 %v4627, 0.6666667
      %v4660 = vmul.f32 %v4628, 0.6666667
      %v4661 = vmul.f32 %v4629, 0.6666667
      %v4662 = vmul.f32 %v4630, 0.6666667
      %v4663 = vmul.f32 %v4631, 0.6666667
      %v4664 = vmul.f32 %v4632, 0.6666667
      %v4665 = vmul.f32 %v4633, 0.6666667
      %v4666 = vmax.f32 %v4602, %v4634
      %v4667 = vmax.f32 %v4603, %v4635
      %v4668 = vmax.f32 %v4604, %v4636
      %v4669 = vmax.f32 %v4605, %v4637
      %v4670 = vmax.f32 %v4606, %v4638
      %v4671 = vmax.f32 %v4607, %v4639
      %v4672 = vmax.f32 %v4608, %v4640
      %v4673 = vmax.f32 %v4609, %v4641
      %v4674 = vmax.f32 %v4610, %v4642
      %v4675 = vmax.f32 %v4611, %v4643
      %v4676 = vmax.f32 %v4612, %v4644
      %v4677 = vmax.f32 %v4613, %v4645
      %v4678 = vmax.f32 %v4614, %v4646
      %v4679 = vmax.f32 %v4615, %v4647
      %v4680 = vmax.f32 %v4616, %v4648
      %v4681 = vmax.f32 %v4617, %v4649
      %v4682 = vmax.f32 %v4618, %v4650
      %v4683 = vmax.f32 %v4619, %v4651
      %v4684 = vmax.f32 %v4620, %v4652
      %v4685 = vmax.f32 %v4621, %v4653
      %v4686 = vmax.f32 %v4622, %v4654
      %v4687 = vmax.f32 %v4623, %v4655
      %v4688 = vmax.f32 %v4624, %v4656
      %v4689 = vmax.f32 %v4625, %v4657
      %v4690 = vmax.f32 %v4626, %v4658
      %v4691 = vmax.f32 %v4627, %v4659
      %v4692 = vmax.f32 %v4628, %v4660
      %v4693 = vmax.f32 %v4629, %v4661
      %v4694 = vmax.f32 %v4630, %v4662
      %v4695 = vmax.f32 %v4631, %v4663
      %v4696 = vmax.f32 %v4632, %v4664
      %v4697 = vmax.f32 %v4633, %v4665
      %v4698 = vpack.c.bf16 %v4667, %v4666
      %v4699 = vpack.c.bf16 %v4669, %v4668
      %v4700 = vpack.c.bf16 %v4671, %v4670
      %v4701 = vpack.c.bf16 %v4673, %v4672
      %v4702 = vpack.c.bf16 %v4675, %v4674
      %v4703 = vpack.c.bf16 %v4677, %v4676
      %v4704 = vpack.c.bf16 %v4679, %v4678
      %v4705 = vpack.c.bf16 %v4681, %v4680
      %v4706 = vpack.c.bf16 %v4683, %v4682
      %v4707 = vpack.c.bf16 %v4685, %v4684
      %v4708 = vpack.c.bf16 %v4687, %v4686
      %v4709 = vpack.c.bf16 %v4689, %v4688
      %v4710 = vpack.c.bf16 %v4691, %v4690
      %v4711 = vpack.c.bf16 %v4693, %v4692
      %v4712 = vpack.c.bf16 %v4695, %v4694
      %v4713 = vpack.c.bf16 %v4697, %v4696
      %v4715 = vshrl.u32 %v4698, 16
      %v4717 = vrot.slane %v4715, 7
      %v4718 = vshll.u32 %v4698, 16
      %v4720 = vor.u32 %v4717, %v4718
      %v4722 = vshrl.u32 %v4699, 16
      %v4724 = vrot.slane %v4722, 7
      %v4725 = vshll.u32 %v4699, 16
      %v4727 = vor.u32 %v4724, %v4725
      %v4729 = vshrl.u32 %v4700, 16
      %v4731 = vrot.slane %v4729, 7
      %v4732 = vshll.u32 %v4700, 16
      %v4734 = vor.u32 %v4731, %v4732
      %v4736 = vshrl.u32 %v4701, 16
      %v4738 = vrot.slane %v4736, 7
      %v4739 = vshll.u32 %v4701, 16
      %v4741 = vor.u32 %v4738, %v4739
      %v4743 = vshrl.u32 %v4702, 16
      %v4745 = vrot.slane %v4743, 7
      %v4746 = vshll.u32 %v4702, 16
      %v4748 = vor.u32 %v4745, %v4746
      %v4750 = vshrl.u32 %v4703, 16
      %v4752 = vrot.slane %v4750, 7
      %v4753 = vshll.u32 %v4703, 16
      %v4755 = vor.u32 %v4752, %v4753
      %v4757 = vshrl.u32 %v4704, 16
      %v4759 = vrot.slane %v4757, 7
      %v4760 = vshll.u32 %v4704, 16
      %v4762 = vor.u32 %v4759, %v4760
      %v4764 = vshrl.u32 %v4705, 16
      %v4766 = vrot.slane %v4764, 7
      %v4767 = vshll.u32 %v4705, 16
      %v4769 = vor.u32 %v4766, %v4767
      %v4771 = vshrl.u32 %v4706, 16
      %v4773 = vrot.slane %v4771, 7
      %v4774 = vshll.u32 %v4706, 16
      %v4776 = vor.u32 %v4773, %v4774
      %v4778 = vshrl.u32 %v4707, 16
      %v4780 = vrot.slane %v4778, 7
      %v4781 = vshll.u32 %v4707, 16
      %v4783 = vor.u32 %v4780, %v4781
      %v4785 = vshrl.u32 %v4708, 16
      %v4787 = vrot.slane %v4785, 7
      %v4788 = vshll.u32 %v4708, 16
      %v4790 = vor.u32 %v4787, %v4788
      %v4792 = vshrl.u32 %v4709, 16
      %v4794 = vrot.slane %v4792, 7
      %v4795 = vshll.u32 %v4709, 16
      %v4797 = vor.u32 %v4794, %v4795
      %v4799 = vshrl.u32 %v4710, 16
      %v4801 = vrot.slane %v4799, 7
      %v4802 = vshll.u32 %v4710, 16
      %v4804 = vor.u32 %v4801, %v4802
      %v4806 = vshrl.u32 %v4711, 16
      %v4808 = vrot.slane %v4806, 7
      %v4809 = vshll.u32 %v4711, 16
      %v4811 = vor.u32 %v4808, %v4809
      %v4813 = vshrl.u32 %v4712, 16
      %v4815 = vrot.slane %v4813, 7
      %v4816 = vshll.u32 %v4712, 16
      %v4818 = vor.u32 %v4815, %v4816
      %v4820 = vshrl.u32 %v4713, 16
      %v4822 = vrot.slane %v4820, 7
      %v4823 = vshll.u32 %v4713, 16
      %v4825 = vor.u32 %v4822, %v4823
      %v4842 = vsel %vm860, 0, %v4720
      %v4843 = vsel %vm860, 0, %v4727
      %v4844 = vsel %vm860, 0, %v4734
      %v4845 = vsel %vm860, 0, %v4741
      %v4846 = vsel %vm860, 0, %v4748
      %v4847 = vsel %vm860, 0, %v4755
      %v4848 = vsel %vm860, 0, %v4762
      %v4849 = vsel %vm860, 0, %v4769
      %v4850 = vsel %vm860, 0, %v4776
      %v4851 = vsel %vm860, 0, %v4783
      %v4852 = vsel %vm860, 0, %v4790
      %v4853 = vsel %vm860, 0, %v4797
      %v4854 = vsel %vm860, 0, %v4804
      %v4855 = vsel %vm860, 0, %v4811
      %v4856 = vsel %vm860, 0, %v4818
      %v4857 = vsel %vm860, 0, %v4825
      %v4858 = vrot.slane %v4718, 1
      %v4859 = vor.u32 %v4715, %v4858
      %v4860 = vrot.slane %v4725, 1
      %v4861 = vor.u32 %v4722, %v4860
      %v4862 = vrot.slane %v4732, 1
      %v4863 = vor.u32 %v4729, %v4862
      %v4864 = vrot.slane %v4739, 1
      %v4865 = vor.u32 %v4736, %v4864
      %v4866 = vrot.slane %v4746, 1
      %v4867 = vor.u32 %v4743, %v4866
      %v4868 = vrot.slane %v4753, 1
      %v4869 = vor.u32 %v4750, %v4868
      %v4870 = vrot.slane %v4760, 1
      %v4871 = vor.u32 %v4757, %v4870
      %v4872 = vrot.slane %v4767, 1
      %v4873 = vor.u32 %v4764, %v4872
      %v4874 = vrot.slane %v4774, 1
      %v4875 = vor.u32 %v4771, %v4874
      %v4876 = vrot.slane %v4781, 1
      %v4877 = vor.u32 %v4778, %v4876
      %v4878 = vrot.slane %v4788, 1
      %v4879 = vor.u32 %v4785, %v4878
      %v4880 = vrot.slane %v4795, 1
      %v4881 = vor.u32 %v4792, %v4880
      %v4882 = vrot.slane %v4802, 1
      %v4883 = vor.u32 %v4799, %v4882
      %v4884 = vrot.slane %v4809, 1
      %v4885 = vor.u32 %v4806, %v4884
      %v4886 = vrot.slane %v4816, 1
      %v4887 = vor.u32 %v4813, %v4886
      %v4888 = vrot.slane %v4823, 1
      %v4889 = vor.u32 %v4820, %v4888
      %v4906 = vsel %vm927, %v4859, 0
      %v4907 = vsel %vm927, %v4861, 0
      %v4908 = vsel %vm927, %v4863, 0
      %v4909 = vsel %vm927, %v4865, 0
      %v4910 = vsel %vm927, %v4867, 0
      %v4911 = vsel %vm927, %v4869, 0
      %v4912 = vsel %vm927, %v4871, 0
      %v4913 = vsel %vm927, %v4873, 0
      %v4914 = vsel %vm927, %v4875, 0
      %v4915 = vsel %vm927, %v4877, 0
      %v4916 = vsel %vm927, %v4879, 0
      %v4917 = vsel %vm927, %v4881, 0
      %v4918 = vsel %vm927, %v4883, 0
      %v4919 = vsel %vm927, %v4885, 0
      %v4920 = vsel %vm927, %v4887, 0
      %v4921 = vsel %vm927, %v4889, 0
      %v4970 = vunpack.c.l.b16 %v4842
      %v4971 = vunpack.c.l.b16 %v4698
      %v4972 = vunpack.c.l.b16 %v4906
      %v4973 = vunpack.c.h.b16 %v4842
      %v4974 = vunpack.c.h.b16 %v4698
      %v4975 = vunpack.c.h.b16 %v4906
      %v4976 = vunpack.c.l.b16 %v4843
      %v4977 = vunpack.c.l.b16 %v4699
      %v4978 = vunpack.c.l.b16 %v4907
      %v4979 = vunpack.c.h.b16 %v4843
      %v4980 = vunpack.c.h.b16 %v4699
      %v4981 = vunpack.c.h.b16 %v4907
      %v4982 = vunpack.c.l.b16 %v4844
      %v4983 = vunpack.c.l.b16 %v4700
      %v4984 = vunpack.c.l.b16 %v4908
      %v4985 = vunpack.c.h.b16 %v4844
      %v4986 = vunpack.c.h.b16 %v4700
      %v4987 = vunpack.c.h.b16 %v4908
      %v4988 = vunpack.c.l.b16 %v4845
      %v4989 = vunpack.c.l.b16 %v4701
      %v4990 = vunpack.c.l.b16 %v4909
      %v4991 = vunpack.c.h.b16 %v4845
      %v4992 = vunpack.c.h.b16 %v4701
      %v4993 = vunpack.c.h.b16 %v4909
      %v4994 = vunpack.c.l.b16 %v4846
      %v4995 = vunpack.c.l.b16 %v4702
      %v4996 = vunpack.c.l.b16 %v4910
      %v4997 = vunpack.c.h.b16 %v4846
      %v4998 = vunpack.c.h.b16 %v4702
      %v4999 = vunpack.c.h.b16 %v4910
      %v5000 = vunpack.c.l.b16 %v4847
      %v5001 = vunpack.c.l.b16 %v4703
      %v5002 = vunpack.c.l.b16 %v4911
      %v5003 = vunpack.c.h.b16 %v4847
      %v5004 = vunpack.c.h.b16 %v4703
      %v5005 = vunpack.c.h.b16 %v4911
      %v5006 = vunpack.c.l.b16 %v4848
      %v5007 = vunpack.c.l.b16 %v4704
      %v5008 = vunpack.c.l.b16 %v4912
      %v5009 = vunpack.c.h.b16 %v4848
      %v5010 = vunpack.c.h.b16 %v4704
      %v5011 = vunpack.c.h.b16 %v4912
      %v5012 = vunpack.c.l.b16 %v4849
      %v5013 = vunpack.c.l.b16 %v4705
      %v5014 = vunpack.c.l.b16 %v4913
      %v5015 = vunpack.c.h.b16 %v4849
      %v5016 = vunpack.c.h.b16 %v4705
      %v5017 = vunpack.c.h.b16 %v4913
      %v5018 = vunpack.c.l.b16 %v4850
      %v5019 = vunpack.c.l.b16 %v4706
      %v5020 = vunpack.c.l.b16 %v4914
      %v5021 = vunpack.c.h.b16 %v4850
      %v5022 = vunpack.c.h.b16 %v4706
      %v5023 = vunpack.c.h.b16 %v4914
      %v5024 = vunpack.c.l.b16 %v4851
      %v5025 = vunpack.c.l.b16 %v4707
      %v5026 = vunpack.c.l.b16 %v4915
      %v5027 = vunpack.c.h.b16 %v4851
      %v5028 = vunpack.c.h.b16 %v4707
      %v5029 = vunpack.c.h.b16 %v4915
      %v5030 = vunpack.c.l.b16 %v4852
      %v5031 = vunpack.c.l.b16 %v4708
      %v5032 = vunpack.c.l.b16 %v4916
      %v5033 = vunpack.c.h.b16 %v4852
      %v5034 = vunpack.c.h.b16 %v4708
      %v5035 = vunpack.c.h.b16 %v4916
      %v5036 = vunpack.c.l.b16 %v4853
      %v5037 = vunpack.c.l.b16 %v4709
      %v5038 = vunpack.c.l.b16 %v4917
      %v5039 = vunpack.c.h.b16 %v4853
      %v5040 = vunpack.c.h.b16 %v4709
      %v5041 = vunpack.c.h.b16 %v4917
      %v5042 = vunpack.c.l.b16 %v4854
      %v5043 = vunpack.c.l.b16 %v4710
      %v5044 = vunpack.c.l.b16 %v4918
      %v5045 = vunpack.c.h.b16 %v4854
      %v5046 = vunpack.c.h.b16 %v4710
      %v5047 = vunpack.c.h.b16 %v4918
      %v5048 = vunpack.c.l.b16 %v4855
      %v5049 = vunpack.c.l.b16 %v4711
      %v5050 = vunpack.c.l.b16 %v4919
      %v5051 = vunpack.c.h.b16 %v4855
      %v5052 = vunpack.c.h.b16 %v4711
      %v5053 = vunpack.c.h.b16 %v4919
      %v5054 = vunpack.c.l.b16 %v4856
      %v5055 = vunpack.c.l.b16 %v4712
      %v5056 = vunpack.c.l.b16 %v4920
      %v5057 = vunpack.c.h.b16 %v4856
      %v5058 = vunpack.c.h.b16 %v4712
      %v5059 = vunpack.c.h.b16 %v4920
      %v5060 = vunpack.c.l.b16 %v4857
      %v5061 = vunpack.c.l.b16 %v4713
      %v5062 = vunpack.c.l.b16 %v4921
      %v5063 = vunpack.c.h.b16 %v4857
      %v5064 = vunpack.c.h.b16 %v4713
      %v5065 = vunpack.c.h.b16 %v4921
      %v5066 = vpack.c.b16 %v4971, %v4970
      %v5067 = vpack.c.b16 %v4972, %v4972
      %v5068 = vpack.c.b16 %v4974, %v4973
      %v5069 = vpack.c.b16 %v4975, %v4975
      %v5070 = vpack.c.b16 %v4977, %v4976
      %v5071 = vpack.c.b16 %v4978, %v4978
      %v5072 = vpack.c.b16 %v4980, %v4979
      %v5073 = vpack.c.b16 %v4981, %v4981
      %v5074 = vpack.c.b16 %v4983, %v4982
      %v5075 = vpack.c.b16 %v4984, %v4984
      %v5076 = vpack.c.b16 %v4986, %v4985
      %v5077 = vpack.c.b16 %v4987, %v4987
      %v5078 = vpack.c.b16 %v4989, %v4988
      %v5079 = vpack.c.b16 %v4990, %v4990
      %v5080 = vpack.c.b16 %v4992, %v4991
      %v5081 = vpack.c.b16 %v4993, %v4993
      %v5082 = vpack.c.b16 %v4995, %v4994
      %v5083 = vpack.c.b16 %v4996, %v4996
      %v5084 = vpack.c.b16 %v4998, %v4997
      %v5085 = vpack.c.b16 %v4999, %v4999
      %v5086 = vpack.c.b16 %v5001, %v5000
      %v5087 = vpack.c.b16 %v5002, %v5002
      %v5088 = vpack.c.b16 %v5004, %v5003
      %v5089 = vpack.c.b16 %v5005, %v5005
      %v5090 = vpack.c.b16 %v5007, %v5006
      %v5091 = vpack.c.b16 %v5008, %v5008
      %v5092 = vpack.c.b16 %v5010, %v5009
      %v5093 = vpack.c.b16 %v5011, %v5011
      %v5094 = vpack.c.b16 %v5013, %v5012
      %v5095 = vpack.c.b16 %v5014, %v5014
      %v5096 = vpack.c.b16 %v5016, %v5015
      %v5097 = vpack.c.b16 %v5017, %v5017
      %v5098 = vpack.c.b16 %v5019, %v5018
      %v5099 = vpack.c.b16 %v5020, %v5020
      %v5100 = vpack.c.b16 %v5022, %v5021
      %v5101 = vpack.c.b16 %v5023, %v5023
      %v5102 = vpack.c.b16 %v5025, %v5024
      %v5103 = vpack.c.b16 %v5026, %v5026
      %v5104 = vpack.c.b16 %v5028, %v5027
      %v5105 = vpack.c.b16 %v5029, %v5029
      %v5106 = vpack.c.b16 %v5031, %v5030
      %v5107 = vpack.c.b16 %v5032, %v5032
      %v5108 = vpack.c.b16 %v5034, %v5033
      %v5109 = vpack.c.b16 %v5035, %v5035
      %v5110 = vpack.c.b16 %v5037, %v5036
      %v5111 = vpack.c.b16 %v5038, %v5038
      %v5112 = vpack.c.b16 %v5040, %v5039
      %v5113 = vpack.c.b16 %v5041, %v5041
      %v5114 = vpack.c.b16 %v5043, %v5042
      %v5115 = vpack.c.b16 %v5044, %v5044
      %v5116 = vpack.c.b16 %v5046, %v5045
      %v5117 = vpack.c.b16 %v5047, %v5047
      %v5118 = vpack.c.b16 %v5049, %v5048
      %v5119 = vpack.c.b16 %v5050, %v5050
      %v5120 = vpack.c.b16 %v5052, %v5051
      %v5121 = vpack.c.b16 %v5053, %v5053
      %v5122 = vpack.c.b16 %v5055, %v5054
      %v5123 = vpack.c.b16 %v5056, %v5056
      %v5124 = vpack.c.b16 %v5058, %v5057
      %v5125 = vpack.c.b16 %v5059, %v5059
      %v5126 = vpack.c.b16 %v5061, %v5060
      %v5127 = vpack.c.b16 %v5062, %v5062
      %v5128 = vpack.c.b16 %v5064, %v5063
      %v5129 = vpack.c.b16 %v5065, %v5065
      %s5194 = scalar_lea.vmem [#allocation4], 24
      %5195 = vst [vmem:[%s5194] sm:$0xff] %v5066
      %5196 = vst [vmem:[%s5194 + $0x8] sm:$0xf] %v5067
      %5197 = vst [vmem:[%s5194 + $0xc] sm:$0xff] %v5068
      %5198 = vst [vmem:[%s5194 + $0x14] sm:$0xf] %v5069
      %5199 = vst [vmem:[%s5194 + $0x18] sm:$0xff] %v5070
      %5200 = vst [vmem:[%s5194 + $0x20] sm:$0xf] %v5071
      %5201 = vst [vmem:[%s5194 + $0x24] sm:$0xff] %v5072
      %5202 = vst [vmem:[%s5194 + $0x2c] sm:$0xf] %v5073
      %5203 = vst [vmem:[%s5194 + $0x30] sm:$0xff] %v5074
      %5204 = vst [vmem:[%s5194 + $0x38] sm:$0xf] %v5075
      %5205 = vst [vmem:[%s5194 + $0x3c] sm:$0xff] %v5076
      %5206 = vst [vmem:[%s5194 + $0x44] sm:$0xf] %v5077
      %5207 = vst [vmem:[%s5194 + $0x48] sm:$0xff] %v5078
      %5208 = vst [vmem:[%s5194 + $0x50] sm:$0xf] %v5079
      %5209 = vst [vmem:[%s5194 + $0x54] sm:$0xff] %v5080
      %5210 = vst [vmem:[%s5194 + $0x5c] sm:$0xf] %v5081
      %5211 = vst [vmem:[%s5194 + $0x60] sm:$0xff] %v5082
      %5212 = vst [vmem:[%s5194 + $0x68] sm:$0xf] %v5083
      %5213 = vst [vmem:[%s5194 + $0x6c] sm:$0xff] %v5084
      %5214 = vst [vmem:[%s5194 + $0x74] sm:$0xf] %v5085
      %5215 = vst [vmem:[%s5194 + $0x78] sm:$0xff] %v5086
      %5216 = vst [vmem:[%s5194 + $0x80] sm:$0xf] %v5087
      %5217 = vst [vmem:[%s5194 + $0x84] sm:$0xff] %v5088
      %5218 = vst [vmem:[%s5194 + $0x8c] sm:$0xf] %v5089
      %5219 = vst [vmem:[%s5194 + $0x90] sm:$0xff] %v5090
      %5220 = vst [vmem:[%s5194 + $0x98] sm:$0xf] %v5091
      %5221 = vst [vmem:[%s5194 + $0x9c] sm:$0xff] %v5092
      %5222 = vst [vmem:[%s5194 + $0xa4] sm:$0xf] %v5093
      %5223 = vst [vmem:[%s5194 + $0xa8] sm:$0xff] %v5094
      %5224 = vst [vmem:[%s5194 + $0xb0] sm:$0xf] %v5095
      %5225 = vst [vmem:[%s5194 + $0xb4] sm:$0xff] %v5096
      %5226 = vst [vmem:[%s5194 + $0xbc] sm:$0xf] %v5097
      %5227 = vst [vmem:[%s5194 + $0xc0] sm:$0xff] %v5098
      %5228 = vst [vmem:[%s5194 + $0xc8] sm:$0xf] %v5099
      %5229 = vst [vmem:[%s5194 + $0xcc] sm:$0xff] %v5100
      %5230 = vst [vmem:[%s5194 + $0xd4] sm:$0xf] %v5101
      %5231 = vst [vmem:[%s5194 + $0xd8] sm:$0xff] %v5102
      %5232 = vst [vmem:[%s5194 + $0xe0] sm:$0xf] %v5103
      %5233 = vst [vmem:[%s5194 + $0xe4] sm:$0xff] %v5104
      %5234 = vst [vmem:[%s5194 + $0xec] sm:$0xf] %v5105
      %5235 = vst [vmem:[%s5194 + $0xf0] sm:$0xff] %v5106
      %5236 = vst [vmem:[%s5194 + $0xf8] sm:$0xf] %v5107
      %5237 = vst [vmem:[%s5194 + $0xfc] sm:$0xff] %v5108
      %5238 = vst [vmem:[%s5194 + $0x104] sm:$0xf] %v5109
      %5239 = vst [vmem:[%s5194 + $0x108] sm:$0xff] %v5110
      %5240 = vst [vmem:[%s5194 + $0x110] sm:$0xf] %v5111
      %5241 = vst [vmem:[%s5194 + $0x114] sm:$0xff] %v5112
      %5242 = vst [vmem:[%s5194 + $0x11c] sm:$0xf] %v5113
      %5243 = vst [vmem:[%s5194 + $0x120] sm:$0xff] %v5114
      %5244 = vst [vmem:[%s5194 + $0x128] sm:$0xf] %v5115
      %5245 = vst [vmem:[%s5194 + $0x12c] sm:$0xff] %v5116
      %5246 = vst [vmem:[%s5194 + $0x134] sm:$0xf] %v5117
      %5247 = vst [vmem:[%s5194 + $0x138] sm:$0xff] %v5118
      %5248 = vst [vmem:[%s5194 + $0x140] sm:$0xf] %v5119
      %5249 = vst [vmem:[%s5194 + $0x144] sm:$0xff] %v5120
      %5250 = vst [vmem:[%s5194 + $0x14c] sm:$0xf] %v5121
      %5251 = vst [vmem:[%s5194 + $0x150] sm:$0xff] %v5122
      %5252 = vst [vmem:[%s5194 + $0x158] sm:$0xf] %v5123
      %5253 = vst [vmem:[%s5194 + $0x15c] sm:$0xff] %v5124
      %5254 = vst [vmem:[%s5194 + $0x164] sm:$0xf] %v5125
      %5255 = vst [vmem:[%s5194 + $0x168] sm:$0xff] %v5126
      %5256 = vst [vmem:[%s5194 + $0x170] sm:$0xf] %v5127
      %5257 = vst [vmem:[%s5194 + $0x174] sm:$0xff] %v5128
      %5258 = vst [vmem:[%s5194 + $0x17c] sm:$0xf] %v5129
      %v5259 = vld [vmem:[#allocation4] sm:$0xff]
      %v5260 = vld [vmem:[#allocation4 + $0x8] sm:$0xf]
      %v5261 = vld [vmem:[#allocation4 + $0xc] sm:$0xff]
      %v5262 = vld [vmem:[#allocation4 + $0x14] sm:$0xf]
      %v5263 = vld [vmem:[#allocation4 + $0x18] sm:$0xff]
      %v5264 = vld [vmem:[#allocation4 + $0x20] sm:$0xf]
      %v5265 = vld [vmem:[#allocation4 + $0x24] sm:$0xff]
      %v5266 = vld [vmem:[#allocation4 + $0x2c] sm:$0xf]
      %v5267 = vld [vmem:[#allocation4 + $0x30] sm:$0xff]
      %v5268 = vld [vmem:[#allocation4 + $0x38] sm:$0xf]
      %v5269 = vld [vmem:[#allocation4 + $0x3c] sm:$0xff]
      %v5270 = vld [vmem:[#allocation4 + $0x44] sm:$0xf]
      %v5271 = vld [vmem:[#allocation4 + $0x48] sm:$0xff]
      %v5272 = vld [vmem:[#allocation4 + $0x50] sm:$0xf]
      %v5273 = vld [vmem:[#allocation4 + $0x54] sm:$0xff]
      %v5274 = vld [vmem:[#allocation4 + $0x5c] sm:$0xf]
      %v5275 = vld [vmem:[#allocation4 + $0x60] sm:$0xff]
      %v5276 = vld [vmem:[#allocation4 + $0x68] sm:$0xf]
      %v5277 = vld [vmem:[#allocation4 + $0x6c] sm:$0xff]
      %v5278 = vld [vmem:[#allocation4 + $0x74] sm:$0xf]
      %v5279 = vld [vmem:[#allocation4 + $0x78] sm:$0xff]
      %v5280 = vld [vmem:[#allocation4 + $0x80] sm:$0xf]
      %v5281 = vld [vmem:[#allocation4 + $0x84] sm:$0xff]
      %v5282 = vld [vmem:[#allocation4 + $0x8c] sm:$0xf]
      %v5283 = vld [vmem:[#allocation4 + $0x90] sm:$0xff]
      %v5284 = vld [vmem:[#allocation4 + $0x98] sm:$0xf]
      %v5285 = vld [vmem:[#allocation4 + $0x9c] sm:$0xff]
      %v5286 = vld [vmem:[#allocation4 + $0xa4] sm:$0xf]
      %v5287 = vld [vmem:[#allocation4 + $0xa8] sm:$0xff]
      %v5288 = vld [vmem:[#allocation4 + $0xb0] sm:$0xf]
      %v5289 = vld [vmem:[#allocation4 + $0xb4] sm:$0xff]
      %v5290 = vld [vmem:[#allocation4 + $0xbc] sm:$0xf]
      %v5291 = vld [vmem:[#allocation4 + $0xc0] sm:$0xff]
      %v5292 = vld [vmem:[#allocation4 + $0xc8] sm:$0xf]
      %v5293 = vld [vmem:[#allocation4 + $0xcc] sm:$0xff]
      %v5294 = vld [vmem:[#allocation4 + $0xd4] sm:$0xf]
      %v5295 = vld [vmem:[#allocation4 + $0xd8] sm:$0xff]
      %v5296 = vld [vmem:[#allocation4 + $0xe0] sm:$0xf]
      %v5297 = vld [vmem:[#allocation4 + $0xe4] sm:$0xff]
      %v5298 = vld [vmem:[#allocation4 + $0xec] sm:$0xf]
      %v5299 = vld [vmem:[#allocation4 + $0xf0] sm:$0xff]
      %v5300 = vld [vmem:[#allocation4 + $0xf8] sm:$0xf]
      %v5301 = vld [vmem:[#allocation4 + $0xfc] sm:$0xff]
      %v5302 = vld [vmem:[#allocation4 + $0x104] sm:$0xf]
      %v5303 = vld [vmem:[#allocation4 + $0x108] sm:$0xff]
      %v5304 = vld [vmem:[#allocation4 + $0x110] sm:$0xf]
      %v5305 = vld [vmem:[#allocation4 + $0x114] sm:$0xff]
      %v5306 = vld [vmem:[#allocation4 + $0x11c] sm:$0xf]
      %v5307 = vld [vmem:[#allocation4 + $0x120] sm:$0xff]
      %v5308 = vld [vmem:[#allocation4 + $0x128] sm:$0xf]
      %v5309 = vld [vmem:[#allocation4 + $0x12c] sm:$0xff]
      %v5310 = vld [vmem:[#allocation4 + $0x134] sm:$0xf]
      %v5311 = vld [vmem:[#allocation4 + $0x138] sm:$0xff]
      %v5312 = vld [vmem:[#allocation4 + $0x140] sm:$0xf]
      %v5313 = vld [vmem:[#allocation4 + $0x144] sm:$0xff]
      %v5314 = vld [vmem:[#allocation4 + $0x14c] sm:$0xf]
      %v5315 = vld [vmem:[#allocation4 + $0x150] sm:$0xff]
      %v5316 = vld [vmem:[#allocation4 + $0x158] sm:$0xf]
      %v5317 = vld [vmem:[#allocation4 + $0x15c] sm:$0xff]
      %v5318 = vld [vmem:[#allocation4 + $0x164] sm:$0xf]
      %v5319 = vld [vmem:[#allocation4 + $0x168] sm:$0xff]
      %v5320 = vld [vmem:[#allocation4 + $0x170] sm:$0xf]
      %v5321 = vld [vmem:[#allocation4 + $0x174] sm:$0xff]
      %v5322 = vld [vmem:[#allocation4 + $0x17c] sm:$0xf]
      %v5323 = vld [vmem:[%s6] sm:$0xf]
      %v5324 = vld [vmem:[%s6 + $0x4] sm:$0xf]
      %v5325 = vld [vmem:[%s6 + $0x8] sm:$0xf]
      %v5326 = vld [vmem:[%s6 + $0xc] sm:$0xf]
      %v5327 = vld [vmem:[%s6 + $0x10] sm:$0xf]
      %v5328 = vld [vmem:[%s6 + $0x14] sm:$0xf]
      %v5329 = vld [vmem:[%s6 + $0x18] sm:$0xf]
      %v5330 = vld [vmem:[%s6 + $0x1c] sm:$0xf]
      %v5331 = vld [vmem:[%s6 + $0x20] sm:$0xf]
      %v5332 = vld [vmem:[%s6 + $0x24] sm:$0xf]
      %v5333 = vld [vmem:[%s6 + $0x28] sm:$0xf]
      %v5334 = vld [vmem:[%s6 + $0x2c] sm:$0xf]
      %v5335 = vld [vmem:[%s6 + $0x30] sm:$0xf]
      %v5336 = vld [vmem:[%s6 + $0x34] sm:$0xf]
      %v5337 = vld [vmem:[%s6 + $0x38] sm:$0xf]
      %v5338 = vld [vmem:[%s6 + $0x3c] sm:$0xf]
      %v5339 = vld [vmem:[%s6 + $0x40] sm:$0xf]
      %v5340 = vld [vmem:[%s6 + $0x44] sm:$0xf]
      %v5341 = vld [vmem:[%s6 + $0x48] sm:$0xf]
      %v5342 = vld [vmem:[%s6 + $0x4c] sm:$0xf]
      %v5343 = vld [vmem:[%s6 + $0x50] sm:$0xf]
      %v5344 = vld [vmem:[%s6 + $0x54] sm:$0xf]
      %v5345 = vld [vmem:[%s6 + $0x58] sm:$0xf]
      %v5346 = vld [vmem:[%s6 + $0x5c] sm:$0xf]
      %v5347 = vld [vmem:[%s6 + $0x60] sm:$0xf]
      %v5348 = vld [vmem:[%s6 + $0x64] sm:$0xf]
      %v5349 = vld [vmem:[%s6 + $0x68] sm:$0xf]
      %v5350 = vld [vmem:[%s6 + $0x6c] sm:$0xf]
      %v5351 = vld [vmem:[%s6 + $0x70] sm:$0xf]
      %v5352 = vld [vmem:[%s6 + $0x74] sm:$0xf]
      %v5353 = vld [vmem:[%s6 + $0x78] sm:$0xf]
      %v5354 = vld [vmem:[%s6 + $0x7c] sm:$0xf]
      %v5355 = vld [vmem:[%s6 + $0x80] sm:$0xf]
      %v5356 = vld [vmem:[%s6 + $0x84] sm:$0xf]
      %v5357 = vld [vmem:[%s6 + $0x88] sm:$0xf]
      %v5358 = vld [vmem:[%s6 + $0x8c] sm:$0xf]
      %v5359 = vld [vmem:[%s6 + $0x90] sm:$0xf]
      %v5360 = vld [vmem:[%s6 + $0x94] sm:$0xf]
      %v5361 = vld [vmem:[%s6 + $0x98] sm:$0xf]
      %v5362 = vld [vmem:[%s6 + $0x9c] sm:$0xf]
      %v5363 = vld [vmem:[%s6 + $0xa0] sm:$0xf]
      %v5364 = vld [vmem:[%s6 + $0xa4] sm:$0xf]
      %v5365 = vld [vmem:[%s6 + $0xa8] sm:$0xf]
      %v5366 = vld [vmem:[%s6 + $0xac] sm:$0xf]
      %v5367 = vld [vmem:[%s6 + $0xb0] sm:$0xf]
      %v5368 = vld [vmem:[%s6 + $0xb4] sm:$0xf]
      %v5369 = vld [vmem:[%s6 + $0xb8] sm:$0xf]
      %v5370 = vld [vmem:[%s6 + $0xbc] sm:$0xf]
      %v5371 = vld [vmem:[%s5194] sm:$0xff]
      %v5372 = vld [vmem:[%s5194 + $0x8] sm:$0xf]
      %v5373 = vld [vmem:[%s5194 + $0xc] sm:$0xff]
      %v5374 = vld [vmem:[%s5194 + $0x14] sm:$0xf]
      %v5375 = vld [vmem:[%s5194 + $0x18] sm:$0xff]
      %v5376 = vld [vmem:[%s5194 + $0x20] sm:$0xf]
      %v5377 = vld [vmem:[%s5194 + $0x24] sm:$0xff]
      %v5378 = vld [vmem:[%s5194 + $0x2c] sm:$0xf]
      %v5379 = vld [vmem:[%s5194 + $0x30] sm:$0xff]
      %v5380 = vld [vmem:[%s5194 + $0x38] sm:$0xf]
      %v5381 = vld [vmem:[%s5194 + $0x3c] sm:$0xff]
      %v5382 = vld [vmem:[%s5194 + $0x44] sm:$0xf]
      %v5383 = vld [vmem:[%s5194 + $0x48] sm:$0xff]
      %v5384 = vld [vmem:[%s5194 + $0x50] sm:$0xf]
      %v5385 = vld [vmem:[%s5194 + $0x54] sm:$0xff]
      %v5386 = vld [vmem:[%s5194 + $0x5c] sm:$0xf]
      %v5387 = vld [vmem:[%s5194 + $0x60] sm:$0xff]
      %v5388 = vld [vmem:[%s5194 + $0x68] sm:$0xf]
      %v5389 = vld [vmem:[%s5194 + $0x6c] sm:$0xff]
      %v5390 = vld [vmem:[%s5194 + $0x74] sm:$0xf]
      %v5391 = vld [vmem:[%s5194 + $0x78] sm:$0xff]
      %v5392 = vld [vmem:[%s5194 + $0x80] sm:$0xf]
      %v5393 = vld [vmem:[%s5194 + $0x84] sm:$0xff]
      %v5394 = vld [vmem:[%s5194 + $0x8c] sm:$0xf]
      %v5395 = vld [vmem:[%s5194 + $0x90] sm:$0xff]
      %v5396 = vld [vmem:[%s5194 + $0x98] sm:$0xf]
      %v5397 = vld [vmem:[%s5194 + $0x9c] sm:$0xff]
      %v5398 = vld [vmem:[%s5194 + $0xa4] sm:$0xf]
      %v5399 = vld [vmem:[%s5194 + $0xa8] sm:$0xff]
      %v5400 = vld [vmem:[%s5194 + $0xb0] sm:$0xf]
      %v5401 = vld [vmem:[%s5194 + $0xb4] sm:$0xff]
      %v5402 = vld [vmem:[%s5194 + $0xbc] sm:$0xf]
      %v5403 = vld [vmem:[%s5194 + $0xc0] sm:$0xff]
      %v5404 = vld [vmem:[%s5194 + $0xc8] sm:$0xf]
      %v5405 = vld [vmem:[%s5194 + $0xcc] sm:$0xff]
      %v5406 = vld [vmem:[%s5194 + $0xd4] sm:$0xf]
      %v5407 = vld [vmem:[%s5194 + $0xd8] sm:$0xff]
      %v5408 = vld [vmem:[%s5194 + $0xe0] sm:$0xf]
      %v5409 = vld [vmem:[%s5194 + $0xe4] sm:$0xff]
      %v5410 = vld [vmem:[%s5194 + $0xec] sm:$0xf]
      %v5411 = vld [vmem:[%s5194 + $0xf0] sm:$0xff]
      %v5412 = vld [vmem:[%s5194 + $0xf8] sm:$0xf]
      %v5413 = vld [vmem:[%s5194 + $0xfc] sm:$0xff]
      %v5414 = vld [vmem:[%s5194 + $0x104] sm:$0xf]
      %v5415 = vld [vmem:[%s5194 + $0x108] sm:$0xff]
      %v5416 = vld [vmem:[%s5194 + $0x110] sm:$0xf]
      %v5417 = vld [vmem:[%s5194 + $0x114] sm:$0xff]
      %v5418 = vld [vmem:[%s5194 + $0x11c] sm:$0xf]
      %v5419 = vld [vmem:[%s5194 + $0x120] sm:$0xff]
      %v5420 = vld [vmem:[%s5194 + $0x128] sm:$0xf]
      %v5421 = vld [vmem:[%s5194 + $0x12c] sm:$0xff]
      %v5422 = vld [vmem:[%s5194 + $0x134] sm:$0xf]
      %v5423 = vld [vmem:[%s5194 + $0x138] sm:$0xff]
      %v5424 = vld [vmem:[%s5194 + $0x140] sm:$0xf]
      %v5425 = vld [vmem:[%s5194 + $0x144] sm:$0xff]
      %v5426 = vld [vmem:[%s5194 + $0x14c] sm:$0xf]
      %v5427 = vld [vmem:[%s5194 + $0x150] sm:$0xff]
      %v5428 = vld [vmem:[%s5194 + $0x158] sm:$0xf]
      %v5429 = vld [vmem:[%s5194 + $0x15c] sm:$0xff]
      %v5430 = vld [vmem:[%s5194 + $0x164] sm:$0xf]
      %v5431 = vld [vmem:[%s5194 + $0x168] sm:$0xff]
      %v5432 = vld [vmem:[%s5194 + $0x170] sm:$0xf]
      %v5433 = vld [vmem:[%s5194 + $0x174] sm:$0xff]
      %v5434 = vld [vmem:[%s5194 + $0x17c] sm:$0xf]
      %s5435 = scalar_lea.vmem %s6, 192
      %v5436 = vld [vmem:[%s5435] sm:$0xf]
      %v5437 = vld [vmem:[%s5435 + $0x4] sm:$0xf]
      %v5438 = vld [vmem:[%s5435 + $0x8] sm:$0xf]
      %v5439 = vld [vmem:[%s5435 + $0xc] sm:$0xf]
      %v5440 = vld [vmem:[%s5435 + $0x10] sm:$0xf]
      %v5441 = vld [vmem:[%s5435 + $0x14] sm:$0xf]
      %v5442 = vld [vmem:[%s5435 + $0x18] sm:$0xf]
      %v5443 = vld [vmem:[%s5435 + $0x1c] sm:$0xf]
      %v5444 = vld [vmem:[%s5435 + $0x20] sm:$0xf]
      %v5445 = vld [vmem:[%s5435 + $0x24] sm:$0xf]
      %v5446 = vld [vmem:[%s5435 + $0x28] sm:$0xf]
      %v5447 = vld [vmem:[%s5435 + $0x2c] sm:$0xf]
      %v5448 = vld [vmem:[%s5435 + $0x30] sm:$0xf]
      %v5449 = vld [vmem:[%s5435 + $0x34] sm:$0xf]
      %v5450 = vld [vmem:[%s5435 + $0x38] sm:$0xf]
      %v5451 = vld [vmem:[%s5435 + $0x3c] sm:$0xf]
      %v5452 = vld [vmem:[%s5435 + $0x40] sm:$0xf]
      %v5453 = vld [vmem:[%s5435 + $0x44] sm:$0xf]
      %v5454 = vld [vmem:[%s5435 + $0x48] sm:$0xf]
      %v5455 = vld [vmem:[%s5435 + $0x4c] sm:$0xf]
      %v5456 = vld [vmem:[%s5435 + $0x50] sm:$0xf]
      %v5457 = vld [vmem:[%s5435 + $0x54] sm:$0xf]
      %v5458 = vld [vmem:[%s5435 + $0x58] sm:$0xf]
      %v5459 = vld [vmem:[%s5435 + $0x5c] sm:$0xf]
      %v5460 = vld [vmem:[%s5435 + $0x60] sm:$0xf]
      %v5461 = vld [vmem:[%s5435 + $0x64] sm:$0xf]
      %v5462 = vld [vmem:[%s5435 + $0x68] sm:$0xf]
      %v5463 = vld [vmem:[%s5435 + $0x6c] sm:$0xf]
      %v5464 = vld [vmem:[%s5435 + $0x70] sm:$0xf]
      %v5465 = vld [vmem:[%s5435 + $0x74] sm:$0xf]
      %v5466 = vld [vmem:[%s5435 + $0x78] sm:$0xf]
      %v5467 = vld [vmem:[%s5435 + $0x7c] sm:$0xf]
      %v5468 = vld [vmem:[%s5435 + $0x80] sm:$0xf]
      %v5469 = vld [vmem:[%s5435 + $0x84] sm:$0xf]
      %v5470 = vld [vmem:[%s5435 + $0x88] sm:$0xf]
      %v5471 = vld [vmem:[%s5435 + $0x8c] sm:$0xf]
      %v5472 = vld [vmem:[%s5435 + $0x90] sm:$0xf]
      %v5473 = vld [vmem:[%s5435 + $0x94] sm:$0xf]
      %v5474 = vld [vmem:[%s5435 + $0x98] sm:$0xf]
      %v5475 = vld [vmem:[%s5435 + $0x9c] sm:$0xf]
      %v5476 = vld [vmem:[%s5435 + $0xa0] sm:$0xf]
      %v5477 = vld [vmem:[%s5435 + $0xa4] sm:$0xf]
      %v5478 = vld [vmem:[%s5435 + $0xa8] sm:$0xf]
      %v5479 = vld [vmem:[%s5435 + $0xac] sm:$0xf]
      %v5480 = vld [vmem:[%s5435 + $0xb0] sm:$0xf]
      %v5481 = vld [vmem:[%s5435 + $0xb4] sm:$0xf]
      %v5482 = vld [vmem:[%s5435 + $0xb8] sm:$0xf]
      %v5483 = vld [vmem:[%s5435 + $0xbc] sm:$0xf]
      %v5548 = vunpack.c.l.b16 %v5371
      %v5549 = vunpack.c.h.b16 %v5371
      %v5550 = vunpack.c.l.b16 %v5372
      %v5551 = vunpack.c.l.b16 %v5373
      %v5552 = vunpack.c.h.b16 %v5373
      %v5553 = vunpack.c.l.b16 %v5374
      %v5554 = vunpack.c.l.b16 %v5375
      %v5555 = vunpack.c.h.b16 %v5375
      %v5556 = vunpack.c.l.b16 %v5376
      %v5557 = vunpack.c.l.b16 %v5377
      %v5558 = vunpack.c.h.b16 %v5377
      %v5559 = vunpack.c.l.b16 %v5378
      %v5560 = vunpack.c.l.b16 %v5379
      %v5561 = vunpack.c.h.b16 %v5379
      %v5562 = vunpack.c.l.b16 %v5380
      %v5563 = vunpack.c.l.b16 %v5381
      %v5564 = vunpack.c.h.b16 %v5381
      %v5565 = vunpack.c.l.b16 %v5382
      %v5566 = vunpack.c.l.b16 %v5383
      %v5567 = vunpack.c.h.b16 %v5383
      %v5568 = vunpack.c.l.b16 %v5384
      %v5569 = vunpack.c.l.b16 %v5385
      %v5570 = vunpack.c.h.b16 %v5385
      %v5571 = vunpack.c.l.b16 %v5386
      %v5572 = vunpack.c.l.b16 %v5387
      %v5573 = vunpack.c.h.b16 %v5387
      %v5574 = vunpack.c.l.b16 %v5388
      %v5575 = vunpack.c.l.b16 %v5389
      %v5576 = vunpack.c.h.b16 %v5389
      %v5577 = vunpack.c.l.b16 %v5390
      %v5578 = vunpack.c.l.b16 %v5391
      %v5579 = vunpack.c.h.b16 %v5391
      %v5580 = vunpack.c.l.b16 %v5392
      %v5581 = vunpack.c.l.b16 %v5393
      %v5582 = vunpack.c.h.b16 %v5393
      %v5583 = vunpack.c.l.b16 %v5394
      %v5584 = vunpack.c.l.b16 %v5395
      %v5585 = vunpack.c.h.b16 %v5395
      %v5586 = vunpack.c.l.b16 %v5396
      %v5587 = vunpack.c.l.b16 %v5397
      %v5588 = vunpack.c.h.b16 %v5397
      %v5589 = vunpack.c.l.b16 %v5398
      %v5590 = vunpack.c.l.b16 %v5399
      %v5591 = vunpack.c.h.b16 %v5399
      %v5592 = vunpack.c.l.b16 %v5400
      %v5593 = vunpack.c.l.b16 %v5401
      %v5594 = vunpack.c.h.b16 %v5401
      %v5595 = vunpack.c.l.b16 %v5402
      %v5596 = vunpack.c.l.b16 %v5403
      %v5597 = vunpack.c.h.b16 %v5403
      %v5598 = vunpack.c.l.b16 %v5404
      %v5599 = vunpack.c.l.b16 %v5405
      %v5600 = vunpack.c.h.b16 %v5405
      %v5601 = vunpack.c.l.b16 %v5406
      %v5602 = vunpack.c.l.b16 %v5407
      %v5603 = vunpack.c.h.b16 %v5407
      %v5604 = vunpack.c.l.b16 %v5408
      %v5605 = vunpack.c.l.b16 %v5409
      %v5606 = vunpack.c.h.b16 %v5409
      %v5607 = vunpack.c.l.b16 %v5410
      %v5608 = vunpack.c.l.b16 %v5411
      %v5609 = vunpack.c.h.b16 %v5411
      %v5610 = vunpack.c.l.b16 %v5412
      %v5611 = vunpack.c.l.b16 %v5413
      %v5612 = vunpack.c.h.b16 %v5413
      %v5613 = vunpack.c.l.b16 %v5414
      %v5614 = vunpack.c.l.b16 %v5415
      %v5615 = vunpack.c.h.b16 %v5415
      %v5616 = vunpack.c.l.b16 %v5416
      %v5617 = vunpack.c.l.b16 %v5417
      %v5618 = vunpack.c.h.b16 %v5417
      %v5619 = vunpack.c.l.b16 %v5418
      %v5620 = vunpack.c.l.b16 %v5419
      %v5621 = vunpack.c.h.b16 %v5419
      %v5622 = vunpack.c.l.b16 %v5420
      %v5623 = vunpack.c.l.b16 %v5421
      %v5624 = vunpack.c.h.b16 %v5421
      %v5625 = vunpack.c.l.b16 %v5422
      %v5626 = vunpack.c.l.b16 %v5423
      %v5627 = vunpack.c.h.b16 %v5423
      %v5628 = vunpack.c.l.b16 %v5424
      %v5629 = vunpack.c.l.b16 %v5425
      %v5630 = vunpack.c.h.b16 %v5425
      %v5631 = vunpack.c.l.b16 %v5426
      %v5632 = vunpack.c.l.b16 %v5427
      %v5633 = vunpack.c.h.b16 %v5427
      %v5634 = vunpack.c.l.b16 %v5428
      %v5635 = vunpack.c.l.b16 %v5429
      %v5636 = vunpack.c.h.b16 %v5429
      %v5637 = vunpack.c.l.b16 %v5430
      %v5638 = vunpack.c.l.b16 %v5431
      %v5639 = vunpack.c.h.b16 %v5431
      %v5640 = vunpack.c.l.b16 %v5432
      %v5641 = vunpack.c.l.b16 %v5433
      %v5642 = vunpack.c.h.b16 %v5433
      %v5643 = vunpack.c.l.b16 %v5434
      %v5644 = vpack.c.b16 %v5551, %v5548
      %v5645 = vpack.c.b16 %v5552, %v5549
      %v5646 = vpack.c.b16 %v5553, %v5550
      %v5647 = vpack.c.b16 %v5557, %v5554
      %v5648 = vpack.c.b16 %v5558, %v5555
      %v5649 = vpack.c.b16 %v5559, %v5556
      %v5650 = vpack.c.b16 %v5563, %v5560
      %v5651 = vpack.c.b16 %v5564, %v5561
      %v5652 = vpack.c.b16 %v5565, %v5562
      %v5653 = vpack.c.b16 %v5569, %v5566
      %v5654 = vpack.c.b16 %v5570, %v5567
      %v5655 = vpack.c.b16 %v5571, %v5568
      %v5656 = vpack.c.b16 %v5575, %v5572
      %v5657 = vpack.c.b16 %v5576, %v5573
      %v5658 = vpack.c.b16 %v5577, %v5574
      %v5659 = vpack.c.b16 %v5581, %v5578
      %v5660 = vpack.c.b16 %v5582, %v5579
      %v5661 = vpack.c.b16 %v5583, %v5580
      %v5662 = vpack.c.b16 %v5587, %v5584
      %v5663 = vpack.c.b16 %v5588, %v5585
      %v5664 = vpack.c.b16 %v5589, %v5586
      %v5665 = vpack.c.b16 %v5593, %v5590
      %v5666 = vpack.c.b16 %v5594, %v5591
      %v5667 = vpack.c.b16 %v5595, %v5592
      %v5668 = vpack.c.b16 %v5599, %v5596
      %v5669 = vpack.c.b16 %v5600, %v5597
      %v5670 = vpack.c.b16 %v5601, %v5598
      %v5671 = vpack.c.b16 %v5605, %v5602
      %v5672 = vpack.c.b16 %v5606, %v5603
      %v5673 = vpack.c.b16 %v5607, %v5604
      %v5674 = vpack.c.b16 %v5611, %v5608
      %v5675 = vpack.c.b16 %v5612, %v5609
      %v5676 = vpack.c.b16 %v5613, %v5610
      %v5677 = vpack.c.b16 %v5617, %v5614
      %v5678 = vpack.c.b16 %v5618, %v5615
      %v5679 = vpack.c.b16 %v5619, %v5616
      %v5680 = vpack.c.b16 %v5623, %v5620
      %v5681 = vpack.c.b16 %v5624, %v5621
      %v5682 = vpack.c.b16 %v5625, %v5622
      %v5683 = vpack.c.b16 %v5629, %v5626
      %v5684 = vpack.c.b16 %v5630, %v5627
      %v5685 = vpack.c.b16 %v5631, %v5628
      %v5686 = vpack.c.b16 %v5635, %v5632
      %v5687 = vpack.c.b16 %v5636, %v5633
      %v5688 = vpack.c.b16 %v5637, %v5634
      %v5689 = vpack.c.b16 %v5641, %v5638
      %v5690 = vpack.c.b16 %v5642, %v5639
      %v5691 = vpack.c.b16 %v5643, %v5640
      %v5788 = vunpack.c.l.b16 %v5436
      %v5789 = vunpack.c.l.b16 %v5437
      %v5790 = vunpack.c.l.b16 %v5438
      %v5791 = vunpack.c.l.b16 %v5439
      %v5792 = vunpack.c.l.b16 %v5440
      %v5793 = vunpack.c.l.b16 %v5441
      %v5794 = vunpack.c.l.b16 %v5442
      %v5795 = vunpack.c.l.b16 %v5443
      %v5796 = vunpack.c.l.b16 %v5444
      %v5797 = vunpack.c.l.b16 %v5445
      %v5798 = vunpack.c.l.b16 %v5446
      %v5799 = vunpack.c.l.b16 %v5447
      %v5800 = vunpack.c.l.b16 %v5448
      %v5801 = vunpack.c.l.b16 %v5449
      %v5802 = vunpack.c.l.b16 %v5450
      %v5803 = vunpack.c.l.b16 %v5451
      %v5804 = vunpack.c.l.b16 %v5452
      %v5805 = vunpack.c.l.b16 %v5453
      %v5806 = vunpack.c.l.b16 %v5454
      %v5807 = vunpack.c.l.b16 %v5455
      %v5808 = vunpack.c.l.b16 %v5456
      %v5809 = vunpack.c.l.b16 %v5457
      %v5810 = vunpack.c.l.b16 %v5458
      %v5811 = vunpack.c.l.b16 %v5459
      %v5812 = vunpack.c.l.b16 %v5460
      %v5813 = vunpack.c.l.b16 %v5461
      %v5814 = vunpack.c.l.b16 %v5462
      %v5815 = vunpack.c.l.b16 %v5463
      %v5816 = vunpack.c.l.b16 %v5464
      %v5817 = vunpack.c.l.b16 %v5465
      %v5818 = vunpack.c.l.b16 %v5466
      %v5819 = vunpack.c.l.b16 %v5467
      %v5820 = vunpack.c.l.b16 %v5468
      %v5821 = vunpack.c.l.b16 %v5469
      %v5822 = vunpack.c.l.b16 %v5470
      %v5823 = vunpack.c.l.b16 %v5471
      %v5824 = vunpack.c.l.b16 %v5472
      %v5825 = vunpack.c.l.b16 %v5473
      %v5826 = vunpack.c.l.b16 %v5474
      %v5827 = vunpack.c.l.b16 %v5475
      %v5828 = vunpack.c.l.b16 %v5476
      %v5829 = vunpack.c.l.b16 %v5477
      %v5830 = vunpack.c.l.b16 %v5478
      %v5831 = vunpack.c.l.b16 %v5479
      %v5832 = vunpack.c.l.b16 %v5480
      %v5833 = vunpack.c.l.b16 %v5481
      %v5834 = vunpack.c.l.b16 %v5482
      %v5835 = vunpack.c.l.b16 %v5483
      %v5836 = vpack.c.b16 %v5789, %v5788
      %v5837 = vpack.c.b16 %v5791, %v5790
      %v5838 = vpack.c.b16 %v5793, %v5792
      %v5839 = vpack.c.b16 %v5795, %v5794
      %v5840 = vpack.c.b16 %v5797, %v5796
      %v5841 = vpack.c.b16 %v5799, %v5798
      %v5842 = vpack.c.b16 %v5801, %v5800
      %v5843 = vpack.c.b16 %v5803, %v5802
      %v5844 = vpack.c.b16 %v5805, %v5804
      %v5845 = vpack.c.b16 %v5807, %v5806
      %v5846 = vpack.c.b16 %v5809, %v5808
      %v5847 = vpack.c.b16 %v5811, %v5810
      %v5848 = vpack.c.b16 %v5813, %v5812
      %v5849 = vpack.c.b16 %v5815, %v5814
      %v5850 = vpack.c.b16 %v5817, %v5816
      %v5851 = vpack.c.b16 %v5819, %v5818
      %v5852 = vpack.c.b16 %v5821, %v5820
      %v5853 = vpack.c.b16 %v5823, %v5822
      %v5854 = vpack.c.b16 %v5825, %v5824
      %v5855 = vpack.c.b16 %v5827, %v5826
      %v5856 = vpack.c.b16 %v5829, %v5828
      %v5857 = vpack.c.b16 %v5831, %v5830
      %v5858 = vpack.c.b16 %v5833, %v5832
      %v5859 = vpack.c.b16 %v5835, %v5834
      %5884 = vmatprep.subr.bf16.mxu0 0
      %5885 = vmatpush1.bf16.msra.mxu0 %v5843
      %5886 = vmatprep.subr.bf16.mxu0 0
      %5887 = vmatpush1.bf16.msra.mxu0 %v5842
      %5888 = vmatprep.subr.bf16.mxu0 0
      %5889 = vmatpush1.bf16.msra.mxu0 %v5841
      %5890 = vmatprep.subr.bf16.mxu0 0
      %5891 = vmatpush1.bf16.msra.mxu0 %v5840
      %5892 = vmatprep.subr.bf16.mxu0 0
      %5893 = vmatpush1.bf16.msra.mxu0 %v5839
      %5894 = vmatprep.subr.bf16.mxu0 0
      %5895 = vmatpush1.bf16.msra.mxu0 %v5838
      %5896 = vmatprep.subr.bf16.mxu0 0
      %5897 = vmatpush1.bf16.msra.mxu0 %v5837
      %5898 = vmatprep.subr.bf16.mxu0 0
      %5899 = vmatpush1.bf16.msra.mxu0 %v5836
      %5900 = vmatprep.subr.bf16.mxu0 0
      %5901 = vmatpush2.bf16.msra.mxu0 %v5851
      %5902 = vmatprep.subr.bf16.mxu0 0
      %5903 = vmatpush2.bf16.msra.mxu0 %v5850
      %5904 = vmatprep.subr.bf16.mxu0 0
      %5905 = vmatpush2.bf16.msra.mxu0 %v5849
      %5906 = vmatprep.subr.bf16.mxu0 0
      %5907 = vmatpush2.bf16.msra.mxu0 %v5848
      %5908 = vmatprep.subr.bf16.mxu0 0
      %5909 = vmatpush2.bf16.msra.mxu0 %v5847
      %5910 = vmatprep.subr.bf16.mxu0 0
      %5911 = vmatpush2.bf16.msra.mxu0 %v5846
      %5912 = vmatprep.subr.bf16.mxu0 0
      %5913 = vmatpush2.bf16.msra.mxu0 %v5845
      %5914 = vmatprep.subr.bf16.mxu0 0
      %5915 = vmatpush2.bf16.msra.mxu0 %v5844
      %5916 = vmatprep.mubr.bf16.mxu0 %v5645
      %5917 = vmatmul.mubr.bf16.gmra.mxu0 %v5644
      %v5918 = vpop.f32.mrf.mxu0
      %v5919 = vadd.f32 0.0, %v5918
      %v5920 = vpop.f32.mrf.mxu0
      %v5921 = vpop.f32.mrf.mxu0
      %v5922 = vadd.f32 0.0, %v5921
      %v5923 = vpop.f32.mrf.mxu0
      %5924 = vmatprep.mubr.bf16.mxu0 %v5648
      %5925 = vmatmul.mubr.bf16.gmra.mxu0 %v5647
      %v5926 = vpop.f32.mrf.mxu0
      %v5927 = vadd.f32 0.0, %v5926
      %v5928 = vpop.f32.mrf.mxu0
      %v5929 = vpop.f32.mrf.mxu0
      %v5930 = vadd.f32 0.0, %v5929
      %v5931 = vpop.f32.mrf.mxu0
      %5932 = vmatprep.mubr.bf16.mxu0 %v5651
      %5933 = vmatmul.mubr.bf16.gmra.mxu0 %v5650
      %v5934 = vpop.f32.mrf.mxu0
      %v5935 = vadd.f32 0.0, %v5934
      %v5936 = vpop.f32.mrf.mxu0
      %v5937 = vpop.f32.mrf.mxu0
      %v5938 = vadd.f32 0.0, %v5937
      %v5939 = vpop.f32.mrf.mxu0
      %5940 = vmatprep.mubr.bf16.mxu0 %v5654
      %5941 = vmatmul.mubr.bf16.gmra.mxu0 %v5653
      %v5942 = vpop.f32.mrf.mxu0
      %v5943 = vadd.f32 0.0, %v5942
      %v5944 = vpop.f32.mrf.mxu0
      %v5945 = vpop.f32.mrf.mxu0
      %v5946 = vadd.f32 0.0, %v5945
      %v5947 = vpop.f32.mrf.mxu0
      %5948 = vmatprep.mubr.bf16.mxu0 %v5657
      %5949 = vmatmul.mubr.bf16.gmra.mxu0 %v5656
      %v5950 = vpop.f32.mrf.mxu0
      %v5951 = vadd.f32 0.0, %v5950
      %v5952 = vpop.f32.mrf.mxu0
      %v5953 = vpop.f32.mrf.mxu0
      %v5954 = vadd.f32 0.0, %v5953
      %v5955 = vpop.f32.mrf.mxu0
      %5956 = vmatprep.mubr.bf16.mxu0 %v5660
      %5957 = vmatmul.mubr.bf16.gmra.mxu0 %v5659
      %v5958 = vpop.f32.mrf.mxu0
      %v5959 = vadd.f32 0.0, %v5958
      %v5960 = vpop.f32.mrf.mxu0
      %v5961 = vpop.f32.mrf.mxu0
      %v5962 = vadd.f32 0.0, %v5961
      %v5963 = vpop.f32.mrf.mxu0
      %5964 = vmatprep.mubr.bf16.mxu0 %v5663
      %5965 = vmatmul.mubr.bf16.gmra.mxu0 %v5662
      %v5966 = vpop.f32.mrf.mxu0
      %v5967 = vadd.f32 0.0, %v5966
      %v5968 = vpop.f32.mrf.mxu0
      %v5969 = vpop.f32.mrf.mxu0
      %v5970 = vadd.f32 0.0, %v5969
      %v5971 = vpop.f32.mrf.mxu0
      %5972 = vmatprep.mubr.bf16.mxu0 %v5666
      %5973 = vmatmul.mubr.bf16.gmra.mxu0 %v5665
      %v5974 = vpop.f32.mrf.mxu0
      %v5975 = vadd.f32 0.0, %v5974
      %v5976 = vpop.f32.mrf.mxu0
      %v5977 = vpop.f32.mrf.mxu0
      %v5978 = vadd.f32 0.0, %v5977
      %v5979 = vpop.f32.mrf.mxu0
      %5980 = vmatprep.mubr.bf16.mxu0 %v5669
      %5981 = vmatmul.mubr.bf16.gmra.mxu0 %v5668
      %v5982 = vpop.f32.mrf.mxu0
      %v5983 = vadd.f32 0.0, %v5982
      %v5984 = vpop.f32.mrf.mxu0
      %v5985 = vpop.f32.mrf.mxu0
      %v5986 = vadd.f32 0.0, %v5985
      %v5987 = vpop.f32.mrf.mxu0
      %5988 = vmatprep.mubr.bf16.mxu0 %v5672
      %5989 = vmatmul.mubr.bf16.gmra.mxu0 %v5671
      %v5990 = vpop.f32.mrf.mxu0
      %v5991 = vadd.f32 0.0, %v5990
      %v5992 = vpop.f32.mrf.mxu0
      %v5993 = vpop.f32.mrf.mxu0
      %v5994 = vadd.f32 0.0, %v5993
      %v5995 = vpop.f32.mrf.mxu0
      %5996 = vmatprep.mubr.bf16.mxu0 %v5675
      %5997 = vmatmul.mubr.bf16.gmra.mxu0 %v5674
      %v5998 = vpop.f32.mrf.mxu0
      %v5999 = vadd.f32 0.0, %v5998
      %v6000 = vpop.f32.mrf.mxu0
      %v6001 = vpop.f32.mrf.mxu0
      %v6002 = vadd.f32 0.0, %v6001
      %v6003 = vpop.f32.mrf.mxu0
      %6004 = vmatprep.mubr.bf16.mxu0 %v5678
      %6005 = vmatmul.mubr.bf16.gmra.mxu0 %v5677
      %v6006 = vpop.f32.mrf.mxu0
      %v6007 = vadd.f32 0.0, %v6006
      %v6008 = vpop.f32.mrf.mxu0
      %v6009 = vpop.f32.mrf.mxu0
      %v6010 = vadd.f32 0.0, %v6009
      %v6011 = vpop.f32.mrf.mxu0
      %6012 = vmatprep.mubr.bf16.mxu0 %v5681
      %6013 = vmatmul.mubr.bf16.gmra.mxu0 %v5680
      %v6014 = vpop.f32.mrf.mxu0
      %v6015 = vadd.f32 0.0, %v6014
      %v6016 = vpop.f32.mrf.mxu0
      %v6017 = vpop.f32.mrf.mxu0
      %v6018 = vadd.f32 0.0, %v6017
      %v6019 = vpop.f32.mrf.mxu0
      %6020 = vmatprep.mubr.bf16.mxu0 %v5684
      %6021 = vmatmul.mubr.bf16.gmra.mxu0 %v5683
      %v6022 = vpop.f32.mrf.mxu0
      %v6023 = vadd.f32 0.0, %v6022
      %v6024 = vpop.f32.mrf.mxu0
      %v6025 = vpop.f32.mrf.mxu0
      %v6026 = vadd.f32 0.0, %v6025
      %v6027 = vpop.f32.mrf.mxu0
      %6028 = vmatprep.mubr.bf16.mxu0 %v5687
      %6029 = vmatmul.mubr.bf16.gmra.mxu0 %v5686
      %v6030 = vpop.f32.mrf.mxu0
      %v6031 = vadd.f32 0.0, %v6030
      %v6032 = vpop.f32.mrf.mxu0
      %v6033 = vpop.f32.mrf.mxu0
      %v6034 = vadd.f32 0.0, %v6033
      %v6035 = vpop.f32.mrf.mxu0
      %6036 = vmatprep.mubr.bf16.mxu0 %v5690
      %6037 = vmatmul.mubr.bf16.gmra.mxu0 %v5689
      %v6038 = vpop.f32.mrf.mxu0
      %v6039 = vadd.f32 0.0, %v6038
      %v6040 = vpop.f32.mrf.mxu0
      %v6041 = vpop.f32.mrf.mxu0
      %v6042 = vadd.f32 0.0, %v6041
      %v6043 = vpop.f32.mrf.mxu0
      %6044 = vdwg.mxu0
      %6045 = vmatprep.subr.bf16.mxu0 0
      %6046 = vmatpush1.bf16.msra.mxu0 %v5859
      %6047 = vmatprep.subr.bf16.mxu0 0
      %6048 = vmatpush1.bf16.msra.mxu0 %v5858
      %6049 = vmatprep.subr.bf16.mxu0 0
      %6050 = vmatpush1.bf16.msra.mxu0 %v5857
      %6051 = vmatprep.subr.bf16.mxu0 0
      %6052 = vmatpush1.bf16.msra.mxu0 %v5856
      %6053 = vmatprep.subr.bf16.mxu0 0
      %6054 = vmatpush1.bf16.msra.mxu0 %v5855
      %6055 = vmatprep.subr.bf16.mxu0 0
      %6056 = vmatpush1.bf16.msra.mxu0 %v5854
      %6057 = vmatprep.subr.bf16.mxu0 0
      %6058 = vmatpush1.bf16.msra.mxu0 %v5853
      %6059 = vmatprep.subr.bf16.mxu0 0
      %6060 = vmatpush1.bf16.msra.mxu0 %v5852
      %6061 = vmatprep.subr.bf16.mxu0 0
      %6062 = vmatpush2.bf16.msra.mxu0 0
      %6063 = vmatprep.subr.bf16.mxu0 0
      %6064 = vmatpush2.bf16.msra.mxu0 0
      %6065 = vmatprep.subr.bf16.mxu0 0
      %6066 = vmatpush2.bf16.msra.mxu0 0
      %6067 = vmatprep.subr.bf16.mxu0 0
      %6068 = vmatpush2.bf16.msra.mxu0 0
      %6069 = vmatprep.subr.bf16.mxu0 0
      %6070 = vmatpush2.bf16.msra.mxu0 0
      %6071 = vmatprep.subr.bf16.mxu0 0
      %6072 = vmatpush2.bf16.msra.mxu0 0
      %6073 = vmatprep.subr.bf16.mxu0 0
      %6074 = vmatpush2.bf16.msra.mxu0 0
      %6075 = vmatprep.subr.bf16.mxu0 0
      %6076 = vmatpush2.bf16.msra.mxu0 0
      %6077 = vmatprep.mubr.bf16.mxu0 0
      %6078 = vmatmul.mubr.bf16.gmra.mxu0 %v5646
      %v6079 = vpop.f32.mrf.mxu0
      %v6080 = vadd.f32 %v5919, %v6079
      %v6081 = vpop.f32.mrf.mxu0
      %v6082 = vpop.f32.mrf.mxu0
      %v6083 = vadd.f32 %v5922, %v6082
      %v6084 = vpop.f32.mrf.mxu0
      %6085 = vmatprep.mubr.bf16.mxu0 0
      %6086 = vmatmul.mubr.bf16.gmra.mxu0 %v5649
      %v6087 = vpop.f32.mrf.mxu0
      %v6088 = vadd.f32 %v5927, %v6087
      %v6089 = vpop.f32.mrf.mxu0
      %v6090 = vpop.f32.mrf.mxu0
      %v6091 = vadd.f32 %v5930, %v6090
      %v6092 = vpop.f32.mrf.mxu0
      %6093 = vmatprep.mubr.bf16.mxu0 0
      %6094 = vmatmul.mubr.bf16.gmra.mxu0 %v5652
      %v6095 = vpop.f32.mrf.mxu0
      %v6096 = vadd.f32 %v5935, %v6095
      %v6097 = vpop.f32.mrf.mxu0
      %v6098 = vpop.f32.mrf.mxu0
      %v6099 = vadd.f32 %v5938, %v6098
      %v6100 = vpop.f32.mrf.mxu0
      %6101 = vmatprep.mubr.bf16.mxu0 0
      %6102 = vmatmul.mubr.bf16.gmra.mxu0 %v5655
      %v6103 = vpop.f32.mrf.mxu0
      %v6104 = vadd.f32 %v5943, %v6103
      %v6105 = vpop.f32.mrf.mxu0
      %v6106 = vpop.f32.mrf.mxu0
      %v6107 = vadd.f32 %v5946, %v6106
      %v6108 = vpop.f32.mrf.mxu0
      %6109 = vmatprep.mubr.bf16.mxu0 0
      %6110 = vmatmul.mubr.bf16.gmra.mxu0 %v5658
      %v6111 = vpop.f32.mrf.mxu0
      %v6112 = vadd.f32 %v5951, %v6111
      %v6113 = vpop.f32.mrf.mxu0
      %v6114 = vpop.f32.mrf.mxu0
      %v6115 = vadd.f32 %v5954, %v6114
      %v6116 = vpop.f32.mrf.mxu0
      %6117 = vmatprep.mubr.bf16.mxu0 0
      %6118 = vmatmul.mubr.bf16.gmra.mxu0 %v5661
      %v6119 = vpop.f32.mrf.mxu0
      %v6120 = vadd.f32 %v5959, %v6119
      %v6121 = vpop.f32.mrf.mxu0
      %v6122 = vpop.f32.mrf.mxu0
      %v6123 = vadd.f32 %v5962, %v6122
      %v6124 = vpop.f32.mrf.mxu0
      %6125 = vmatprep.mubr.bf16.mxu0 0
      %6126 = vmatmul.mubr.bf16.gmra.mxu0 %v5664
      %v6127 = vpop.f32.mrf.mxu0
      %v6128 = vadd.f32 %v5967, %v6127
      %v6129 = vpop.f32.mrf.mxu0
      %v6130 = vpop.f32.mrf.mxu0
      %v6131 = vadd.f32 %v5970, %v6130
      %v6132 = vpop.f32.mrf.mxu0
      %6133 = vmatprep.mubr.bf16.mxu0 0
      %6134 = vmatmul.mubr.bf16.gmra.mxu0 %v5667
      %v6135 = vpop.f32.mrf.mxu0
      %v6136 = vadd.f32 %v5975, %v6135
      %v6137 = vpop.f32.mrf.mxu0
      %v6138 = vpop.f32.mrf.mxu0
      %v6139 = vadd.f32 %v5978, %v6138
      %v6140 = vpop.f32.mrf.mxu0
      %6141 = vmatprep.mubr.bf16.mxu0 0
      %6142 = vmatmul.mubr.bf16.gmra.mxu0 %v5670
      %v6143 = vpop.f32.mrf.mxu0
      %v6144 = vadd.f32 %v5983, %v6143
      %v6145 = vpop.f32.mrf.mxu0
      %v6146 = vpop.f32.mrf.mxu0
      %v6147 = vadd.f32 %v5986, %v6146
      %v6148 = vpop.f32.mrf.mxu0
      %6149 = vmatprep.mubr.bf16.mxu0 0
      %6150 = vmatmul.mubr.bf16.gmra.mxu0 %v5673
      %v6151 = vpop.f32.mrf.mxu0
      %v6152 = vadd.f32 %v5991, %v6151
      %v6153 = vpop.f32.mrf.mxu0
      %v6154 = vpop.f32.mrf.mxu0
      %v6155 = vadd.f32 %v5994, %v6154
      %v6156 = vpop.f32.mrf.mxu0
      %6157 = vmatprep.mubr.bf16.mxu0 0
      %6158 = vmatmul.mubr.bf16.gmra.mxu0 %v5676
      %v6159 = vpop.f32.mrf.mxu0
      %v6160 = vadd.f32 %v5999, %v6159
      %v6161 = vpop.f32.mrf.mxu0
      %v6162 = vpop.f32.mrf.mxu0
      %v6163 = vadd.f32 %v6002, %v6162
      %v6164 = vpop.f32.mrf.mxu0
      %6165 = vmatprep.mubr.bf16.mxu0 0
      %6166 = vmatmul.mubr.bf16.gmra.mxu0 %v5679
      %v6167 = vpop.f32.mrf.mxu0
      %v6168 = vadd.f32 %v6007, %v6167
      %v6169 = vpop.f32.mrf.mxu0
      %v6170 = vpop.f32.mrf.mxu0
      %v6171 = vadd.f32 %v6010, %v6170
      %v6172 = vpop.f32.mrf.mxu0
      %6173 = vmatprep.mubr.bf16.mxu0 0
      %6174 = vmatmul.mubr.bf16.gmra.mxu0 %v5682
      %v6175 = vpop.f32.mrf.mxu0
      %v6176 = vadd.f32 %v6015, %v6175
      %v6177 = vpop.f32.mrf.mxu0
      %v6178 = vpop.f32.mrf.mxu0
      %v6179 = vadd.f32 %v6018, %v6178
      %v6180 = vpop.f32.mrf.mxu0
      %6181 = vmatprep.mubr.bf16.mxu0 0
      %6182 = vmatmul.mubr.bf16.gmra.mxu0 %v5685
      %v6183 = vpop.f32.mrf.mxu0
      %v6184 = vadd.f32 %v6023, %v6183
      %v6185 = vpop.f32.mrf.mxu0
      %v6186 = vpop.f32.mrf.mxu0
      %v6187 = vadd.f32 %v6026, %v6186
      %v6188 = vpop.f32.mrf.mxu0
      %6189 = vmatprep.mubr.bf16.mxu0 0
      %6190 = vmatmul.mubr.bf16.gmra.mxu0 %v5688
      %v6191 = vpop.f32.mrf.mxu0
      %v6192 = vadd.f32 %v6031, %v6191
      %v6193 = vpop.f32.mrf.mxu0
      %v6194 = vpop.f32.mrf.mxu0
      %v6195 = vadd.f32 %v6034, %v6194
      %v6196 = vpop.f32.mrf.mxu0
      %6197 = vmatprep.mubr.bf16.mxu0 0
      %6198 = vmatmul.mubr.bf16.gmra.mxu0 %v5691
      %v6199 = vpop.f32.mrf.mxu0
      %v6200 = vadd.f32 %v6039, %v6199
      %v6201 = vpop.f32.mrf.mxu0
      %v6202 = vpop.f32.mrf.mxu0
      %v6203 = vadd.f32 %v6042, %v6202
      %v6204 = vpop.f32.mrf.mxu0
      %6205 = vdwg.mxu0
      %v6270 = vunpack.c.l.b16 %v5259
      %v6271 = vunpack.c.h.b16 %v5259
      %v6272 = vunpack.c.l.b16 %v5260
      %v6273 = vunpack.c.l.b16 %v5261
      %v6274 = vunpack.c.h.b16 %v5261
      %v6275 = vunpack.c.l.b16 %v5262
      %v6276 = vunpack.c.l.b16 %v5263
      %v6277 = vunpack.c.h.b16 %v5263
      %v6278 = vunpack.c.l.b16 %v5264
      %v6279 = vunpack.c.l.b16 %v5265
      %v6280 = vunpack.c.h.b16 %v5265
      %v6281 = vunpack.c.l.b16 %v5266
      %v6282 = vunpack.c.l.b16 %v5267
      %v6283 = vunpack.c.h.b16 %v5267
      %v6284 = vunpack.c.l.b16 %v5268
      %v6285 = vunpack.c.l.b16 %v5269
      %v6286 = vunpack.c.h.b16 %v5269
      %v6287 = vunpack.c.l.b16 %v5270
      %v6288 = vunpack.c.l.b16 %v5271
      %v6289 = vunpack.c.h.b16 %v5271
      %v6290 = vunpack.c.l.b16 %v5272
      %v6291 = vunpack.c.l.b16 %v5273
      %v6292 = vunpack.c.h.b16 %v5273
      %v6293 = vunpack.c.l.b16 %v5274
      %v6294 = vunpack.c.l.b16 %v5275
      %v6295 = vunpack.c.h.b16 %v5275
      %v6296 = vunpack.c.l.b16 %v5276
      %v6297 = vunpack.c.l.b16 %v5277
      %v6298 = vunpack.c.h.b16 %v5277
      %v6299 = vunpack.c.l.b16 %v5278
      %v6300 = vunpack.c.l.b16 %v5279
      %v6301 = vunpack.c.h.b16 %v5279
      %v6302 = vunpack.c.l.b16 %v5280
      %v6303 = vunpack.c.l.b16 %v5281
      %v6304 = vunpack.c.h.b16 %v5281
      %v6305 = vunpack.c.l.b16 %v5282
      %v6306 = vunpack.c.l.b16 %v5283
      %v6307 = vunpack.c.h.b16 %v5283
      %v6308 = vunpack.c.l.b16 %v5284
      %v6309 = vunpack.c.l.b16 %v5285
      %v6310 = vunpack.c.h.b16 %v5285
      %v6311 = vunpack.c.l.b16 %v5286
      %v6312 = vunpack.c.l.b16 %v5287
      %v6313 = vunpack.c.h.b16 %v5287
      %v6314 = vunpack.c.l.b16 %v5288
      %v6315 = vunpack.c.l.b16 %v5289
      %v6316 = vunpack.c.h.b16 %v5289
      %v6317 = vunpack.c.l.b16 %v5290
      %v6318 = vunpack.c.l.b16 %v5291
      %v6319 = vunpack.c.h.b16 %v5291
      %v6320 = vunpack.c.l.b16 %v5292
      %v6321 = vunpack.c.l.b16 %v5293
      %v6322 = vunpack.c.h.b16 %v5293
      %v6323 = vunpack.c.l.b16 %v5294
      %v6324 = vunpack.c.l.b16 %v5295
      %v6325 = vunpack.c.h.b16 %v5295
      %v6326 = vunpack.c.l.b16 %v5296
      %v6327 = vunpack.c.l.b16 %v5297
      %v6328 = vunpack.c.h.b16 %v5297
      %v6329 = vunpack.c.l.b16 %v5298
      %v6330 = vunpack.c.l.b16 %v5299
      %v6331 = vunpack.c.h.b16 %v5299
      %v6332 = vunpack.c.l.b16 %v5300
      %v6333 = vunpack.c.l.b16 %v5301
      %v6334 = vunpack.c.h.b16 %v5301
      %v6335 = vunpack.c.l.b16 %v5302
      %v6336 = vunpack.c.l.b16 %v5303
      %v6337 = vunpack.c.h.b16 %v5303
      %v6338 = vunpack.c.l.b16 %v5304
      %v6339 = vunpack.c.l.b16 %v5305
      %v6340 = vunpack.c.h.b16 %v5305
      %v6341 = vunpack.c.l.b16 %v5306
      %v6342 = vunpack.c.l.b16 %v5307
      %v6343 = vunpack.c.h.b16 %v5307
      %v6344 = vunpack.c.l.b16 %v5308
      %v6345 = vunpack.c.l.b16 %v5309
      %v6346 = vunpack.c.h.b16 %v5309
      %v6347 = vunpack.c.l.b16 %v5310
      %v6348 = vunpack.c.l.b16 %v5311
      %v6349 = vunpack.c.h.b16 %v5311
      %v6350 = vunpack.c.l.b16 %v5312
      %v6351 = vunpack.c.l.b16 %v5313
      %v6352 = vunpack.c.h.b16 %v5313
      %v6353 = vunpack.c.l.b16 %v5314
      %v6354 = vunpack.c.l.b16 %v5315
      %v6355 = vunpack.c.h.b16 %v5315
      %v6356 = vunpack.c.l.b16 %v5316
      %v6357 = vunpack.c.l.b16 %v5317
      %v6358 = vunpack.c.h.b16 %v5317
      %v6359 = vunpack.c.l.b16 %v5318
      %v6360 = vunpack.c.l.b16 %v5319
      %v6361 = vunpack.c.h.b16 %v5319
      %v6362 = vunpack.c.l.b16 %v5320
      %v6363 = vunpack.c.l.b16 %v5321
      %v6364 = vunpack.c.h.b16 %v5321
      %v6365 = vunpack.c.l.b16 %v5322
      %v6366 = vpack.c.b16 %v6273, %v6270
      %v6367 = vpack.c.b16 %v6274, %v6271
      %v6368 = vpack.c.b16 %v6275, %v6272
      %v6369 = vpack.c.b16 %v6279, %v6276
      %v6370 = vpack.c.b16 %v6280, %v6277
      %v6371 = vpack.c.b16 %v6281, %v6278
      %v6372 = vpack.c.b16 %v6285, %v6282
      %v6373 = vpack.c.b16 %v6286, %v6283
      %v6374 = vpack.c.b16 %v6287, %v6284
      %v6375 = vpack.c.b16 %v6291, %v6288
      %v6376 = vpack.c.b16 %v6292, %v6289
      %v6377 = vpack.c.b16 %v6293, %v6290
      %v6378 = vpack.c.b16 %v6297, %v6294
      %v6379 = vpack.c.b16 %v6298, %v6295
      %v6380 = vpack.c.b16 %v6299, %v6296
      %v6381 = vpack.c.b16 %v6303, %v6300
      %v6382 = vpack.c.b16 %v6304, %v6301
      %v6383 = vpack.c.b16 %v6305, %v6302
      %v6384 = vpack.c.b16 %v6309, %v6306
      %v6385 = vpack.c.b16 %v6310, %v6307
      %v6386 = vpack.c.b16 %v6311, %v6308
      %v6387 = vpack.c.b16 %v6315, %v6312
      %v6388 = vpack.c.b16 %v6316, %v6313
      %v6389 = vpack.c.b16 %v6317, %v6314
      %v6390 = vpack.c.b16 %v6321, %v6318
      %v6391 = vpack.c.b16 %v6322, %v6319
      %v6392 = vpack.c.b16 %v6323, %v6320
      %v6393 = vpack.c.b16 %v6327, %v6324
      %v6394 = vpack.c.b16 %v6328, %v6325
      %v6395 = vpack.c.b16 %v6329, %v6326
      %v6396 = vpack.c.b16 %v6333, %v6330
      %v6397 = vpack.c.b16 %v6334, %v6331
      %v6398 = vpack.c.b16 %v6335, %v6332
      %v6399 = vpack.c.b16 %v6339, %v6336
      %v6400 = vpack.c.b16 %v6340, %v6337
      %v6401 = vpack.c.b16 %v6341, %v6338
      %v6402 = vpack.c.b16 %v6345, %v6342
      %v6403 = vpack.c.b16 %v6346, %v6343
      %v6404 = vpack.c.b16 %v6347, %v6344
      %v6405 = vpack.c.b16 %v6351, %v6348
      %v6406 = vpack.c.b16 %v6352, %v6349
      %v6407 = vpack.c.b16 %v6353, %v6350
      %v6408 = vpack.c.b16 %v6357, %v6354
      %v6409 = vpack.c.b16 %v6358, %v6355
      %v6410 = vpack.c.b16 %v6359, %v6356
      %v6411 = vpack.c.b16 %v6363, %v6360
      %v6412 = vpack.c.b16 %v6364, %v6361
      %v6413 = vpack.c.b16 %v6365, %v6362
      %v6510 = vunpack.c.l.b16 %v5323
      %v6511 = vunpack.c.l.b16 %v5324
      %v6512 = vunpack.c.l.b16 %v5325
      %v6513 = vunpack.c.l.b16 %v5326
      %v6514 = vunpack.c.l.b16 %v5327
      %v6515 = vunpack.c.l.b16 %v5328
      %v6516 = vunpack.c.l.b16 %v5329
      %v6517 = vunpack.c.l.b16 %v5330
      %v6518 = vunpack.c.l.b16 %v5331
      %v6519 = vunpack.c.l.b16 %v5332
      %v6520 = vunpack.c.l.b16 %v5333
      %v6521 = vunpack.c.l.b16 %v5334
      %v6522 = vunpack.c.l.b16 %v5335
      %v6523 = vunpack.c.l.b16 %v5336
      %v6524 = vunpack.c.l.b16 %v5337
      %v6525 = vunpack.c.l.b16 %v5338
      %v6526 = vunpack.c.l.b16 %v5339
      %v6527 = vunpack.c.l.b16 %v5340
      %v6528 = vunpack.c.l.b16 %v5341
      %v6529 = vunpack.c.l.b16 %v5342
      %v6530 = vunpack.c.l.b16 %v5343
      %v6531 = vunpack.c.l.b16 %v5344
      %v6532 = vunpack.c.l.b16 %v5345
      %v6533 = vunpack.c.l.b16 %v5346
      %v6534 = vunpack.c.l.b16 %v5347
      %v6535 = vunpack.c.l.b16 %v5348
      %v6536 = vunpack.c.l.b16 %v5349
      %v6537 = vunpack.c.l.b16 %v5350
      %v6538 = vunpack.c.l.b16 %v5351
      %v6539 = vunpack.c.l.b16 %v5352
      %v6540 = vunpack.c.l.b16 %v5353
      %v6541 = vunpack.c.l.b16 %v5354
      %v6542 = vunpack.c.l.b16 %v5355
      %v6543 = vunpack.c.l.b16 %v5356
      %v6544 = vunpack.c.l.b16 %v5357
      %v6545 = vunpack.c.l.b16 %v5358
      %v6546 = vunpack.c.l.b16 %v5359
      %v6547 = vunpack.c.l.b16 %v5360
      %v6548 = vunpack.c.l.b16 %v5361
      %v6549 = vunpack.c.l.b16 %v5362
      %v6550 = vunpack.c.l.b16 %v5363
      %v6551 = vunpack.c.l.b16 %v5364
      %v6552 = vunpack.c.l.b16 %v5365
      %v6553 = vunpack.c.l.b16 %v5366
      %v6554 = vunpack.c.l.b16 %v5367
      %v6555 = vunpack.c.l.b16 %v5368
      %v6556 = vunpack.c.l.b16 %v5369
      %v6557 = vunpack.c.l.b16 %v5370
      %v6558 = vpack.c.b16 %v6511, %v6510
      %v6559 = vpack.c.b16 %v6513, %v6512
      %v6560 = vpack.c.b16 %v6515, %v6514
      %v6561 = vpack.c.b16 %v6517, %v6516
      %v6562 = vpack.c.b16 %v6519, %v6518
      %v6563 = vpack.c.b16 %v6521, %v6520
      %v6564 = vpack.c.b16 %v6523, %v6522
      %v6565 = vpack.c.b16 %v6525, %v6524
      %v6566 = vpack.c.b16 %v6527, %v6526
      %v6567 = vpack.c.b16 %v6529, %v6528
      %v6568 = vpack.c.b16 %v6531, %v6530
      %v6569 = vpack.c.b16 %v6533, %v6532
      %v6570 = vpack.c.b16 %v6535, %v6534
      %v6571 = vpack.c.b16 %v6537, %v6536
      %v6572 = vpack.c.b16 %v6539, %v6538
      %v6573 = vpack.c.b16 %v6541, %v6540
      %v6574 = vpack.c.b16 %v6543, %v6542
      %v6575 = vpack.c.b16 %v6545, %v6544
      %v6576 = vpack.c.b16 %v6547, %v6546
      %v6577 = vpack.c.b16 %v6549, %v6548
      %v6578 = vpack.c.b16 %v6551, %v6550
      %v6579 = vpack.c.b16 %v6553, %v6552
      %v6580 = vpack.c.b16 %v6555, %v6554
      %v6581 = vpack.c.b16 %v6557, %v6556
      %6606 = vmatprep.subr.bf16.mxu0 0
      %6607 = vmatpush1.bf16.msra.mxu0 %v6565
      %6608 = vmatprep.subr.bf16.mxu0 0
      %6609 = vmatpush1.bf16.msra.mxu0 %v6564
      %6610 = vmatprep.subr.bf16.mxu0 0
      %6611 = vmatpush1.bf16.msra.mxu0 %v6563
      %6612 = vmatprep.subr.bf16.mxu0 0
      %6613 = vmatpush1.bf16.msra.mxu0 %v6562
      %6614 = vmatprep.subr.bf16.mxu0 0
      %6615 = vmatpush1.bf16.msra.mxu0 %v6561
      %6616 = vmatprep.subr.bf16.mxu0 0
      %6617 = vmatpush1.bf16.msra.mxu0 %v6560
      %6618 = vmatprep.subr.bf16.mxu0 0
      %6619 = vmatpush1.bf16.msra.mxu0 %v6559
      %6620 = vmatprep.subr.bf16.mxu0 0
      %6621 = vmatpush1.bf16.msra.mxu0 %v6558
      %6622 = vmatprep.subr.bf16.mxu0 0
      %6623 = vmatpush2.bf16.msra.mxu0 %v6573
      %6624 = vmatprep.subr.bf16.mxu0 0
      %6625 = vmatpush2.bf16.msra.mxu0 %v6572
      %6626 = vmatprep.subr.bf16.mxu0 0
      %6627 = vmatpush2.bf16.msra.mxu0 %v6571
      %6628 = vmatprep.subr.bf16.mxu0 0
      %6629 = vmatpush2.bf16.msra.mxu0 %v6570
      %6630 = vmatprep.subr.bf16.mxu0 0
      %6631 = vmatpush2.bf16.msra.mxu0 %v6569
      %6632 = vmatprep.subr.bf16.mxu0 0
      %6633 = vmatpush2.bf16.msra.mxu0 %v6568
      %6634 = vmatprep.subr.bf16.mxu0 0
      %6635 = vmatpush2.bf16.msra.mxu0 %v6567
      %6636 = vmatprep.subr.bf16.mxu0 0
      %6637 = vmatpush2.bf16.msra.mxu0 %v6566
      %6638 = vmatprep.mubr.bf16.mxu0 %v6367
      %6639 = vmatmul.mubr.bf16.gmra.mxu0 %v6366
      %v6640 = vpop.f32.mrf.mxu0
      %v6641 = vadd.f32 %v6080, %v6640
      %v6642 = vpop.f32.mrf.mxu0
      %v6643 = vpop.f32.mrf.mxu0
      %v6644 = vadd.f32 %v6083, %v6643
      %v6645 = vpop.f32.mrf.mxu0
      %6646 = vmatprep.mubr.bf16.mxu0 %v6370
      %6647 = vmatmul.mubr.bf16.gmra.mxu0 %v6369
      %v6648 = vpop.f32.mrf.mxu0
      %v6649 = vadd.f32 %v6088, %v6648
      %v6650 = vpop.f32.mrf.mxu0
      %v6651 = vpop.f32.mrf.mxu0
      %v6652 = vadd.f32 %v6091, %v6651
      %v6653 = vpop.f32.mrf.mxu0
      %6654 = vmatprep.mubr.bf16.mxu0 %v6373
      %6655 = vmatmul.mubr.bf16.gmra.mxu0 %v6372
      %v6656 = vpop.f32.mrf.mxu0
      %v6657 = vadd.f32 %v6096, %v6656
      %v6658 = vpop.f32.mrf.mxu0
      %v6659 = vpop.f32.mrf.mxu0
      %v6660 = vadd.f32 %v6099, %v6659
      %v6661 = vpop.f32.mrf.mxu0
      %6662 = vmatprep.mubr.bf16.mxu0 %v6376
      %6663 = vmatmul.mubr.bf16.gmra.mxu0 %v6375
      %v6664 = vpop.f32.mrf.mxu0
      %v6665 = vadd.f32 %v6104, %v6664
      %v6666 = vpop.f32.mrf.mxu0
      %v6667 = vpop.f32.mrf.mxu0
      %v6668 = vadd.f32 %v6107, %v6667
      %v6669 = vpop.f32.mrf.mxu0
      %6670 = vmatprep.mubr.bf16.mxu0 %v6379
      %6671 = vmatmul.mubr.bf16.gmra.mxu0 %v6378
      %v6672 = vpop.f32.mrf.mxu0
      %v6673 = vadd.f32 %v6112, %v6672
      %v6674 = vpop.f32.mrf.mxu0
      %v6675 = vpop.f32.mrf.mxu0
      %v6676 = vadd.f32 %v6115, %v6675
      %v6677 = vpop.f32.mrf.mxu0
      %6678 = vmatprep.mubr.bf16.mxu0 %v6382
      %6679 = vmatmul.mubr.bf16.gmra.mxu0 %v6381
      %v6680 = vpop.f32.mrf.mxu0
      %v6681 = vadd.f32 %v6120, %v6680
      %v6682 = vpop.f32.mrf.mxu0
      %v6683 = vpop.f32.mrf.mxu0
      %v6684 = vadd.f32 %v6123, %v6683
      %v6685 = vpop.f32.mrf.mxu0
      %6686 = vmatprep.mubr.bf16.mxu0 %v6385
      %6687 = vmatmul.mubr.bf16.gmra.mxu0 %v6384
      %v6688 = vpop.f32.mrf.mxu0
      %v6689 = vadd.f32 %v6128, %v6688
      %v6690 = vpop.f32.mrf.mxu0
      %v6691 = vpop.f32.mrf.mxu0
      %v6692 = vadd.f32 %v6131, %v6691
      %v6693 = vpop.f32.mrf.mxu0
      %6694 = vmatprep.mubr.bf16.mxu0 %v6388
      %6695 = vmatmul.mubr.bf16.gmra.mxu0 %v6387
      %v6696 = vpop.f32.mrf.mxu0
      %v6697 = vadd.f32 %v6136, %v6696
      %v6698 = vpop.f32.mrf.mxu0
      %v6699 = vpop.f32.mrf.mxu0
      %v6700 = vadd.f32 %v6139, %v6699
      %v6701 = vpop.f32.mrf.mxu0
      %6702 = vmatprep.mubr.bf16.mxu0 %v6391
      %6703 = vmatmul.mubr.bf16.gmra.mxu0 %v6390
      %v6704 = vpop.f32.mrf.mxu0
      %v6705 = vadd.f32 %v6144, %v6704
      %v6706 = vpop.f32.mrf.mxu0
      %v6707 = vpop.f32.mrf.mxu0
      %v6708 = vadd.f32 %v6147, %v6707
      %v6709 = vpop.f32.mrf.mxu0
      %6710 = vmatprep.mubr.bf16.mxu0 %v6394
      %6711 = vmatmul.mubr.bf16.gmra.mxu0 %v6393
      %v6712 = vpop.f32.mrf.mxu0
      %v6713 = vadd.f32 %v6152, %v6712
      %v6714 = vpop.f32.mrf.mxu0
      %v6715 = vpop.f32.mrf.mxu0
      %v6716 = vadd.f32 %v6155, %v6715
      %v6717 = vpop.f32.mrf.mxu0
      %6718 = vmatprep.mubr.bf16.mxu0 %v6397
      %6719 = vmatmul.mubr.bf16.gmra.mxu0 %v6396
      %v6720 = vpop.f32.mrf.mxu0
      %v6721 = vadd.f32 %v6160, %v6720
      %v6722 = vpop.f32.mrf.mxu0
      %v6723 = vpop.f32.mrf.mxu0
      %v6724 = vadd.f32 %v6163, %v6723
      %v6725 = vpop.f32.mrf.mxu0
      %6726 = vmatprep.mubr.bf16.mxu0 %v6400
      %6727 = vmatmul.mubr.bf16.gmra.mxu0 %v6399
      %v6728 = vpop.f32.mrf.mxu0
      %v6729 = vadd.f32 %v6168, %v6728
      %v6730 = vpop.f32.mrf.mxu0
      %v6731 = vpop.f32.mrf.mxu0
      %v6732 = vadd.f32 %v6171, %v6731
      %v6733 = vpop.f32.mrf.mxu0
      %6734 = vmatprep.mubr.bf16.mxu0 %v6403
      %6735 = vmatmul.mubr.bf16.gmra.mxu0 %v6402
      %v6736 = vpop.f32.mrf.mxu0
      %v6737 = vadd.f32 %v6176, %v6736
      %v6738 = vpop.f32.mrf.mxu0
      %v6739 = vpop.f32.mrf.mxu0
      %v6740 = vadd.f32 %v6179, %v6739
      %v6741 = vpop.f32.mrf.mxu0
      %6742 = vmatprep.mubr.bf16.mxu0 %v6406
      %6743 = vmatmul.mubr.bf16.gmra.mxu0 %v6405
      %v6744 = vpop.f32.mrf.mxu0
      %v6745 = vadd.f32 %v6184, %v6744
      %v6746 = vpop.f32.mrf.mxu0
      %v6747 = vpop.f32.mrf.mxu0
      %v6748 = vadd.f32 %v6187, %v6747
      %v6749 = vpop.f32.mrf.mxu0
      %6750 = vmatprep.mubr.bf16.mxu0 %v6409
      %6751 = vmatmul.mubr.bf16.gmra.mxu0 %v6408
      %v6752 = vpop.f32.mrf.mxu0
      %v6753 = vadd.f32 %v6192, %v6752
      %v6754 = vpop.f32.mrf.mxu0
      %v6755 = vpop.f32.mrf.mxu0
      %v6756 = vadd.f32 %v6195, %v6755
      %v6757 = vpop.f32.mrf.mxu0
      %6758 = vmatprep.mubr.bf16.mxu0 %v6412
      %6759 = vmatmul.mubr.bf16.gmra.mxu0 %v6411
      %v6760 = vpop.f32.mrf.mxu0
      %v6761 = vadd.f32 %v6200, %v6760
      %v6762 = vpop.f32.mrf.mxu0
      %v6763 = vpop.f32.mrf.mxu0
      %v6764 = vadd.f32 %v6203, %v6763
      %v6765 = vpop.f32.mrf.mxu0
      %6766 = vdwg.mxu0
      %6767 = vmatprep.subr.bf16.mxu0 0
      %6768 = vmatpush1.bf16.msra.mxu0 %v6581
      %6769 = vmatprep.subr.bf16.mxu0 0
      %6770 = vmatpush1.bf16.msra.mxu0 %v6580
      %6771 = vmatprep.subr.bf16.mxu0 0
      %6772 = vmatpush1.bf16.msra.mxu0 %v6579
      %6773 = vmatprep.subr.bf16.mxu0 0
      %6774 = vmatpush1.bf16.msra.mxu0 %v6578
      %6775 = vmatprep.subr.bf16.mxu0 0
      %6776 = vmatpush1.bf16.msra.mxu0 %v6577
      %6777 = vmatprep.subr.bf16.mxu0 0
      %6778 = vmatpush1.bf16.msra.mxu0 %v6576
      %6779 = vmatprep.subr.bf16.mxu0 0
      %6780 = vmatpush1.bf16.msra.mxu0 %v6575
      %6781 = vmatprep.subr.bf16.mxu0 0
      %6782 = vmatpush1.bf16.msra.mxu0 %v6574
      %6783 = vmatprep.subr.bf16.mxu0 0
      %6784 = vmatpush2.bf16.msra.mxu0 0
      %6785 = vmatprep.subr.bf16.mxu0 0
      %6786 = vmatpush2.bf16.msra.mxu0 0
      %6787 = vmatprep.subr.bf16.mxu0 0
      %6788 = vmatpush2.bf16.msra.mxu0 0
      %6789 = vmatprep.subr.bf16.mxu0 0
      %6790 = vmatpush2.bf16.msra.mxu0 0
      %6791 = vmatprep.subr.bf16.mxu0 0
      %6792 = vmatpush2.bf16.msra.mxu0 0
      %6793 = vmatprep.subr.bf16.mxu0 0
      %6794 = vmatpush2.bf16.msra.mxu0 0
      %6795 = vmatprep.subr.bf16.mxu0 0
      %6796 = vmatpush2.bf16.msra.mxu0 0
      %6797 = vmatprep.subr.bf16.mxu0 0
      %6798 = vmatpush2.bf16.msra.mxu0 0
      %6799 = vmatprep.mubr.bf16.mxu0 0
      %6800 = vmatmul.mubr.bf16.gmra.mxu0 %v6368
      %v6801 = vpop.f32.mrf.mxu0
      %v6802 = vadd.f32 %v6641, %v6801
      %v6803 = vpop.f32.mrf.mxu0
      %v6804 = vpop.f32.mrf.mxu0
      %v6805 = vadd.f32 %v6644, %v6804
      %v6806 = vpop.f32.mrf.mxu0
      %6807 = vmatprep.mubr.bf16.mxu0 0
      %6808 = vmatmul.mubr.bf16.gmra.mxu0 %v6371
      %v6809 = vpop.f32.mrf.mxu0
      %v6810 = vadd.f32 %v6649, %v6809
      %v6811 = vpop.f32.mrf.mxu0
      %v6812 = vpop.f32.mrf.mxu0
      %v6813 = vadd.f32 %v6652, %v6812
      %v6814 = vpop.f32.mrf.mxu0
      %6815 = vmatprep.mubr.bf16.mxu0 0
      %6816 = vmatmul.mubr.bf16.gmra.mxu0 %v6374
      %v6817 = vpop.f32.mrf.mxu0
      %v6818 = vadd.f32 %v6657, %v6817
      %v6819 = vpop.f32.mrf.mxu0
      %v6820 = vpop.f32.mrf.mxu0
      %v6821 = vadd.f32 %v6660, %v6820
      %v6822 = vpop.f32.mrf.mxu0
      %6823 = vmatprep.mubr.bf16.mxu0 0
      %6824 = vmatmul.mubr.bf16.gmra.mxu0 %v6377
      %v6825 = vpop.f32.mrf.mxu0
      %v6826 = vadd.f32 %v6665, %v6825
      %v6827 = vpop.f32.mrf.mxu0
      %v6828 = vpop.f32.mrf.mxu0
      %v6829 = vadd.f32 %v6668, %v6828
      %v6830 = vpop.f32.mrf.mxu0
      %6831 = vmatprep.mubr.bf16.mxu0 0
      %6832 = vmatmul.mubr.bf16.gmra.mxu0 %v6380
      %v6833 = vpop.f32.mrf.mxu0
      %v6834 = vadd.f32 %v6673, %v6833
      %v6835 = vpop.f32.mrf.mxu0
      %v6836 = vpop.f32.mrf.mxu0
      %v6837 = vadd.f32 %v6676, %v6836
      %v6838 = vpop.f32.mrf.mxu0
      %6839 = vmatprep.mubr.bf16.mxu0 0
      %6840 = vmatmul.mubr.bf16.gmra.mxu0 %v6383
      %v6841 = vpop.f32.mrf.mxu0
      %v6842 = vadd.f32 %v6681, %v6841
      %v6843 = vpop.f32.mrf.mxu0
      %v6844 = vpop.f32.mrf.mxu0
      %v6845 = vadd.f32 %v6684, %v6844
      %v6846 = vpop.f32.mrf.mxu0
      %6847 = vmatprep.mubr.bf16.mxu0 0
      %6848 = vmatmul.mubr.bf16.gmra.mxu0 %v6386
      %v6849 = vpop.f32.mrf.mxu0
      %v6850 = vadd.f32 %v6689, %v6849
      %v6851 = vpop.f32.mrf.mxu0
      %v6852 = vpop.f32.mrf.mxu0
      %v6853 = vadd.f32 %v6692, %v6852
      %v6854 = vpop.f32.mrf.mxu0
      %6855 = vmatprep.mubr.bf16.mxu0 0
      %6856 = vmatmul.mubr.bf16.gmra.mxu0 %v6389
      %v6857 = vpop.f32.mrf.mxu0
      %v6858 = vadd.f32 %v6697, %v6857
      %v6859 = vpop.f32.mrf.mxu0
      %v6860 = vpop.f32.mrf.mxu0
      %v6861 = vadd.f32 %v6700, %v6860
      %v6862 = vpop.f32.mrf.mxu0
      %6863 = vmatprep.mubr.bf16.mxu0 0
      %6864 = vmatmul.mubr.bf16.gmra.mxu0 %v6392
      %v6865 = vpop.f32.mrf.mxu0
      %v6866 = vadd.f32 %v6705, %v6865
      %v6867 = vpop.f32.mrf.mxu0
      %v6868 = vpop.f32.mrf.mxu0
      %v6869 = vadd.f32 %v6708, %v6868
      %v6870 = vpop.f32.mrf.mxu0
      %6871 = vmatprep.mubr.bf16.mxu0 0
      %6872 = vmatmul.mubr.bf16.gmra.mxu0 %v6395
      %v6873 = vpop.f32.mrf.mxu0
      %v6874 = vadd.f32 %v6713, %v6873
      %v6875 = vpop.f32.mrf.mxu0
      %v6876 = vpop.f32.mrf.mxu0
      %v6877 = vadd.f32 %v6716, %v6876
      %v6878 = vpop.f32.mrf.mxu0
      %6879 = vmatprep.mubr.bf16.mxu0 0
      %6880 = vmatmul.mubr.bf16.gmra.mxu0 %v6398
      %v6881 = vpop.f32.mrf.mxu0
      %v6882 = vadd.f32 %v6721, %v6881
      %v6883 = vpop.f32.mrf.mxu0
      %v6884 = vpop.f32.mrf.mxu0
      %v6885 = vadd.f32 %v6724, %v6884
      %v6886 = vpop.f32.mrf.mxu0
      %6887 = vmatprep.mubr.bf16.mxu0 0
      %6888 = vmatmul.mubr.bf16.gmra.mxu0 %v6401
      %v6889 = vpop.f32.mrf.mxu0
      %v6890 = vadd.f32 %v6729, %v6889
      %v6891 = vpop.f32.mrf.mxu0
      %v6892 = vpop.f32.mrf.mxu0
      %v6893 = vadd.f32 %v6732, %v6892
      %v6894 = vpop.f32.mrf.mxu0
      %6895 = vmatprep.mubr.bf16.mxu0 0
      %6896 = vmatmul.mubr.bf16.gmra.mxu0 %v6404
      %v6897 = vpop.f32.mrf.mxu0
      %v6898 = vadd.f32 %v6737, %v6897
      %v6899 = vpop.f32.mrf.mxu0
      %v6900 = vpop.f32.mrf.mxu0
      %v6901 = vadd.f32 %v6740, %v6900
      %v6902 = vpop.f32.mrf.mxu0
      %6903 = vmatprep.mubr.bf16.mxu0 0
      %6904 = vmatmul.mubr.bf16.gmra.mxu0 %v6407
      %v6905 = vpop.f32.mrf.mxu0
      %v6906 = vadd.f32 %v6745, %v6905
      %v6907 = vpop.f32.mrf.mxu0
      %v6908 = vpop.f32.mrf.mxu0
      %v6909 = vadd.f32 %v6748, %v6908
      %v6910 = vpop.f32.mrf.mxu0
      %6911 = vmatprep.mubr.bf16.mxu0 0
      %6912 = vmatmul.mubr.bf16.gmra.mxu0 %v6410
      %v6913 = vpop.f32.mrf.mxu0
      %v6914 = vadd.f32 %v6753, %v6913
      %v6915 = vpop.f32.mrf.mxu0
      %v6916 = vpop.f32.mrf.mxu0
      %v6917 = vadd.f32 %v6756, %v6916
      %v6918 = vpop.f32.mrf.mxu0
      %6919 = vmatprep.mubr.bf16.mxu0 0
      %6920 = vmatmul.mubr.bf16.gmra.mxu0 %v6413
      %v6921 = vpop.f32.mrf.mxu0
      %v6922 = vadd.f32 %v6761, %v6921
      %v6923 = vpop.f32.mrf.mxu0
      %v6924 = vpop.f32.mrf.mxu0
      %v6925 = vadd.f32 %v6764, %v6924
      %v6926 = vpop.f32.mrf.mxu0
      %6927 = vdwg.mxu0
      %s6928 = scalar_lea.vmem [#allocation4], 48
      %v6929 = vld [vmem:[%s6928] sm:$0xff]
      %v6930 = vld [vmem:[%s6928 + $0x8] sm:$0xf]
      %v6931 = vld [vmem:[%s6928 + $0xc] sm:$0xff]
      %v6932 = vld [vmem:[%s6928 + $0x14] sm:$0xf]
      %v6933 = vld [vmem:[%s6928 + $0x18] sm:$0xff]
      %v6934 = vld [vmem:[%s6928 + $0x20] sm:$0xf]
      %v6935 = vld [vmem:[%s6928 + $0x24] sm:$0xff]
      %v6936 = vld [vmem:[%s6928 + $0x2c] sm:$0xf]
      %v6937 = vld [vmem:[%s6928 + $0x30] sm:$0xff]
      %v6938 = vld [vmem:[%s6928 + $0x38] sm:$0xf]
      %v6939 = vld [vmem:[%s6928 + $0x3c] sm:$0xff]
      %v6940 = vld [vmem:[%s6928 + $0x44] sm:$0xf]
      %v6941 = vld [vmem:[%s6928 + $0x48] sm:$0xff]
      %v6942 = vld [vmem:[%s6928 + $0x50] sm:$0xf]
      %v6943 = vld [vmem:[%s6928 + $0x54] sm:$0xff]
      %v6944 = vld [vmem:[%s6928 + $0x5c] sm:$0xf]
      %v6945 = vld [vmem:[%s6928 + $0x60] sm:$0xff]
      %v6946 = vld [vmem:[%s6928 + $0x68] sm:$0xf]
      %v6947 = vld [vmem:[%s6928 + $0x6c] sm:$0xff]
      %v6948 = vld [vmem:[%s6928 + $0x74] sm:$0xf]
      %v6949 = vld [vmem:[%s6928 + $0x78] sm:$0xff]
      %v6950 = vld [vmem:[%s6928 + $0x80] sm:$0xf]
      %v6951 = vld [vmem:[%s6928 + $0x84] sm:$0xff]
      %v6952 = vld [vmem:[%s6928 + $0x8c] sm:$0xf]
      %v6953 = vld [vmem:[%s6928 + $0x90] sm:$0xff]
      %v6954 = vld [vmem:[%s6928 + $0x98] sm:$0xf]
      %v6955 = vld [vmem:[%s6928 + $0x9c] sm:$0xff]
      %v6956 = vld [vmem:[%s6928 + $0xa4] sm:$0xf]
      %v6957 = vld [vmem:[%s6928 + $0xa8] sm:$0xff]
      %v6958 = vld [vmem:[%s6928 + $0xb0] sm:$0xf]
      %v6959 = vld [vmem:[%s6928 + $0xb4] sm:$0xff]
      %v6960 = vld [vmem:[%s6928 + $0xbc] sm:$0xf]
      %v6961 = vld [vmem:[%s6928 + $0xc0] sm:$0xff]
      %v6962 = vld [vmem:[%s6928 + $0xc8] sm:$0xf]
      %v6963 = vld [vmem:[%s6928 + $0xcc] sm:$0xff]
      %v6964 = vld [vmem:[%s6928 + $0xd4] sm:$0xf]
      %v6965 = vld [vmem:[%s6928 + $0xd8] sm:$0xff]
      %v6966 = vld [vmem:[%s6928 + $0xe0] sm:$0xf]
      %v6967 = vld [vmem:[%s6928 + $0xe4] sm:$0xff]
      %v6968 = vld [vmem:[%s6928 + $0xec] sm:$0xf]
      %v6969 = vld [vmem:[%s6928 + $0xf0] sm:$0xff]
      %v6970 = vld [vmem:[%s6928 + $0xf8] sm:$0xf]
      %v6971 = vld [vmem:[%s6928 + $0xfc] sm:$0xff]
      %v6972 = vld [vmem:[%s6928 + $0x104] sm:$0xf]
      %v6973 = vld [vmem:[%s6928 + $0x108] sm:$0xff]
      %v6974 = vld [vmem:[%s6928 + $0x110] sm:$0xf]
      %v6975 = vld [vmem:[%s6928 + $0x114] sm:$0xff]
      %v6976 = vld [vmem:[%s6928 + $0x11c] sm:$0xf]
      %v6977 = vld [vmem:[%s6928 + $0x120] sm:$0xff]
      %v6978 = vld [vmem:[%s6928 + $0x128] sm:$0xf]
      %v6979 = vld [vmem:[%s6928 + $0x12c] sm:$0xff]
      %v6980 = vld [vmem:[%s6928 + $0x134] sm:$0xf]
      %v6981 = vld [vmem:[%s6928 + $0x138] sm:$0xff]
      %v6982 = vld [vmem:[%s6928 + $0x140] sm:$0xf]
      %v6983 = vld [vmem:[%s6928 + $0x144] sm:$0xff]
      %v6984 = vld [vmem:[%s6928 + $0x14c] sm:$0xf]
      %v6985 = vld [vmem:[%s6928 + $0x150] sm:$0xff]
      %v6986 = vld [vmem:[%s6928 + $0x158] sm:$0xf]
      %v6987 = vld [vmem:[%s6928 + $0x15c] sm:$0xff]
      %v6988 = vld [vmem:[%s6928 + $0x164] sm:$0xf]
      %v6989 = vld [vmem:[%s6928 + $0x168] sm:$0xff]
      %v6990 = vld [vmem:[%s6928 + $0x170] sm:$0xf]
      %v6991 = vld [vmem:[%s6928 + $0x174] sm:$0xff]
      %v6992 = vld [vmem:[%s6928 + $0x17c] sm:$0xf]
      %s6993 = scalar_lea.vmem %s6, 384
      %v6994 = vld [vmem:[%s6993] sm:$0xf]
      %v6995 = vld [vmem:[%s6993 + $0x4] sm:$0xf]
      %v6996 = vld [vmem:[%s6993 + $0x8] sm:$0xf]
      %v6997 = vld [vmem:[%s6993 + $0xc] sm:$0xf]
      %v6998 = vld [vmem:[%s6993 + $0x10] sm:$0xf]
      %v6999 = vld [vmem:[%s6993 + $0x14] sm:$0xf]
      %v7000 = vld [vmem:[%s6993 + $0x18] sm:$0xf]
      %v7001 = vld [vmem:[%s6993 + $0x1c] sm:$0xf]
      %v7002 = vld [vmem:[%s6993 + $0x20] sm:$0xf]
      %v7003 = vld [vmem:[%s6993 + $0x24] sm:$0xf]
      %v7004 = vld [vmem:[%s6993 + $0x28] sm:$0xf]
      %v7005 = vld [vmem:[%s6993 + $0x2c] sm:$0xf]
      %v7006 = vld [vmem:[%s6993 + $0x30] sm:$0xf]
      %v7007 = vld [vmem:[%s6993 + $0x34] sm:$0xf]
      %v7008 = vld [vmem:[%s6993 + $0x38] sm:$0xf]
      %v7009 = vld [vmem:[%s6993 + $0x3c] sm:$0xf]
      %v7010 = vld [vmem:[%s6993 + $0x40] sm:$0xf]
      %v7011 = vld [vmem:[%s6993 + $0x44] sm:$0xf]
      %v7012 = vld [vmem:[%s6993 + $0x48] sm:$0xf]
      %v7013 = vld [vmem:[%s6993 + $0x4c] sm:$0xf]
      %v7014 = vld [vmem:[%s6993 + $0x50] sm:$0xf]
      %v7015 = vld [vmem:[%s6993 + $0x54] sm:$0xf]
      %v7016 = vld [vmem:[%s6993 + $0x58] sm:$0xf]
      %v7017 = vld [vmem:[%s6993 + $0x5c] sm:$0xf]
      %v7018 = vld [vmem:[%s6993 + $0x60] sm:$0xf]
      %v7019 = vld [vmem:[%s6993 + $0x64] sm:$0xf]
      %v7020 = vld [vmem:[%s6993 + $0x68] sm:$0xf]
      %v7021 = vld [vmem:[%s6993 + $0x6c] sm:$0xf]
      %v7022 = vld [vmem:[%s6993 + $0x70] sm:$0xf]
      %v7023 = vld [vmem:[%s6993 + $0x74] sm:$0xf]
      %v7024 = vld [vmem:[%s6993 + $0x78] sm:$0xf]
      %v7025 = vld [vmem:[%s6993 + $0x7c] sm:$0xf]
      %v7026 = vld [vmem:[%s6993 + $0x80] sm:$0xf]
      %v7027 = vld [vmem:[%s6993 + $0x84] sm:$0xf]
      %v7028 = vld [vmem:[%s6993 + $0x88] sm:$0xf]
      %v7029 = vld [vmem:[%s6993 + $0x8c] sm:$0xf]
      %v7030 = vld [vmem:[%s6993 + $0x90] sm:$0xf]
      %v7031 = vld [vmem:[%s6993 + $0x94] sm:$0xf]
      %v7032 = vld [vmem:[%s6993 + $0x98] sm:$0xf]
      %v7033 = vld [vmem:[%s6993 + $0x9c] sm:$0xf]
      %v7034 = vld [vmem:[%s6993 + $0xa0] sm:$0xf]
      %v7035 = vld [vmem:[%s6993 + $0xa4] sm:$0xf]
      %v7036 = vld [vmem:[%s6993 + $0xa8] sm:$0xf]
      %v7037 = vld [vmem:[%s6993 + $0xac] sm:$0xf]
      %v7038 = vld [vmem:[%s6993 + $0xb0] sm:$0xf]
      %v7039 = vld [vmem:[%s6993 + $0xb4] sm:$0xf]
      %v7040 = vld [vmem:[%s6993 + $0xb8] sm:$0xf]
      %v7041 = vld [vmem:[%s6993 + $0xbc] sm:$0xf]
      %v7106 = vunpack.c.l.b16 %v6929
      %v7107 = vunpack.c.h.b16 %v6929
      %v7108 = vunpack.c.l.b16 %v6930
      %v7109 = vunpack.c.l.b16 %v6931
      %v7110 = vunpack.c.h.b16 %v6931
      %v7111 = vunpack.c.l.b16 %v6932
      %v7112 = vunpack.c.l.b16 %v6933
      %v7113 = vunpack.c.h.b16 %v6933
      %v7114 = vunpack.c.l.b16 %v6934
      %v7115 = vunpack.c.l.b16 %v6935
      %v7116 = vunpack.c.h.b16 %v6935
      %v7117 = vunpack.c.l.b16 %v6936
      %v7118 = vunpack.c.l.b16 %v6937
      %v7119 = vunpack.c.h.b16 %v6937
      %v7120 = vunpack.c.l.b16 %v6938
      %v7121 = vunpack.c.l.b16 %v6939
      %v7122 = vunpack.c.h.b16 %v6939
      %v7123 = vunpack.c.l.b16 %v6940
      %v7124 = vunpack.c.l.b16 %v6941
      %v7125 = vunpack.c.h.b16 %v6941
      %v7126 = vunpack.c.l.b16 %v6942
      %v7127 = vunpack.c.l.b16 %v6943
      %v7128 = vunpack.c.h.b16 %v6943
      %v7129 = vunpack.c.l.b16 %v6944
      %v7130 = vunpack.c.l.b16 %v6945
      %v7131 = vunpack.c.h.b16 %v6945
      %v7132 = vunpack.c.l.b16 %v6946
      %v7133 = vunpack.c.l.b16 %v6947
      %v7134 = vunpack.c.h.b16 %v6947
      %v7135 = vunpack.c.l.b16 %v6948
      %v7136 = vunpack.c.l.b16 %v6949
      %v7137 = vunpack.c.h.b16 %v6949
      %v7138 = vunpack.c.l.b16 %v6950
      %v7139 = vunpack.c.l.b16 %v6951
      %v7140 = vunpack.c.h.b16 %v6951
      %v7141 = vunpack.c.l.b16 %v6952
      %v7142 = vunpack.c.l.b16 %v6953
      %v7143 = vunpack.c.h.b16 %v6953
      %v7144 = vunpack.c.l.b16 %v6954
      %v7145 = vunpack.c.l.b16 %v6955
      %v7146 = vunpack.c.h.b16 %v6955
      %v7147 = vunpack.c.l.b16 %v6956
      %v7148 = vunpack.c.l.b16 %v6957
      %v7149 = vunpack.c.h.b16 %v6957
      %v7150 = vunpack.c.l.b16 %v6958
      %v7151 = vunpack.c.l.b16 %v6959
      %v7152 = vunpack.c.h.b16 %v6959
      %v7153 = vunpack.c.l.b16 %v6960
      %v7154 = vunpack.c.l.b16 %v6961
      %v7155 = vunpack.c.h.b16 %v6961
      %v7156 = vunpack.c.l.b16 %v6962
      %v7157 = vunpack.c.l.b16 %v6963
      %v7158 = vunpack.c.h.b16 %v6963
      %v7159 = vunpack.c.l.b16 %v6964
      %v7160 = vunpack.c.l.b16 %v6965
      %v7161 = vunpack.c.h.b16 %v6965
      %v7162 = vunpack.c.l.b16 %v6966
      %v7163 = vunpack.c.l.b16 %v6967
      %v7164 = vunpack.c.h.b16 %v6967
      %v7165 = vunpack.c.l.b16 %v6968
      %v7166 = vunpack.c.l.b16 %v6969
      %v7167 = vunpack.c.h.b16 %v6969
      %v7168 = vunpack.c.l.b16 %v6970
      %v7169 = vunpack.c.l.b16 %v6971
      %v7170 = vunpack.c.h.b16 %v6971
      %v7171 = vunpack.c.l.b16 %v6972
      %v7172 = vunpack.c.l.b16 %v6973
      %v7173 = vunpack.c.h.b16 %v6973
      %v7174 = vunpack.c.l.b16 %v6974
      %v7175 = vunpack.c.l.b16 %v6975
      %v7176 = vunpack.c.h.b16 %v6975
      %v7177 = vunpack.c.l.b16 %v6976
      %v7178 = vunpack.c.l.b16 %v6977
      %v7179 = vunpack.c.h.b16 %v6977
      %v7180 = vunpack.c.l.b16 %v6978
      %v7181 = vunpack.c.l.b16 %v6979
      %v7182 = vunpack.c.h.b16 %v6979
      %v7183 = vunpack.c.l.b16 %v6980
      %v7184 = vunpack.c.l.b16 %v6981
      %v7185 = vunpack.c.h.b16 %v6981
      %v7186 = vunpack.c.l.b16 %v6982
      %v7187 = vunpack.c.l.b16 %v6983
      %v7188 = vunpack.c.h.b16 %v6983
      %v7189 = vunpack.c.l.b16 %v6984
      %v7190 = vunpack.c.l.b16 %v6985
      %v7191 = vunpack.c.h.b16 %v6985
      %v7192 = vunpack.c.l.b16 %v6986
      %v7193 = vunpack.c.l.b16 %v6987
      %v7194 = vunpack.c.h.b16 %v6987
      %v7195 = vunpack.c.l.b16 %v6988
      %v7196 = vunpack.c.l.b16 %v6989
      %v7197 = vunpack.c.h.b16 %v6989
      %v7198 = vunpack.c.l.b16 %v6990
      %v7199 = vunpack.c.l.b16 %v6991
      %v7200 = vunpack.c.h.b16 %v6991
      %v7201 = vunpack.c.l.b16 %v6992
      %v7202 = vpack.c.b16 %v7109, %v7106
      %v7203 = vpack.c.b16 %v7110, %v7107
      %v7204 = vpack.c.b16 %v7111, %v7108
      %v7205 = vpack.c.b16 %v7115, %v7112
      %v7206 = vpack.c.b16 %v7116, %v7113
      %v7207 = vpack.c.b16 %v7117, %v7114
      %v7208 = vpack.c.b16 %v7121, %v7118
      %v7209 = vpack.c.b16 %v7122, %v7119
      %v7210 = vpack.c.b16 %v7123, %v7120
      %v7211 = vpack.c.b16 %v7127, %v7124
      %v7212 = vpack.c.b16 %v7128, %v7125
      %v7213 = vpack.c.b16 %v7129, %v7126
      %v7214 = vpack.c.b16 %v7133, %v7130
      %v7215 = vpack.c.b16 %v7134, %v7131
      %v7216 = vpack.c.b16 %v7135, %v7132
      %v7217 = vpack.c.b16 %v7139, %v7136
      %v7218 = vpack.c.b16 %v7140, %v7137
      %v7219 = vpack.c.b16 %v7141, %v7138
      %v7220 = vpack.c.b16 %v7145, %v7142
      %v7221 = vpack.c.b16 %v7146, %v7143
      %v7222 = vpack.c.b16 %v7147, %v7144
      %v7223 = vpack.c.b16 %v7151, %v7148
      %v7224 = vpack.c.b16 %v7152, %v7149
      %v7225 = vpack.c.b16 %v7153, %v7150
      %v7226 = vpack.c.b16 %v7157, %v7154
      %v7227 = vpack.c.b16 %v7158, %v7155
      %v7228 = vpack.c.b16 %v7159, %v7156
      %v7229 = vpack.c.b16 %v7163, %v7160
      %v7230 = vpack.c.b16 %v7164, %v7161
      %v7231 = vpack.c.b16 %v7165, %v7162
      %v7232 = vpack.c.b16 %v7169, %v7166
      %v7233 = vpack.c.b16 %v7170, %v7167
      %v7234 = vpack.c.b16 %v7171, %v7168
      %v7235 = vpack.c.b16 %v7175, %v7172
      %v7236 = vpack.c.b16 %v7176, %v7173
      %v7237 = vpack.c.b16 %v7177, %v7174
      %v7238 = vpack.c.b16 %v7181, %v7178
      %v7239 = vpack.c.b16 %v7182, %v7179
      %v7240 = vpack.c.b16 %v7183, %v7180
      %v7241 = vpack.c.b16 %v7187, %v7184
      %v7242 = vpack.c.b16 %v7188, %v7185
      %v7243 = vpack.c.b16 %v7189, %v7186
      %v7244 = vpack.c.b16 %v7193, %v7190
      %v7245 = vpack.c.b16 %v7194, %v7191
      %v7246 = vpack.c.b16 %v7195, %v7192
      %v7247 = vpack.c.b16 %v7199, %v7196
      %v7248 = vpack.c.b16 %v7200, %v7197
      %v7249 = vpack.c.b16 %v7201, %v7198
      %v7346 = vunpack.c.l.b16 %v6994
      %v7347 = vunpack.c.l.b16 %v6995
      %v7348 = vunpack.c.l.b16 %v6996
      %v7349 = vunpack.c.l.b16 %v6997
      %v7350 = vunpack.c.l.b16 %v6998
      %v7351 = vunpack.c.l.b16 %v6999
      %v7352 = vunpack.c.l.b16 %v7000
      %v7353 = vunpack.c.l.b16 %v7001
      %v7354 = vunpack.c.l.b16 %v7002
      %v7355 = vunpack.c.l.b16 %v7003
      %v7356 = vunpack.c.l.b16 %v7004
      %v7357 = vunpack.c.l.b16 %v7005
      %v7358 = vunpack.c.l.b16 %v7006
      %v7359 = vunpack.c.l.b16 %v7007
      %v7360 = vunpack.c.l.b16 %v7008
      %v7361 = vunpack.c.l.b16 %v7009
      %v7362 = vunpack.c.l.b16 %v7010
      %v7363 = vunpack.c.l.b16 %v7011
      %v7364 = vunpack.c.l.b16 %v7012
      %v7365 = vunpack.c.l.b16 %v7013
      %v7366 = vunpack.c.l.b16 %v7014
      %v7367 = vunpack.c.l.b16 %v7015
      %v7368 = vunpack.c.l.b16 %v7016
      %v7369 = vunpack.c.l.b16 %v7017
      %v7370 = vunpack.c.l.b16 %v7018
      %v7371 = vunpack.c.l.b16 %v7019
      %v7372 = vunpack.c.l.b16 %v7020
      %v7373 = vunpack.c.l.b16 %v7021
      %v7374 = vunpack.c.l.b16 %v7022
      %v7375 = vunpack.c.l.b16 %v7023
      %v7376 = vunpack.c.l.b16 %v7024
      %v7377 = vunpack.c.l.b16 %v7025
      %v7378 = vunpack.c.l.b16 %v7026
      %v7379 = vunpack.c.l.b16 %v7027
      %v7380 = vunpack.c.l.b16 %v7028
      %v7381 = vunpack.c.l.b16 %v7029
      %v7382 = vunpack.c.l.b16 %v7030
      %v7383 = vunpack.c.l.b16 %v7031
      %v7384 = vunpack.c.l.b16 %v7032
      %v7385 = vunpack.c.l.b16 %v7033
      %v7386 = vunpack.c.l.b16 %v7034
      %v7387 = vunpack.c.l.b16 %v7035
      %v7388 = vunpack.c.l.b16 %v7036
      %v7389 = vunpack.c.l.b16 %v7037
      %v7390 = vunpack.c.l.b16 %v7038
      %v7391 = vunpack.c.l.b16 %v7039
      %v7392 = vunpack.c.l.b16 %v7040
      %v7393 = vunpack.c.l.b16 %v7041
      %v7394 = vpack.c.b16 %v7347, %v7346
      %v7395 = vpack.c.b16 %v7349, %v7348
      %v7396 = vpack.c.b16 %v7351, %v7350
      %v7397 = vpack.c.b16 %v7353, %v7352
      %v7398 = vpack.c.b16 %v7355, %v7354
      %v7399 = vpack.c.b16 %v7357, %v7356
      %v7400 = vpack.c.b16 %v7359, %v7358
      %v7401 = vpack.c.b16 %v7361, %v7360
      %v7402 = vpack.c.b16 %v7363, %v7362
      %v7403 = vpack.c.b16 %v7365, %v7364
      %v7404 = vpack.c.b16 %v7367, %v7366
      %v7405 = vpack.c.b16 %v7369, %v7368
      %v7406 = vpack.c.b16 %v7371, %v7370
      %v7407 = vpack.c.b16 %v7373, %v7372
      %v7408 = vpack.c.b16 %v7375, %v7374
      %v7409 = vpack.c.b16 %v7377, %v7376
      %v7410 = vpack.c.b16 %v7379, %v7378
      %v7411 = vpack.c.b16 %v7381, %v7380
      %v7412 = vpack.c.b16 %v7383, %v7382
      %v7413 = vpack.c.b16 %v7385, %v7384
      %v7414 = vpack.c.b16 %v7387, %v7386
      %v7415 = vpack.c.b16 %v7389, %v7388
      %v7416 = vpack.c.b16 %v7391, %v7390
      %v7417 = vpack.c.b16 %v7393, %v7392
      %7442 = vmatprep.subr.bf16.mxu0 0
      %7443 = vmatpush1.bf16.msra.mxu0 %v7401
      %7444 = vmatprep.subr.bf16.mxu0 0
      %7445 = vmatpush1.bf16.msra.mxu0 %v7400
      %7446 = vmatprep.subr.bf16.mxu0 0
      %7447 = vmatpush1.bf16.msra.mxu0 %v7399
      %7448 = vmatprep.subr.bf16.mxu0 0
      %7449 = vmatpush1.bf16.msra.mxu0 %v7398
      %7450 = vmatprep.subr.bf16.mxu0 0
      %7451 = vmatpush1.bf16.msra.mxu0 %v7397
      %7452 = vmatprep.subr.bf16.mxu0 0
      %7453 = vmatpush1.bf16.msra.mxu0 %v7396
      %7454 = vmatprep.subr.bf16.mxu0 0
      %7455 = vmatpush1.bf16.msra.mxu0 %v7395
      %7456 = vmatprep.subr.bf16.mxu0 0
      %7457 = vmatpush1.bf16.msra.mxu0 %v7394
      %7458 = vmatprep.subr.bf16.mxu0 0
      %7459 = vmatpush2.bf16.msra.mxu0 %v7409
      %7460 = vmatprep.subr.bf16.mxu0 0
      %7461 = vmatpush2.bf16.msra.mxu0 %v7408
      %7462 = vmatprep.subr.bf16.mxu0 0
      %7463 = vmatpush2.bf16.msra.mxu0 %v7407
      %7464 = vmatprep.subr.bf16.mxu0 0
      %7465 = vmatpush2.bf16.msra.mxu0 %v7406
      %7466 = vmatprep.subr.bf16.mxu0 0
      %7467 = vmatpush2.bf16.msra.mxu0 %v7405
      %7468 = vmatprep.subr.bf16.mxu0 0
      %7469 = vmatpush2.bf16.msra.mxu0 %v7404
      %7470 = vmatprep.subr.bf16.mxu0 0
      %7471 = vmatpush2.bf16.msra.mxu0 %v7403
      %7472 = vmatprep.subr.bf16.mxu0 0
      %7473 = vmatpush2.bf16.msra.mxu0 %v7402
      %7474 = vmatprep.mubr.bf16.mxu0 %v7203
      %7475 = vmatmul.mubr.bf16.gmra.mxu0 %v7202
      %v7476 = vpop.f32.mrf.mxu0
      %v7477 = vadd.f32 0.0, %v7476
      %v7478 = vpop.f32.mrf.mxu0
      %v7479 = vpop.f32.mrf.mxu0
      %v7480 = vadd.f32 0.0, %v7479
      %v7481 = vpop.f32.mrf.mxu0
      %7482 = vmatprep.mubr.bf16.mxu0 %v7206
      %7483 = vmatmul.mubr.bf16.gmra.mxu0 %v7205
      %v7484 = vpop.f32.mrf.mxu0
      %v7485 = vadd.f32 0.0, %v7484
      %v7486 = vpop.f32.mrf.mxu0
      %v7487 = vpop.f32.mrf.mxu0
      %v7488 = vadd.f32 0.0, %v7487
      %v7489 = vpop.f32.mrf.mxu0
      %7490 = vmatprep.mubr.bf16.mxu0 %v7209
      %7491 = vmatmul.mubr.bf16.gmra.mxu0 %v7208
      %v7492 = vpop.f32.mrf.mxu0
      %v7493 = vadd.f32 0.0, %v7492
      %v7494 = vpop.f32.mrf.mxu0
      %v7495 = vpop.f32.mrf.mxu0
      %v7496 = vadd.f32 0.0, %v7495
      %v7497 = vpop.f32.mrf.mxu0
      %7498 = vmatprep.mubr.bf16.mxu0 %v7212
      %7499 = vmatmul.mubr.bf16.gmra.mxu0 %v7211
      %v7500 = vpop.f32.mrf.mxu0
      %v7501 = vadd.f32 0.0, %v7500
      %v7502 = vpop.f32.mrf.mxu0
      %v7503 = vpop.f32.mrf.mxu0
      %v7504 = vadd.f32 0.0, %v7503
      %v7505 = vpop.f32.mrf.mxu0
      %7506 = vmatprep.mubr.bf16.mxu0 %v7215
      %7507 = vmatmul.mubr.bf16.gmra.mxu0 %v7214
      %v7508 = vpop.f32.mrf.mxu0
      %v7509 = vadd.f32 0.0, %v7508
      %v7510 = vpop.f32.mrf.mxu0
      %v7511 = vpop.f32.mrf.mxu0
      %v7512 = vadd.f32 0.0, %v7511
      %v7513 = vpop.f32.mrf.mxu0
      %7514 = vmatprep.mubr.bf16.mxu0 %v7218
      %7515 = vmatmul.mubr.bf16.gmra.mxu0 %v7217
      %v7516 = vpop.f32.mrf.mxu0
      %v7517 = vadd.f32 0.0, %v7516
      %v7518 = vpop.f32.mrf.mxu0
      %v7519 = vpop.f32.mrf.mxu0
      %v7520 = vadd.f32 0.0, %v7519
      %v7521 = vpop.f32.mrf.mxu0
      %7522 = vmatprep.mubr.bf16.mxu0 %v7221
      %7523 = vmatmul.mubr.bf16.gmra.mxu0 %v7220
      %v7524 = vpop.f32.mrf.mxu0
      %v7525 = vadd.f32 0.0, %v7524
      %v7526 = vpop.f32.mrf.mxu0
      %v7527 = vpop.f32.mrf.mxu0
      %v7528 = vadd.f32 0.0, %v7527
      %v7529 = vpop.f32.mrf.mxu0
      %7530 = vmatprep.mubr.bf16.mxu0 %v7224
      %7531 = vmatmul.mubr.bf16.gmra.mxu0 %v7223
      %v7532 = vpop.f32.mrf.mxu0
      %v7533 = vadd.f32 0.0, %v7532
      %v7534 = vpop.f32.mrf.mxu0
      %v7535 = vpop.f32.mrf.mxu0
      %v7536 = vadd.f32 0.0, %v7535
      %v7537 = vpop.f32.mrf.mxu0
      %7538 = vmatprep.mubr.bf16.mxu0 %v7227
      %7539 = vmatmul.mubr.bf16.gmra.mxu0 %v7226
      %v7540 = vpop.f32.mrf.mxu0
      %v7541 = vadd.f32 0.0, %v7540
      %v7542 = vpop.f32.mrf.mxu0
      %v7543 = vpop.f32.mrf.mxu0
      %v7544 = vadd.f32 0.0, %v7543
      %v7545 = vpop.f32.mrf.mxu0
      %7546 = vmatprep.mubr.bf16.mxu0 %v7230
      %7547 = vmatmul.mubr.bf16.gmra.mxu0 %v7229
      %v7548 = vpop.f32.mrf.mxu0
      %v7549 = vadd.f32 0.0, %v7548
      %v7550 = vpop.f32.mrf.mxu0
      %v7551 = vpop.f32.mrf.mxu0
      %v7552 = vadd.f32 0.0, %v7551
      %v7553 = vpop.f32.mrf.mxu0
      %7554 = vmatprep.mubr.bf16.mxu0 %v7233
      %7555 = vmatmul.mubr.bf16.gmra.mxu0 %v7232
      %v7556 = vpop.f32.mrf.mxu0
      %v7557 = vadd.f32 0.0, %v7556
      %v7558 = vpop.f32.mrf.mxu0
      %v7559 = vpop.f32.mrf.mxu0
      %v7560 = vadd.f32 0.0, %v7559
      %v7561 = vpop.f32.mrf.mxu0
      %7562 = vmatprep.mubr.bf16.mxu0 %v7236
      %7563 = vmatmul.mubr.bf16.gmra.mxu0 %v7235
      %v7564 = vpop.f32.mrf.mxu0
      %v7565 = vadd.f32 0.0, %v7564
      %v7566 = vpop.f32.mrf.mxu0
      %v7567 = vpop.f32.mrf.mxu0
      %v7568 = vadd.f32 0.0, %v7567
      %v7569 = vpop.f32.mrf.mxu0
      %7570 = vmatprep.mubr.bf16.mxu0 %v7239
      %7571 = vmatmul.mubr.bf16.gmra.mxu0 %v7238
      %v7572 = vpop.f32.mrf.mxu0
      %v7573 = vadd.f32 0.0, %v7572
      %v7574 = vpop.f32.mrf.mxu0
      %v7575 = vpop.f32.mrf.mxu0
      %v7576 = vadd.f32 0.0, %v7575
      %v7577 = vpop.f32.mrf.mxu0
      %7578 = vmatprep.mubr.bf16.mxu0 %v7242
      %7579 = vmatmul.mubr.bf16.gmra.mxu0 %v7241
      %v7580 = vpop.f32.mrf.mxu0
      %v7581 = vadd.f32 0.0, %v7580
      %v7582 = vpop.f32.mrf.mxu0
      %v7583 = vpop.f32.mrf.mxu0
      %v7584 = vadd.f32 0.0, %v7583
      %v7585 = vpop.f32.mrf.mxu0
      %7586 = vmatprep.mubr.bf16.mxu0 %v7245
      %7587 = vmatmul.mubr.bf16.gmra.mxu0 %v7244
      %v7588 = vpop.f32.mrf.mxu0
      %v7589 = vadd.f32 0.0, %v7588
      %v7590 = vpop.f32.mrf.mxu0
      %v7591 = vpop.f32.mrf.mxu0
      %v7592 = vadd.f32 0.0, %v7591
      %v7593 = vpop.f32.mrf.mxu0
      %7594 = vmatprep.mubr.bf16.mxu0 %v7248
      %7595 = vmatmul.mubr.bf16.gmra.mxu0 %v7247
      %v7596 = vpop.f32.mrf.mxu0
      %v7597 = vadd.f32 0.0, %v7596
      %v7598 = vpop.f32.mrf.mxu0
      %v7599 = vpop.f32.mrf.mxu0
      %v7600 = vadd.f32 0.0, %v7599
      %v7601 = vpop.f32.mrf.mxu0
      %7602 = vdwg.mxu0
      %7603 = vmatprep.subr.bf16.mxu0 0
      %7604 = vmatpush1.bf16.msra.mxu0 %v7417
      %7605 = vmatprep.subr.bf16.mxu0 0
      %7606 = vmatpush1.bf16.msra.mxu0 %v7416
      %7607 = vmatprep.subr.bf16.mxu0 0
      %7608 = vmatpush1.bf16.msra.mxu0 %v7415
      %7609 = vmatprep.subr.bf16.mxu0 0
      %7610 = vmatpush1.bf16.msra.mxu0 %v7414
      %7611 = vmatprep.subr.bf16.mxu0 0
      %7612 = vmatpush1.bf16.msra.mxu0 %v7413
      %7613 = vmatprep.subr.bf16.mxu0 0
      %7614 = vmatpush1.bf16.msra.mxu0 %v7412
      %7615 = vmatprep.subr.bf16.mxu0 0
      %7616 = vmatpush1.bf16.msra.mxu0 %v7411
      %7617 = vmatprep.subr.bf16.mxu0 0
      %7618 = vmatpush1.bf16.msra.mxu0 %v7410
      %7619 = vmatprep.subr.bf16.mxu0 0
      %7620 = vmatpush2.bf16.msra.mxu0 0
      %7621 = vmatprep.subr.bf16.mxu0 0
      %7622 = vmatpush2.bf16.msra.mxu0 0
      %7623 = vmatprep.subr.bf16.mxu0 0
      %7624 = vmatpush2.bf16.msra.mxu0 0
      %7625 = vmatprep.subr.bf16.mxu0 0
      %7626 = vmatpush2.bf16.msra.mxu0 0
      %7627 = vmatprep.subr.bf16.mxu0 0
      %7628 = vmatpush2.bf16.msra.mxu0 0
      %7629 = vmatprep.subr.bf16.mxu0 0
      %7630 = vmatpush2.bf16.msra.mxu0 0
      %7631 = vmatprep.subr.bf16.mxu0 0
      %7632 = vmatpush2.bf16.msra.mxu0 0
      %7633 = vmatprep.subr.bf16.mxu0 0
      %7634 = vmatpush2.bf16.msra.mxu0 0
      %7635 = vmatprep.mubr.bf16.mxu0 0
      %7636 = vmatmul.mubr.bf16.gmra.mxu0 %v7204
      %v7637 = vpop.f32.mrf.mxu0
      %v7638 = vadd.f32 %v7477, %v7637
      %v7639 = vpop.f32.mrf.mxu0
      %v7640 = vpop.f32.mrf.mxu0
      %v7641 = vadd.f32 %v7480, %v7640
      %v7642 = vpop.f32.mrf.mxu0
      %7643 = vmatprep.mubr.bf16.mxu0 0
      %7644 = vmatmul.mubr.bf16.gmra.mxu0 %v7207
      %v7645 = vpop.f32.mrf.mxu0
      %v7646 = vadd.f32 %v7485, %v7645
      %v7647 = vpop.f32.mrf.mxu0
      %v7648 = vpop.f32.mrf.mxu0
      %v7649 = vadd.f32 %v7488, %v7648
      %v7650 = vpop.f32.mrf.mxu0
      %7651 = vmatprep.mubr.bf16.mxu0 0
      %7652 = vmatmul.mubr.bf16.gmra.mxu0 %v7210
      %v7653 = vpop.f32.mrf.mxu0
      %v7654 = vadd.f32 %v7493, %v7653
      %v7655 = vpop.f32.mrf.mxu0
      %v7656 = vpop.f32.mrf.mxu0
      %v7657 = vadd.f32 %v7496, %v7656
      %v7658 = vpop.f32.mrf.mxu0
      %7659 = vmatprep.mubr.bf16.mxu0 0
      %7660 = vmatmul.mubr.bf16.gmra.mxu0 %v7213
      %v7661 = vpop.f32.mrf.mxu0
      %v7662 = vadd.f32 %v7501, %v7661
      %v7663 = vpop.f32.mrf.mxu0
      %v7664 = vpop.f32.mrf.mxu0
      %v7665 = vadd.f32 %v7504, %v7664
      %v7666 = vpop.f32.mrf.mxu0
      %7667 = vmatprep.mubr.bf16.mxu0 0
      %7668 = vmatmul.mubr.bf16.gmra.mxu0 %v7216
      %v7669 = vpop.f32.mrf.mxu0
      %v7670 = vadd.f32 %v7509, %v7669
      %v7671 = vpop.f32.mrf.mxu0
      %v7672 = vpop.f32.mrf.mxu0
      %v7673 = vadd.f32 %v7512, %v7672
      %v7674 = vpop.f32.mrf.mxu0
      %7675 = vmatprep.mubr.bf16.mxu0 0
      %7676 = vmatmul.mubr.bf16.gmra.mxu0 %v7219
      %v7677 = vpop.f32.mrf.mxu0
      %v7678 = vadd.f32 %v7517, %v7677
      %v7679 = vpop.f32.mrf.mxu0
      %v7680 = vpop.f32.mrf.mxu0
      %v7681 = vadd.f32 %v7520, %v7680
      %v7682 = vpop.f32.mrf.mxu0
      %7683 = vmatprep.mubr.bf16.mxu0 0
      %7684 = vmatmul.mubr.bf16.gmra.mxu0 %v7222
      %v7685 = vpop.f32.mrf.mxu0
      %v7686 = vadd.f32 %v7525, %v7685
      %v7687 = vpop.f32.mrf.mxu0
      %v7688 = vpop.f32.mrf.mxu0
      %v7689 = vadd.f32 %v7528, %v7688
      %v7690 = vpop.f32.mrf.mxu0
      %7691 = vmatprep.mubr.bf16.mxu0 0
      %7692 = vmatmul.mubr.bf16.gmra.mxu0 %v7225
      %v7693 = vpop.f32.mrf.mxu0
      %v7694 = vadd.f32 %v7533, %v7693
      %v7695 = vpop.f32.mrf.mxu0
      %v7696 = vpop.f32.mrf.mxu0
      %v7697 = vadd.f32 %v7536, %v7696
      %v7698 = vpop.f32.mrf.mxu0
      %7699 = vmatprep.mubr.bf16.mxu0 0
      %7700 = vmatmul.mubr.bf16.gmra.mxu0 %v7228
      %v7701 = vpop.f32.mrf.mxu0
      %v7702 = vadd.f32 %v7541, %v7701
      %v7703 = vpop.f32.mrf.mxu0
      %v7704 = vpop.f32.mrf.mxu0
      %v7705 = vadd.f32 %v7544, %v7704
      %v7706 = vpop.f32.mrf.mxu0
      %7707 = vmatprep.mubr.bf16.mxu0 0
      %7708 = vmatmul.mubr.bf16.gmra.mxu0 %v7231
      %v7709 = vpop.f32.mrf.mxu0
      %v7710 = vadd.f32 %v7549, %v7709
      %v7711 = vpop.f32.mrf.mxu0
      %v7712 = vpop.f32.mrf.mxu0
      %v7713 = vadd.f32 %v7552, %v7712
      %v7714 = vpop.f32.mrf.mxu0
      %7715 = vmatprep.mubr.bf16.mxu0 0
      %7716 = vmatmul.mubr.bf16.gmra.mxu0 %v7234
      %v7717 = vpop.f32.mrf.mxu0
      %v7718 = vadd.f32 %v7557, %v7717
      %v7719 = vpop.f32.mrf.mxu0
      %v7720 = vpop.f32.mrf.mxu0
      %v7721 = vadd.f32 %v7560, %v7720
      %v7722 = vpop.f32.mrf.mxu0
      %7723 = vmatprep.mubr.bf16.mxu0 0
      %7724 = vmatmul.mubr.bf16.gmra.mxu0 %v7237
      %v7725 = vpop.f32.mrf.mxu0
      %v7726 = vadd.f32 %v7565, %v7725
      %v7727 = vpop.f32.mrf.mxu0
      %v7728 = vpop.f32.mrf.mxu0
      %v7729 = vadd.f32 %v7568, %v7728
      %v7730 = vpop.f32.mrf.mxu0
      %7731 = vmatprep.mubr.bf16.mxu0 0
      %7732 = vmatmul.mubr.bf16.gmra.mxu0 %v7240
      %v7733 = vpop.f32.mrf.mxu0
      %v7734 = vadd.f32 %v7573, %v7733
      %v7735 = vpop.f32.mrf.mxu0
      %v7736 = vpop.f32.mrf.mxu0
      %v7737 = vadd.f32 %v7576, %v7736
      %v7738 = vpop.f32.mrf.mxu0
      %7739 = vmatprep.mubr.bf16.mxu0 0
      %7740 = vmatmul.mubr.bf16.gmra.mxu0 %v7243
      %v7741 = vpop.f32.mrf.mxu0
      %v7742 = vadd.f32 %v7581, %v7741
      %v7743 = vpop.f32.mrf.mxu0
      %v7744 = vpop.f32.mrf.mxu0
      %v7745 = vadd.f32 %v7584, %v7744
      %v7746 = vpop.f32.mrf.mxu0
      %7747 = vmatprep.mubr.bf16.mxu0 0
      %7748 = vmatmul.mubr.bf16.gmra.mxu0 %v7246
      %v7749 = vpop.f32.mrf.mxu0
      %v7750 = vadd.f32 %v7589, %v7749
      %v7751 = vpop.f32.mrf.mxu0
      %v7752 = vpop.f32.mrf.mxu0
      %v7753 = vadd.f32 %v7592, %v7752
      %v7754 = vpop.f32.mrf.mxu0
      %7755 = vmatprep.mubr.bf16.mxu0 0
      %7756 = vmatmul.mubr.bf16.gmra.mxu0 %v7249
      %v7757 = vpop.f32.mrf.mxu0
      %v7758 = vadd.f32 %v7597, %v7757
      %v7759 = vpop.f32.mrf.mxu0
      %v7760 = vpop.f32.mrf.mxu0
      %v7761 = vadd.f32 %v7600, %v7760
      %v7762 = vpop.f32.mrf.mxu0
      %7763 = vdwg.mxu0
      %v7764 = vadd.f32 %v6802, %v7638
      %v7765 = vadd.f32 %v6805, %v7641
      %v7766 = vadd.f32 %v6810, %v7646
      %v7767 = vadd.f32 %v6813, %v7649
      %v7768 = vadd.f32 %v6818, %v7654
      %v7769 = vadd.f32 %v6821, %v7657
      %v7770 = vadd.f32 %v6826, %v7662
      %v7771 = vadd.f32 %v6829, %v7665
      %v7772 = vadd.f32 %v6834, %v7670
      %v7773 = vadd.f32 %v6837, %v7673
      %v7774 = vadd.f32 %v6842, %v7678
      %v7775 = vadd.f32 %v6845, %v7681
      %v7776 = vadd.f32 %v6850, %v7686
      %v7777 = vadd.f32 %v6853, %v7689
      %v7778 = vadd.f32 %v6858, %v7694
      %v7779 = vadd.f32 %v6861, %v7697
      %v7780 = vadd.f32 %v6866, %v7702
      %v7781 = vadd.f32 %v6869, %v7705
      %v7782 = vadd.f32 %v6874, %v7710
      %v7783 = vadd.f32 %v6877, %v7713
      %v7784 = vadd.f32 %v6882, %v7718
      %v7785 = vadd.f32 %v6885, %v7721
      %v7786 = vadd.f32 %v6890, %v7726
      %v7787 = vadd.f32 %v6893, %v7729
      %v7788 = vadd.f32 %v6898, %v7734
      %v7789 = vadd.f32 %v6901, %v7737
      %v7790 = vadd.f32 %v6906, %v7742
      %v7791 = vadd.f32 %v6909, %v7745
      %v7792 = vadd.f32 %v6914, %v7750
      %v7793 = vadd.f32 %v6917, %v7753
      %v7794 = vadd.f32 %v6922, %v7758
      %v7795 = vadd.f32 %v6925, %v7761
      %v7796 = vld [vmem:[%s7] sm:$0x1]
      %v7798 = vlaneseq
      %v7799 = vshrl.u32 %v7798, 7
      %v7800 = vsub.s32 0, %v7799
      %v7801 = vrot.slane %v7796, %v7800
      %v7803 = vadd.f32 %v7764, %v7801
      %v7804 = vadd.f32 %v7765, %v7801
      %v7805 = vadd.f32 %v7766, %v7801
      %v7806 = vadd.f32 %v7767, %v7801
      %v7807 = vadd.f32 %v7768, %v7801
      %v7808 = vadd.f32 %v7769, %v7801
      %v7809 = vadd.f32 %v7770, %v7801
      %v7810 = vadd.f32 %v7771, %v7801
      %v7811 = vadd.f32 %v7772, %v7801
      %v7812 = vadd.f32 %v7773, %v7801
      %v7813 = vadd.f32 %v7774, %v7801
      %v7814 = vadd.f32 %v7775, %v7801
      %v7815 = vadd.f32 %v7776, %v7801
      %v7816 = vadd.f32 %v7777, %v7801
      %v7817 = vadd.f32 %v7778, %v7801
      %v7818 = vadd.f32 %v7779, %v7801
      %v7819 = vadd.f32 %v7780, %v7801
      %v7820 = vadd.f32 %v7781, %v7801
      %v7821 = vadd.f32 %v7782, %v7801
      %v7822 = vadd.f32 %v7783, %v7801
      %v7823 = vadd.f32 %v7784, %v7801
      %v7824 = vadd.f32 %v7785, %v7801
      %v7825 = vadd.f32 %v7786, %v7801
      %v7826 = vadd.f32 %v7787, %v7801
      %v7827 = vadd.f32 %v7788, %v7801
      %v7828 = vadd.f32 %v7789, %v7801
      %v7829 = vadd.f32 %v7790, %v7801
      %v7830 = vadd.f32 %v7791, %v7801
      %v7831 = vadd.f32 %v7792, %v7801
      %v7832 = vadd.f32 %v7793, %v7801
      %v7833 = vadd.f32 %v7794, %v7801
      %v7834 = vadd.f32 %v7795, %v7801
      %v7835 = vmul.f32 %v7803, 0.6666667
      %v7836 = vmul.f32 %v7804, 0.6666667
      %v7837 = vmul.f32 %v7805, 0.6666667
      %v7838 = vmul.f32 %v7806, 0.6666667
      %v7839 = vmul.f32 %v7807, 0.6666667
      %v7840 = vmul.f32 %v7808, 0.6666667
      %v7841 = vmul.f32 %v7809, 0.6666667
      %v7842 = vmul.f32 %v7810, 0.6666667
      %v7843 = vmul.f32 %v7811, 0.6666667
      %v7844 = vmul.f32 %v7812, 0.6666667
      %v7845 = vmul.f32 %v7813, 0.6666667
      %v7846 = vmul.f32 %v7814, 0.6666667
      %v7847 = vmul.f32 %v7815, 0.6666667
      %v7848 = vmul.f32 %v7816, 0.6666667
      %v7849 = vmul.f32 %v7817, 0.6666667
      %v7850 = vmul.f32 %v7818, 0.6666667
      %v7851 = vmul.f32 %v7819, 0.6666667
      %v7852 = vmul.f32 %v7820, 0.6666667
      %v7853 = vmul.f32 %v7821, 0.6666667
      %v7854 = vmul.f32 %v7822, 0.6666667
      %v7855 = vmul.f32 %v7823, 0.6666667
      %v7856 = vmul.f32 %v7824, 0.6666667
      %v7857 = vmul.f32 %v7825, 0.6666667
      %v7858 = vmul.f32 %v7826, 0.6666667
      %v7859 = vmul.f32 %v7827, 0.6666667
      %v7860 = vmul.f32 %v7828, 0.6666667
      %v7861 = vmul.f32 %v7829, 0.6666667
      %v7862 = vmul.f32 %v7830, 0.6666667
      %v7863 = vmul.f32 %v7831, 0.6666667
      %v7864 = vmul.f32 %v7832, 0.6666667
      %v7865 = vmul.f32 %v7833, 0.6666667
      %v7866 = vmul.f32 %v7834, 0.6666667
      %v7867 = vmax.f32 %v7803, %v7835
      %v7868 = vmax.f32 %v7804, %v7836
      %v7869 = vmax.f32 %v7805, %v7837
      %v7870 = vmax.f32 %v7806, %v7838
      %v7871 = vmax.f32 %v7807, %v7839
      %v7872 = vmax.f32 %v7808, %v7840
      %v7873 = vmax.f32 %v7809, %v7841
      %v7874 = vmax.f32 %v7810, %v7842
      %v7875 = vmax.f32 %v7811, %v7843
      %v7876 = vmax.f32 %v7812, %v7844
      %v7877 = vmax.f32 %v7813, %v7845
      %v7878 = vmax.f32 %v7814, %v7846
      %v7879 = vmax.f32 %v7815, %v7847
      %v7880 = vmax.f32 %v7816, %v7848
      %v7881 = vmax.f32 %v7817, %v7849
      %v7882 = vmax.f32 %v7818, %v7850
      %v7883 = vmax.f32 %v7819, %v7851
      %v7884 = vmax.f32 %v7820, %v7852
      %v7885 = vmax.f32 %v7821, %v7853
      %v7886 = vmax.f32 %v7822, %v7854
      %v7887 = vmax.f32 %v7823, %v7855
      %v7888 = vmax.f32 %v7824, %v7856
      %v7889 = vmax.f32 %v7825, %v7857
      %v7890 = vmax.f32 %v7826, %v7858
      %v7891 = vmax.f32 %v7827, %v7859
      %v7892 = vmax.f32 %v7828, %v7860
      %v7893 = vmax.f32 %v7829, %v7861
      %v7894 = vmax.f32 %v7830, %v7862
      %v7895 = vmax.f32 %v7831, %v7863
      %v7896 = vmax.f32 %v7832, %v7864
      %v7897 = vmax.f32 %v7833, %v7865
      %v7898 = vmax.f32 %v7834, %v7866
      %v7899 = vpack.c.bf16 %v7868, %v7867
      %v7900 = vpack.c.bf16 %v7870, %v7869
      %v7901 = vpack.c.bf16 %v7872, %v7871
      %v7902 = vpack.c.bf16 %v7874, %v7873
      %v7903 = vpack.c.bf16 %v7876, %v7875
      %v7904 = vpack.c.bf16 %v7878, %v7877
      %v7905 = vpack.c.bf16 %v7880, %v7879
      %v7906 = vpack.c.bf16 %v7882, %v7881
      %v7907 = vpack.c.bf16 %v7884, %v7883
      %v7908 = vpack.c.bf16 %v7886, %v7885
      %v7909 = vpack.c.bf16 %v7888, %v7887
      %v7910 = vpack.c.bf16 %v7890, %v7889
      %v7911 = vpack.c.bf16 %v7892, %v7891
      %v7912 = vpack.c.bf16 %v7894, %v7893
      %v7913 = vpack.c.bf16 %v7896, %v7895
      %v7914 = vpack.c.bf16 %v7898, %v7897
      %v7916 = vshrl.u32 %v7899, 16
      %v7918 = vrot.slane %v7916, 7
      %v7919 = vshll.u32 %v7899, 16
      %v7921 = vor.u32 %v7918, %v7919
      %v7923 = vshrl.u32 %v7900, 16
      %v7925 = vrot.slane %v7923, 7
      %v7926 = vshll.u32 %v7900, 16
      %v7928 = vor.u32 %v7925, %v7926
      %v7930 = vshrl.u32 %v7901, 16
      %v7932 = vrot.slane %v7930, 7
      %v7933 = vshll.u32 %v7901, 16
      %v7935 = vor.u32 %v7932, %v7933
      %v7937 = vshrl.u32 %v7902, 16
      %v7939 = vrot.slane %v7937, 7
      %v7940 = vshll.u32 %v7902, 16
      %v7942 = vor.u32 %v7939, %v7940
      %v7944 = vshrl.u32 %v7903, 16
      %v7946 = vrot.slane %v7944, 7
      %v7947 = vshll.u32 %v7903, 16
      %v7949 = vor.u32 %v7946, %v7947
      %v7951 = vshrl.u32 %v7904, 16
      %v7953 = vrot.slane %v7951, 7
      %v7954 = vshll.u32 %v7904, 16
      %v7956 = vor.u32 %v7953, %v7954
      %v7958 = vshrl.u32 %v7905, 16
      %v7960 = vrot.slane %v7958, 7
      %v7961 = vshll.u32 %v7905, 16
      %v7963 = vor.u32 %v7960, %v7961
      %v7965 = vshrl.u32 %v7906, 16
      %v7967 = vrot.slane %v7965, 7
      %v7968 = vshll.u32 %v7906, 16
      %v7970 = vor.u32 %v7967, %v7968
      %v7972 = vshrl.u32 %v7907, 16
      %v7974 = vrot.slane %v7972, 7
      %v7975 = vshll.u32 %v7907, 16
      %v7977 = vor.u32 %v7974, %v7975
      %v7979 = vshrl.u32 %v7908, 16
      %v7981 = vrot.slane %v7979, 7
      %v7982 = vshll.u32 %v7908, 16
      %v7984 = vor.u32 %v7981, %v7982
      %v7986 = vshrl.u32 %v7909, 16
      %v7988 = vrot.slane %v7986, 7
      %v7989 = vshll.u32 %v7909, 16
      %v7991 = vor.u32 %v7988, %v7989
      %v7993 = vshrl.u32 %v7910, 16
      %v7995 = vrot.slane %v7993, 7
      %v7996 = vshll.u32 %v7910, 16
      %v7998 = vor.u32 %v7995, %v7996
      %v8000 = vshrl.u32 %v7911, 16
      %v8002 = vrot.slane %v8000, 7
      %v8003 = vshll.u32 %v7911, 16
      %v8005 = vor.u32 %v8002, %v8003
      %v8007 = vshrl.u32 %v7912, 16
      %v8009 = vrot.slane %v8007, 7
      %v8010 = vshll.u32 %v7912, 16
      %v8012 = vor.u32 %v8009, %v8010
      %v8014 = vshrl.u32 %v7913, 16
      %v8016 = vrot.slane %v8014, 7
      %v8017 = vshll.u32 %v7913, 16
      %v8019 = vor.u32 %v8016, %v8017
      %v8021 = vshrl.u32 %v7914, 16
      %v8023 = vrot.slane %v8021, 7
      %v8024 = vshll.u32 %v7914, 16
      %v8026 = vor.u32 %v8023, %v8024
      %v8043 = vsel %vm860, 0, %v7921
      %v8044 = vsel %vm860, 0, %v7928
      %v8045 = vsel %vm860, 0, %v7935
      %v8046 = vsel %vm860, 0, %v7942
      %v8047 = vsel %vm860, 0, %v7949
      %v8048 = vsel %vm860, 0, %v7956
      %v8049 = vsel %vm860, 0, %v7963
      %v8050 = vsel %vm860, 0, %v7970
      %v8051 = vsel %vm860, 0, %v7977
      %v8052 = vsel %vm860, 0, %v7984
      %v8053 = vsel %vm860, 0, %v7991
      %v8054 = vsel %vm860, 0, %v7998
      %v8055 = vsel %vm860, 0, %v8005
      %v8056 = vsel %vm860, 0, %v8012
      %v8057 = vsel %vm860, 0, %v8019
      %v8058 = vsel %vm860, 0, %v8026
      %v8059 = vrot.slane %v7919, 1
      %v8060 = vor.u32 %v7916, %v8059
      %v8061 = vrot.slane %v7926, 1
      %v8062 = vor.u32 %v7923, %v8061
      %v8063 = vrot.slane %v7933, 1
      %v8064 = vor.u32 %v7930, %v8063
      %v8065 = vrot.slane %v7940, 1
      %v8066 = vor.u32 %v7937, %v8065
      %v8067 = vrot.slane %v7947, 1
      %v8068 = vor.u32 %v7944, %v8067
      %v8069 = vrot.slane %v7954, 1
      %v8070 = vor.u32 %v7951, %v8069
      %v8071 = vrot.slane %v7961, 1
      %v8072 = vor.u32 %v7958, %v8071
      %v8073 = vrot.slane %v7968, 1
      %v8074 = vor.u32 %v7965, %v8073
      %v8075 = vrot.slane %v7975, 1
      %v8076 = vor.u32 %v7972, %v8075
      %v8077 = vrot.slane %v7982, 1
      %v8078 = vor.u32 %v7979, %v8077
      %v8079 = vrot.slane %v7989, 1
      %v8080 = vor.u32 %v7986, %v8079
      %v8081 = vrot.slane %v7996, 1
      %v8082 = vor.u32 %v7993, %v8081
      %v8083 = vrot.slane %v8003, 1
      %v8084 = vor.u32 %v8000, %v8083
      %v8085 = vrot.slane %v8010, 1
      %v8086 = vor.u32 %v8007, %v8085
      %v8087 = vrot.slane %v8017, 1
      %v8088 = vor.u32 %v8014, %v8087
      %v8089 = vrot.slane %v8024, 1
      %v8090 = vor.u32 %v8021, %v8089
      %v8107 = vsel %vm927, %v8060, 0
      %v8108 = vsel %vm927, %v8062, 0
      %v8109 = vsel %vm927, %v8064, 0
      %v8110 = vsel %vm927, %v8066, 0
      %v8111 = vsel %vm927, %v8068, 0
      %v8112 = vsel %vm927, %v8070, 0
      %v8113 = vsel %vm927, %v8072, 0
      %v8114 = vsel %vm927, %v8074, 0
      %v8115 = vsel %vm927, %v8076, 0
      %v8116 = vsel %vm927, %v8078, 0
      %v8117 = vsel %vm927, %v8080, 0
      %v8118 = vsel %vm927, %v8082, 0
      %v8119 = vsel %vm927, %v8084, 0
      %v8120 = vsel %vm927, %v8086, 0
      %v8121 = vsel %vm927, %v8088, 0
      %v8122 = vsel %vm927, %v8090, 0
      %8139 = vrot.lane.b32.xlu0 %v7899, 64
      %v8140 = vpop.permute.xlu0 %8139
      %8141 = vrot.lane.b32.xlu0 %v7900, 64
      %v8142 = vpop.permute.xlu0 %8141
      %8143 = vrot.lane.b32.xlu0 %v7901, 64
      %v8144 = vpop.permute.xlu0 %8143
      %8145 = vrot.lane.b32.xlu0 %v7902, 64
      %v8146 = vpop.permute.xlu0 %8145
      %8147 = vrot.lane.b32.xlu0 %v7903, 64
      %v8148 = vpop.permute.xlu0 %8147
      %8149 = vrot.lane.b32.xlu0 %v7904, 64
      %v8150 = vpop.permute.xlu0 %8149
      %8151 = vrot.lane.b32.xlu0 %v7905, 64
      %v8152 = vpop.permute.xlu0 %8151
      %8153 = vrot.lane.b32.xlu0 %v7906, 64
      %v8154 = vpop.permute.xlu0 %8153
      %8155 = vrot.lane.b32.xlu0 %v7907, 64
      %v8156 = vpop.permute.xlu0 %8155
      %8157 = vrot.lane.b32.xlu0 %v7908, 64
      %v8158 = vpop.permute.xlu0 %8157
      %8159 = vrot.lane.b32.xlu0 %v7909, 64
      %v8160 = vpop.permute.xlu0 %8159
      %8161 = vrot.lane.b32.xlu0 %v7910, 64
      %v8162 = vpop.permute.xlu0 %8161
      %8163 = vrot.lane.b32.xlu0 %v7911, 64
      %v8164 = vpop.permute.xlu0 %8163
      %8165 = vrot.lane.b32.xlu0 %v7912, 64
      %v8166 = vpop.permute.xlu0 %8165
      %8167 = vrot.lane.b32.xlu0 %v7913, 64
      %v8168 = vpop.permute.xlu0 %8167
      %8169 = vrot.lane.b32.xlu0 %v7914, 64
      %v8170 = vpop.permute.xlu0 %8169
      %v8173 = vsel %vm2298, %v8043, %v8140
      %v8176 = vsel %vm2298, %v8044, %v8142
      %v8179 = vsel %vm2298, %v8045, %v8144
      %v8182 = vsel %vm2298, %v8046, %v8146
      %v8185 = vsel %vm2298, %v8047, %v8148
      %v8188 = vsel %vm2298, %v8048, %v8150
      %v8191 = vsel %vm2298, %v8049, %v8152
      %v8194 = vsel %vm2298, %v8050, %v8154
      %v8197 = vsel %vm2298, %v8051, %v8156
      %v8200 = vsel %vm2298, %v8052, %v8158
      %v8203 = vsel %vm2298, %v8053, %v8160
      %v8206 = vsel %vm2298, %v8054, %v8162
      %v8209 = vsel %vm2298, %v8055, %v8164
      %v8212 = vsel %vm2298, %v8056, %v8166
      %v8215 = vsel %vm2298, %v8057, %v8168
      %v8218 = vsel %vm2298, %v8058, %v8170
      %v8251 = vunpack.c.l.b16 %v8173
      %v8252 = vunpack.c.l.b16 %v8107
      %v8253 = vunpack.c.h.b16 %v8173
      %v8254 = vunpack.c.h.b16 %v8107
      %v8255 = vunpack.c.l.b16 %v8176
      %v8256 = vunpack.c.l.b16 %v8108
      %v8257 = vunpack.c.h.b16 %v8176
      %v8258 = vunpack.c.h.b16 %v8108
      %v8259 = vunpack.c.l.b16 %v8179
      %v8260 = vunpack.c.l.b16 %v8109
      %v8261 = vunpack.c.h.b16 %v8179
      %v8262 = vunpack.c.h.b16 %v8109
      %v8263 = vunpack.c.l.b16 %v8182
      %v8264 = vunpack.c.l.b16 %v8110
      %v8265 = vunpack.c.h.b16 %v8182
      %v8266 = vunpack.c.h.b16 %v8110
      %v8267 = vunpack.c.l.b16 %v8185
      %v8268 = vunpack.c.l.b16 %v8111
      %v8269 = vunpack.c.h.b16 %v8185
      %v8270 = vunpack.c.h.b16 %v8111
      %v8271 = vunpack.c.l.b16 %v8188
      %v8272 = vunpack.c.l.b16 %v8112
      %v8273 = vunpack.c.h.b16 %v8188
      %v8274 = vunpack.c.h.b16 %v8112
      %v8275 = vunpack.c.l.b16 %v8191
      %v8276 = vunpack.c.l.b16 %v8113
      %v8277 = vunpack.c.h.b16 %v8191
      %v8278 = vunpack.c.h.b16 %v8113
      %v8279 = vunpack.c.l.b16 %v8194
      %v8280 = vunpack.c.l.b16 %v8114
      %v8281 = vunpack.c.h.b16 %v8194
      %v8282 = vunpack.c.h.b16 %v8114
      %v8283 = vunpack.c.l.b16 %v8197
      %v8284 = vunpack.c.l.b16 %v8115
      %v8285 = vunpack.c.h.b16 %v8197
      %v8286 = vunpack.c.h.b16 %v8115
      %v8287 = vunpack.c.l.b16 %v8200
      %v8288 = vunpack.c.l.b16 %v8116
      %v8289 = vunpack.c.h.b16 %v8200
      %v8290 = vunpack.c.h.b16 %v8116
      %v8291 = vunpack.c.l.b16 %v8203
      %v8292 = vunpack.c.l.b16 %v8117
      %v8293 = vunpack.c.h.b16 %v8203
      %v8294 = vunpack.c.h.b16 %v8117
      %v8295 = vunpack.c.l.b16 %v8206
      %v8296 = vunpack.c.l.b16 %v8118
      %v8297 = vunpack.c.h.b16 %v8206
      %v8298 = vunpack.c.h.b16 %v8118
      %v8299 = vunpack.c.l.b16 %v8209
      %v8300 = vunpack.c.l.b16 %v8119
      %v8301 = vunpack.c.h.b16 %v8209
      %v8302 = vunpack.c.h.b16 %v8119
      %v8303 = vunpack.c.l.b16 %v8212
      %v8304 = vunpack.c.l.b16 %v8120
      %v8305 = vunpack.c.h.b16 %v8212
      %v8306 = vunpack.c.h.b16 %v8120
      %v8307 = vunpack.c.l.b16 %v8215
      %v8308 = vunpack.c.l.b16 %v8121
      %v8309 = vunpack.c.h.b16 %v8215
      %v8310 = vunpack.c.h.b16 %v8121
      %v8311 = vunpack.c.l.b16 %v8218
      %v8312 = vunpack.c.l.b16 %v8122
      %v8313 = vunpack.c.h.b16 %v8218
      %v8314 = vunpack.c.h.b16 %v8122
      %v8315 = vpack.c.b16 %v8252, %v8251
      %v8316 = vpack.c.b16 %v8254, %v8253
      %v8317 = vpack.c.b16 %v8256, %v8255
      %v8318 = vpack.c.b16 %v8258, %v8257
      %v8319 = vpack.c.b16 %v8260, %v8259
      %v8320 = vpack.c.b16 %v8262, %v8261
      %v8321 = vpack.c.b16 %v8264, %v8263
      %v8322 = vpack.c.b16 %v8266, %v8265
      %v8323 = vpack.c.b16 %v8268, %v8267
      %v8324 = vpack.c.b16 %v8270, %v8269
      %v8325 = vpack.c.b16 %v8272, %v8271
      %v8326 = vpack.c.b16 %v8274, %v8273
      %v8327 = vpack.c.b16 %v8276, %v8275
      %v8328 = vpack.c.b16 %v8278, %v8277
      %v8329 = vpack.c.b16 %v8280, %v8279
      %v8330 = vpack.c.b16 %v8282, %v8281
      %v8331 = vpack.c.b16 %v8284, %v8283
      %v8332 = vpack.c.b16 %v8286, %v8285
      %v8333 = vpack.c.b16 %v8288, %v8287
      %v8334 = vpack.c.b16 %v8290, %v8289
      %v8335 = vpack.c.b16 %v8292, %v8291
      %v8336 = vpack.c.b16 %v8294, %v8293
      %v8337 = vpack.c.b16 %v8296, %v8295
      %v8338 = vpack.c.b16 %v8298, %v8297
      %v8339 = vpack.c.b16 %v8300, %v8299
      %v8340 = vpack.c.b16 %v8302, %v8301
      %v8341 = vpack.c.b16 %v8304, %v8303
      %v8342 = vpack.c.b16 %v8306, %v8305
      %v8343 = vpack.c.b16 %v8308, %v8307
      %v8344 = vpack.c.b16 %v8310, %v8309
      %v8345 = vpack.c.b16 %v8312, %v8311
      %v8346 = vpack.c.b16 %v8314, %v8313
      %8379 = vst.msk [vmem:[%s3084] sm:$0xff] %vm369, %v8315
      %8380 = vst.msk [vmem:[%s3084 + $0x8] sm:$0xff] %vm369, %v8316
      %8381 = vst.msk [vmem:[%s3084 + $0x10] sm:$0xff] %vm369, %v8317
      %8382 = vst.msk [vmem:[%s3084 + $0x18] sm:$0xff] %vm369, %v8318
      %8383 = vst.msk [vmem:[%s3084 + $0x20] sm:$0xff] %vm369, %v8319
      %8384 = vst.msk [vmem:[%s3084 + $0x28] sm:$0xff] %vm369, %v8320
      %8385 = vst.msk [vmem:[%s3084 + $0x30] sm:$0xff] %vm369, %v8321
      %8386 = vst.msk [vmem:[%s3084 + $0x38] sm:$0xff] %vm369, %v8322
      %8387 = vst.msk [vmem:[%s3084 + $0x40] sm:$0xff] %vm369, %v8323
      %8388 = vst.msk [vmem:[%s3084 + $0x48] sm:$0xff] %vm369, %v8324
      %8389 = vst.msk [vmem:[%s3084 + $0x50] sm:$0xff] %vm369, %v8325
      %8390 = vst.msk [vmem:[%s3084 + $0x58] sm:$0xff] %vm369, %v8326
      %8391 = vst.msk [vmem:[%s3084 + $0x60] sm:$0xff] %vm369, %v8327
      %8392 = vst.msk [vmem:[%s3084 + $0x68] sm:$0xff] %vm369, %v8328
      %8393 = vst.msk [vmem:[%s3084 + $0x70] sm:$0xff] %vm369, %v8329
      %8394 = vst.msk [vmem:[%s3084 + $0x78] sm:$0xff] %vm369, %v8330
      %8395 = vst.msk [vmem:[%s3084 + $0x80] sm:$0xff] %vm369, %v8331
      %8396 = vst.msk [vmem:[%s3084 + $0x88] sm:$0xff] %vm369, %v8332
      %8397 = vst.msk [vmem:[%s3084 + $0x90] sm:$0xff] %vm369, %v8333
      %8398 = vst.msk [vmem:[%s3084 + $0x98] sm:$0xff] %vm369, %v8334
      %8399 = vst.msk [vmem:[%s3084 + $0xa0] sm:$0xff] %vm369, %v8335
      %8400 = vst.msk [vmem:[%s3084 + $0xa8] sm:$0xff] %vm369, %v8336
      %8401 = vst.msk [vmem:[%s3084 + $0xb0] sm:$0xff] %vm369, %v8337
      %8402 = vst.msk [vmem:[%s3084 + $0xb8] sm:$0xff] %vm369, %v8338
      %8403 = vst.msk [vmem:[%s3084 + $0xc0] sm:$0xff] %vm369, %v8339
      %8404 = vst.msk [vmem:[%s3084 + $0xc8] sm:$0xff] %vm369, %v8340
      %8405 = vst.msk [vmem:[%s3084 + $0xd0] sm:$0xff] %vm369, %v8341
      %8406 = vst.msk [vmem:[%s3084 + $0xd8] sm:$0xff] %vm369, %v8342
      %8407 = vst.msk [vmem:[%s3084 + $0xe0] sm:$0xff] %vm369, %v8343
      %8408 = vst.msk [vmem:[%s3084 + $0xe8] sm:$0xff] %vm369, %v8344
      %8409 = vst.msk [vmem:[%s3084 + $0xf0] sm:$0xff] %vm369, %v8345
      %8410 = vst.msk [vmem:[%s3084 + $0xf8] sm:$0xff] %vm369, %v8346
      %v8411 = vld [vmem:[#allocation3] sm:$0xff]
      %v8412 = vld [vmem:[#allocation3 + $0x8] sm:$0xff]
      %v8413 = vld [vmem:[#allocation3 + $0x10] sm:$0xff]
      %v8414 = vld [vmem:[#allocation3 + $0x18] sm:$0xff]
      %v8415 = vld [vmem:[#allocation3 + $0x20] sm:$0xff]
      %v8416 = vld [vmem:[#allocation3 + $0x28] sm:$0xff]
      %v8417 = vld [vmem:[#allocation3 + $0x30] sm:$0xff]
      %v8418 = vld [vmem:[#allocation3 + $0x38] sm:$0xff]
      %v8419 = vld [vmem:[#allocation3 + $0x40] sm:$0xff]
      %v8420 = vld [vmem:[#allocation3 + $0x48] sm:$0xff]
      %v8421 = vld [vmem:[#allocation3 + $0x50] sm:$0xff]
      %v8422 = vld [vmem:[#allocation3 + $0x58] sm:$0xff]
      %v8423 = vld [vmem:[#allocation3 + $0x60] sm:$0xff]
      %v8424 = vld [vmem:[#allocation3 + $0x68] sm:$0xff]
      %v8425 = vld [vmem:[#allocation3 + $0x70] sm:$0xff]
      %v8426 = vld [vmem:[#allocation3 + $0x78] sm:$0xff]
      %v8427 = vld [vmem:[#allocation3 + $0x80] sm:$0xff]
      %v8428 = vld [vmem:[#allocation3 + $0x88] sm:$0xff]
      %v8429 = vld [vmem:[#allocation3 + $0x90] sm:$0xff]
      %v8430 = vld [vmem:[#allocation3 + $0x98] sm:$0xff]
      %v8431 = vld [vmem:[#allocation3 + $0xa0] sm:$0xff]
      %v8432 = vld [vmem:[#allocation3 + $0xa8] sm:$0xff]
      %v8433 = vld [vmem:[#allocation3 + $0xb0] sm:$0xff]
      %v8434 = vld [vmem:[#allocation3 + $0xb8] sm:$0xff]
      %v8435 = vld [vmem:[#allocation3 + $0xc0] sm:$0xff]
      %v8436 = vld [vmem:[#allocation3 + $0xc8] sm:$0xff]
      %v8437 = vld [vmem:[#allocation3 + $0xd0] sm:$0xff]
      %v8438 = vld [vmem:[#allocation3 + $0xd8] sm:$0xff]
      %v8439 = vld [vmem:[#allocation3 + $0xe0] sm:$0xff]
      %v8440 = vld [vmem:[#allocation3 + $0xe8] sm:$0xff]
      %v8441 = vld [vmem:[#allocation3 + $0xf0] sm:$0xff]
      %v8442 = vld [vmem:[#allocation3 + $0xf8] sm:$0xff]
      %v8443 = vld [vmem:[%s8] sm:$0xf]
      %v8444 = vld [vmem:[%s8 + $0x4] sm:$0xf]
      %v8445 = vld [vmem:[%s8 + $0x8] sm:$0xf]
      %v8446 = vld [vmem:[%s8 + $0xc] sm:$0xf]
      %v8447 = vld [vmem:[%s8 + $0x10] sm:$0xf]
      %v8448 = vld [vmem:[%s8 + $0x14] sm:$0xf]
      %v8449 = vld [vmem:[%s8 + $0x18] sm:$0xf]
      %v8450 = vld [vmem:[%s8 + $0x1c] sm:$0xf]
      %v8451 = vld [vmem:[%s8 + $0x20] sm:$0xf]
      %v8452 = vld [vmem:[%s8 + $0x24] sm:$0xf]
      %v8453 = vld [vmem:[%s8 + $0x28] sm:$0xf]
      %v8454 = vld [vmem:[%s8 + $0x2c] sm:$0xf]
      %v8455 = vld [vmem:[%s8 + $0x30] sm:$0xf]
      %v8456 = vld [vmem:[%s8 + $0x34] sm:$0xf]
      %v8457 = vld [vmem:[%s8 + $0x38] sm:$0xf]
      %v8458 = vld [vmem:[%s8 + $0x3c] sm:$0xf]
      %v8459 = vld [vmem:[%s8 + $0x40] sm:$0xf]
      %v8460 = vld [vmem:[%s8 + $0x44] sm:$0xf]
      %v8461 = vld [vmem:[%s8 + $0x48] sm:$0xf]
      %v8462 = vld [vmem:[%s8 + $0x4c] sm:$0xf]
      %v8463 = vld [vmem:[%s8 + $0x50] sm:$0xf]
      %v8464 = vld [vmem:[%s8 + $0x54] sm:$0xf]
      %v8465 = vld [vmem:[%s8 + $0x58] sm:$0xf]
      %v8466 = vld [vmem:[%s8 + $0x5c] sm:$0xf]
      %v8467 = vld [vmem:[%s3084] sm:$0xff]
      %v8468 = vld [vmem:[%s3084 + $0x8] sm:$0xff]
      %v8469 = vld [vmem:[%s3084 + $0x10] sm:$0xff]
      %v8470 = vld [vmem:[%s3084 + $0x18] sm:$0xff]
      %v8471 = vld [vmem:[%s3084 + $0x20] sm:$0xff]
      %v8472 = vld [vmem:[%s3084 + $0x28] sm:$0xff]
      %v8473 = vld [vmem:[%s3084 + $0x30] sm:$0xff]
      %v8474 = vld [vmem:[%s3084 + $0x38] sm:$0xff]
      %v8475 = vld [vmem:[%s3084 + $0x40] sm:$0xff]
      %v8476 = vld [vmem:[%s3084 + $0x48] sm:$0xff]
      %v8477 = vld [vmem:[%s3084 + $0x50] sm:$0xff]
      %v8478 = vld [vmem:[%s3084 + $0x58] sm:$0xff]
      %v8479 = vld [vmem:[%s3084 + $0x60] sm:$0xff]
      %v8480 = vld [vmem:[%s3084 + $0x68] sm:$0xff]
      %v8481 = vld [vmem:[%s3084 + $0x70] sm:$0xff]
      %v8482 = vld [vmem:[%s3084 + $0x78] sm:$0xff]
      %v8483 = vld [vmem:[%s3084 + $0x80] sm:$0xff]
      %v8484 = vld [vmem:[%s3084 + $0x88] sm:$0xff]
      %v8485 = vld [vmem:[%s3084 + $0x90] sm:$0xff]
      %v8486 = vld [vmem:[%s3084 + $0x98] sm:$0xff]
      %v8487 = vld [vmem:[%s3084 + $0xa0] sm:$0xff]
      %v8488 = vld [vmem:[%s3084 + $0xa8] sm:$0xff]
      %v8489 = vld [vmem:[%s3084 + $0xb0] sm:$0xff]
      %v8490 = vld [vmem:[%s3084 + $0xb8] sm:$0xff]
      %v8491 = vld [vmem:[%s3084 + $0xc0] sm:$0xff]
      %v8492 = vld [vmem:[%s3084 + $0xc8] sm:$0xff]
      %v8493 = vld [vmem:[%s3084 + $0xd0] sm:$0xff]
      %v8494 = vld [vmem:[%s3084 + $0xd8] sm:$0xff]
      %v8495 = vld [vmem:[%s3084 + $0xe0] sm:$0xff]
      %v8496 = vld [vmem:[%s3084 + $0xe8] sm:$0xff]
      %v8497 = vld [vmem:[%s3084 + $0xf0] sm:$0xff]
      %v8498 = vld [vmem:[%s3084 + $0xf8] sm:$0xff]
      %s8499 = scalar_lea.vmem %s8, 96
      %v8500 = vld [vmem:[%s8499] sm:$0xf]
      %v8501 = vld [vmem:[%s8499 + $0x4] sm:$0xf]
      %v8502 = vld [vmem:[%s8499 + $0x8] sm:$0xf]
      %v8503 = vld [vmem:[%s8499 + $0xc] sm:$0xf]
      %v8504 = vld [vmem:[%s8499 + $0x10] sm:$0xf]
      %v8505 = vld [vmem:[%s8499 + $0x14] sm:$0xf]
      %v8506 = vld [vmem:[%s8499 + $0x18] sm:$0xf]
      %v8507 = vld [vmem:[%s8499 + $0x1c] sm:$0xf]
      %v8508 = vld [vmem:[%s8499 + $0x20] sm:$0xf]
      %v8509 = vld [vmem:[%s8499 + $0x24] sm:$0xf]
      %v8510 = vld [vmem:[%s8499 + $0x28] sm:$0xf]
      %v8511 = vld [vmem:[%s8499 + $0x2c] sm:$0xf]
      %v8512 = vld [vmem:[%s8499 + $0x30] sm:$0xf]
      %v8513 = vld [vmem:[%s8499 + $0x34] sm:$0xf]
      %v8514 = vld [vmem:[%s8499 + $0x38] sm:$0xf]
      %v8515 = vld [vmem:[%s8499 + $0x3c] sm:$0xf]
      %v8516 = vld [vmem:[%s8499 + $0x40] sm:$0xf]
      %v8517 = vld [vmem:[%s8499 + $0x44] sm:$0xf]
      %v8518 = vld [vmem:[%s8499 + $0x48] sm:$0xf]
      %v8519 = vld [vmem:[%s8499 + $0x4c] sm:$0xf]
      %v8520 = vld [vmem:[%s8499 + $0x50] sm:$0xf]
      %v8521 = vld [vmem:[%s8499 + $0x54] sm:$0xf]
      %v8522 = vld [vmem:[%s8499 + $0x58] sm:$0xf]
      %v8523 = vld [vmem:[%s8499 + $0x5c] sm:$0xf]
      %v8556 = vunpack.c.l.b16 %v8467
      %v8557 = vunpack.c.h.b16 %v8467
      %v8558 = vunpack.c.l.b16 %v8468
      %v8559 = vunpack.c.h.b16 %v8468
      %v8560 = vunpack.c.l.b16 %v8469
      %v8561 = vunpack.c.h.b16 %v8469
      %v8562 = vunpack.c.l.b16 %v8470
      %v8563 = vunpack.c.h.b16 %v8470
      %v8564 = vunpack.c.l.b16 %v8471
      %v8565 = vunpack.c.h.b16 %v8471
      %v8566 = vunpack.c.l.b16 %v8472
      %v8567 = vunpack.c.h.b16 %v8472
      %v8568 = vunpack.c.l.b16 %v8473
      %v8569 = vunpack.c.h.b16 %v8473
      %v8570 = vunpack.c.l.b16 %v8474
      %v8571 = vunpack.c.h.b16 %v8474
      %v8572 = vunpack.c.l.b16 %v8475
      %v8573 = vunpack.c.h.b16 %v8475
      %v8574 = vunpack.c.l.b16 %v8476
      %v8575 = vunpack.c.h.b16 %v8476
      %v8576 = vunpack.c.l.b16 %v8477
      %v8577 = vunpack.c.h.b16 %v8477
      %v8578 = vunpack.c.l.b16 %v8478
      %v8579 = vunpack.c.h.b16 %v8478
      %v8580 = vunpack.c.l.b16 %v8479
      %v8581 = vunpack.c.h.b16 %v8479
      %v8582 = vunpack.c.l.b16 %v8480
      %v8583 = vunpack.c.h.b16 %v8480
      %v8584 = vunpack.c.l.b16 %v8481
      %v8585 = vunpack.c.h.b16 %v8481
      %v8586 = vunpack.c.l.b16 %v8482
      %v8587 = vunpack.c.h.b16 %v8482
      %v8588 = vunpack.c.l.b16 %v8483
      %v8589 = vunpack.c.h.b16 %v8483
      %v8590 = vunpack.c.l.b16 %v8484
      %v8591 = vunpack.c.h.b16 %v8484
      %v8592 = vunpack.c.l.b16 %v8485
      %v8593 = vunpack.c.h.b16 %v8485
      %v8594 = vunpack.c.l.b16 %v8486
      %v8595 = vunpack.c.h.b16 %v8486
      %v8596 = vunpack.c.l.b16 %v8487
      %v8597 = vunpack.c.h.b16 %v8487
      %v8598 = vunpack.c.l.b16 %v8488
      %v8599 = vunpack.c.h.b16 %v8488
      %v8600 = vunpack.c.l.b16 %v8489
      %v8601 = vunpack.c.h.b16 %v8489
      %v8602 = vunpack.c.l.b16 %v8490
      %v8603 = vunpack.c.h.b16 %v8490
      %v8604 = vunpack.c.l.b16 %v8491
      %v8605 = vunpack.c.h.b16 %v8491
      %v8606 = vunpack.c.l.b16 %v8492
      %v8607 = vunpack.c.h.b16 %v8492
      %v8608 = vunpack.c.l.b16 %v8493
      %v8609 = vunpack.c.h.b16 %v8493
      %v8610 = vunpack.c.l.b16 %v8494
      %v8611 = vunpack.c.h.b16 %v8494
      %v8612 = vunpack.c.l.b16 %v8495
      %v8613 = vunpack.c.h.b16 %v8495
      %v8614 = vunpack.c.l.b16 %v8496
      %v8615 = vunpack.c.h.b16 %v8496
      %v8616 = vunpack.c.l.b16 %v8497
      %v8617 = vunpack.c.h.b16 %v8497
      %v8618 = vunpack.c.l.b16 %v8498
      %v8619 = vunpack.c.h.b16 %v8498
      %v8620 = vpack.c.b16 %v8558, %v8556
      %v8621 = vpack.c.b16 %v8559, %v8557
      %v8622 = vpack.c.b16 %v8562, %v8560
      %v8623 = vpack.c.b16 %v8563, %v8561
      %v8624 = vpack.c.b16 %v8566, %v8564
      %v8625 = vpack.c.b16 %v8567, %v8565
      %v8626 = vpack.c.b16 %v8570, %v8568
      %v8627 = vpack.c.b16 %v8571, %v8569
      %v8628 = vpack.c.b16 %v8574, %v8572
      %v8629 = vpack.c.b16 %v8575, %v8573
      %v8630 = vpack.c.b16 %v8578, %v8576
      %v8631 = vpack.c.b16 %v8579, %v8577
      %v8632 = vpack.c.b16 %v8582, %v8580
      %v8633 = vpack.c.b16 %v8583, %v8581
      %v8634 = vpack.c.b16 %v8586, %v8584
      %v8635 = vpack.c.b16 %v8587, %v8585
      %v8636 = vpack.c.b16 %v8590, %v8588
      %v8637 = vpack.c.b16 %v8591, %v8589
      %v8638 = vpack.c.b16 %v8594, %v8592
      %v8639 = vpack.c.b16 %v8595, %v8593
      %v8640 = vpack.c.b16 %v8598, %v8596
      %v8641 = vpack.c.b16 %v8599, %v8597
      %v8642 = vpack.c.b16 %v8602, %v8600
      %v8643 = vpack.c.b16 %v8603, %v8601
      %v8644 = vpack.c.b16 %v8606, %v8604
      %v8645 = vpack.c.b16 %v8607, %v8605
      %v8646 = vpack.c.b16 %v8610, %v8608
      %v8647 = vpack.c.b16 %v8611, %v8609
      %v8648 = vpack.c.b16 %v8614, %v8612
      %v8649 = vpack.c.b16 %v8615, %v8613
      %v8650 = vpack.c.b16 %v8618, %v8616
      %v8651 = vpack.c.b16 %v8619, %v8617
      %v8692 = vunpack.c.l.b16 %v8500
      %v8693 = vunpack.c.l.b16 %v8501
      %v8694 = vunpack.c.l.b16 %v8502
      %v8695 = vunpack.c.l.b16 %v8503
      %v8696 = vunpack.c.l.b16 %v8504
      %v8697 = vunpack.c.l.b16 %v8505
      %v8698 = vunpack.c.l.b16 %v8506
      %v8699 = vunpack.c.l.b16 %v8507
      %v8700 = vunpack.c.l.b16 %v8508
      %v8701 = vunpack.c.l.b16 %v8509
      %v8702 = vunpack.c.l.b16 %v8510
      %v8703 = vunpack.c.l.b16 %v8511
      %v8704 = vunpack.c.l.b16 %v8512
      %v8705 = vunpack.c.l.b16 %v8513
      %v8706 = vunpack.c.l.b16 %v8514
      %v8707 = vunpack.c.l.b16 %v8515
      %v8708 = vunpack.c.l.b16 %v8516
      %v8709 = vunpack.c.l.b16 %v8517
      %v8710 = vunpack.c.l.b16 %v8518
      %v8711 = vunpack.c.l.b16 %v8519
      %v8712 = vunpack.c.l.b16 %v8520
      %v8713 = vunpack.c.l.b16 %v8521
      %v8714 = vunpack.c.l.b16 %v8522
      %v8715 = vunpack.c.l.b16 %v8523
      %v8716 = vpack.c.b16 %v8693, %v8692
      %v8717 = vpack.c.b16 %v8695, %v8694
      %v8718 = vpack.c.b16 %v8697, %v8696
      %v8719 = vpack.c.b16 %v8699, %v8698
      %v8720 = vpack.c.b16 %v8701, %v8700
      %v8721 = vpack.c.b16 %v8703, %v8702
      %v8722 = vpack.c.b16 %v8705, %v8704
      %v8723 = vpack.c.b16 %v8707, %v8706
      %v8724 = vpack.c.b16 %v8709, %v8708
      %v8725 = vpack.c.b16 %v8711, %v8710
      %v8726 = vpack.c.b16 %v8713, %v8712
      %v8727 = vpack.c.b16 %v8715, %v8714
      %v8741 = vsel %vm2298, %v8621, 0
      %v8744 = vsel %vm2298, %v8623, 0
      %v8747 = vsel %vm2298, %v8625, 0
      %v8750 = vsel %vm2298, %v8627, 0
      %v8753 = vsel %vm2298, %v8629, 0
      %v8756 = vsel %vm2298, %v8631, 0
      %v8759 = vsel %vm2298, %v8633, 0
      %v8762 = vsel %vm2298, %v8635, 0
      %v8765 = vsel %vm2298, %v8637, 0
      %v8768 = vsel %vm2298, %v8639, 0
      %v8771 = vsel %vm2298, %v8641, 0
      %v8774 = vsel %vm2298, %v8643, 0
      %v8777 = vsel %vm2298, %v8645, 0
      %v8780 = vsel %vm2298, %v8647, 0
      %v8783 = vsel %vm2298, %v8649, 0
      %v8786 = vsel %vm2298, %v8651, 0
      %8788 = vmatprep.subr.bf16.mxu0 0
      %8789 = vmatpush1.bf16.msra.mxu0 %v8723
      %8790 = vmatprep.subr.bf16.mxu0 0
      %8791 = vmatpush1.bf16.msra.mxu0 %v8722
      %8792 = vmatprep.subr.bf16.mxu0 0
      %8793 = vmatpush1.bf16.msra.mxu0 %v8721
      %8794 = vmatprep.subr.bf16.mxu0 0
      %8795 = vmatpush1.bf16.msra.mxu0 %v8720
      %8796 = vmatprep.subr.bf16.mxu0 0
      %8797 = vmatpush1.bf16.msra.mxu0 %v8719
      %8798 = vmatprep.subr.bf16.mxu0 0
      %8799 = vmatpush1.bf16.msra.mxu0 %v8718
      %8800 = vmatprep.subr.bf16.mxu0 0
      %8801 = vmatpush1.bf16.msra.mxu0 %v8717
      %8802 = vmatprep.subr.bf16.mxu0 0
      %8803 = vmatpush1.bf16.msra.mxu0 %v8716
      %8804 = vmatprep.subr.bf16.mxu0 0
      %8805 = vmatpush2.bf16.msra.mxu0 0
      %8806 = vmatprep.subr.bf16.mxu0 0
      %8807 = vmatpush2.bf16.msra.mxu0 0
      %8808 = vmatprep.subr.bf16.mxu0 0
      %8809 = vmatpush2.bf16.msra.mxu0 0
      %8810 = vmatprep.subr.bf16.mxu0 0
      %8811 = vmatpush2.bf16.msra.mxu0 0
      %8812 = vmatprep.subr.bf16.mxu0 0
      %8813 = vmatpush2.bf16.msra.mxu0 %v8727
      %8814 = vmatprep.subr.bf16.mxu0 0
      %8815 = vmatpush2.bf16.msra.mxu0 %v8726
      %8816 = vmatprep.subr.bf16.mxu0 0
      %8817 = vmatpush2.bf16.msra.mxu0 %v8725
      %8818 = vmatprep.subr.bf16.mxu0 0
      %8819 = vmatpush2.bf16.msra.mxu0 %v8724
      %8820 = vmatprep.mubr.bf16.mxu0 %v8741
      %8821 = vmatmul.mubr.bf16.gmra.mxu0 %v8620
      %v8822 = vpop.f32.mrf.mxu0
      %v8823 = vadd.f32 0.0, %v8822
      %v8824 = vpop.f32.mrf.mxu0
      %v8825 = vpop.f32.mrf.mxu0
      %v8826 = vadd.f32 0.0, %v8825
      %v8827 = vpop.f32.mrf.mxu0
      %8828 = vmatprep.mubr.bf16.mxu0 %v8744
      %8829 = vmatmul.mubr.bf16.gmra.mxu0 %v8622
      %v8830 = vpop.f32.mrf.mxu0
      %v8831 = vadd.f32 0.0, %v8830
      %v8832 = vpop.f32.mrf.mxu0
      %v8833 = vpop.f32.mrf.mxu0
      %v8834 = vadd.f32 0.0, %v8833
      %v8835 = vpop.f32.mrf.mxu0
      %8836 = vmatprep.mubr.bf16.mxu0 %v8747
      %8837 = vmatmul.mubr.bf16.gmra.mxu0 %v8624
      %v8838 = vpop.f32.mrf.mxu0
      %v8839 = vadd.f32 0.0, %v8838
      %v8840 = vpop.f32.mrf.mxu0
      %v8841 = vpop.f32.mrf.mxu0
      %v8842 = vadd.f32 0.0, %v8841
      %v8843 = vpop.f32.mrf.mxu0
      %8844 = vmatprep.mubr.bf16.mxu0 %v8750
      %8845 = vmatmul.mubr.bf16.gmra.mxu0 %v8626
      %v8846 = vpop.f32.mrf.mxu0
      %v8847 = vadd.f32 0.0, %v8846
      %v8848 = vpop.f32.mrf.mxu0
      %v8849 = vpop.f32.mrf.mxu0
      %v8850 = vadd.f32 0.0, %v8849
      %v8851 = vpop.f32.mrf.mxu0
      %8852 = vmatprep.mubr.bf16.mxu0 %v8753
      %8853 = vmatmul.mubr.bf16.gmra.mxu0 %v8628
      %v8854 = vpop.f32.mrf.mxu0
      %v8855 = vadd.f32 0.0, %v8854
      %v8856 = vpop.f32.mrf.mxu0
      %v8857 = vpop.f32.mrf.mxu0
      %v8858 = vadd.f32 0.0, %v8857
      %v8859 = vpop.f32.mrf.mxu0
      %8860 = vmatprep.mubr.bf16.mxu0 %v8756
      %8861 = vmatmul.mubr.bf16.gmra.mxu0 %v8630
      %v8862 = vpop.f32.mrf.mxu0
      %v8863 = vadd.f32 0.0, %v8862
      %v8864 = vpop.f32.mrf.mxu0
      %v8865 = vpop.f32.mrf.mxu0
      %v8866 = vadd.f32 0.0, %v8865
      %v8867 = vpop.f32.mrf.mxu0
      %8868 = vmatprep.mubr.bf16.mxu0 %v8759
      %8869 = vmatmul.mubr.bf16.gmra.mxu0 %v8632
      %v8870 = vpop.f32.mrf.mxu0
      %v8871 = vadd.f32 0.0, %v8870
      %v8872 = vpop.f32.mrf.mxu0
      %v8873 = vpop.f32.mrf.mxu0
      %v8874 = vadd.f32 0.0, %v8873
      %v8875 = vpop.f32.mrf.mxu0
      %8876 = vmatprep.mubr.bf16.mxu0 %v8762
      %8877 = vmatmul.mubr.bf16.gmra.mxu0 %v8634
      %v8878 = vpop.f32.mrf.mxu0
      %v8879 = vadd.f32 0.0, %v8878
      %v8880 = vpop.f32.mrf.mxu0
      %v8881 = vpop.f32.mrf.mxu0
      %v8882 = vadd.f32 0.0, %v8881
      %v8883 = vpop.f32.mrf.mxu0
      %8884 = vmatprep.mubr.bf16.mxu0 %v8765
      %8885 = vmatmul.mubr.bf16.gmra.mxu0 %v8636
      %v8886 = vpop.f32.mrf.mxu0
      %v8887 = vadd.f32 0.0, %v8886
      %v8888 = vpop.f32.mrf.mxu0
      %v8889 = vpop.f32.mrf.mxu0
      %v8890 = vadd.f32 0.0, %v8889
      %v8891 = vpop.f32.mrf.mxu0
      %8892 = vmatprep.mubr.bf16.mxu0 %v8768
      %8893 = vmatmul.mubr.bf16.gmra.mxu0 %v8638
      %v8894 = vpop.f32.mrf.mxu0
      %v8895 = vadd.f32 0.0, %v8894
      %v8896 = vpop.f32.mrf.mxu0
      %v8897 = vpop.f32.mrf.mxu0
      %v8898 = vadd.f32 0.0, %v8897
      %v8899 = vpop.f32.mrf.mxu0
      %8900 = vmatprep.mubr.bf16.mxu0 %v8771
      %8901 = vmatmul.mubr.bf16.gmra.mxu0 %v8640
      %v8902 = vpop.f32.mrf.mxu0
      %v8903 = vadd.f32 0.0, %v8902
      %v8904 = vpop.f32.mrf.mxu0
      %v8905 = vpop.f32.mrf.mxu0
      %v8906 = vadd.f32 0.0, %v8905
      %v8907 = vpop.f32.mrf.mxu0
      %8908 = vmatprep.mubr.bf16.mxu0 %v8774
      %8909 = vmatmul.mubr.bf16.gmra.mxu0 %v8642
      %v8910 = vpop.f32.mrf.mxu0
      %v8911 = vadd.f32 0.0, %v8910
      %v8912 = vpop.f32.mrf.mxu0
      %v8913 = vpop.f32.mrf.mxu0
      %v8914 = vadd.f32 0.0, %v8913
      %v8915 = vpop.f32.mrf.mxu0
      %8916 = vmatprep.mubr.bf16.mxu0 %v8777
      %8917 = vmatmul.mubr.bf16.gmra.mxu0 %v8644
      %v8918 = vpop.f32.mrf.mxu0
      %v8919 = vadd.f32 0.0, %v8918
      %v8920 = vpop.f32.mrf.mxu0
      %v8921 = vpop.f32.mrf.mxu0
      %v8922 = vadd.f32 0.0, %v8921
      %v8923 = vpop.f32.mrf.mxu0
      %8924 = vmatprep.mubr.bf16.mxu0 %v8780
      %8925 = vmatmul.mubr.bf16.gmra.mxu0 %v8646
      %v8926 = vpop.f32.mrf.mxu0
      %v8927 = vadd.f32 0.0, %v8926
      %v8928 = vpop.f32.mrf.mxu0
      %v8929 = vpop.f32.mrf.mxu0
      %v8930 = vadd.f32 0.0, %v8929
      %v8931 = vpop.f32.mrf.mxu0
      %8932 = vmatprep.mubr.bf16.mxu0 %v8783
      %8933 = vmatmul.mubr.bf16.gmra.mxu0 %v8648
      %v8934 = vpop.f32.mrf.mxu0
      %v8935 = vadd.f32 0.0, %v8934
      %v8936 = vpop.f32.mrf.mxu0
      %v8937 = vpop.f32.mrf.mxu0
      %v8938 = vadd.f32 0.0, %v8937
      %v8939 = vpop.f32.mrf.mxu0
      %8940 = vmatprep.mubr.bf16.mxu0 %v8786
      %8941 = vmatmul.mubr.bf16.gmra.mxu0 %v8650
      %v8942 = vpop.f32.mrf.mxu0
      %v8943 = vadd.f32 0.0, %v8942
      %v8944 = vpop.f32.mrf.mxu0
      %v8945 = vpop.f32.mrf.mxu0
      %v8946 = vadd.f32 0.0, %v8945
      %v8947 = vpop.f32.mrf.mxu0
      %8948 = vdwg.mxu0
      %v8981 = vunpack.c.l.b16 %v8411
      %v8982 = vunpack.c.h.b16 %v8411
      %v8983 = vunpack.c.l.b16 %v8412
      %v8984 = vunpack.c.h.b16 %v8412
      %v8985 = vunpack.c.l.b16 %v8413
      %v8986 = vunpack.c.h.b16 %v8413
      %v8987 = vunpack.c.l.b16 %v8414
      %v8988 = vunpack.c.h.b16 %v8414
      %v8989 = vunpack.c.l.b16 %v8415
      %v8990 = vunpack.c.h.b16 %v8415
      %v8991 = vunpack.c.l.b16 %v8416
      %v8992 = vunpack.c.h.b16 %v8416
      %v8993 = vunpack.c.l.b16 %v8417
      %v8994 = vunpack.c.h.b16 %v8417
      %v8995 = vunpack.c.l.b16 %v8418
      %v8996 = vunpack.c.h.b16 %v8418
      %v8997 = vunpack.c.l.b16 %v8419
      %v8998 = vunpack.c.h.b16 %v8419
      %v8999 = vunpack.c.l.b16 %v8420
      %v9000 = vunpack.c.h.b16 %v8420
      %v9001 = vunpack.c.l.b16 %v8421
      %v9002 = vunpack.c.h.b16 %v8421
      %v9003 = vunpack.c.l.b16 %v8422
      %v9004 = vunpack.c.h.b16 %v8422
      %v9005 = vunpack.c.l.b16 %v8423
      %v9006 = vunpack.c.h.b16 %v8423
      %v9007 = vunpack.c.l.b16 %v8424
      %v9008 = vunpack.c.h.b16 %v8424
      %v9009 = vunpack.c.l.b16 %v8425
      %v9010 = vunpack.c.h.b16 %v8425
      %v9011 = vunpack.c.l.b16 %v8426
      %v9012 = vunpack.c.h.b16 %v8426
      %v9013 = vunpack.c.l.b16 %v8427
      %v9014 = vunpack.c.h.b16 %v8427
      %v9015 = vunpack.c.l.b16 %v8428
      %v9016 = vunpack.c.h.b16 %v8428
      %v9017 = vunpack.c.l.b16 %v8429
      %v9018 = vunpack.c.h.b16 %v8429
      %v9019 = vunpack.c.l.b16 %v8430
      %v9020 = vunpack.c.h.b16 %v8430
      %v9021 = vunpack.c.l.b16 %v8431
      %v9022 = vunpack.c.h.b16 %v8431
      %v9023 = vunpack.c.l.b16 %v8432
      %v9024 = vunpack.c.h.b16 %v8432
      %v9025 = vunpack.c.l.b16 %v8433
      %v9026 = vunpack.c.h.b16 %v8433
      %v9027 = vunpack.c.l.b16 %v8434
      %v9028 = vunpack.c.h.b16 %v8434
      %v9029 = vunpack.c.l.b16 %v8435
      %v9030 = vunpack.c.h.b16 %v8435
      %v9031 = vunpack.c.l.b16 %v8436
      %v9032 = vunpack.c.h.b16 %v8436
      %v9033 = vunpack.c.l.b16 %v8437
      %v9034 = vunpack.c.h.b16 %v8437
      %v9035 = vunpack.c.l.b16 %v8438
      %v9036 = vunpack.c.h.b16 %v8438
      %v9037 = vunpack.c.l.b16 %v8439
      %v9038 = vunpack.c.h.b16 %v8439
      %v9039 = vunpack.c.l.b16 %v8440
      %v9040 = vunpack.c.h.b16 %v8440
      %v9041 = vunpack.c.l.b16 %v8441
      %v9042 = vunpack.c.h.b16 %v8441
      %v9043 = vunpack.c.l.b16 %v8442
      %v9044 = vunpack.c.h.b16 %v8442
      %v9045 = vpack.c.b16 %v8983, %v8981
      %v9046 = vpack.c.b16 %v8984, %v8982
      %v9047 = vpack.c.b16 %v8987, %v8985
      %v9048 = vpack.c.b16 %v8988, %v8986
      %v9049 = vpack.c.b16 %v8991, %v8989
      %v9050 = vpack.c.b16 %v8992, %v8990
      %v9051 = vpack.c.b16 %v8995, %v8993
      %v9052 = vpack.c.b16 %v8996, %v8994
      %v9053 = vpack.c.b16 %v8999, %v8997
      %v9054 = vpack.c.b16 %v9000, %v8998
      %v9055 = vpack.c.b16 %v9003, %v9001
      %v9056 = vpack.c.b16 %v9004, %v9002
      %v9057 = vpack.c.b16 %v9007, %v9005
      %v9058 = vpack.c.b16 %v9008, %v9006
      %v9059 = vpack.c.b16 %v9011, %v9009
      %v9060 = vpack.c.b16 %v9012, %v9010
      %v9061 = vpack.c.b16 %v9015, %v9013
      %v9062 = vpack.c.b16 %v9016, %v9014
      %v9063 = vpack.c.b16 %v9019, %v9017
      %v9064 = vpack.c.b16 %v9020, %v9018
      %v9065 = vpack.c.b16 %v9023, %v9021
      %v9066 = vpack.c.b16 %v9024, %v9022
      %v9067 = vpack.c.b16 %v9027, %v9025
      %v9068 = vpack.c.b16 %v9028, %v9026
      %v9069 = vpack.c.b16 %v9031, %v9029
      %v9070 = vpack.c.b16 %v9032, %v9030
      %v9071 = vpack.c.b16 %v9035, %v9033
      %v9072 = vpack.c.b16 %v9036, %v9034
      %v9073 = vpack.c.b16 %v9039, %v9037
      %v9074 = vpack.c.b16 %v9040, %v9038
      %v9075 = vpack.c.b16 %v9043, %v9041
      %v9076 = vpack.c.b16 %v9044, %v9042
      %v9117 = vunpack.c.l.b16 %v8443
      %v9118 = vunpack.c.l.b16 %v8444
      %v9119 = vunpack.c.l.b16 %v8445
      %v9120 = vunpack.c.l.b16 %v8446
      %v9121 = vunpack.c.l.b16 %v8447
      %v9122 = vunpack.c.l.b16 %v8448
      %v9123 = vunpack.c.l.b16 %v8449
      %v9124 = vunpack.c.l.b16 %v8450
      %v9125 = vunpack.c.l.b16 %v8451
      %v9126 = vunpack.c.l.b16 %v8452
      %v9127 = vunpack.c.l.b16 %v8453
      %v9128 = vunpack.c.l.b16 %v8454
      %v9129 = vunpack.c.l.b16 %v8455
      %v9130 = vunpack.c.l.b16 %v8456
      %v9131 = vunpack.c.l.b16 %v8457
      %v9132 = vunpack.c.l.b16 %v8458
      %v9133 = vunpack.c.l.b16 %v8459
      %v9134 = vunpack.c.l.b16 %v8460
      %v9135 = vunpack.c.l.b16 %v8461
      %v9136 = vunpack.c.l.b16 %v8462
      %v9137 = vunpack.c.l.b16 %v8463
      %v9138 = vunpack.c.l.b16 %v8464
      %v9139 = vunpack.c.l.b16 %v8465
      %v9140 = vunpack.c.l.b16 %v8466
      %v9141 = vpack.c.b16 %v9118, %v9117
      %v9142 = vpack.c.b16 %v9120, %v9119
      %v9143 = vpack.c.b16 %v9122, %v9121
      %v9144 = vpack.c.b16 %v9124, %v9123
      %v9145 = vpack.c.b16 %v9126, %v9125
      %v9146 = vpack.c.b16 %v9128, %v9127
      %v9147 = vpack.c.b16 %v9130, %v9129
      %v9148 = vpack.c.b16 %v9132, %v9131
      %v9149 = vpack.c.b16 %v9134, %v9133
      %v9150 = vpack.c.b16 %v9136, %v9135
      %v9151 = vpack.c.b16 %v9138, %v9137
      %v9152 = vpack.c.b16 %v9140, %v9139
      %v9166 = vsel %vm2298, %v9046, 0
      %v9169 = vsel %vm2298, %v9048, 0
      %v9172 = vsel %vm2298, %v9050, 0
      %v9175 = vsel %vm2298, %v9052, 0
      %v9178 = vsel %vm2298, %v9054, 0
      %v9181 = vsel %vm2298, %v9056, 0
      %v9184 = vsel %vm2298, %v9058, 0
      %v9187 = vsel %vm2298, %v9060, 0
      %v9190 = vsel %vm2298, %v9062, 0
      %v9193 = vsel %vm2298, %v9064, 0
      %v9196 = vsel %vm2298, %v9066, 0
      %v9199 = vsel %vm2298, %v9068, 0
      %v9202 = vsel %vm2298, %v9070, 0
      %v9205 = vsel %vm2298, %v9072, 0
      %v9208 = vsel %vm2298, %v9074, 0
      %v9211 = vsel %vm2298, %v9076, 0
      %9213 = vmatprep.subr.bf16.mxu0 0
      %9214 = vmatpush1.bf16.msra.mxu0 %v9148
      %9215 = vmatprep.subr.bf16.mxu0 0
      %9216 = vmatpush1.bf16.msra.mxu0 %v9147
      %9217 = vmatprep.subr.bf16.mxu0 0
      %9218 = vmatpush1.bf16.msra.mxu0 %v9146
      %9219 = vmatprep.subr.bf16.mxu0 0
      %9220 = vmatpush1.bf16.msra.mxu0 %v9145
      %9221 = vmatprep.subr.bf16.mxu0 0
      %9222 = vmatpush1.bf16.msra.mxu0 %v9144
      %9223 = vmatprep.subr.bf16.mxu0 0
      %9224 = vmatpush1.bf16.msra.mxu0 %v9143
      %9225 = vmatprep.subr.bf16.mxu0 0
      %9226 = vmatpush1.bf16.msra.mxu0 %v9142
      %9227 = vmatprep.subr.bf16.mxu0 0
      %9228 = vmatpush1.bf16.msra.mxu0 %v9141
      %9229 = vmatprep.subr.bf16.mxu0 0
      %9230 = vmatpush2.bf16.msra.mxu0 0
      %9231 = vmatprep.subr.bf16.mxu0 0
      %9232 = vmatpush2.bf16.msra.mxu0 0
      %9233 = vmatprep.subr.bf16.mxu0 0
      %9234 = vmatpush2.bf16.msra.mxu0 0
      %9235 = vmatprep.subr.bf16.mxu0 0
      %9236 = vmatpush2.bf16.msra.mxu0 0
      %9237 = vmatprep.subr.bf16.mxu0 0
      %9238 = vmatpush2.bf16.msra.mxu0 %v9152
      %9239 = vmatprep.subr.bf16.mxu0 0
      %9240 = vmatpush2.bf16.msra.mxu0 %v9151
      %9241 = vmatprep.subr.bf16.mxu0 0
      %9242 = vmatpush2.bf16.msra.mxu0 %v9150
      %9243 = vmatprep.subr.bf16.mxu0 0
      %9244 = vmatpush2.bf16.msra.mxu0 %v9149
      %9245 = vmatprep.mubr.bf16.mxu0 %v9166
      %9246 = vmatmul.mubr.bf16.gmra.mxu0 %v9045
      %v9247 = vpop.f32.mrf.mxu0
      %v9248 = vadd.f32 %v8823, %v9247
      %v9249 = vpop.f32.mrf.mxu0
      %v9250 = vpop.f32.mrf.mxu0
      %v9251 = vadd.f32 %v8826, %v9250
      %v9252 = vpop.f32.mrf.mxu0
      %9253 = vmatprep.mubr.bf16.mxu0 %v9169
      %9254 = vmatmul.mubr.bf16.gmra.mxu0 %v9047
      %v9255 = vpop.f32.mrf.mxu0
      %v9256 = vadd.f32 %v8831, %v9255
      %v9257 = vpop.f32.mrf.mxu0
      %v9258 = vpop.f32.mrf.mxu0
      %v9259 = vadd.f32 %v8834, %v9258
      %v9260 = vpop.f32.mrf.mxu0
      %9261 = vmatprep.mubr.bf16.mxu0 %v9172
      %9262 = vmatmul.mubr.bf16.gmra.mxu0 %v9049
      %v9263 = vpop.f32.mrf.mxu0
      %v9264 = vadd.f32 %v8839, %v9263
      %v9265 = vpop.f32.mrf.mxu0
      %v9266 = vpop.f32.mrf.mxu0
      %v9267 = vadd.f32 %v8842, %v9266
      %v9268 = vpop.f32.mrf.mxu0
      %9269 = vmatprep.mubr.bf16.mxu0 %v9175
      %9270 = vmatmul.mubr.bf16.gmra.mxu0 %v9051
      %v9271 = vpop.f32.mrf.mxu0
      %v9272 = vadd.f32 %v8847, %v9271
      %v9273 = vpop.f32.mrf.mxu0
      %v9274 = vpop.f32.mrf.mxu0
      %v9275 = vadd.f32 %v8850, %v9274
      %v9276 = vpop.f32.mrf.mxu0
      %9277 = vmatprep.mubr.bf16.mxu0 %v9178
      %9278 = vmatmul.mubr.bf16.gmra.mxu0 %v9053
      %v9279 = vpop.f32.mrf.mxu0
      %v9280 = vadd.f32 %v8855, %v9279
      %v9281 = vpop.f32.mrf.mxu0
      %v9282 = vpop.f32.mrf.mxu0
      %v9283 = vadd.f32 %v8858, %v9282
      %v9284 = vpop.f32.mrf.mxu0
      %9285 = vmatprep.mubr.bf16.mxu0 %v9181
      %9286 = vmatmul.mubr.bf16.gmra.mxu0 %v9055
      %v9287 = vpop.f32.mrf.mxu0
      %v9288 = vadd.f32 %v8863, %v9287
      %v9289 = vpop.f32.mrf.mxu0
      %v9290 = vpop.f32.mrf.mxu0
      %v9291 = vadd.f32 %v8866, %v9290
      %v9292 = vpop.f32.mrf.mxu0
      %9293 = vmatprep.mubr.bf16.mxu0 %v9184
      %9294 = vmatmul.mubr.bf16.gmra.mxu0 %v9057
      %v9295 = vpop.f32.mrf.mxu0
      %v9296 = vadd.f32 %v8871, %v9295
      %v9297 = vpop.f32.mrf.mxu0
      %v9298 = vpop.f32.mrf.mxu0
      %v9299 = vadd.f32 %v8874, %v9298
      %v9300 = vpop.f32.mrf.mxu0
      %9301 = vmatprep.mubr.bf16.mxu0 %v9187
      %9302 = vmatmul.mubr.bf16.gmra.mxu0 %v9059
      %v9303 = vpop.f32.mrf.mxu0
      %v9304 = vadd.f32 %v8879, %v9303
      %v9305 = vpop.f32.mrf.mxu0
      %v9306 = vpop.f32.mrf.mxu0
      %v9307 = vadd.f32 %v8882, %v9306
      %v9308 = vpop.f32.mrf.mxu0
      %9309 = vmatprep.mubr.bf16.mxu0 %v9190
      %9310 = vmatmul.mubr.bf16.gmra.mxu0 %v9061
      %v9311 = vpop.f32.mrf.mxu0
      %v9312 = vadd.f32 %v8887, %v9311
      %v9313 = vpop.f32.mrf.mxu0
      %v9314 = vpop.f32.mrf.mxu0
      %v9315 = vadd.f32 %v8890, %v9314
      %v9316 = vpop.f32.mrf.mxu0
      %9317 = vmatprep.mubr.bf16.mxu0 %v9193
      %9318 = vmatmul.mubr.bf16.gmra.mxu0 %v9063
      %v9319 = vpop.f32.mrf.mxu0
      %v9320 = vadd.f32 %v8895, %v9319
      %v9321 = vpop.f32.mrf.mxu0
      %v9322 = vpop.f32.mrf.mxu0
      %v9323 = vadd.f32 %v8898, %v9322
      %v9324 = vpop.f32.mrf.mxu0
      %9325 = vmatprep.mubr.bf16.mxu0 %v9196
      %9326 = vmatmul.mubr.bf16.gmra.mxu0 %v9065
      %v9327 = vpop.f32.mrf.mxu0
      %v9328 = vadd.f32 %v8903, %v9327
      %v9329 = vpop.f32.mrf.mxu0
      %v9330 = vpop.f32.mrf.mxu0
      %v9331 = vadd.f32 %v8906, %v9330
      %v9332 = vpop.f32.mrf.mxu0
      %9333 = vmatprep.mubr.bf16.mxu0 %v9199
      %9334 = vmatmul.mubr.bf16.gmra.mxu0 %v9067
      %v9335 = vpop.f32.mrf.mxu0
      %v9336 = vadd.f32 %v8911, %v9335
      %v9337 = vpop.f32.mrf.mxu0
      %v9338 = vpop.f32.mrf.mxu0
      %v9339 = vadd.f32 %v8914, %v9338
      %v9340 = vpop.f32.mrf.mxu0
      %9341 = vmatprep.mubr.bf16.mxu0 %v9202
      %9342 = vmatmul.mubr.bf16.gmra.mxu0 %v9069
      %v9343 = vpop.f32.mrf.mxu0
      %v9344 = vadd.f32 %v8919, %v9343
      %v9345 = vpop.f32.mrf.mxu0
      %v9346 = vpop.f32.mrf.mxu0
      %v9347 = vadd.f32 %v8922, %v9346
      %v9348 = vpop.f32.mrf.mxu0
      %9349 = vmatprep.mubr.bf16.mxu0 %v9205
      %9350 = vmatmul.mubr.bf16.gmra.mxu0 %v9071
      %v9351 = vpop.f32.mrf.mxu0
      %v9352 = vadd.f32 %v8927, %v9351
      %v9353 = vpop.f32.mrf.mxu0
      %v9354 = vpop.f32.mrf.mxu0
      %v9355 = vadd.f32 %v8930, %v9354
      %v9356 = vpop.f32.mrf.mxu0
      %9357 = vmatprep.mubr.bf16.mxu0 %v9208
      %9358 = vmatmul.mubr.bf16.gmra.mxu0 %v9073
      %v9359 = vpop.f32.mrf.mxu0
      %v9360 = vadd.f32 %v8935, %v9359
      %v9361 = vpop.f32.mrf.mxu0
      %v9362 = vpop.f32.mrf.mxu0
      %v9363 = vadd.f32 %v8938, %v9362
      %v9364 = vpop.f32.mrf.mxu0
      %9365 = vmatprep.mubr.bf16.mxu0 %v9211
      %9366 = vmatmul.mubr.bf16.gmra.mxu0 %v9075
      %v9367 = vpop.f32.mrf.mxu0
      %v9368 = vadd.f32 %v8943, %v9367
      %v9369 = vpop.f32.mrf.mxu0
      %v9370 = vpop.f32.mrf.mxu0
      %v9371 = vadd.f32 %v8946, %v9370
      %v9372 = vpop.f32.mrf.mxu0
      %9373 = vdwg.mxu0
      %v9374 = vld [vmem:[%s4080] sm:$0xff]
      %v9375 = vld [vmem:[%s4080 + $0x8] sm:$0xff]
      %v9376 = vld [vmem:[%s4080 + $0x10] sm:$0xff]
      %v9377 = vld [vmem:[%s4080 + $0x18] sm:$0xff]
      %v9378 = vld [vmem:[%s4080 + $0x20] sm:$0xff]
      %v9379 = vld [vmem:[%s4080 + $0x28] sm:$0xff]
      %v9380 = vld [vmem:[%s4080 + $0x30] sm:$0xff]
      %v9381 = vld [vmem:[%s4080 + $0x38] sm:$0xff]
      %v9382 = vld [vmem:[%s4080 + $0x40] sm:$0xff]
      %v9383 = vld [vmem:[%s4080 + $0x48] sm:$0xff]
      %v9384 = vld [vmem:[%s4080 + $0x50] sm:$0xff]
      %v9385 = vld [vmem:[%s4080 + $0x58] sm:$0xff]
      %v9386 = vld [vmem:[%s4080 + $0x60] sm:$0xff]
      %v9387 = vld [vmem:[%s4080 + $0x68] sm:$0xff]
      %v9388 = vld [vmem:[%s4080 + $0x70] sm:$0xff]
      %v9389 = vld [vmem:[%s4080 + $0x78] sm:$0xff]
      %v9390 = vld [vmem:[%s4080 + $0x80] sm:$0xff]
      %v9391 = vld [vmem:[%s4080 + $0x88] sm:$0xff]
      %v9392 = vld [vmem:[%s4080 + $0x90] sm:$0xff]
      %v9393 = vld [vmem:[%s4080 + $0x98] sm:$0xff]
      %v9394 = vld [vmem:[%s4080 + $0xa0] sm:$0xff]
      %v9395 = vld [vmem:[%s4080 + $0xa8] sm:$0xff]
      %v9396 = vld [vmem:[%s4080 + $0xb0] sm:$0xff]
      %v9397 = vld [vmem:[%s4080 + $0xb8] sm:$0xff]
      %v9398 = vld [vmem:[%s4080 + $0xc0] sm:$0xff]
      %v9399 = vld [vmem:[%s4080 + $0xc8] sm:$0xff]
      %v9400 = vld [vmem:[%s4080 + $0xd0] sm:$0xff]
      %v9401 = vld [vmem:[%s4080 + $0xd8] sm:$0xff]
      %v9402 = vld [vmem:[%s4080 + $0xe0] sm:$0xff]
      %v9403 = vld [vmem:[%s4080 + $0xe8] sm:$0xff]
      %v9404 = vld [vmem:[%s4080 + $0xf0] sm:$0xff]
      %v9405 = vld [vmem:[%s4080 + $0xf8] sm:$0xff]
      %s9406 = scalar_lea.vmem %s8, 192
      %v9407 = vld [vmem:[%s9406] sm:$0xf]
      %v9408 = vld [vmem:[%s9406 + $0x4] sm:$0xf]
      %v9409 = vld [vmem:[%s9406 + $0x8] sm:$0xf]
      %v9410 = vld [vmem:[%s9406 + $0xc] sm:$0xf]
      %v9411 = vld [vmem:[%s9406 + $0x10] sm:$0xf]
      %v9412 = vld [vmem:[%s9406 + $0x14] sm:$0xf]
      %v9413 = vld [vmem:[%s9406 + $0x18] sm:$0xf]
      %v9414 = vld [vmem:[%s9406 + $0x1c] sm:$0xf]
      %v9415 = vld [vmem:[%s9406 + $0x20] sm:$0xf]
      %v9416 = vld [vmem:[%s9406 + $0x24] sm:$0xf]
      %v9417 = vld [vmem:[%s9406 + $0x28] sm:$0xf]
      %v9418 = vld [vmem:[%s9406 + $0x2c] sm:$0xf]
      %v9419 = vld [vmem:[%s9406 + $0x30] sm:$0xf]
      %v9420 = vld [vmem:[%s9406 + $0x34] sm:$0xf]
      %v9421 = vld [vmem:[%s9406 + $0x38] sm:$0xf]
      %v9422 = vld [vmem:[%s9406 + $0x3c] sm:$0xf]
      %v9423 = vld [vmem:[%s9406 + $0x40] sm:$0xf]
      %v9424 = vld [vmem:[%s9406 + $0x44] sm:$0xf]
      %v9425 = vld [vmem:[%s9406 + $0x48] sm:$0xf]
      %v9426 = vld [vmem:[%s9406 + $0x4c] sm:$0xf]
      %v9427 = vld [vmem:[%s9406 + $0x50] sm:$0xf]
      %v9428 = vld [vmem:[%s9406 + $0x54] sm:$0xf]
      %v9429 = vld [vmem:[%s9406 + $0x58] sm:$0xf]
      %v9430 = vld [vmem:[%s9406 + $0x5c] sm:$0xf]
      %v9463 = vunpack.c.l.b16 %v9374
      %v9464 = vunpack.c.h.b16 %v9374
      %v9465 = vunpack.c.l.b16 %v9375
      %v9466 = vunpack.c.h.b16 %v9375
      %v9467 = vunpack.c.l.b16 %v9376
      %v9468 = vunpack.c.h.b16 %v9376
      %v9469 = vunpack.c.l.b16 %v9377
      %v9470 = vunpack.c.h.b16 %v9377
      %v9471 = vunpack.c.l.b16 %v9378
      %v9472 = vunpack.c.h.b16 %v9378
      %v9473 = vunpack.c.l.b16 %v9379
      %v9474 = vunpack.c.h.b16 %v9379
      %v9475 = vunpack.c.l.b16 %v9380
      %v9476 = vunpack.c.h.b16 %v9380
      %v9477 = vunpack.c.l.b16 %v9381
      %v9478 = vunpack.c.h.b16 %v9381
      %v9479 = vunpack.c.l.b16 %v9382
      %v9480 = vunpack.c.h.b16 %v9382
      %v9481 = vunpack.c.l.b16 %v9383
      %v9482 = vunpack.c.h.b16 %v9383
      %v9483 = vunpack.c.l.b16 %v9384
      %v9484 = vunpack.c.h.b16 %v9384
      %v9485 = vunpack.c.l.b16 %v9385
      %v9486 = vunpack.c.h.b16 %v9385
      %v9487 = vunpack.c.l.b16 %v9386
      %v9488 = vunpack.c.h.b16 %v9386
      %v9489 = vunpack.c.l.b16 %v9387
      %v9490 = vunpack.c.h.b16 %v9387
      %v9491 = vunpack.c.l.b16 %v9388
      %v9492 = vunpack.c.h.b16 %v9388
      %v9493 = vunpack.c.l.b16 %v9389
      %v9494 = vunpack.c.h.b16 %v9389
      %v9495 = vunpack.c.l.b16 %v9390
      %v9496 = vunpack.c.h.b16 %v9390
      %v9497 = vunpack.c.l.b16 %v9391
      %v9498 = vunpack.c.h.b16 %v9391
      %v9499 = vunpack.c.l.b16 %v9392
      %v9500 = vunpack.c.h.b16 %v9392
      %v9501 = vunpack.c.l.b16 %v9393
      %v9502 = vunpack.c.h.b16 %v9393
      %v9503 = vunpack.c.l.b16 %v9394
      %v9504 = vunpack.c.h.b16 %v9394
      %v9505 = vunpack.c.l.b16 %v9395
      %v9506 = vunpack.c.h.b16 %v9395
      %v9507 = vunpack.c.l.b16 %v9396
      %v9508 = vunpack.c.h.b16 %v9396
      %v9509 = vunpack.c.l.b16 %v9397
      %v9510 = vunpack.c.h.b16 %v9397
      %v9511 = vunpack.c.l.b16 %v9398
      %v9512 = vunpack.c.h.b16 %v9398
      %v9513 = vunpack.c.l.b16 %v9399
      %v9514 = vunpack.c.h.b16 %v9399
      %v9515 = vunpack.c.l.b16 %v9400
      %v9516 = vunpack.c.h.b16 %v9400
      %v9517 = vunpack.c.l.b16 %v9401
      %v9518 = vunpack.c.h.b16 %v9401
      %v9519 = vunpack.c.l.b16 %v9402
      %v9520 = vunpack.c.h.b16 %v9402
      %v9521 = vunpack.c.l.b16 %v9403
      %v9522 = vunpack.c.h.b16 %v9403
      %v9523 = vunpack.c.l.b16 %v9404
      %v9524 = vunpack.c.h.b16 %v9404
      %v9525 = vunpack.c.l.b16 %v9405
      %v9526 = vunpack.c.h.b16 %v9405
      %v9527 = vpack.c.b16 %v9465, %v9463
      %v9528 = vpack.c.b16 %v9466, %v9464
      %v9529 = vpack.c.b16 %v9469, %v9467
      %v9530 = vpack.c.b16 %v9470, %v9468
      %v9531 = vpack.c.b16 %v9473, %v9471
      %v9532 = vpack.c.b16 %v9474, %v9472
      %v9533 = vpack.c.b16 %v9477, %v9475
      %v9534 = vpack.c.b16 %v9478, %v9476
      %v9535 = vpack.c.b16 %v9481, %v9479
      %v9536 = vpack.c.b16 %v9482, %v9480
      %v9537 = vpack.c.b16 %v9485, %v9483
      %v9538 = vpack.c.b16 %v9486, %v9484
      %v9539 = vpack.c.b16 %v9489, %v9487
      %v9540 = vpack.c.b16 %v9490, %v9488
      %v9541 = vpack.c.b16 %v9493, %v9491
      %v9542 = vpack.c.b16 %v9494, %v9492
      %v9543 = vpack.c.b16 %v9497, %v9495
      %v9544 = vpack.c.b16 %v9498, %v9496
      %v9545 = vpack.c.b16 %v9501, %v9499
      %v9546 = vpack.c.b16 %v9502, %v9500
      %v9547 = vpack.c.b16 %v9505, %v9503
      %v9548 = vpack.c.b16 %v9506, %v9504
      %v9549 = vpack.c.b16 %v9509, %v9507
      %v9550 = vpack.c.b16 %v9510, %v9508
      %v9551 = vpack.c.b16 %v9513, %v9511
      %v9552 = vpack.c.b16 %v9514, %v9512
      %v9553 = vpack.c.b16 %v9517, %v9515
      %v9554 = vpack.c.b16 %v9518, %v9516
      %v9555 = vpack.c.b16 %v9521, %v9519
      %v9556 = vpack.c.b16 %v9522, %v9520
      %v9557 = vpack.c.b16 %v9525, %v9523
      %v9558 = vpack.c.b16 %v9526, %v9524
      %v9599 = vunpack.c.l.b16 %v9407
      %v9600 = vunpack.c.l.b16 %v9408
      %v9601 = vunpack.c.l.b16 %v9409
      %v9602 = vunpack.c.l.b16 %v9410
      %v9603 = vunpack.c.l.b16 %v9411
      %v9604 = vunpack.c.l.b16 %v9412
      %v9605 = vunpack.c.l.b16 %v9413
      %v9606 = vunpack.c.l.b16 %v9414
      %v9607 = vunpack.c.l.b16 %v9415
      %v9608 = vunpack.c.l.b16 %v9416
      %v9609 = vunpack.c.l.b16 %v9417
      %v9610 = vunpack.c.l.b16 %v9418
      %v9611 = vunpack.c.l.b16 %v9419
      %v9612 = vunpack.c.l.b16 %v9420
      %v9613 = vunpack.c.l.b16 %v9421
      %v9614 = vunpack.c.l.b16 %v9422
      %v9615 = vunpack.c.l.b16 %v9423
      %v9616 = vunpack.c.l.b16 %v9424
      %v9617 = vunpack.c.l.b16 %v9425
      %v9618 = vunpack.c.l.b16 %v9426
      %v9619 = vunpack.c.l.b16 %v9427
      %v9620 = vunpack.c.l.b16 %v9428
      %v9621 = vunpack.c.l.b16 %v9429
      %v9622 = vunpack.c.l.b16 %v9430
      %v9623 = vpack.c.b16 %v9600, %v9599
      %v9624 = vpack.c.b16 %v9602, %v9601
      %v9625 = vpack.c.b16 %v9604, %v9603
      %v9626 = vpack.c.b16 %v9606, %v9605
      %v9627 = vpack.c.b16 %v9608, %v9607
      %v9628 = vpack.c.b16 %v9610, %v9609
      %v9629 = vpack.c.b16 %v9612, %v9611
      %v9630 = vpack.c.b16 %v9614, %v9613
      %v9631 = vpack.c.b16 %v9616, %v9615
      %v9632 = vpack.c.b16 %v9618, %v9617
      %v9633 = vpack.c.b16 %v9620, %v9619
      %v9634 = vpack.c.b16 %v9622, %v9621
      %v9648 = vsel %vm2298, %v9528, 0
      %v9651 = vsel %vm2298, %v9530, 0
      %v9654 = vsel %vm2298, %v9532, 0
      %v9657 = vsel %vm2298, %v9534, 0
      %v9660 = vsel %vm2298, %v9536, 0
      %v9663 = vsel %vm2298, %v9538, 0
      %v9666 = vsel %vm2298, %v9540, 0
      %v9669 = vsel %vm2298, %v9542, 0
      %v9672 = vsel %vm2298, %v9544, 0
      %v9675 = vsel %vm2298, %v9546, 0
      %v9678 = vsel %vm2298, %v9548, 0
      %v9681 = vsel %vm2298, %v9550, 0
      %v9684 = vsel %vm2298, %v9552, 0
      %v9687 = vsel %vm2298, %v9554, 0
      %v9690 = vsel %vm2298, %v9556, 0
      %v9693 = vsel %vm2298, %v9558, 0
      %9695 = vmatprep.subr.bf16.mxu0 0
      %9696 = vmatpush1.bf16.msra.mxu0 %v9630
      %9697 = vmatprep.subr.bf16.mxu0 0
      %9698 = vmatpush1.bf16.msra.mxu0 %v9629
      %9699 = vmatprep.subr.bf16.mxu0 0
      %9700 = vmatpush1.bf16.msra.mxu0 %v9628
      %9701 = vmatprep.subr.bf16.mxu0 0
      %9702 = vmatpush1.bf16.msra.mxu0 %v9627
      %9703 = vmatprep.subr.bf16.mxu0 0
      %9704 = vmatpush1.bf16.msra.mxu0 %v9626
      %9705 = vmatprep.subr.bf16.mxu0 0
      %9706 = vmatpush1.bf16.msra.mxu0 %v9625
      %9707 = vmatprep.subr.bf16.mxu0 0
      %9708 = vmatpush1.bf16.msra.mxu0 %v9624
      %9709 = vmatprep.subr.bf16.mxu0 0
      %9710 = vmatpush1.bf16.msra.mxu0 %v9623
      %9711 = vmatprep.subr.bf16.mxu0 0
      %9712 = vmatpush2.bf16.msra.mxu0 0
      %9713 = vmatprep.subr.bf16.mxu0 0
      %9714 = vmatpush2.bf16.msra.mxu0 0
      %9715 = vmatprep.subr.bf16.mxu0 0
      %9716 = vmatpush2.bf16.msra.mxu0 0
      %9717 = vmatprep.subr.bf16.mxu0 0
      %9718 = vmatpush2.bf16.msra.mxu0 0
      %9719 = vmatprep.subr.bf16.mxu0 0
      %9720 = vmatpush2.bf16.msra.mxu0 %v9634
      %9721 = vmatprep.subr.bf16.mxu0 0
      %9722 = vmatpush2.bf16.msra.mxu0 %v9633
      %9723 = vmatprep.subr.bf16.mxu0 0
      %9724 = vmatpush2.bf16.msra.mxu0 %v9632
      %9725 = vmatprep.subr.bf16.mxu0 0
      %9726 = vmatpush2.bf16.msra.mxu0 %v9631
      %9727 = vmatprep.mubr.bf16.mxu0 %v9648
      %9728 = vmatmul.mubr.bf16.gmra.mxu0 %v9527
      %v9729 = vpop.f32.mrf.mxu0
      %v9730 = vadd.f32 0.0, %v9729
      %v9731 = vpop.f32.mrf.mxu0
      %v9732 = vpop.f32.mrf.mxu0
      %v9733 = vadd.f32 0.0, %v9732
      %v9734 = vpop.f32.mrf.mxu0
      %9735 = vmatprep.mubr.bf16.mxu0 %v9651
      %9736 = vmatmul.mubr.bf16.gmra.mxu0 %v9529
      %v9737 = vpop.f32.mrf.mxu0
      %v9738 = vadd.f32 0.0, %v9737
      %v9739 = vpop.f32.mrf.mxu0
      %v9740 = vpop.f32.mrf.mxu0
      %v9741 = vadd.f32 0.0, %v9740
      %v9742 = vpop.f32.mrf.mxu0
      %9743 = vmatprep.mubr.bf16.mxu0 %v9654
      %9744 = vmatmul.mubr.bf16.gmra.mxu0 %v9531
      %v9745 = vpop.f32.mrf.mxu0
      %v9746 = vadd.f32 0.0, %v9745
      %v9747 = vpop.f32.mrf.mxu0
      %v9748 = vpop.f32.mrf.mxu0
      %v9749 = vadd.f32 0.0, %v9748
      %v9750 = vpop.f32.mrf.mxu0
      %9751 = vmatprep.mubr.bf16.mxu0 %v9657
      %9752 = vmatmul.mubr.bf16.gmra.mxu0 %v9533
      %v9753 = vpop.f32.mrf.mxu0
      %v9754 = vadd.f32 0.0, %v9753
      %v9755 = vpop.f32.mrf.mxu0
      %v9756 = vpop.f32.mrf.mxu0
      %v9757 = vadd.f32 0.0, %v9756
      %v9758 = vpop.f32.mrf.mxu0
      %9759 = vmatprep.mubr.bf16.mxu0 %v9660
      %9760 = vmatmul.mubr.bf16.gmra.mxu0 %v9535
      %v9761 = vpop.f32.mrf.mxu0
      %v9762 = vadd.f32 0.0, %v9761
      %v9763 = vpop.f32.mrf.mxu0
      %v9764 = vpop.f32.mrf.mxu0
      %v9765 = vadd.f32 0.0, %v9764
      %v9766 = vpop.f32.mrf.mxu0
      %9767 = vmatprep.mubr.bf16.mxu0 %v9663
      %9768 = vmatmul.mubr.bf16.gmra.mxu0 %v9537
      %v9769 = vpop.f32.mrf.mxu0
      %v9770 = vadd.f32 0.0, %v9769
      %v9771 = vpop.f32.mrf.mxu0
      %v9772 = vpop.f32.mrf.mxu0
      %v9773 = vadd.f32 0.0, %v9772
      %v9774 = vpop.f32.mrf.mxu0
      %9775 = vmatprep.mubr.bf16.mxu0 %v9666
      %9776 = vmatmul.mubr.bf16.gmra.mxu0 %v9539
      %v9777 = vpop.f32.mrf.mxu0
      %v9778 = vadd.f32 0.0, %v9777
      %v9779 = vpop.f32.mrf.mxu0
      %v9780 = vpop.f32.mrf.mxu0
      %v9781 = vadd.f32 0.0, %v9780
      %v9782 = vpop.f32.mrf.mxu0
      %9783 = vmatprep.mubr.bf16.mxu0 %v9669
      %9784 = vmatmul.mubr.bf16.gmra.mxu0 %v9541
      %v9785 = vpop.f32.mrf.mxu0
      %v9786 = vadd.f32 0.0, %v9785
      %v9787 = vpop.f32.mrf.mxu0
      %v9788 = vpop.f32.mrf.mxu0
      %v9789 = vadd.f32 0.0, %v9788
      %v9790 = vpop.f32.mrf.mxu0
      %9791 = vmatprep.mubr.bf16.mxu0 %v9672
      %9792 = vmatmul.mubr.bf16.gmra.mxu0 %v9543
      %v9793 = vpop.f32.mrf.mxu0
      %v9794 = vadd.f32 0.0, %v9793
      %v9795 = vpop.f32.mrf.mxu0
      %v9796 = vpop.f32.mrf.mxu0
      %v9797 = vadd.f32 0.0, %v9796
      %v9798 = vpop.f32.mrf.mxu0
      %9799 = vmatprep.mubr.bf16.mxu0 %v9675
      %9800 = vmatmul.mubr.bf16.gmra.mxu0 %v9545
      %v9801 = vpop.f32.mrf.mxu0
      %v9802 = vadd.f32 0.0, %v9801
      %v9803 = vpop.f32.mrf.mxu0
      %v9804 = vpop.f32.mrf.mxu0
      %v9805 = vadd.f32 0.0, %v9804
      %v9806 = vpop.f32.mrf.mxu0
      %9807 = vmatprep.mubr.bf16.mxu0 %v9678
      %9808 = vmatmul.mubr.bf16.gmra.mxu0 %v9547
      %v9809 = vpop.f32.mrf.mxu0
      %v9810 = vadd.f32 0.0, %v9809
      %v9811 = vpop.f32.mrf.mxu0
      %v9812 = vpop.f32.mrf.mxu0
      %v9813 = vadd.f32 0.0, %v9812
      %v9814 = vpop.f32.mrf.mxu0
      %9815 = vmatprep.mubr.bf16.mxu0 %v9681
      %9816 = vmatmul.mubr.bf16.gmra.mxu0 %v9549
      %v9817 = vpop.f32.mrf.mxu0
      %v9818 = vadd.f32 0.0, %v9817
      %v9819 = vpop.f32.mrf.mxu0
      %v9820 = vpop.f32.mrf.mxu0
      %v9821 = vadd.f32 0.0, %v9820
      %v9822 = vpop.f32.mrf.mxu0
      %9823 = vmatprep.mubr.bf16.mxu0 %v9684
      %9824 = vmatmul.mubr.bf16.gmra.mxu0 %v9551
      %v9825 = vpop.f32.mrf.mxu0
      %v9826 = vadd.f32 0.0, %v9825
      %v9827 = vpop.f32.mrf.mxu0
      %v9828 = vpop.f32.mrf.mxu0
      %v9829 = vadd.f32 0.0, %v9828
      %v9830 = vpop.f32.mrf.mxu0
      %9831 = vmatprep.mubr.bf16.mxu0 %v9687
      %9832 = vmatmul.mubr.bf16.gmra.mxu0 %v9553
      %v9833 = vpop.f32.mrf.mxu0
      %v9834 = vadd.f32 0.0, %v9833
      %v9835 = vpop.f32.mrf.mxu0
      %v9836 = vpop.f32.mrf.mxu0
      %v9837 = vadd.f32 0.0, %v9836
      %v9838 = vpop.f32.mrf.mxu0
      %9839 = vmatprep.mubr.bf16.mxu0 %v9690
      %9840 = vmatmul.mubr.bf16.gmra.mxu0 %v9555
      %v9841 = vpop.f32.mrf.mxu0
      %v9842 = vadd.f32 0.0, %v9841
      %v9843 = vpop.f32.mrf.mxu0
      %v9844 = vpop.f32.mrf.mxu0
      %v9845 = vadd.f32 0.0, %v9844
      %v9846 = vpop.f32.mrf.mxu0
      %9847 = vmatprep.mubr.bf16.mxu0 %v9693
      %9848 = vmatmul.mubr.bf16.gmra.mxu0 %v9557
      %v9849 = vpop.f32.mrf.mxu0
      %v9850 = vadd.f32 0.0, %v9849
      %v9851 = vpop.f32.mrf.mxu0
      %v9852 = vpop.f32.mrf.mxu0
      %v9853 = vadd.f32 0.0, %v9852
      %v9854 = vpop.f32.mrf.mxu0
      %9855 = vdwg.mxu0
      %v9856 = vadd.f32 %v9248, %v9730
      %v9857 = vadd.f32 %v9251, %v9733
      %v9858 = vadd.f32 %v9256, %v9738
      %v9859 = vadd.f32 %v9259, %v9741
      %v9860 = vadd.f32 %v9264, %v9746
      %v9861 = vadd.f32 %v9267, %v9749
      %v9862 = vadd.f32 %v9272, %v9754
      %v9863 = vadd.f32 %v9275, %v9757
      %v9864 = vadd.f32 %v9280, %v9762
      %v9865 = vadd.f32 %v9283, %v9765
      %v9866 = vadd.f32 %v9288, %v9770
      %v9867 = vadd.f32 %v9291, %v9773
      %v9868 = vadd.f32 %v9296, %v9778
      %v9869 = vadd.f32 %v9299, %v9781
      %v9870 = vadd.f32 %v9304, %v9786
      %v9871 = vadd.f32 %v9307, %v9789
      %v9872 = vadd.f32 %v9312, %v9794
      %v9873 = vadd.f32 %v9315, %v9797
      %v9874 = vadd.f32 %v9320, %v9802
      %v9875 = vadd.f32 %v9323, %v9805
      %v9876 = vadd.f32 %v9328, %v9810
      %v9877 = vadd.f32 %v9331, %v9813
      %v9878 = vadd.f32 %v9336, %v9818
      %v9879 = vadd.f32 %v9339, %v9821
      %v9880 = vadd.f32 %v9344, %v9826
      %v9881 = vadd.f32 %v9347, %v9829
      %v9882 = vadd.f32 %v9352, %v9834
      %v9883 = vadd.f32 %v9355, %v9837
      %v9884 = vadd.f32 %v9360, %v9842
      %v9885 = vadd.f32 %v9363, %v9845
      %v9886 = vadd.f32 %v9368, %v9850
      %v9887 = vadd.f32 %v9371, %v9853
      %v9888 = vld [vmem:[%s9] sm:$0x1]
      %v9890 = vlaneseq
      %v9891 = vshrl.u32 %v9890, 7
      %v9892 = vsub.s32 0, %v9891
      %v9893 = vrot.slane %v9888, %v9892
      %v9895 = vadd.f32 %v9856, %v9893
      %v9896 = vadd.f32 %v9857, %v9893
      %v9897 = vadd.f32 %v9858, %v9893
      %v9898 = vadd.f32 %v9859, %v9893
      %v9899 = vadd.f32 %v9860, %v9893
      %v9900 = vadd.f32 %v9861, %v9893
      %v9901 = vadd.f32 %v9862, %v9893
      %v9902 = vadd.f32 %v9863, %v9893
      %v9903 = vadd.f32 %v9864, %v9893
      %v9904 = vadd.f32 %v9865, %v9893
      %v9905 = vadd.f32 %v9866, %v9893
      %v9906 = vadd.f32 %v9867, %v9893
      %v9907 = vadd.f32 %v9868, %v9893
      %v9908 = vadd.f32 %v9869, %v9893
      %v9909 = vadd.f32 %v9870, %v9893
      %v9910 = vadd.f32 %v9871, %v9893
      %v9911 = vadd.f32 %v9872, %v9893
      %v9912 = vadd.f32 %v9873, %v9893
      %v9913 = vadd.f32 %v9874, %v9893
      %v9914 = vadd.f32 %v9875, %v9893
      %v9915 = vadd.f32 %v9876, %v9893
      %v9916 = vadd.f32 %v9877, %v9893
      %v9917 = vadd.f32 %v9878, %v9893
      %v9918 = vadd.f32 %v9879, %v9893
      %v9919 = vadd.f32 %v9880, %v9893
      %v9920 = vadd.f32 %v9881, %v9893
      %v9921 = vadd.f32 %v9882, %v9893
      %v9922 = vadd.f32 %v9883, %v9893
      %v9923 = vadd.f32 %v9884, %v9893
      %v9924 = vadd.f32 %v9885, %v9893
      %v9925 = vadd.f32 %v9886, %v9893
      %v9926 = vadd.f32 %v9887, %v9893
      %v9927 = vadd.f32 %v384, %v9895
      %v9928 = vadd.f32 %v385, %v9896
      %v9929 = vadd.f32 %v386, %v9897
      %v9930 = vadd.f32 %v387, %v9898
      %v9931 = vadd.f32 %v388, %v9899
      %v9932 = vadd.f32 %v389, %v9900
      %v9933 = vadd.f32 %v390, %v9901
      %v9934 = vadd.f32 %v391, %v9902
      %v9935 = vadd.f32 %v392, %v9903
      %v9936 = vadd.f32 %v393, %v9904
      %v9937 = vadd.f32 %v394, %v9905
      %v9938 = vadd.f32 %v395, %v9906
      %v9939 = vadd.f32 %v396, %v9907
      %v9940 = vadd.f32 %v397, %v9908
      %v9941 = vadd.f32 %v398, %v9909
      %v9942 = vadd.f32 %v399, %v9910
      %v9943 = vadd.f32 %v400, %v9911
      %v9944 = vadd.f32 %v401, %v9912
      %v9945 = vadd.f32 %v402, %v9913
      %v9946 = vadd.f32 %v403, %v9914
      %v9947 = vadd.f32 %v404, %v9915
      %v9948 = vadd.f32 %v405, %v9916
      %v9949 = vadd.f32 %v406, %v9917
      %v9950 = vadd.f32 %v407, %v9918
      %v9951 = vadd.f32 %v408, %v9919
      %v9952 = vadd.f32 %v409, %v9920
      %v9953 = vadd.f32 %v410, %v9921
      %v9954 = vadd.f32 %v411, %v9922
      %v9955 = vadd.f32 %v412, %v9923
      %v9956 = vadd.f32 %v413, %v9924
      %v9957 = vadd.f32 %v414, %v9925
      %v9958 = vadd.f32 %v415, %v9926
      %9959 = vst.msk [vmem:[%s359] sm:$0xff] %vm448, %v9927
      %9960 = vst.msk [vmem:[%s359 + $0x8] sm:$0xff] %vm448, %v9928
      %9961 = vst.msk [vmem:[%s359 + $0x10] sm:$0xff] %vm448, %v9929
      %9962 = vst.msk [vmem:[%s359 + $0x18] sm:$0xff] %vm448, %v9930
      %9963 = vst.msk [vmem:[%s359 + $0x20] sm:$0xff] %vm448, %v9931
      %9964 = vst.msk [vmem:[%s359 + $0x28] sm:$0xff] %vm448, %v9932
      %9965 = vst.msk [vmem:[%s359 + $0x30] sm:$0xff] %vm448, %v9933
      %9966 = vst.msk [vmem:[%s359 + $0x38] sm:$0xff] %vm448, %v9934
      %9967 = vst.msk [vmem:[%s359 + $0x40] sm:$0xff] %vm448, %v9935
      %9968 = vst.msk [vmem:[%s359 + $0x48] sm:$0xff] %vm448, %v9936
      %9969 = vst.msk [vmem:[%s359 + $0x50] sm:$0xff] %vm448, %v9937
      %9970 = vst.msk [vmem:[%s359 + $0x58] sm:$0xff] %vm448, %v9938
      %9971 = vst.msk [vmem:[%s359 + $0x60] sm:$0xff] %vm448, %v9939
      %9972 = vst.msk [vmem:[%s359 + $0x68] sm:$0xff] %vm448, %v9940
      %9973 = vst.msk [vmem:[%s359 + $0x70] sm:$0xff] %vm448, %v9941
      %9974 = vst.msk [vmem:[%s359 + $0x78] sm:$0xff] %vm448, %v9942
      %9975 = vst.msk [vmem:[%s359 + $0x80] sm:$0xff] %vm448, %v9943
      %9976 = vst.msk [vmem:[%s359 + $0x88] sm:$0xff] %vm448, %v9944
      %9977 = vst.msk [vmem:[%s359 + $0x90] sm:$0xff] %vm448, %v9945
      %9978 = vst.msk [vmem:[%s359 + $0x98] sm:$0xff] %vm448, %v9946
      %9979 = vst.msk [vmem:[%s359 + $0xa0] sm:$0xff] %vm448, %v9947
      %9980 = vst.msk [vmem:[%s359 + $0xa8] sm:$0xff] %vm448, %v9948
      %9981 = vst.msk [vmem:[%s359 + $0xb0] sm:$0xff] %vm448, %v9949
      %9982 = vst.msk [vmem:[%s359 + $0xb8] sm:$0xff] %vm448, %v9950
      %9983 = vst.msk [vmem:[%s359 + $0xc0] sm:$0xff] %vm448, %v9951
      %9984 = vst.msk [vmem:[%s359 + $0xc8] sm:$0xff] %vm448, %v9952
      %9985 = vst.msk [vmem:[%s359 + $0xd0] sm:$0xff] %vm448, %v9953
      %9986 = vst.msk [vmem:[%s359 + $0xd8] sm:$0xff] %vm448, %v9954
      %9987 = vst.msk [vmem:[%s359 + $0xe0] sm:$0xff] %vm448, %v9955
      %9988 = vst.msk [vmem:[%s359 + $0xe8] sm:$0xff] %vm448, %v9956
      %9989 = vst.msk [vmem:[%s359 + $0xf0] sm:$0xff] %vm448, %v9957
      %9990 = vst.msk [vmem:[%s359 + $0xf8] sm:$0xff] %vm448, %v9958
      %p9991 = scmp.lt.s32.totalorder %s21, 1
      %s9992 = scalar_select %p9991, %s21, 1
      %s9993 = smul.addr %s9992, 32
      %s9994 = smul.addr %s9993, 8
      %s9995 = scalar_lea.vmem %s10, %s9994
      // Predicated region
      $region61: #{resnet_block1_forward.1} parent=59 // pred_check
        %p9996 = pneg %p254
      $region62: #{resnet_block1_forward.1} parent=59 // pred_check_branch
        %9998 = sbr.rel (%p9996) target = $region64
      $region63: #{resnet_block1_forward.1} parent=59 // pred_region
        _
      $region64: #{resnet_block1_forward.1} parent=59 // pred_fallthru
        _
    $region60: #{resnet_block1_forward.1} parent=5 // pred_fallthru
      _
    %p9999 = scmp.le.s32.totalorder 2, %s16
    // Predicated region
    $region65: #{resnet_block1_forward.1} parent=5 // pred_check
      %p10000 = pneg %p9999
    $region66: #{resnet_block1_forward.1} parent=5 // pred_check_branch
      %10002 = sbr.rel (%p10000) target = $region68
    $region67: #{resnet_block1_forward.1} parent=5 // pred_region
      %s10003 = ssub.s32 %s16, 2
      // Predicated region
      $region69: #{resnet_block1_forward.1} parent=67 // pred_check
        %p10004 = pneg %p260
      $region70: #{resnet_block1_forward.1} parent=67 // pred_check_branch
        %10006 = sbr.rel (%p10004) target = $region72
      $region71: #{resnet_block1_forward.1} parent=67 // pred_region
        %p10007 = scmp.lt.s32.totalorder %s22, 1
        %s10008 = scalar_select %p10007, %s22, 1
        %s10009 = smul.addr %s10008, 32
        %s10010 = smul.addr %s10009, 8
        %s10011 = scalar_lea.vmem %s10, %s10010
      $region72: #{resnet_block1_forward.1} parent=67 // pred_fallthru
        _
    $region68: #{resnet_block1_forward.1} parent=5 // pred_fallthru
      _
  $region6: #{resnet_block1_forward.1} parent=0 // loop_footer
    %s20 = sadd.s32 1, %s16
  $region7: #{resnet_block1_forward.1} parent=0 // loop_footer_branch
    %15 = sbr.rel target = $region3
  $region8: #{resnet_block1_forward.1} parent=0 // loop_exit
    _

</llo_original>
